<compile_context>
chip_gen: v6e
topology: v6e:2x2x1
jax: 0.10.0
libtpu: 0.0.40
codegen_flags: <defaults>
</compile_context>

<pallas_src>
import functools
import math

import jax
import jax.numpy as jnp
from jax import lax
from jax.experimental import pallas as pl
from jax.experimental.pallas import tpu as pltpu

EPS = 1e-12

PARAM_ORDER = (
    "wqkv", "bqkv", "wo", "bo",
    "ln1g", "ln1b", "ln2g", "ln2b",
    "w1", "b1", "w2", "b2",
    "gg", "gb",
)


# --------------------------------------------------------------------------
# kernel
# --------------------------------------------------------------------------
def transformer_stack_kernel(x_ref, pe_ref,
                             wqkv_ref, bqkv_ref, wo_ref, bo_ref,
                             ln1g_ref, ln1b_ref, ln2g_ref, ln2b_ref,
                             w1_ref, b1_ref, w2_ref, b2_ref,
                             gg_ref, gb_ref,
                             o_ref,
                             h_ref,
                             *, num_layers, num_heads, head_dim,
                             nb, seq_len, d_model, eps, compute_dtype):
    """One post-norm nn.TransformerEncoder layer per grid step (layer axis is
    grid axis 1, 'arbitrary'); the activation is carried in VMEM scratch.

    Layer 0 applies the positional-encoding add (x + (x + PE)); the last layer
    applies the final gLN / GroupNorm(1) and the SepFormer block residual.
    """
    NB, T, F, H, hd = nb, seq_len, d_model, num_heads, head_dim
    R = NB * T
    cdt = compute_dtype
    l = pl.program_id(1)

    # ---- first layer step: positional encoding (dropout p=0 => identity) ----
    @pl.when(l == 0)
    def _():
        # PyTorch: x = x + (x + PE)  ==  2*x + PE
        h_ref[...] = 2.0 * x_ref[...] + pe_ref[...]

    # ---- this layer's weights (blocked per layer on the grid) --------------
    wqkv = wqkv_ref[0]            # (F, 3F) bf16, 1/sqrt(hd) folded into Q cols
    bqkv = bqkv_ref[0]            # (1, 3F) f32
    wo, bo = wo_ref[0], bo_ref[0]
    g1, be1 = ln1g_ref[0], ln1b_ref[0]
    g2, be2 = ln2g_ref[0], ln2b_ref[0]
    w1, fb1 = w1_ref[0], b1_ref[0]
    w2, fb2 = w2_ref[0], b2_ref[0]

    def layer_norm(y, g, b):
        m = jnp.mean(y, axis=-1, keepdims=True)
        c = y - m
        v = jnp.mean(jnp.square(c), axis=-1, keepdims=True)
        return c * lax.rsqrt(v + eps) * g + b

    r = h_ref[...].reshape(R, F)                              # (R, F) f32

    # ---- fused QKV projection ----------------------------------------------
    qkv = jnp.dot(r.astype(cdt), wqkv,
                  preferred_element_type=jnp.float32) + bqkv   # (R, 3F) f32
    qkv = qkv.reshape(NB, T, 3 * F)

    # ---- multi-head self-attention, batched over the NB sequence axis ------
    head_outs = []
    for h in range(H):
        q = qkv[:, :, h * hd:(h + 1) * hd].astype(cdt)
        k = qkv[:, :, F + h * hd:F + (h + 1) * hd].astype(cdt)
        v = qkv[:, :, 2 * F + h * hd:2 * F + (h + 1) * hd].astype(cdt)
        s = jnp.einsum('ntd,nsd->nts', q, k,
                       preferred_element_type=jnp.float32)     # (NB, T, T)
        s = s - jnp.max(s, axis=-1, keepdims=True)
        p = jnp.exp(s)
        p = p * pl.reciprocal(jnp.sum(p, axis=-1, keepdims=True), approx=True)
        head_outs.append(
            jnp.einsum('nts,nsd->ntd', p.astype(cdt), v,
                       preferred_element_type=jnp.float32))    # (NB, T, hd)

    ho = jnp.concatenate(head_outs, axis=-1).reshape(R, F)
    attn = jnp.dot(ho.astype(cdt), wo,
                   preferred_element_type=jnp.float32) + bo    # (R, F)
    y = layer_norm(r + attn, g1, be1)

    # ---- feed-forward (ReLU) ------------------------------------------------
    hid = jnp.maximum(
        jnp.dot(y.astype(cdt), w1, preferred_element_type=jnp.float32) + fb1,
        0.0)
    ff = jnp.dot(hid.astype(cdt), w2,
                 preferred_element_type=jnp.float32) + fb2
    out = layer_norm(y + ff, g2, be2)
    h_ref[...] = out.reshape(NB, T, F)

    # ---- last layer step: final gLN (GroupNorm(1,F) over (T,F) of each
    # sequence, per LayerNormWrapper) + SepFormer residual, then store -------
    @pl.when(l == num_layers - 1)
    def _():
        y3 = out.reshape(NB, T, F)
        inv_tf = 1.0 / (T * F)
        gm = jnp.sum(jnp.sum(y3, axis=2, keepdims=True),
                     axis=1, keepdims=True) * inv_tf
        c = y3 - gm
        gv = jnp.sum(jnp.sum(jnp.square(c), axis=2, keepdims=True),
                     axis=1, keepdims=True) * inv_tf
        yn = c * lax.rsqrt(gv + eps) * gg_ref[...] + gb_ref[...]
        o_ref[...] = (yn + x_ref[...]).astype(o_ref.dtype)


# --------------------------------------------------------------------------
# wrapper
# --------------------------------------------------------------------------
def _choose_block_sequences(N, T, target_rows=512):
    """Pick NB (sequences per grid step): NB | N, NB*T near target_rows rows
    (MXU-friendly), and the parallel grid axis has >= 2 (ideally even) steps
    so v7x megacore can shard it."""
    divisors = [d for d in range(1, N + 1) if N % d == 0]
    fitting = [d for d in divisors if d * T <= target_rows]
    nb = fitting[-1] if fitting else 1
    if N // nb < 2 and N >= 2:                       # keep >= 2 grid steps
        nb = max(d for d in divisors if d <= max(N // 2, 1))
    if (N // nb) % 2 and N >= 4:                     # prefer even step count
        even = [d for d in divisors if d <= nb and (N // d) % 2 == 0]
        if even and even[-1] * 2 >= nb:              # never shrink block > 2x
            nb = even[-1]
    return max(nb, 1)


def _vmem_limit_bytes():
    """Generation-aware scoped-VMEM limit (~60% of per-core capacity)."""
    cap = 64 * 1024 * 1024                 # conservative default (v7x per-TC)
    try:
        info = pltpu.get_tpu_info()
        cap = int(getattr(info, "vmem_capacity_bytes", cap))
    except Exception:
        pass
    return int(min(cap * 3 // 5, 100 * 1024 * 1024))


def transformer_stack(seqs, pe, params, *, num_layers, num_heads, eps=EPS,
                      compute_dtype=jnp.bfloat16, target_rows=512):
    """seqs: (N, T, F) raw sequences (before PE / residual).  Returns (N,T,F)
    which already includes the SepFormer residual add."""
    N, T, F = seqs.shape
    assert F % num_heads == 0
    head_dim = F // num_heads
    nb = _choose_block_sequences(N, T, target_rows)

    param_list = [params[name] for name in PARAM_ORDER]

    kernel = functools.partial(
        transformer_stack_kernel,
        num_layers=num_layers, num_heads=num_heads, head_dim=head_dim,
        nb=nb, seq_len=T, d_model=F, eps=eps, compute_dtype=compute_dtype)

    in_specs = [
        pl.BlockSpec((nb, T, F), lambda *g: (g[0], 0, 0)),   # sequences
        pl.BlockSpec((T, F), lambda *g: (0, 0)),             # PE (grid-invariant)
    ]
    for name, p in zip(PARAM_ORDER, param_list):
        nd = p.ndim
        if name in ("gg", "gb"):
            # final-norm affine params: tiny, grid-invariant
            in_specs.append(pl.BlockSpec(p.shape,
                                         lambda *g, _nd=nd: (0,) * _nd))
        else:
            # per-layer weights: block (1, ...), indexed by the layer grid axis
            in_specs.append(pl.BlockSpec(
                (1,) + p.shape[1:],
                lambda *g, _nd=nd: (g[-1],) + (0,) * (_nd - 1)))

    out_spec = pl.BlockSpec((nb, T, F), lambda *g: (g[0], 0, 0))

    grid_spec = pltpu.PrefetchScalarGridSpec(
        num_scalar_prefetch=0,
        grid=(N // nb, num_layers),
        in_specs=in_specs,
        out_specs=out_spec,
        scratch_shapes=[pltpu.VMEM((nb, T, F), jnp.float32)])

    return pl.pallas_call(
        kernel,
        out_shape=jax.ShapeDtypeStruct((N, T, F), seqs.dtype),
        grid_spec=grid_spec,
        compiler_params=pltpu.CompilerParams(
            dimension_semantics=("parallel", "arbitrary"),
            vmem_limit_bytes=_vmem_limit_bytes()),
    )(seqs, pe, *param_list)


def positional_encoding(T, F, base=10000.0):
    # Matches PositionalEncoding: interleaved [sin, cos] along feature axis.
    pos = jnp.arange(T, dtype=jnp.float32)
    idx = jnp.arange(0, F, 2, dtype=jnp.float32) / F
    ind = pos[:, None] / (base ** idx[None, :])
    return jnp.stack([jnp.sin(ind), jnp.cos(ind)], axis=-1).reshape(T, F)


def init_transformer_params(key, num_layers, num_heads, d_model, d_ff):
    ks = jax.random.split(key, 4)

    def w(k, shape, fan_in):
        return jax.random.normal(k, shape, jnp.float32) / math.sqrt(fan_in)

    return {
        "wqkv": w(ks[0], (num_layers, d_model, 3 * d_model), d_model),
        "bqkv": jnp.zeros((num_layers, 1, 3 * d_model), jnp.float32),
        "wo": w(ks[1], (num_layers, d_model, d_model), d_model),
        "bo": jnp.zeros((num_layers, 1, d_model), jnp.float32),
        "ln1g": jnp.ones((num_layers, 1, d_model), jnp.float32),
        "ln1b": jnp.zeros((num_layers, 1, d_model), jnp.float32),
        "ln2g": jnp.ones((num_layers, 1, d_model), jnp.float32),
        "ln2b": jnp.zeros((num_layers, 1, d_model), jnp.float32),
        "w1": w(ks[2], (num_layers, d_model, d_ff), d_model),
        "b1": jnp.zeros((num_layers, 1, d_ff), jnp.float32),
        "w2": w(ks[3], (num_layers, d_ff, d_model), d_ff),
        "b2": jnp.zeros((num_layers, 1, d_model), jnp.float32),
        "gg": jnp.ones((1, d_model), jnp.float32),   # GroupNorm weight
        "gb": jnp.zeros((1, d_model), jnp.float32),  # GroupNorm bias
    }


def _prepare_params(params, num_heads, compute_dtype):
    """Fold the 1/sqrt(head_dim) attention scale into the Q part of the fused
    QKV weights/bias, and cast the MXU weight matrices to the compute dtype."""
    F = params["wo"].shape[-1]
    hd = F // num_heads
    scale = jnp.concatenate([
        jnp.full((F,), 1.0 / math.sqrt(hd), jnp.float32),
        jnp.ones((2 * F,), jnp.float32)])
    out = dict(params)
    out["wqkv"] = (params["wqkv"] * scale).astype(compute_dtype)
    out["bqkv"] = params["bqkv"] * scale
    out["wo"] = params["wo"].astype(compute_dtype)
    out["w1"] = params["w1"].astype(compute_dtype)
    out["w2"] = params["w2"].astype(compute_dtype)
    return out


def sepformer_block(x, intra_params, inter_params, *,
                    num_layers_intra, num_heads_intra,
                    num_layers_inter, num_heads_inter,
                    eps=EPS, compute_dtype=jnp.bfloat16):
    """x: (batch, num_features, S, chunk_size) -> same shape."""
    B, F, S, K = x.shape

    intra_p = _prepare_params(intra_params, num_heads_intra, compute_dtype)
    inter_p = _prepare_params(inter_params, num_heads_inter, compute_dtype)

    # ---- IntraTransformer: attention along chunk_size (T=K), N = B*S ------
    xt = jnp.transpose(x, (0, 2, 3, 1))                        # (B, S, K, F)
    out1 = transformer_stack(xt.reshape(B * S, K, F),
                             positional_encoding(K, F), intra_p,
                             num_layers=num_layers_intra,
                             num_heads=num_heads_intra,
                             eps=eps, compute_dtype=compute_dtype)

    # ---- InterTransformer: attention along S (T=S), N = B*K ---------------
    # Single layout permute (B,S,K,F) -> (B,K,S,F); no NCHW round trip.
    y = jnp.transpose(out1.reshape(B, S, K, F), (0, 2, 1, 3))  # (B, K, S, F)
    out2 = transformer_stack(y.reshape(B * K, S, F),
                             positional_encoding(S, F), inter_p,
                             num_layers=num_layers_inter,
                             num_heads=num_heads_inter,
                             eps=eps, compute_dtype=compute_dtype)

    # ---- back to (batch, num_features, S, chunk_size) ----------------------
    return jnp.transpose(out2.reshape(B, K, S, F), (0, 3, 2, 1))


if __name__ == "__main__":
    key = jax.random.PRNGKey(0)
    # Small shapes consistent with the module: (batch, d_model, S, chunk_size).
    # Real SepFormer uses d_model=256 (lane-dense); the demo is intentionally tiny.
    B, F, S, K = 2, 32, 4, 8
    L_INTRA = L_INTER = 2
    H_INTRA = H_INTER = 2
    D_FF = 64

    k_x, k_i, k_j = jax.random.split(key, 3)
    x = jax.random.normal(k_x, (B, F, S, K), jnp.float32)
    intra_params = init_transformer_params(k_i, L_INTRA, H_INTRA, F, D_FF)
    inter_params = init_transformer_params(k_j, L_INTER, H_INTER, F, D_FF)

    run = jax.jit(functools.partial(
        sepformer_block,
        num_layers_intra=L_INTRA, num_heads_intra=H_INTRA,
        num_layers_inter=L_INTER, num_heads_inter=H_INTER))

    out = jax.block_until_ready(run(x, intra_params, inter_params))

    assert out.shape == x.shape, (out.shape, x.shape)
    assert bool(jnp.all(jnp.isfinite(out)))
    print("KERNEL_OK")
</pallas_src>

<mosaic_0001>
module attributes {stable_mosaic.version = 11 : i64} {
  func.func @transformer_stack_kernel(%arg0: i32, %arg1: i32, %arg2: memref<4x8x32xf32, #tpu.memory_space<vmem>>, %arg3: memref<8x32xf32, #tpu.memory_space<vmem>>, %arg4: memref<1x32x96xbf16, #tpu.memory_space<vmem>>, %arg5: memref<1x1x96xf32, #tpu.memory_space<vmem>>, %arg6: memref<1x32x32xbf16, #tpu.memory_space<vmem>>, %arg7: memref<1x1x32xf32, #tpu.memory_space<vmem>>, %arg8: memref<1x1x32xf32, #tpu.memory_space<vmem>>, %arg9: memref<1x1x32xf32, #tpu.memory_space<vmem>>, %arg10: memref<1x1x32xf32, #tpu.memory_space<vmem>>, %arg11: memref<1x1x32xf32, #tpu.memory_space<vmem>>, %arg12: memref<1x32x64xbf16, #tpu.memory_space<vmem>>, %arg13: memref<1x1x64xf32, #tpu.memory_space<vmem>>, %arg14: memref<1x64x32xbf16, #tpu.memory_space<vmem>>, %arg15: memref<1x1x32xf32, #tpu.memory_space<vmem>>, %arg16: memref<1x32xf32, #tpu.memory_space<vmem>>, %arg17: memref<1x32xf32, #tpu.memory_space<vmem>>, %arg18: memref<4x8x32xf32, #tpu.memory_space<vmem>>, %arg19: memref<4x8x32xf32, #tpu.memory_space<vmem>>) attributes {dimension_semantics = [#tpu.dimension_semantics<parallel>, #tpu.dimension_semantics<arbitrary>], iteration_bounds = array<i64: 2, 2>, scalar_prefetch = 0 : i64, scratch_operands = 1 : i64, tpu.core_type = #tpu.core_type<tc>, window_params = [{transform_indices = @transform_0, window_bounds = array<i64: 4, 8, 32>}, {pipeline_mode = #tpu.pipeline_mode<synchronous>, transform_indices = @transform_1, window_bounds = array<i64: 8, 32>}, {transform_indices = @transform_2, window_bounds = array<i64: 1, 32, 96>}, {transform_indices = @transform_3, window_bounds = array<i64: 1, 1, 96>}, {transform_indices = @transform_4, window_bounds = array<i64: 1, 32, 32>}, {transform_indices = @transform_5, window_bounds = array<i64: 1, 1, 32>}, {transform_indices = @transform_6, window_bounds = array<i64: 1, 1, 32>}, {transform_indices = @transform_7, window_bounds = array<i64: 1, 1, 32>}, {transform_indices = @transform_8, window_bounds = array<i64: 1, 1, 32>}, {transform_indices = @transform_9, window_bounds = array<i64: 1, 1, 32>}, {transform_indices = @transform_10, window_bounds = array<i64: 1, 32, 64>}, {transform_indices = @transform_11, window_bounds = array<i64: 1, 1, 64>}, {transform_indices = @transform_12, window_bounds = array<i64: 1, 64, 32>}, {transform_indices = @transform_13, window_bounds = array<i64: 1, 1, 32>}, {pipeline_mode = #tpu.pipeline_mode<synchronous>, transform_indices = @transform_14, window_bounds = array<i64: 1, 32>}, {pipeline_mode = #tpu.pipeline_mode<synchronous>, transform_indices = @transform_15, window_bounds = array<i64: 1, 32>}, {transform_indices = @transform_16, window_bounds = array<i64: 4, 8, 32>}]} {
    %c0_i32 = arith.constant 0 : i32
    %0 = arith.cmpi eq, %arg1, %c0_i32 : i32
    %1 = arith.extui %0 : i1 to i32
    %c0_i32_0 = arith.constant 0 : i32
    %2 = arith.cmpi ne, %1, %c0_i32_0 : i32
    scf.if %2 {
      %c0_65 = arith.constant 0 : index
      %c0_66 = arith.constant 0 : index
      %c0_67 = arith.constant 0 : index
      %135 = vector.load %arg2[%c0_65, %c0_66, %c0_67] : memref<4x8x32xf32, #tpu.memory_space<vmem>>, vector<4x8x32xf32>
      %cst_68 = arith.constant 2.000000e+00 : f32
      %136 = vector.broadcast %cst_68 : f32 to vector<4x8x32xf32>
      %137 = arith.mulf %136, %135 : vector<4x8x32xf32>
      %c0_69 = arith.constant 0 : index
      %c0_70 = arith.constant 0 : index
      %138 = vector.load %arg3[%c0_69, %c0_70] : memref<8x32xf32, #tpu.memory_space<vmem>>, vector<8x32xf32>
      %139 = vector.shape_cast %138 : vector<8x32xf32> to vector<1x8x32xf32>
      %140 = vector.broadcast %139 : vector<1x8x32xf32> to vector<4x8x32xf32>
      %141 = arith.addf %137, %140 : vector<4x8x32xf32>
      %c0_71 = arith.constant 0 : index
      %c0_72 = arith.constant 0 : index
      %c0_73 = arith.constant 0 : index
      %142 = vector.load %arg19[%c0_71, %c0_72, %c0_73] : memref<4x8x32xf32, #tpu.memory_space<vmem>>, vector<4x8x32xf32>
      tpu.vector_store %arg19[%c0_71, %c0_72, %c0_73], %141 {strides = array<i32>} : memref<4x8x32xf32, #tpu.memory_space<vmem>>, vector<4x8x32xf32>,
    } else {
    }
    %c0 = arith.constant 0 : index
    %c0_1 = arith.constant 0 : index
    %c0_2 = arith.constant 0 : index
    %3 = vector.load %arg4[%c0, %c0_1, %c0_2] : memref<1x32x96xbf16, #tpu.memory_space<vmem>>, vector<1x32x96xbf16>
    %4 = vector.shape_cast %3 : vector<1x32x96xbf16> to vector<32x96xbf16>
    %c0_3 = arith.constant 0 : index
    %c0_4 = arith.constant 0 : index
    %c0_5 = arith.constant 0 : index
    %5 = vector.load %arg5[%c0_3, %c0_4, %c0_5] : memref<1x1x96xf32, #tpu.memory_space<vmem>>, vector<1x1x96xf32>
    %6 = vector.shape_cast %5 : vector<1x1x96xf32> to vector<1x96xf32>
    %c0_6 = arith.constant 0 : index
    %c0_7 = arith.constant 0 : index
    %c0_8 = arith.constant 0 : index
    %7 = vector.load %arg6[%c0_6, %c0_7, %c0_8] : memref<1x32x32xbf16, #tpu.memory_space<vmem>>, vector<1x32x32xbf16>
    %8 = vector.shape_cast %7 : vector<1x32x32xbf16> to vector<32x32xbf16>
    %c0_9 = arith.constant 0 : index
    %c0_10 = arith.constant 0 : index
    %c0_11 = arith.constant 0 : index
    %9 = vector.load %arg7[%c0_9, %c0_10, %c0_11] : memref<1x1x32xf32, #tpu.memory_space<vmem>>, vector<1x1x32xf32>
    %10 = vector.shape_cast %9 : vector<1x1x32xf32> to vector<1x32xf32>
    %c0_12 = arith.constant 0 : index
    %c0_13 = arith.constant 0 : index
    %c0_14 = arith.constant 0 : index
    %11 = vector.load %arg8[%c0_12, %c0_13, %c0_14] : memref<1x1x32xf32, #tpu.memory_space<vmem>>, vector<1x1x32xf32>
    %12 = vector.shape_cast %11 : vector<1x1x32xf32> to vector<1x32xf32>
    %c0_15 = arith.constant 0 : index
    %c0_16 = arith.constant 0 : index
    %c0_17 = arith.constant 0 : index
    %13 = vector.load %arg9[%c0_15, %c0_16, %c0_17] : memref<1x1x32xf32, #tpu.memory_space<vmem>>, vector<1x1x32xf32>
    %14 = vector.shape_cast %13 : vector<1x1x32xf32> to vector<1x32xf32>
    %c0_18 = arith.constant 0 : index
    %c0_19 = arith.constant 0 : index
    %c0_20 = arith.constant 0 : index
    %15 = vector.load %arg10[%c0_18, %c0_19, %c0_20] : memref<1x1x32xf32, #tpu.memory_space<vmem>>, vector<1x1x32xf32>
    %16 = vector.shape_cast %15 : vector<1x1x32xf32> to vector<1x32xf32>
    %c0_21 = arith.constant 0 : index
    %c0_22 = arith.constant 0 : index
    %c0_23 = arith.constant 0 : index
    %17 = vector.load %arg11[%c0_21, %c0_22, %c0_23] : memref<1x1x32xf32, #tpu.memory_space<vmem>>, vector<1x1x32xf32>
    %18 = vector.shape_cast %17 : vector<1x1x32xf32> to vector<1x32xf32>
    %c0_24 = arith.constant 0 : index
    %c0_25 = arith.constant 0 : index
    %c0_26 = arith.constant 0 : index
    %19 = vector.load %arg12[%c0_24, %c0_25, %c0_26] : memref<1x32x64xbf16, #tpu.memory_space<vmem>>, vector<1x32x64xbf16>
    %20 = vector.shape_cast %19 : vector<1x32x64xbf16> to vector<32x64xbf16>
    %c0_27 = arith.constant 0 : index
    %c0_28 = arith.constant 0 : index
    %c0_29 = arith.constant 0 : index
    %21 = vector.load %arg13[%c0_27, %c0_28, %c0_29] : memref<1x1x64xf32, #tpu.memory_space<vmem>>, vector<1x1x64xf32>
    %22 = vector.shape_cast %21 : vector<1x1x64xf32> to vector<1x64xf32>
    %c0_30 = arith.constant 0 : index
    %c0_31 = arith.constant 0 : index
    %c0_32 = arith.constant 0 : index
    %23 = vector.load %arg14[%c0_30, %c0_31, %c0_32] : memref<1x64x32xbf16, #tpu.memory_space<vmem>>, vector<1x64x32xbf16>
    %24 = vector.shape_cast %23 : vector<1x64x32xbf16> to vector<64x32xbf16>
    %c0_33 = arith.constant 0 : index
    %c0_34 = arith.constant 0 : index
    %c0_35 = arith.constant 0 : index
    %25 = vector.load %arg15[%c0_33, %c0_34, %c0_35] : memref<1x1x32xf32, #tpu.memory_space<vmem>>, vector<1x1x32xf32>
    %26 = vector.shape_cast %25 : vector<1x1x32xf32> to vector<1x32xf32>
    %c0_36 = arith.constant 0 : index
    %c0_37 = arith.constant 0 : index
    %c0_38 = arith.constant 0 : index
    %27 = vector.load %arg19[%c0_36, %c0_37, %c0_38] : memref<4x8x32xf32, #tpu.memory_space<vmem>>, vector<4x8x32xf32>
    %28 = vector.shape_cast %27 : vector<4x8x32xf32> to vector<32x32xf32>
    %29 = arith.truncf %28 : vector<32x32xf32> to vector<32x32xbf16>
    %cst = arith.constant dense<0.000000e+00> : vector<32x96xf32>
    %30 = tpu.matmul %29, %4, %cst {dimension_numbers = #tpu.dot_dimension_numbers<[1], [0], [0], [1], [0, 0, 1, 1], [], []>} : vector<32x32xbf16>, vector<32x96xbf16>, vector<32x96xf32> -> vector<32x96xf32>
    %31 = vector.broadcast %6 : vector<1x96xf32> to vector<32x96xf32>
    %32 = arith.addf %30, %31 : vector<32x96xf32>
    %33 = vector.shape_cast %32 : vector<32x96xf32> to vector<4x8x96xf32>
    %34 = vector.extract_strided_slice %33 {offsets = [0, 0, 0], sizes = [4, 8, 16], strides = [1, 1, 1]} : vector<4x8x96xf32> to vector<4x8x16xf32>
    %35 = arith.truncf %34 : vector<4x8x16xf32> to vector<4x8x16xbf16>
    %36 = vector.extract_strided_slice %33 {offsets = [0, 0, 32], sizes = [4, 8, 16], strides = [1, 1, 1]} : vector<4x8x96xf32> to vector<4x8x16xf32>
    %37 = arith.truncf %36 : vector<4x8x16xf32> to vector<4x8x16xbf16>
    %38 = vector.extract_strided_slice %33 {offsets = [0, 0, 64], sizes = [4, 8, 16], strides = [1, 1, 1]} : vector<4x8x96xf32> to vector<4x8x16xf32>
    %39 = arith.truncf %38 : vector<4x8x16xf32> to vector<4x8x16xbf16>
    "tpu.trace_start"() <{level = 10 : i32, message = "ntd,nsd->nts"}> : () -> ()
    %cst_39 = arith.constant dense<0.000000e+00> : vector<4x8x8xf32>
    %40 = tpu.matmul %35, %37, %cst_39 {dimension_numbers = #tpu.dot_dimension_numbers<[2], [2], [1], [1], [0, 0, 0, 1, 1, 1], [0], [0]>} : vector<4x8x16xbf16>, vector<4x8x16xbf16>, vector<4x8x8xf32> -> vector<4x8x8xf32>
    "tpu.trace_stop"() : () -> ()
    %cst_40 = arith.constant dense<0xFF800000> : vector<4x8xf32>
    %41 = vector.multi_reduction <maximumf>, %40, %cst_40 [2] : vector<4x8x8xf32> to vector<4x8xf32>
    %42 = vector.shape_cast %41 : vector<4x8xf32> to vector<4x8x1xf32>
    %43 = vector.broadcast %42 : vector<4x8x1xf32> to vector<4x8x8xf32>
    %44 = arith.subf %40, %43 : vector<4x8x8xf32>
    %45 = math.exp %44 : vector<4x8x8xf32>
    %cst_41 = arith.constant dense<0.000000e+00> : vector<4x8xf32>
    %46 = vector.multi_reduction <add>, %45, %cst_41 [2] : vector<4x8x8xf32> to vector<4x8xf32>
    %47 = vector.shape_cast %46 : vector<4x8xf32> to vector<4x8x1xf32>
    %48 = tpu.reciprocal %47 {approx = true} : vector<4x8x1xf32> -> vector<4x8x1xf32>
    %49 = vector.broadcast %48 : vector<4x8x1xf32> to vector<4x8x8xf32>
    %50 = arith.mulf %45, %49 : vector<4x8x8xf32>
    %51 = arith.truncf %50 : vector<4x8x8xf32> to vector<4x8x8xbf16>
    "tpu.trace_start"() <{level = 10 : i32, message = "nts,nsd->ntd"}> : () -> ()
    %cst_42 = arith.constant dense<0.000000e+00> : vector<4x8x16xf32>
    %52 = tpu.matmul %51, %39, %cst_42 {dimension_numbers = #tpu.dot_dimension_numbers<[2], [1], [1], [2], [0, 0, 0, 1, 1, 2], [0], [0]>} : vector<4x8x8xbf16>, vector<4x8x16xbf16>, vector<4x8x16xf32> -> vector<4x8x16xf32>
    "tpu.trace_stop"() : () -> ()
    %53 = vector.extract_strided_slice %33 {offsets = [0, 0, 16], sizes = [4, 8, 16], strides = [1, 1, 1]} : vector<4x8x96xf32> to vector<4x8x16xf32>
    %54 = arith.truncf %53 : vector<4x8x16xf32> to vector<4x8x16xbf16>
    %55 = vector.extract_strided_slice %33 {offsets = [0, 0, 48], sizes = [4, 8, 16], strides = [1, 1, 1]} : vector<4x8x96xf32> to vector<4x8x16xf32>
    %56 = arith.truncf %55 : vector<4x8x16xf32> to vector<4x8x16xbf16>
    %57 = vector.extract_strided_slice %33 {offsets = [0, 0, 80], sizes = [4, 8, 16], strides = [1, 1, 1]} : vector<4x8x96xf32> to vector<4x8x16xf32>
    %58 = arith.truncf %57 : vector<4x8x16xf32> to vector<4x8x16xbf16>
    "tpu.trace_start"() <{level = 10 : i32, message = "ntd,nsd->nts"}> : () -> ()
    %cst_43 = arith.constant dense<0.000000e+00> : vector<4x8x8xf32>
    %59 = tpu.matmul %54, %56, %cst_43 {dimension_numbers = #tpu.dot_dimension_numbers<[2], [2], [1], [1], [0, 0, 0, 1, 1, 1], [0], [0]>} : vector<4x8x16xbf16>, vector<4x8x16xbf16>, vector<4x8x8xf32> -> vector<4x8x8xf32>
    "tpu.trace_stop"() : () -> ()
    %cst_44 = arith.constant dense<0xFF800000> : vector<4x8xf32>
    %60 = vector.multi_reduction <maximumf>, %59, %cst_44 [2] : vector<4x8x8xf32> to vector<4x8xf32>
    %61 = vector.shape_cast %60 : vector<4x8xf32> to vector<4x8x1xf32>
    %62 = vector.broadcast %61 : vector<4x8x1xf32> to vector<4x8x8xf32>
    %63 = arith.subf %59, %62 : vector<4x8x8xf32>
    %64 = math.exp %63 : vector<4x8x8xf32>
    %cst_45 = arith.constant dense<0.000000e+00> : vector<4x8xf32>
    %65 = vector.multi_reduction <add>, %64, %cst_45 [2] : vector<4x8x8xf32> to vector<4x8xf32>
    %66 = vector.shape_cast %65 : vector<4x8xf32> to vector<4x8x1xf32>
    %67 = tpu.reciprocal %66 {approx = true} : vector<4x8x1xf32> -> vector<4x8x1xf32>
    %68 = vector.broadcast %67 : vector<4x8x1xf32> to vector<4x8x8xf32>
    %69 = arith.mulf %64, %68 : vector<4x8x8xf32>
    %70 = arith.truncf %69 : vector<4x8x8xf32> to vector<4x8x8xbf16>
    "tpu.trace_start"() <{level = 10 : i32, message = "nts,nsd->ntd"}> : () -> ()
    %cst_46 = arith.constant dense<0.000000e+00> : vector<4x8x16xf32>
    %71 = tpu.matmul %70, %58, %cst_46 {dimension_numbers = #tpu.dot_dimension_numbers<[2], [1], [1], [2], [0, 0, 0, 1, 1, 2], [0], [0]>} : vector<4x8x8xbf16>, vector<4x8x16xbf16>, vector<4x8x16xf32> -> vector<4x8x16xf32>
    "tpu.trace_stop"() : () -> ()
    %72 = tpu.concatenate %52, %71 in 2 : vector<4x8x16xf32>, vector<4x8x16xf32> -> vector<4x8x32xf32>
    %73 = vector.shape_cast %72 : vector<4x8x32xf32> to vector<32x32xf32>
    %74 = arith.truncf %73 : vector<32x32xf32> to vector<32x32xbf16>
    %cst_47 = arith.constant dense<0.000000e+00> : vector<32x32xf32>
    %75 = tpu.matmul %74, %8, %cst_47 {dimension_numbers = #tpu.dot_dimension_numbers<[1], [0], [0], [1], [0, 0, 1, 1], [], []>} : vector<32x32xbf16>, vector<32x32xbf16>, vector<32x32xf32> -> vector<32x32xf32>
    %76 = vector.broadcast %10 : vector<1x32xf32> to vector<32x32xf32>
    %77 = arith.addf %75, %76 : vector<32x32xf32>
    %78 = arith.addf %28, %77 : vector<32x32xf32>
    %cst_48 = arith.constant dense<0.000000e+00> : vector<32xf32>
    %79 = vector.multi_reduction <add>, %78, %cst_48 [1] : vector<32x32xf32> to vector<32xf32>
    %80 = vector.shape_cast %79 : vector<32xf32> to vector<32x1xf32>
    %cst_49 = arith.constant 3.200000e+01 : f32
    %81 = vector.broadcast %cst_49 : f32 to vector<32x1xf32>
    %82 = arith.divf %80, %81 : vector<32x1xf32>
    %83 = vector.broadcast %82 : vector<32x1xf32> to vector<32x32xf32>
    %84 = arith.subf %78, %83 : vector<32x32xf32>
    %85 = arith.mulf %84, %84 : vector<32x32xf32>
    %cst_50 = arith.constant dense<0.000000e+00> : vector<32xf32>
    %86 = vector.multi_reduction <add>, %85, %cst_50 [1] : vector<32x32xf32> to vector<32xf32>
    %87 = vector.shape_cast %86 : vector<32xf32> to vector<32x1xf32>
    %cst_51 = arith.constant 3.200000e+01 : f32
    %88 = vector.broadcast %cst_51 : f32 to vector<32x1xf32>
    %89 = arith.divf %87, %88 : vector<32x1xf32>
    %cst_52 = arith.constant 9.99999996E-13 : f32
    %90 = vector.broadcast %cst_52 : f32 to vector<32x1xf32>
    %91 = arith.addf %89, %90 : vector<32x1xf32>
    %92 = math.rsqrt %91 : vector<32x1xf32>
    %93 = vector.broadcast %92 : vector<32x1xf32> to vector<32x32xf32>
    %94 = arith.mulf %84, %93 : vector<32x32xf32>
    %95 = vector.broadcast %12 : vector<1x32xf32> to vector<32x32xf32>
    %96 = arith.mulf %94, %95 : vector<32x32xf32>
    %97 = vector.broadcast %14 : vector<1x32xf32> to vector<32x32xf32>
    %98 = arith.addf %96, %97 : vector<32x32xf32>
    %99 = arith.truncf %98 : vector<32x32xf32> to vector<32x32xbf16>
    %cst_53 = arith.constant dense<0.000000e+00> : vector<32x64xf32>
    %100 = tpu.matmul %99, %20, %cst_53 {dimension_numbers = #tpu.dot_dimension_numbers<[1], [0], [0], [1], [0, 0, 1, 1], [], []>} : vector<32x32xbf16>, vector<32x64xbf16>, vector<32x64xf32> -> vector<32x64xf32>
    %101 = vector.broadcast %22 : vector<1x64xf32> to vector<32x64xf32>
    %102 = arith.addf %100, %101 : vector<32x64xf32>
    %cst_54 = arith.constant 0.000000e+00 : f32
    %103 = vector.broadcast %cst_54 : f32 to vector<32x64xf32>
    %104 = arith.maximumf %102, %103 : vector<32x64xf32>
    %105 = arith.truncf %104 : vector<32x64xf32> to vector<32x64xbf16>
    %cst_55 = arith.constant dense<0.000000e+00> : vector<32x32xf32>
    %106 = tpu.matmul %105, %24, %cst_55 {dimension_numbers = #tpu.dot_dimension_numbers<[1], [0], [0], [1], [0, 0, 1, 1], [], []>} : vector<32x64xbf16>, vector<64x32xbf16>, vector<32x32xf32> -> vector<32x32xf32>
    %107 = vector.broadcast %26 : vector<1x32xf32> to vector<32x32xf32>
    %108 = arith.addf %106, %107 : vector<32x32xf32>
    %109 = arith.addf %98, %108 : vector<32x32xf32>
    %cst_56 = arith.constant dense<0.000000e+00> : vector<32xf32>
    %110 = vector.multi_reduction <add>, %109, %cst_56 [1] : vector<32x32xf32> to vector<32xf32>
    %111 = vector.shape_cast %110 : vector<32xf32> to vector<32x1xf32>
    %cst_57 = arith.constant 3.200000e+01 : f32
    %112 = vector.broadcast %cst_57 : f32 to vector<32x1xf32>
    %113 = arith.divf %111, %112 : vector<32x1xf32>
    %114 = vector.broadcast %113 : vector<32x1xf32> to vector<32x32xf32>
    %115 = arith.subf %109, %114 : vector<32x32xf32>
    %116 = arith.mulf %115, %115 : vector<32x32xf32>
    %cst_58 = arith.constant dense<0.000000e+00> : vector<32xf32>
    %117 = vector.multi_reduction <add>, %116, %cst_58 [1] : vector<32x32xf32> to vector<32xf32>
    %118 = vector.shape_cast %117 : vector<32xf32> to vector<32x1xf32>
    %cst_59 = arith.constant 3.200000e+01 : f32
    %119 = vector.broadcast %cst_59 : f32 to vector<32x1xf32>
    %120 = arith.divf %118, %119 : vector<32x1xf32>
    %cst_60 = arith.constant 9.99999996E-13 : f32
    %121 = vector.broadcast %cst_60 : f32 to vector<32x1xf32>
    %122 = arith.addf %120, %121 : vector<32x1xf32>
    %123 = math.rsqrt %122 : vector<32x1xf32>
    %124 = vector.broadcast %123 : vector<32x1xf32> to vector<32x32xf32>
    %125 = arith.mulf %115, %124 : vector<32x32xf32>
    %126 = vector.broadcast %16 : vector<1x32xf32> to vector<32x32xf32>
    %127 = arith.mulf %125, %126 : vector<32x32xf32>
    %128 = vector.broadcast %18 : vector<1x32xf32> to vector<32x32xf32>
    %129 = arith.addf %127, %128 : vector<32x32xf32>
    %130 = vector.shape_cast %129 : vector<32x32xf32> to vector<4x8x32xf32>
    %c0_61 = arith.constant 0 : index
    %c0_62 = arith.constant 0 : index
    %c0_63 = arith.constant 0 : index
    %131 = vector.load %arg19[%c0_61, %c0_62, %c0_63] : memref<4x8x32xf32, #tpu.memory_space<vmem>>, vector<4x8x32xf32>
    tpu.vector_store %arg19[%c0_61, %c0_62, %c0_63], %130 {strides = array<i32>} : memref<4x8x32xf32, #tpu.memory_space<vmem>>, vector<4x8x32xf32>,
    %c1_i32 = arith.constant 1 : i32
    %132 = arith.cmpi eq, %arg1, %c1_i32 : i32
    %133 = arith.extui %132 : i1 to i32
    %c0_i32_64 = arith.constant 0 : i32
    %134 = arith.cmpi ne, %133, %c0_i32_64 : i32
    scf.if %134 {
      %135 = vector.shape_cast %129 : vector<32x32xf32> to vector<4x8x32xf32>
      %cst_65 = arith.constant dense<0.000000e+00> : vector<4x8xf32>
      %136 = vector.multi_reduction <add>, %135, %cst_65 [2] : vector<4x8x32xf32> to vector<4x8xf32>
      %137 = vector.shape_cast %136 : vector<4x8xf32> to vector<4x8x1xf32>
      %cst_66 = arith.constant dense<0.000000e+00> : vector<4x1xf32>
      %138 = vector.multi_reduction <add>, %137, %cst_66 [1] : vector<4x8x1xf32> to vector<4x1xf32>
      %139 = vector.shape_cast %138 : vector<4x1xf32> to vector<4x1x1xf32>
      %cst_67 = arith.constant 3.906250e-03 : f32
      %140 = vector.broadcast %cst_67 : f32 to vector<4x1x1xf32>
      %141 = arith.mulf %139, %140 : vector<4x1x1xf32>
      %142 = vector.broadcast %141 : vector<4x1x1xf32> to vector<4x8x32xf32>
      %143 = arith.subf %135, %142 : vector<4x8x32xf32>
      %144 = arith.mulf %143, %143 : vector<4x8x32xf32>
      %cst_68 = arith.constant dense<0.000000e+00> : vector<4x8xf32>
      %145 = vector.multi_reduction <add>, %144, %cst_68 [2] : vector<4x8x32xf32> to vector<4x8xf32>
      %146 = vector.shape_cast %145 : vector<4x8xf32> to vector<4x8x1xf32>
      %cst_69 = arith.constant dense<0.000000e+00> : vector<4x1xf32>
      %147 = vector.multi_reduction <add>, %146, %cst_69 [1] : vector<4x8x1xf32> to vector<4x1xf32>
      %148 = vector.shape_cast %147 : vector<4x1xf32> to vector<4x1x1xf32>
      %cst_70 = arith.constant 3.906250e-03 : f32
      %149 = vector.broadcast %cst_70 : f32 to vector<4x1x1xf32>
      %150 = arith.mulf %148, %149 : vector<4x1x1xf32>
      %cst_71 = arith.constant 9.99999996E-13 : f32
      %151 = vector.broadcast %cst_71 : f32 to vector<4x1x1xf32>
      %152 = arith.addf %150, %151 : vector<4x1x1xf32>
      %153 = math.rsqrt %152 : vector<4x1x1xf32>
      %154 = vector.broadcast %153 : vector<4x1x1xf32> to vector<4x8x32xf32>
      %155 = arith.mulf %143, %154 : vector<4x8x32xf32>
      %c0_72 = arith.constant 0 : index
      %c0_73 = arith.constant 0 : index
      %156 = vector.load %arg16[%c0_72, %c0_73] : memref<1x32xf32, #tpu.memory_space<vmem>>, vector<1x32xf32>
      %157 = vector.shape_cast %156 : vector<1x32xf32> to vector<1x1x32xf32>
      %158 = vector.broadcast %157 : vector<1x1x32xf32> to vector<4x8x32xf32>
      %159 = arith.mulf %155, %158 : vector<4x8x32xf32>
      %c0_74 = arith.constant 0 : index
      %c0_75 = arith.constant 0 : index
      %160 = vector.load %arg17[%c0_74, %c0_75] : memref<1x32xf32, #tpu.memory_space<vmem>>, vector<1x32xf32>
      %161 = vector.shape_cast %160 : vector<1x32xf32> to vector<1x1x32xf32>
      %162 = vector.broadcast %161 : vector<1x1x32xf32> to vector<4x8x32xf32>
      %163 = arith.addf %159, %162 : vector<4x8x32xf32>
      %c0_76 = arith.constant 0 : index
      %c0_77 = arith.constant 0 : index
      %c0_78 = arith.constant 0 : index
      %164 = vector.load %arg2[%c0_76, %c0_77, %c0_78] : memref<4x8x32xf32, #tpu.memory_space<vmem>>, vector<4x8x32xf32>
      %165 = arith.addf %163, %164 : vector<4x8x32xf32>
      %c0_79 = arith.constant 0 : index
      %c0_80 = arith.constant 0 : index
      %c0_81 = arith.constant 0 : index
      %166 = vector.load %arg18[%c0_79, %c0_80, %c0_81] : memref<4x8x32xf32, #tpu.memory_space<vmem>>, vector<4x8x32xf32>
      tpu.vector_store %arg18[%c0_79, %c0_80, %c0_81], %165 {strides = array<i32>} : memref<4x8x32xf32, #tpu.memory_space<vmem>>, vector<4x8x32xf32>,
    } else {
    }
    return
  }
  func.func @transform_0(%arg0: i32, %arg1: i32) -> (i32, i32, i32) {
    %c0_i32 = arith.constant 0 : i32
    %c0_i32_0 = arith.constant 0 : i32
    %c0_i32_1 = arith.constant 0 : i32
    return %arg0, %c0_i32, %c0_i32_0 : i32, i32, i32
  }
  func.func @transform_1(%arg0: i32, %arg1: i32) -> (i32, i32) {
    %c0_i32 = arith.constant 0 : i32
    %c0_i32_0 = arith.constant 0 : i32
    %c0_i32_1 = arith.constant 0 : i32
    return %c0_i32, %c0_i32_0 : i32, i32
  }
  func.func @transform_2(%arg0: i32, %arg1: i32) -> (i32, i32, i32) {
    %c0_i32 = arith.constant 0 : i32
    %c0_i32_0 = arith.constant 0 : i32
    %c0_i32_1 = arith.constant 0 : i32
    return %arg1, %c0_i32, %c0_i32_0 : i32, i32, i32
  }
  func.func @transform_3(%arg0: i32, %arg1: i32) -> (i32, i32, i32) {
    %c0_i32 = arith.constant 0 : i32
    %c0_i32_0 = arith.constant 0 : i32
    %c0_i32_1 = arith.constant 0 : i32
    return %arg1, %c0_i32, %c0_i32_0 : i32, i32, i32
  }
  func.func @transform_4(%arg0: i32, %arg1: i32) -> (i32, i32, i32) {
    %c0_i32 = arith.constant 0 : i32
    %c0_i32_0 = arith.constant 0 : i32
    %c0_i32_1 = arith.constant 0 : i32
    return %arg1, %c0_i32, %c0_i32_0 : i32, i32, i32
  }
  func.func @transform_5(%arg0: i32, %arg1: i32) -> (i32, i32, i32) {
    %c0_i32 = arith.constant 0 : i32
    %c0_i32_0 = arith.constant 0 : i32
    %c0_i32_1 = arith.constant 0 : i32
    return %arg1, %c0_i32, %c0_i32_0 : i32, i32, i32
  }
  func.func @transform_6(%arg0: i32, %arg1: i32) -> (i32, i32, i32) {
    %c0_i32 = arith.constant 0 : i32
    %c0_i32_0 = arith.constant 0 : i32
    %c0_i32_1 = arith.constant 0 : i32
    return %arg1, %c0_i32, %c0_i32_0 : i32, i32, i32
  }
  func.func @transform_7(%arg0: i32, %arg1: i32) -> (i32, i32, i32) {
    %c0_i32 = arith.constant 0 : i32
    %c0_i32_0 = arith.constant 0 : i32
    %c0_i32_1 = arith.constant 0 : i32
    return %arg1, %c0_i32, %c0_i32_0 : i32, i32, i32
  }
  func.func @transform_8(%arg0: i32, %arg1: i32) -> (i32, i32, i32) {
    %c0_i32 = arith.constant 0 : i32
    %c0_i32_0 = arith.constant 0 : i32
    %c0_i32_1 = arith.constant 0 : i32
    return %arg1, %c0_i32, %c0_i32_0 : i32, i32, i32
  }
  func.func @transform_9(%arg0: i32, %arg1: i32) -> (i32, i32, i32) {
    %c0_i32 = arith.constant 0 : i32
    %c0_i32_0 = arith.constant 0 : i32
    %c0_i32_1 = arith.constant 0 : i32
    return %arg1, %c0_i32, %c0_i32_0 : i32, i32, i32
  }
  func.func @transform_10(%arg0: i32, %arg1: i32) -> (i32, i32, i32) {
    %c0_i32 = arith.constant 0 : i32
    %c0_i32_0 = arith.constant 0 : i32
    %c0_i32_1 = arith.constant 0 : i32
    return %arg1, %c0_i32, %c0_i32_0 : i32, i32, i32
  }
  func.func @transform_11(%arg0: i32, %arg1: i32) -> (i32, i32, i32) {
    %c0_i32 = arith.constant 0 : i32
    %c0_i32_0 = arith.constant 0 : i32
    %c0_i32_1 = arith.constant 0 : i32
    return %arg1, %c0_i32, %c0_i32_0 : i32, i32, i32
  }
  func.func @transform_12(%arg0: i32, %arg1: i32) -> (i32, i32, i32) {
    %c0_i32 = arith.constant 0 : i32
    %c0_i32_0 = arith.constant 0 : i32
    %c0_i32_1 = arith.constant 0 : i32
    return %arg1, %c0_i32, %c0_i32_0 : i32, i32, i32
  }
  func.func @transform_13(%arg0: i32, %arg1: i32) -> (i32, i32, i32) {
    %c0_i32 = arith.constant 0 : i32
    %c0_i32_0 = arith.constant 0 : i32
    %c0_i32_1 = arith.constant 0 : i32
    return %arg1, %c0_i32, %c0_i32_0 : i32, i32, i32
  }
  func.func @transform_14(%arg0: i32, %arg1: i32) -> (i32, i32) {
    %c0_i32 = arith.constant 0 : i32
    %c0_i32_0 = arith.constant 0 : i32
    %c0_i32_1 = arith.constant 0 : i32
    return %c0_i32, %c0_i32_0 : i32, i32
  }
  func.func @transform_15(%arg0: i32, %arg1: i32) -> (i32, i32) {
    %c0_i32 = arith.constant 0 : i32
    %c0_i32_0 = arith.constant 0 : i32
    %c0_i32_1 = arith.constant 0 : i32
    return %c0_i32, %c0_i32_0 : i32, i32
  }
  func.func @transform_16(%arg0: i32, %arg1: i32) -> (i32, i32, i32) {
    %c0_i32 = arith.constant 0 : i32
    %c0_i32_0 = arith.constant 0 : i32
    %c0_i32_1 = arith.constant 0 : i32
    return %arg0, %c0_i32, %c0_i32_0 : i32, i32, i32
  }
}

module attributes {stable_mosaic.version = 11 : i64} {
  func.func @transformer_stack_kernel(%arg0: i32, %arg1: i32, %arg2: memref<8x4x32xf32, #tpu.memory_space<vmem>>, %arg3: memref<4x32xf32, #tpu.memory_space<vmem>>, %arg4: memref<1x32x96xbf16, #tpu.memory_space<vmem>>, %arg5: memref<1x1x96xf32, #tpu.memory_space<vmem>>, %arg6: memref<1x32x32xbf16, #tpu.memory_space<vmem>>, %arg7: memref<1x1x32xf32, #tpu.memory_space<vmem>>, %arg8: memref<1x1x32xf32, #tpu.memory_space<vmem>>, %arg9: memref<1x1x32xf32, #tpu.memory_space<vmem>>, %arg10: memref<1x1x32xf32, #tpu.memory_space<vmem>>, %arg11: memref<1x1x32xf32, #tpu.memory_space<vmem>>, %arg12: memref<1x32x64xbf16, #tpu.memory_space<vmem>>, %arg13: memref<1x1x64xf32, #tpu.memory_space<vmem>>, %arg14: memref<1x64x32xbf16, #tpu.memory_space<vmem>>, %arg15: memref<1x1x32xf32, #tpu.memory_space<vmem>>, %arg16: memref<1x32xf32, #tpu.memory_space<vmem>>, %arg17: memref<1x32xf32, #tpu.memory_space<vmem>>, %arg18: memref<8x4x32xf32, #tpu.memory_space<vmem>>, %arg19: memref<8x4x32xf32, #tpu.memory_space<vmem>>) attributes {dimension_semantics = [#tpu.dimension_semantics<parallel>, #tpu.dimension_semantics<arbitrary>], iteration_bounds = array<i64: 2, 2>, scalar_prefetch = 0 : i64, scratch_operands = 1 : i64, tpu.core_type = #tpu.core_type<tc>, window_params = [{transform_indices = @transform_0, window_bounds = array<i64: 8, 4, 32>}, {pipeline_mode = #tpu.pipeline_mode<synchronous>, transform_indices = @transform_1, window_bounds = array<i64: 4, 32>}, {transform_indices = @transform_2, window_bounds = array<i64: 1, 32, 96>}, {transform_indices = @transform_3, window_bounds = array<i64: 1, 1, 96>}, {transform_indices = @transform_4, window_bounds = array<i64: 1, 32, 32>}, {transform_indices = @transform_5, window_bounds = array<i64: 1, 1, 32>}, {transform_indices = @transform_6, window_bounds = array<i64: 1, 1, 32>}, {transform_indices = @transform_7, window_bounds = array<i64: 1, 1, 32>}, {transform_indices = @transform_8, window_bounds = array<i64: 1, 1, 32>}, {transform_indices = @transform_9, window_bounds = array<i64: 1, 1, 32>}, {transform_indices = @transform_10, window_bounds = array<i64: 1, 32, 64>}, {transform_indices = @transform_11, window_bounds = array<i64: 1, 1, 64>}, {transform_indices = @transform_12, window_bounds = array<i64: 1, 64, 32>}, {transform_indices = @transform_13, window_bounds = array<i64: 1, 1, 32>}, {pipeline_mode = #tpu.pipeline_mode<synchronous>, transform_indices = @transform_14, window_bounds = array<i64: 1, 32>}, {pipeline_mode = #tpu.pipeline_mode<synchronous>, transform_indices = @transform_15, window_bounds = array<i64: 1, 32>}, {transform_indices = @transform_16, window_bounds = array<i64: 8, 4, 32>}]} {
    %c0_i32 = arith.constant 0 : i32
    %0 = arith.cmpi eq, %arg1, %c0_i32 : i32
    %1 = arith.extui %0 : i1 to i32
    %c0_i32_0 = arith.constant 0 : i32
    %2 = arith.cmpi ne, %1, %c0_i32_0 : i32
    scf.if %2 {
      %c0_65 = arith.constant 0 : index
      %c0_66 = arith.constant 0 : index
      %c0_67 = arith.constant 0 : index
      %135 = vector.load %arg2[%c0_65, %c0_66, %c0_67] : memref<8x4x32xf32, #tpu.memory_space<vmem>>, vector<8x4x32xf32>
      %cst_68 = arith.constant 2.000000e+00 : f32
      %136 = vector.broadcast %cst_68 : f32 to vector<8x4x32xf32>
      %137 = arith.mulf %136, %135 : vector<8x4x32xf32>
      %c0_69 = arith.constant 0 : index
      %c0_70 = arith.constant 0 : index
      %138 = vector.load %arg3[%c0_69, %c0_70] : memref<4x32xf32, #tpu.memory_space<vmem>>, vector<4x32xf32>
      %139 = vector.shape_cast %138 : vector<4x32xf32> to vector<1x4x32xf32>
      %140 = vector.broadcast %139 : vector<1x4x32xf32> to vector<8x4x32xf32>
      %141 = arith.addf %137, %140 : vector<8x4x32xf32>
      %c0_71 = arith.constant 0 : index
      %c0_72 = arith.constant 0 : index
      %c0_73 = arith.constant 0 : index
      %142 = vector.load %arg19[%c0_71, %c0_72, %c0_73] : memref<8x4x32xf32, #tpu.memory_space<vmem>>, vector<8x4x32xf32>
      tpu.vector_store %arg19[%c0_71, %c0_72, %c0_73], %141 {strides = array<i32>} : memref<8x4x32xf32, #tpu.memory_space<vmem>>, vector<8x4x32xf32>,
    } else {
    }
    %c0 = arith.constant 0 : index
    %c0_1 = arith.constant 0 : index
    %c0_2 = arith.constant 0 : index
    %3 = vector.load %arg4[%c0, %c0_1, %c0_2] : memref<1x32x96xbf16, #tpu.memory_space<vmem>>, vector<1x32x96xbf16>
    %4 = vector.shape_cast %3 : vector<1x32x96xbf16> to vector<32x96xbf16>
    %c0_3 = arith.constant 0 : index
    %c0_4 = arith.constant 0 : index
    %c0_5 = arith.constant 0 : index
    %5 = vector.load %arg5[%c0_3, %c0_4, %c0_5] : memref<1x1x96xf32, #tpu.memory_space<vmem>>, vector<1x1x96xf32>
    %6 = vector.shape_cast %5 : vector<1x1x96xf32> to vector<1x96xf32>
    %c0_6 = arith.constant 0 : index
    %c0_7 = arith.constant 0 : index
    %c0_8 = arith.constant 0 : index
    %7 = vector.load %arg6[%c0_6, %c0_7, %c0_8] : memref<1x32x32xbf16, #tpu.memory_space<vmem>>, vector<1x32x32xbf16>
    %8 = vector.shape_cast %7 : vector<1x32x32xbf16> to vector<32x32xbf16>
    %c0_9 = arith.constant 0 : index
    %c0_10 = arith.constant 0 : index
    %c0_11 = arith.constant 0 : index
    %9 = vector.load %arg7[%c0_9, %c0_10, %c0_11] : memref<1x1x32xf32, #tpu.memory_space<vmem>>, vector<1x1x32xf32>
    %10 = vector.shape_cast %9 : vector<1x1x32xf32> to vector<1x32xf32>
    %c0_12 = arith.constant 0 : index
    %c0_13 = arith.constant 0 : index
    %c0_14 = arith.constant 0 : index
    %11 = vector.load %arg8[%c0_12, %c0_13, %c0_14] : memref<1x1x32xf32, #tpu.memory_space<vmem>>, vector<1x1x32xf32>
    %12 = vector.shape_cast %11 : vector<1x1x32xf32> to vector<1x32xf32>
    %c0_15 = arith.constant 0 : index
    %c0_16 = arith.constant 0 : index
    %c0_17 = arith.constant 0 : index
    %13 = vector.load %arg9[%c0_15, %c0_16, %c0_17] : memref<1x1x32xf32, #tpu.memory_space<vmem>>, vector<1x1x32xf32>
    %14 = vector.shape_cast %13 : vector<1x1x32xf32> to vector<1x32xf32>
    %c0_18 = arith.constant 0 : index
    %c0_19 = arith.constant 0 : index
    %c0_20 = arith.constant 0 : index
    %15 = vector.load %arg10[%c0_18, %c0_19, %c0_20] : memref<1x1x32xf32, #tpu.memory_space<vmem>>, vector<1x1x32xf32>
    %16 = vector.shape_cast %15 : vector<1x1x32xf32> to vector<1x32xf32>
    %c0_21 = arith.constant 0 : index
    %c0_22 = arith.constant 0 : index
    %c0_23 = arith.constant 0 : index
    %17 = vector.load %arg11[%c0_21, %c0_22, %c0_23] : memref<1x1x32xf32, #tpu.memory_space<vmem>>, vector<1x1x32xf32>
    %18 = vector.shape_cast %17 : vector<1x1x32xf32> to vector<1x32xf32>
    %c0_24 = arith.constant 0 : index
    %c0_25 = arith.constant 0 : index
    %c0_26 = arith.constant 0 : index
    %19 = vector.load %arg12[%c0_24, %c0_25, %c0_26] : memref<1x32x64xbf16, #tpu.memory_space<vmem>>, vector<1x32x64xbf16>
    %20 = vector.shape_cast %19 : vector<1x32x64xbf16> to vector<32x64xbf16>
    %c0_27 = arith.constant 0 : index
    %c0_28 = arith.constant 0 : index
    %c0_29 = arith.constant 0 : index
    %21 = vector.load %arg13[%c0_27, %c0_28, %c0_29] : memref<1x1x64xf32, #tpu.memory_space<vmem>>, vector<1x1x64xf32>
    %22 = vector.shape_cast %21 : vector<1x1x64xf32> to vector<1x64xf32>
    %c0_30 = arith.constant 0 : index
    %c0_31 = arith.constant 0 : index
    %c0_32 = arith.constant 0 : index
    %23 = vector.load %arg14[%c0_30, %c0_31, %c0_32] : memref<1x64x32xbf16, #tpu.memory_space<vmem>>, vector<1x64x32xbf16>
    %24 = vector.shape_cast %23 : vector<1x64x32xbf16> to vector<64x32xbf16>
    %c0_33 = arith.constant 0 : index
    %c0_34 = arith.constant 0 : index
    %c0_35 = arith.constant 0 : index
    %25 = vector.load %arg15[%c0_33, %c0_34, %c0_35] : memref<1x1x32xf32, #tpu.memory_space<vmem>>, vector<1x1x32xf32>
    %26 = vector.shape_cast %25 : vector<1x1x32xf32> to vector<1x32xf32>
    %c0_36 = arith.constant 0 : index
    %c0_37 = arith.constant 0 : index
    %c0_38 = arith.constant 0 : index
    %27 = vector.load %arg19[%c0_36, %c0_37, %c0_38] : memref<8x4x32xf32, #tpu.memory_space<vmem>>, vector<8x4x32xf32>
    %28 = vector.shape_cast %27 : vector<8x4x32xf32> to vector<32x32xf32>
    %29 = arith.truncf %28 : vector<32x32xf32> to vector<32x32xbf16>
    %cst = arith.constant dense<0.000000e+00> : vector<32x96xf32>
    %30 = tpu.matmul %29, %4, %cst {dimension_numbers = #tpu.dot_dimension_numbers<[1], [0], [0], [1], [0, 0, 1, 1], [], []>} : vector<32x32xbf16>, vector<32x96xbf16>, vector<32x96xf32> -> vector<32x96xf32>
    %31 = vector.broadcast %6 : vector<1x96xf32> to vector<32x96xf32>
    %32 = arith.addf %30, %31 : vector<32x96xf32>
    %33 = vector.shape_cast %32 : vector<32x96xf32> to vector<8x4x96xf32>
    %34 = vector.extract_strided_slice %33 {offsets = [0, 0, 0], sizes = [8, 4, 16], strides = [1, 1, 1]} : vector<8x4x96xf32> to vector<8x4x16xf32>
    %35 = arith.truncf %34 : vector<8x4x16xf32> to vector<8x4x16xbf16>
    %36 = vector.extract_strided_slice %33 {offsets = [0, 0, 32], sizes = [8, 4, 16], strides = [1, 1, 1]} : vector<8x4x96xf32> to vector<8x4x16xf32>
    %37 = arith.truncf %36 : vector<8x4x16xf32> to vector<8x4x16xbf16>
    %38 = vector.extract_strided_slice %33 {offsets = [0, 0, 64], sizes = [8, 4, 16], strides = [1, 1, 1]} : vector<8x4x96xf32> to vector<8x4x16xf32>
    %39 = arith.truncf %38 : vector<8x4x16xf32> to vector<8x4x16xbf16>
    "tpu.trace_start"() <{level = 10 : i32, message = "ntd,nsd->nts"}> : () -> ()
    %cst_39 = arith.constant dense<0.000000e+00> : vector<8x4x4xf32>
    %40 = tpu.matmul %35, %37, %cst_39 {dimension_numbers = #tpu.dot_dimension_numbers<[2], [2], [1], [1], [0, 0, 0, 1, 1, 1], [0], [0]>} : vector<8x4x16xbf16>, vector<8x4x16xbf16>, vector<8x4x4xf32> -> vector<8x4x4xf32>
    "tpu.trace_stop"() : () -> ()
    %cst_40 = arith.constant dense<0xFF800000> : vector<8x4xf32>
    %41 = vector.multi_reduction <maximumf>, %40, %cst_40 [2] : vector<8x4x4xf32> to vector<8x4xf32>
    %42 = vector.shape_cast %41 : vector<8x4xf32> to vector<8x4x1xf32>
    %43 = vector.broadcast %42 : vector<8x4x1xf32> to vector<8x4x4xf32>
    %44 = arith.subf %40, %43 : vector<8x4x4xf32>
    %45 = math.exp %44 : vector<8x4x4xf32>
    %cst_41 = arith.constant dense<0.000000e+00> : vector<8x4xf32>
    %46 = vector.multi_reduction <add>, %45, %cst_41 [2] : vector<8x4x4xf32> to vector<8x4xf32>
    %47 = vector.shape_cast %46 : vector<8x4xf32> to vector<8x4x1xf32>
    %48 = tpu.reciprocal %47 {approx = true} : vector<8x4x1xf32> -> vector<8x4x1xf32>
    %49 = vector.broadcast %48 : vector<8x4x1xf32> to vector<8x4x4xf32>
    %50 = arith.mulf %45, %49 : vector<8x4x4xf32>
    %51 = arith.truncf %50 : vector<8x4x4xf32> to vector<8x4x4xbf16>
    "tpu.trace_start"() <{level = 10 : i32, message = "nts,nsd->ntd"}> : () -> ()
    %cst_42 = arith.constant dense<0.000000e+00> : vector<8x4x16xf32>
    %52 = tpu.matmul %51, %39, %cst_42 {dimension_numbers = #tpu.dot_dimension_numbers<[2], [1], [1], [2], [0, 0, 0, 1, 1, 2], [0], [0]>} : vector<8x4x4xbf16>, vector<8x4x16xbf16>, vector<8x4x16xf32> -> vector<8x4x16xf32>
    "tpu.trace_stop"() : () -> ()
    %53 = vector.extract_strided_slice %33 {offsets = [0, 0, 16], sizes = [8, 4, 16], strides = [1, 1, 1]} : vector<8x4x96xf32> to vector<8x4x16xf32>
    %54 = arith.truncf %53 : vector<8x4x16xf32> to vector<8x4x16xbf16>
    %55 = vector.extract_strided_slice %33 {offsets = [0, 0, 48], sizes = [8, 4, 16], strides = [1, 1, 1]} : vector<8x4x96xf32> to vector<8x4x16xf32>
    %56 = arith.truncf %55 : vector<8x4x16xf32> to vector<8x4x16xbf16>
    %57 = vector.extract_strided_slice %33 {offsets = [0, 0, 80], sizes = [8, 4, 16], strides = [1, 1, 1]} : vector<8x4x96xf32> to vector<8x4x16xf32>
    %58 = arith.truncf %57 : vector<8x4x16xf32> to vector<8x4x16xbf16>
    "tpu.trace_start"() <{level = 10 : i32, message = "ntd,nsd->nts"}> : () -> ()
    %cst_43 = arith.constant dense<0.000000e+00> : vector<8x4x4xf32>
    %59 = tpu.matmul %54, %56, %cst_43 {dimension_numbers = #tpu.dot_dimension_numbers<[2], [2], [1], [1], [0, 0, 0, 1, 1, 1], [0], [0]>} : vector<8x4x16xbf16>, vector<8x4x16xbf16>, vector<8x4x4xf32> -> vector<8x4x4xf32>
    "tpu.trace_stop"() : () -> ()
    %cst_44 = arith.constant dense<0xFF800000> : vector<8x4xf32>
    %60 = vector.multi_reduction <maximumf>, %59, %cst_44 [2] : vector<8x4x4xf32> to vector<8x4xf32>
    %61 = vector.shape_cast %60 : vector<8x4xf32> to vector<8x4x1xf32>
    %62 = vector.broadcast %61 : vector<8x4x1xf32> to vector<8x4x4xf32>
    %63 = arith.subf %59, %62 : vector<8x4x4xf32>
    %64 = math.exp %63 : vector<8x4x4xf32>
    %cst_45 = arith.constant dense<0.000000e+00> : vector<8x4xf32>
    %65 = vector.multi_reduction <add>, %64, %cst_45 [2] : vector<8x4x4xf32> to vector<8x4xf32>
    %66 = vector.shape_cast %65 : vector<8x4xf32> to vector<8x4x1xf32>
    %67 = tpu.reciprocal %66 {approx = true} : vector<8x4x1xf32> -> vector<8x4x1xf32>
    %68 = vector.broadcast %67 : vector<8x4x1xf32> to vector<8x4x4xf32>
    %69 = arith.mulf %64, %68 : vector<8x4x4xf32>
    %70 = arith.truncf %69 : vector<8x4x4xf32> to vector<8x4x4xbf16>
    "tpu.trace_start"() <{level = 10 : i32, message = "nts,nsd->ntd"}> : () -> ()
    %cst_46 = arith.constant dense<0.000000e+00> : vector<8x4x16xf32>
    %71 = tpu.matmul %70, %58, %cst_46 {dimension_numbers = #tpu.dot_dimension_numbers<[2], [1], [1], [2], [0, 0, 0, 1, 1, 2], [0], [0]>} : vector<8x4x4xbf16>, vector<8x4x16xbf16>, vector<8x4x16xf32> -> vector<8x4x16xf32>
    "tpu.trace_stop"() : () -> ()
    %72 = tpu.concatenate %52, %71 in 2 : vector<8x4x16xf32>, vector<8x4x16xf32> -> vector<8x4x32xf32>
    %73 = vector.shape_cast %72 : vector<8x4x32xf32> to vector<32x32xf32>
    %74 = arith.truncf %73 : vector<32x32xf32> to vector<32x32xbf16>
    %cst_47 = arith.constant dense<0.000000e+00> : vector<32x32xf32>
    %75 = tpu.matmul %74, %8, %cst_47 {dimension_numbers = #tpu.dot_dimension_numbers<[1], [0], [0], [1], [0, 0, 1, 1], [], []>} : vector<32x32xbf16>, vector<32x32xbf16>, vector<32x32xf32> -> vector<32x32xf32>
    %76 = vector.broadcast %10 : vector<1x32xf32> to vector<32x32xf32>
    %77 = arith.addf %75, %76 : vector<32x32xf32>
    %78 = arith.addf %28, %77 : vector<32x32xf32>
    %cst_48 = arith.constant dense<0.000000e+00> : vector<32xf32>
    %79 = vector.multi_reduction <add>, %78, %cst_48 [1] : vector<32x32xf32> to vector<32xf32>
    %80 = vector.shape_cast %79 : vector<32xf32> to vector<32x1xf32>
    %cst_49 = arith.constant 3.200000e+01 : f32
    %81 = vector.broadcast %cst_49 : f32 to vector<32x1xf32>
    %82 = arith.divf %80, %81 : vector<32x1xf32>
    %83 = vector.broadcast %82 : vector<32x1xf32> to vector<32x32xf32>
    %84 = arith.subf %78, %83 : vector<32x32xf32>
    %85 = arith.mulf %84, %84 : vector<32x32xf32>
    %cst_50 = arith.constant dense<0.000000e+00> : vector<32xf32>
    %86 = vector.multi_reduction <add>, %85, %cst_50 [1] : vector<32x32xf32> to vector<32xf32>
    %87 = vector.shape_cast %86 : vector<32xf32> to vector<32x1xf32>
    %cst_51 = arith.constant 3.200000e+01 : f32
    %88 = vector.broadcast %cst_51 : f32 to vector<32x1xf32>
    %89 = arith.divf %87, %88 : vector<32x1xf32>
    %cst_52 = arith.constant 9.99999996E-13 : f32
    %90 = vector.broadcast %cst_52 : f32 to vector<32x1xf32>
    %91 = arith.addf %89, %90 : vector<32x1xf32>
    %92 = math.rsqrt %91 : vector<32x1xf32>
    %93 = vector.broadcast %92 : vector<32x1xf32> to vector<32x32xf32>
    %94 = arith.mulf %84, %93 : vector<32x32xf32>
    %95 = vector.broadcast %12 : vector<1x32xf32> to vector<32x32xf32>
    %96 = arith.mulf %94, %95 : vector<32x32xf32>
    %97 = vector.broadcast %14 : vector<1x32xf32> to vector<32x32xf32>
    %98 = arith.addf %96, %97 : vector<32x32xf32>
    %99 = arith.truncf %98 : vector<32x32xf32> to vector<32x32xbf16>
    %cst_53 = arith.constant dense<0.000000e+00> : vector<32x64xf32>
    %100 = tpu.matmul %99, %20, %cst_53 {dimension_numbers = #tpu.dot_dimension_numbers<[1], [0], [0], [1], [0, 0, 1, 1], [], []>} : vector<32x32xbf16>, vector<32x64xbf16>, vector<32x64xf32> -> vector<32x64xf32>
    %101 = vector.broadcast %22 : vector<1x64xf32> to vector<32x64xf32>
    %102 = arith.addf %100, %101 : vector<32x64xf32>
    %cst_54 = arith.constant 0.000000e+00 : f32
    %103 = vector.broadcast %cst_54 : f32 to vector<32x64xf32>
    %104 = arith.maximumf %102, %103 : vector<32x64xf32>
    %105 = arith.truncf %104 : vector<32x64xf32> to vector<32x64xbf16>
    %cst_55 = arith.constant dense<0.000000e+00> : vector<32x32xf32>
    %106 = tpu.matmul %105, %24, %cst_55 {dimension_numbers = #tpu.dot_dimension_numbers<[1], [0], [0], [1], [0, 0, 1, 1], [], []>} : vector<32x64xbf16>, vector<64x32xbf16>, vector<32x32xf32> -> vector<32x32xf32>
    %107 = vector.broadcast %26 : vector<1x32xf32> to vector<32x32xf32>
    %108 = arith.addf %106, %107 : vector<32x32xf32>
    %109 = arith.addf %98, %108 : vector<32x32xf32>
    %cst_56 = arith.constant dense<0.000000e+00> : vector<32xf32>
    %110 = vector.multi_reduction <add>, %109, %cst_56 [1] : vector<32x32xf32> to vector<32xf32>
    %111 = vector.shape_cast %110 : vector<32xf32> to vector<32x1xf32>
    %cst_57 = arith.constant 3.200000e+01 : f32
    %112 = vector.broadcast %cst_57 : f32 to vector<32x1xf32>
    %113 = arith.divf %111, %112 : vector<32x1xf32>
    %114 = vector.broadcast %113 : vector<32x1xf32> to vector<32x32xf32>
    %115 = arith.subf %109, %114 : vector<32x32xf32>
    %116 = arith.mulf %115, %115 : vector<32x32xf32>
    %cst_58 = arith.constant dense<0.000000e+00> : vector<32xf32>
    %117 = vector.multi_reduction <add>, %116, %cst_58 [1] : vector<32x32xf32> to vector<32xf32>
    %118 = vector.shape_cast %117 : vector<32xf32> to vector<32x1xf32>
    %cst_59 = arith.constant 3.200000e+01 : f32
    %119 = vector.broadcast %cst_59 : f32 to vector<32x1xf32>
    %120 = arith.divf %118, %119 : vector<32x1xf32>
    %cst_60 = arith.constant 9.99999996E-13 : f32
    %121 = vector.broadcast %cst_60 : f32 to vector<32x1xf32>
    %122 = arith.addf %120, %121 : vector<32x1xf32>
    %123 = math.rsqrt %122 : vector<32x1xf32>
    %124 = vector.broadcast %123 : vector<32x1xf32> to vector<32x32xf32>
    %125 = arith.mulf %115, %124 : vector<32x32xf32>
    %126 = vector.broadcast %16 : vector<1x32xf32> to vector<32x32xf32>
    %127 = arith.mulf %125, %126 : vector<32x32xf32>
    %128 = vector.broadcast %18 : vector<1x32xf32> to vector<32x32xf32>
    %129 = arith.addf %127, %128 : vector<32x32xf32>
    %130 = vector.shape_cast %129 : vector<32x32xf32> to vector<8x4x32xf32>
    %c0_61 = arith.constant 0 : index
    %c0_62 = arith.constant 0 : index
    %c0_63 = arith.constant 0 : index
    %131 = vector.load %arg19[%c0_61, %c0_62, %c0_63] : memref<8x4x32xf32, #tpu.memory_space<vmem>>, vector<8x4x32xf32>
    tpu.vector_store %arg19[%c0_61, %c0_62, %c0_63], %130 {strides = array<i32>} : memref<8x4x32xf32, #tpu.memory_space<vmem>>, vector<8x4x32xf32>,
    %c1_i32 = arith.constant 1 : i32
    %132 = arith.cmpi eq, %arg1, %c1_i32 : i32
    %133 = arith.extui %132 : i1 to i32
    %c0_i32_64 = arith.constant 0 : i32
    %134 = arith.cmpi ne, %133, %c0_i32_64 : i32
    scf.if %134 {
      %135 = vector.shape_cast %129 : vector<32x32xf32> to vector<8x4x32xf32>
      %cst_65 = arith.constant dense<0.000000e+00> : vector<8x4xf32>
      %136 = vector.multi_reduction <add>, %135, %cst_65 [2] : vector<8x4x32xf32> to vector<8x4xf32>
      %137 = vector.shape_cast %136 : vector<8x4xf32> to vector<8x4x1xf32>
      %cst_66 = arith.constant dense<0.000000e+00> : vector<8x1xf32>
      %138 = vector.multi_reduction <add>, %137, %cst_66 [1] : vector<8x4x1xf32> to vector<8x1xf32>
      %139 = vector.shape_cast %138 : vector<8x1xf32> to vector<8x1x1xf32>
      %cst_67 = arith.constant 7.812500e-03 : f32
      %140 = vector.broadcast %cst_67 : f32 to vector<8x1x1xf32>
      %141 = arith.mulf %139, %140 : vector<8x1x1xf32>
      %142 = vector.broadcast %141 : vector<8x1x1xf32> to vector<8x4x32xf32>
      %143 = arith.subf %135, %142 : vector<8x4x32xf32>
      %144 = arith.mulf %143, %143 : vector<8x4x32xf32>
      %cst_68 = arith.constant dense<0.000000e+00> : vector<8x4xf32>
      %145 = vector.multi_reduction <add>, %144, %cst_68 [2] : vector<8x4x32xf32> to vector<8x4xf32>
      %146 = vector.shape_cast %145 : vector<8x4xf32> to vector<8x4x1xf32>
      %cst_69 = arith.constant dense<0.000000e+00> : vector<8x1xf32>
      %147 = vector.multi_reduction <add>, %146, %cst_69 [1] : vector<8x4x1xf32> to vector<8x1xf32>
      %148 = vector.shape_cast %147 : vector<8x1xf32> to vector<8x1x1xf32>
      %cst_70 = arith.constant 7.812500e-03 : f32
      %149 = vector.broadcast %cst_70 : f32 to vector<8x1x1xf32>
      %150 = arith.mulf %148, %149 : vector<8x1x1xf32>
      %cst_71 = arith.constant 9.99999996E-13 : f32
      %151 = vector.broadcast %cst_71 : f32 to vector<8x1x1xf32>
      %152 = arith.addf %150, %151 : vector<8x1x1xf32>
      %153 = math.rsqrt %152 : vector<8x1x1xf32>
      %154 = vector.broadcast %153 : vector<8x1x1xf32> to vector<8x4x32xf32>
      %155 = arith.mulf %143, %154 : vector<8x4x32xf32>
      %c0_72 = arith.constant 0 : index
      %c0_73 = arith.constant 0 : index
      %156 = vector.load %arg16[%c0_72, %c0_73] : memref<1x32xf32, #tpu.memory_space<vmem>>, vector<1x32xf32>
      %157 = vector.shape_cast %156 : vector<1x32xf32> to vector<1x1x32xf32>
      %158 = vector.broadcast %157 : vector<1x1x32xf32> to vector<8x4x32xf32>
      %159 = arith.mulf %155, %158 : vector<8x4x32xf32>
      %c0_74 = arith.constant 0 : index
      %c0_75 = arith.constant 0 : index
      %160 = vector.load %arg17[%c0_74, %c0_75] : memref<1x32xf32, #tpu.memory_space<vmem>>, vector<1x32xf32>
      %161 = vector.shape_cast %160 : vector<1x32xf32> to vector<1x1x32xf32>
      %162 = vector.broadcast %161 : vector<1x1x32xf32> to vector<8x4x32xf32>
      %163 = arith.addf %159, %162 : vector<8x4x32xf32>
      %c0_76 = arith.constant 0 : index
      %c0_77 = arith.constant 0 : index
      %c0_78 = arith.constant 0 : index
      %164 = vector.load %arg2[%c0_76, %c0_77, %c0_78] : memref<8x4x32xf32, #tpu.memory_space<vmem>>, vector<8x4x32xf32>
      %165 = arith.addf %163, %164 : vector<8x4x32xf32>
      %c0_79 = arith.constant 0 : index
      %c0_80 = arith.constant 0 : index
      %c0_81 = arith.constant 0 : index
      %166 = vector.load %arg18[%c0_79, %c0_80, %c0_81] : memref<8x4x32xf32, #tpu.memory_space<vmem>>, vector<8x4x32xf32>
      tpu.vector_store %arg18[%c0_79, %c0_80, %c0_81], %165 {strides = array<i32>} : memref<8x4x32xf32, #tpu.memory_space<vmem>>, vector<8x4x32xf32>,
    } else {
    }
    return
  }
  func.func @transform_0(%arg0: i32, %arg1: i32) -> (i32, i32, i32) {
    %c0_i32 = arith.constant 0 : i32
    %c0_i32_0 = arith.constant 0 : i32
    %c0_i32_1 = arith.constant 0 : i32
    return %arg0, %c0_i32, %c0_i32_0 : i32, i32, i32
  }
  func.func @transform_1(%arg0: i32, %arg1: i32) -> (i32, i32) {
    %c0_i32 = arith.constant 0 : i32
    %c0_i32_0 = arith.constant 0 : i32
    %c0_i32_1 = arith.constant 0 : i32
    return %c0_i32, %c0_i32_0 : i32, i32
  }
  func.func @transform_2(%arg0: i32, %arg1: i32) -> (i32, i32, i32) {
    %c0_i32 = arith.constant 0 : i32
    %c0_i32_0 = arith.constant 0 : i32
    %c0_i32_1 = arith.constant 0 : i32
    return %arg1, %c0_i32, %c0_i32_0 : i32, i32, i32
  }
  func.func @transform_3(%arg0: i32, %arg1: i32) -> (i32, i32, i32) {
    %c0_i32 = arith.constant 0 : i32
    %c0_i32_0 = arith.constant 0 : i32
    %c0_i32_1 = arith.constant 0 : i32
    return %arg1, %c0_i32, %c0_i32_0 : i32, i32, i32
  }
  func.func @transform_4(%arg0: i32, %arg1: i32) -> (i32, i32, i32) {
    %c0_i32 = arith.constant 0 : i32
    %c0_i32_0 = arith.constant 0 : i32
    %c0_i32_1 = arith.constant 0 : i32
    return %arg1, %c0_i32, %c0_i32_0 : i32, i32, i32
  }
  func.func @transform_5(%arg0: i32, %arg1: i32) -> (i32, i32, i32) {
    %c0_i32 = arith.constant 0 : i32
    %c0_i32_0 = arith.constant 0 : i32
    %c0_i32_1 = arith.constant 0 : i32
    return %arg1, %c0_i32, %c0_i32_0 : i32, i32, i32
  }
  func.func @transform_6(%arg0: i32, %arg1: i32) -> (i32, i32, i32) {
    %c0_i32 = arith.constant 0 : i32
    %c0_i32_0 = arith.constant 0 : i32
    %c0_i32_1 = arith.constant 0 : i32
    return %arg1, %c0_i32, %c0_i32_0 : i32, i32, i32
  }
  func.func @transform_7(%arg0: i32, %arg1: i32) -> (i32, i32, i32) {
    %c0_i32 = arith.constant 0 : i32
    %c0_i32_0 = arith.constant 0 : i32
    %c0_i32_1 = arith.constant 0 : i32
    return %arg1, %c0_i32, %c0_i32_0 : i32, i32, i32
  }
  func.func @transform_8(%arg0: i32, %arg1: i32) -> (i32, i32, i32) {
    %c0_i32 = arith.constant 0 : i32
    %c0_i32_0 = arith.constant 0 : i32
    %c0_i32_1 = arith.constant 0 : i32
    return %arg1, %c0_i32, %c0_i32_0 : i32, i32, i32
  }
  func.func @transform_9(%arg0: i32, %arg1: i32) -> (i32, i32, i32) {
    %c0_i32 = arith.constant 0 : i32
    %c0_i32_0 = arith.constant 0 : i32
    %c0_i32_1 = arith.constant 0 : i32
    return %arg1, %c0_i32, %c0_i32_0 : i32, i32, i32
  }
  func.func @transform_10(%arg0: i32, %arg1: i32) -> (i32, i32, i32) {
    %c0_i32 = arith.constant 0 : i32
    %c0_i32_0 = arith.constant 0 : i32
    %c0_i32_1 = arith.constant 0 : i32
    return %arg1, %c0_i32, %c0_i32_0 : i32, i32, i32
  }
  func.func @transform_11(%arg0: i32, %arg1: i32) -> (i32, i32, i32) {
    %c0_i32 = arith.constant 0 : i32
    %c0_i32_0 = arith.constant 0 : i32
    %c0_i32_1 = arith.constant 0 : i32
    return %arg1, %c0_i32, %c0_i32_0 : i32, i32, i32
  }
  func.func @transform_12(%arg0: i32, %arg1: i32) -> (i32, i32, i32) {
    %c0_i32 = arith.constant 0 : i32
    %c0_i32_0 = arith.constant 0 : i32
    %c0_i32_1 = arith.constant 0 : i32
    return %arg1, %c0_i32, %c0_i32_0 : i32, i32, i32
  }
  func.func @transform_13(%arg0: i32, %arg1: i32) -> (i32, i32, i32) {
    %c0_i32 = arith.constant 0 : i32
    %c0_i32_0 = arith.constant 0 : i32
    %c0_i32_1 = arith.constant 0 : i32
    return %arg1, %c0_i32, %c0_i32_0 : i32, i32, i32
  }
  func.func @transform_14(%arg0: i32, %arg1: i32) -> (i32, i32) {
    %c0_i32 = arith.constant 0 : i32
    %c0_i32_0 = arith.constant 0 : i32
    %c0_i32_1 = arith.constant 0 : i32
    return %c0_i32, %c0_i32_0 : i32, i32
  }
  func.func @transform_15(%arg0: i32, %arg1: i32) -> (i32, i32) {
    %c0_i32 = arith.constant 0 : i32
    %c0_i32_0 = arith.constant 0 : i32
    %c0_i32_1 = arith.constant 0 : i32
    return %c0_i32, %c0_i32_0 : i32, i32
  }
  func.func @transform_16(%arg0: i32, %arg1: i32) -> (i32, i32, i32) {
    %c0_i32 = arith.constant 0 : i32
    %c0_i32_0 = arith.constant 0 : i32
    %c0_i32_1 = arith.constant 0 : i32
    return %arg0, %c0_i32, %c0_i32_0 : i32, i32, i32
  }
}

</mosaic_0001>

<llo_original>
// kernel: sepformer_block.2
$region0: #{sepformer_block.2}
  #allocation0 [shape = 'u32[]', space=smem, size = 0x4, offset = 0x4, fixed_abs, tag = 'smem constant byte address 0x4 - core index']
  #allocation1 [shape = 'u32[144,128]{1,0:T(1,128)}', space=vmem, size = 0x12000, scoped, tag = 'internal scratch']
  #allocation2 [shape = 'f32[4,8,32]{2,1,0:T(8,128)}', space=vmem, size = 0x4000, scoped, tag = 'scratch operand']
  %s0 = inlined_call_operand.vmem [shape: f32[8,8,32], index: 0, kind: input, shape index: {}]
  %s1 = inlined_call_operand.vmem [shape: f32[8,32], index: 1, kind: input, shape index: {}]
  %s2 = inlined_call_operand.vmem [shape: bf16[2,32,96], index: 2, kind: input, shape index: {}]
  %s3 = inlined_call_operand.vmem [shape: f32[2,1,96], index: 3, kind: input, shape index: {}]
  %s4 = inlined_call_operand.vmem [shape: bf16[2,32,32], index: 4, kind: input, shape index: {}]
  %s5 = inlined_call_operand.vmem [shape: f32[2,1,32], index: 5, kind: input, shape index: {}]
  %s6 = inlined_call_operand.vmem [shape: f32[2,1,32], index: 6, kind: input, shape index: {}]
  %s7 = inlined_call_operand.vmem [shape: f32[2,1,32], index: 7, kind: input, shape index: {}]
  %s8 = inlined_call_operand.vmem [shape: f32[2,1,32], index: 8, kind: input, shape index: {}]
  %s9 = inlined_call_operand.vmem [shape: f32[2,1,32], index: 9, kind: input, shape index: {}]
  %s10 = inlined_call_operand.vmem [shape: bf16[2,32,64], index: 10, kind: input, shape index: {}]
  %s11 = inlined_call_operand.vmem [shape: f32[2,1,64], index: 11, kind: input, shape index: {}]
  %s12 = inlined_call_operand.vmem [shape: bf16[2,64,32], index: 12, kind: input, shape index: {}]
  %s13 = inlined_call_operand.vmem [shape: f32[2,1,32], index: 13, kind: input, shape index: {}]
  %s14 = inlined_call_operand.vmem [shape: f32[1,32], index: 14, kind: input, shape index: {}]
  %s15 = inlined_call_operand.vmem [shape: f32[1,32], index: 15, kind: input, shape index: {}]
  %s16 = inlined_call_operand.vmem [shape: f32[8,8,32], index: 16, kind: output, shape index: {}]
  %s17 = sld [smem:[#allocation0]]
  $region105: #{sepformer_block.2} parent=0
    _
  %s19 = ssub.s32 1, %s17
  %s20 = scalar_select 0, %s19, %s17
  loop: start=0, step=1, limit=6
  $region2: #{sepformer_block.2} parent=0 // loop_pre_header
    _
  $region3: #{sepformer_block.2} parent=0 // loop_header
    %s22 = sphi 0, %s26
    %p23 = scmp.ge.s32.totalorder %s22, 6
    %s29 = sphi 0, %s41
    %s30 = sphi 0, %s37
    %s31 = sphi 0, %s29
    %s32 = sphi 0, %s30
    %s33 = sphi 0, %s31
    %s34 = sphi 0, %s32
    %s44 = sphi 0, %s46
    %s47 = sphi 0, %s44
    %s48 = sphi 0, %s47
    %s64 = sphi 0, %s48
    %s68 = sphi 0, %s68
    %s70 = sphi 0, %s68
    %s71 = sphi 0, %s70
    %s85 = sphi 0, %s71
    %s91 = sphi 0, %s93
    %s94 = sphi 0, %s91
    %s95 = sphi 0, %s94
    %s111 = sphi 0, %s95
    %s117 = sphi 0, %s119
    %s120 = sphi 0, %s117
    %s121 = sphi 0, %s120
    %s137 = sphi 0, %s121
    %s143 = sphi 0, %s145
    %s146 = sphi 0, %s143
    %s147 = sphi 0, %s146
    %s163 = sphi 0, %s147
    %s169 = sphi 0, %s171
    %s172 = sphi 0, %s169
    %s173 = sphi 0, %s172
    %s189 = sphi 0, %s173
    %s195 = sphi 0, %s197
    %s198 = sphi 0, %s195
    %s199 = sphi 0, %s198
    %s215 = sphi 0, %s199
    %s221 = sphi 0, %s223
    %s224 = sphi 0, %s221
    %s225 = sphi 0, %s224
    %s241 = sphi 0, %s225
    %s247 = sphi 0, %s249
    %s250 = sphi 0, %s247
    %s251 = sphi 0, %s250
    %s267 = sphi 0, %s251
    %s273 = sphi 0, %s275
    %s276 = sphi 0, %s273
    %s277 = sphi 0, %s276
    %s293 = sphi 0, %s277
    %s299 = sphi 0, %s301
    %s302 = sphi 0, %s299
    %s303 = sphi 0, %s302
    %s319 = sphi 0, %s303
    %s325 = sphi 0, %s327
    %s328 = sphi 0, %s325
    %s329 = sphi 0, %s328
    %s345 = sphi 0, %s329
    %s351 = sphi 0, %s353
    %s354 = sphi 0, %s351
    %s355 = sphi 0, %s354
    %s371 = sphi 0, %s355
    %s377 = sphi 0, %s379
    %s380 = sphi 0, %s377
    %s381 = sphi 0, %s380
    %s397 = sphi 0, %s381
    %s401 = sphi 0, %s401
    %s403 = sphi 0, %s401
    %s404 = sphi 0, %s403
    %s418 = sphi 0, %s404
    %s422 = sphi 0, %s422
    %s424 = sphi 0, %s422
    %s425 = sphi 0, %s424
    %s439 = sphi 0, %s425
    %s445 = sphi 0, %s447
    %s448 = sphi 0, %s445
    %s449 = sphi 0, %s448
    %s465 = sphi 0, %s449
  $region4: #{sepformer_block.2} parent=0 // loop_header_branch
    %25 = sbr.rel (%p23) target = $region8
  $region5: #{sepformer_block.2} parent=0 // loop_body
    %s27 = ssub.s32 %s22, 1
    %s28 = ssub.s32 %s22, 2
    %s35 = sadd.s32 1, %s30
    %p36 = scmp.ge.s32.totalorder %s35, 2
    %s37 = scalar_select %p36, 0, %s35
    %s38 = sadd.s32 1, %s29
    %s39 = scalar_select %p36, %s38, %s29
    %p40 = scmp.ge.s32.totalorder %s39, 2
    %s41 = scalar_select %p40, 0, %s39
    %s42 = ssub.s32 %s29, %s41
    %p43 = scmp.eq.s32.totalorder %s42, 0
    %s45 = sadd.s32 %s44, 1
    %s46 = scalar_select %p43, %s44, %s45
    %p49 = pneg %p43
    %p50 = scmp.eq.s32.totalorder %s22, 3
    %p51 = por %p49, %p50
    %p52 = scmp.ne.s32.totalorder %s44, %s47
    %p53 = scmp.eq.s32.totalorder %s22, 0
    %p54 = por %p52, %p53
    %p55 = scmp.ne.s32.totalorder %s44, %s47
    %p56 = scmp.eq.s32.totalorder %s27, 3
    %p57 = por %p55, %p56
    %p58 = scmp.ne.s32.totalorder %s47, %s48
    %p59 = scmp.eq.s32.totalorder %s27, 0
    %p60 = por %p58, %p59
    %p61 = scmp.ne.s32.totalorder %s47, %s48
    %p62 = scmp.eq.s32.totalorder %s28, 3
    %p63 = por %p61, %p62
    %p65 = scmp.ne.s32.totalorder %s48, %s64
    %p66 = scmp.eq.s32.totalorder %s28, 0
    %p67 = por %p65, %p66
    %s69 = sadd.s32 %s68, 1
    %p72 = scmp.eq.s32.totalorder %s22, 3
    %p73 = scmp.ne.s32.totalorder %s68, %s70
    %p74 = scmp.eq.s32.totalorder %s22, 0
    %p75 = por %p73, %p74
    %p76 = scmp.ne.s32.totalorder %s68, %s70
    %p77 = scmp.eq.s32.totalorder %s27, 3
    %p78 = por %p76, %p77
    %p79 = scmp.ne.s32.totalorder %s70, %s71
    %p80 = scmp.eq.s32.totalorder %s27, 0
    %p81 = por %p79, %p80
    %p82 = scmp.ne.s32.totalorder %s70, %s71
    %p83 = scmp.eq.s32.totalorder %s28, 3
    %p84 = por %p82, %p83
    %p86 = scmp.ne.s32.totalorder %s71, %s85
    %p87 = scmp.eq.s32.totalorder %s28, 0
    %p88 = por %p86, %p87
    %s89 = ssub.s32 %s30, %s37
    %p90 = scmp.eq.s32.totalorder %s89, 0
    %s92 = sadd.s32 %s91, 1
    %s93 = scalar_select %p90, %s91, %s92
    %p96 = pneg %p90
    %p97 = scmp.eq.s32.totalorder %s22, 3
    %p98 = por %p96, %p97
    %p99 = scmp.ne.s32.totalorder %s91, %s94
    %p100 = scmp.eq.s32.totalorder %s22, 0
    %p101 = por %p99, %p100
    %p102 = scmp.ne.s32.totalorder %s91, %s94
    %p103 = scmp.eq.s32.totalorder %s27, 3
    %p104 = por %p102, %p103
    %p105 = scmp.ne.s32.totalorder %s94, %s95
    %p106 = scmp.eq.s32.totalorder %s27, 0
    %p107 = por %p105, %p106
    %p108 = scmp.ne.s32.totalorder %s94, %s95
    %p109 = scmp.eq.s32.totalorder %s28, 3
    %p110 = por %p108, %p109
    %p112 = scmp.ne.s32.totalorder %s95, %s111
    %p113 = scmp.eq.s32.totalorder %s28, 0
    %p114 = por %p112, %p113
    %s115 = ssub.s32 %s30, %s37
    %p116 = scmp.eq.s32.totalorder %s115, 0
    %s118 = sadd.s32 %s117, 1
    %s119 = scalar_select %p116, %s117, %s118
    %p122 = pneg %p116
    %p123 = scmp.eq.s32.totalorder %s22, 3
    %p124 = por %p122, %p123
    %p125 = scmp.ne.s32.totalorder %s117, %s120
    %p126 = scmp.eq.s32.totalorder %s22, 0
    %p127 = por %p125, %p126
    %p128 = scmp.ne.s32.totalorder %s117, %s120
    %p129 = scmp.eq.s32.totalorder %s27, 3
    %p130 = por %p128, %p129
    %p131 = scmp.ne.s32.totalorder %s120, %s121
    %p132 = scmp.eq.s32.totalorder %s27, 0
    %p133 = por %p131, %p132
    %p134 = scmp.ne.s32.totalorder %s120, %s121
    %p135 = scmp.eq.s32.totalorder %s28, 3
    %p136 = por %p134, %p135
    %p138 = scmp.ne.s32.totalorder %s121, %s137
    %p139 = scmp.eq.s32.totalorder %s28, 0
    %p140 = por %p138, %p139
    %s141 = ssub.s32 %s30, %s37
    %p142 = scmp.eq.s32.totalorder %s141, 0
    %s144 = sadd.s32 %s143, 1
    %s145 = scalar_select %p142, %s143, %s144
    %p148 = pneg %p142
    %p149 = scmp.eq.s32.totalorder %s22, 3
    %p150 = por %p148, %p149
    %p151 = scmp.ne.s32.totalorder %s143, %s146
    %p152 = scmp.eq.s32.totalorder %s22, 0
    %p153 = por %p151, %p152
    %p154 = scmp.ne.s32.totalorder %s143, %s146
    %p155 = scmp.eq.s32.totalorder %s27, 3
    %p156 = por %p154, %p155
    %p157 = scmp.ne.s32.totalorder %s146, %s147
    %p158 = scmp.eq.s32.totalorder %s27, 0
    %p159 = por %p157, %p158
    %p160 = scmp.ne.s32.totalorder %s146, %s147
    %p161 = scmp.eq.s32.totalorder %s28, 3
    %p162 = por %p160, %p161
    %p164 = scmp.ne.s32.totalorder %s147, %s163
    %p165 = scmp.eq.s32.totalorder %s28, 0
    %p166 = por %p164, %p165
    %s167 = ssub.s32 %s30, %s37
    %p168 = scmp.eq.s32.totalorder %s167, 0
    %s170 = sadd.s32 %s169, 1
    %s171 = scalar_select %p168, %s169, %s170
    %p174 = pneg %p168
    %p175 = scmp.eq.s32.totalorder %s22, 3
    %p176 = por %p174, %p175
    %p177 = scmp.ne.s32.totalorder %s169, %s172
    %p178 = scmp.eq.s32.totalorder %s22, 0
    %p179 = por %p177, %p178
    %p180 = scmp.ne.s32.totalorder %s169, %s172
    %p181 = scmp.eq.s32.totalorder %s27, 3
    %p182 = por %p180, %p181
    %p183 = scmp.ne.s32.totalorder %s172, %s173
    %p184 = scmp.eq.s32.totalorder %s27, 0
    %p185 = por %p183, %p184
    %p186 = scmp.ne.s32.totalorder %s172, %s173
    %p187 = scmp.eq.s32.totalorder %s28, 3
    %p188 = por %p186, %p187
    %p190 = scmp.ne.s32.totalorder %s173, %s189
    %p191 = scmp.eq.s32.totalorder %s28, 0
    %p192 = por %p190, %p191
    %s193 = ssub.s32 %s30, %s37
    %p194 = scmp.eq.s32.totalorder %s193, 0
    %s196 = sadd.s32 %s195, 1
    %s197 = scalar_select %p194, %s195, %s196
    %p200 = pneg %p194
    %p201 = scmp.eq.s32.totalorder %s22, 3
    %p202 = por %p200, %p201
    %p203 = scmp.ne.s32.totalorder %s195, %s198
    %p204 = scmp.eq.s32.totalorder %s22, 0
    %p205 = por %p203, %p204
    %p206 = scmp.ne.s32.totalorder %s195, %s198
    %p207 = scmp.eq.s32.totalorder %s27, 3
    %p208 = por %p206, %p207
    %p209 = scmp.ne.s32.totalorder %s198, %s199
    %p210 = scmp.eq.s32.totalorder %s27, 0
    %p211 = por %p209, %p210
    %p212 = scmp.ne.s32.totalorder %s198, %s199
    %p213 = scmp.eq.s32.totalorder %s28, 3
    %p214 = por %p212, %p213
    %p216 = scmp.ne.s32.totalorder %s199, %s215
    %p217 = scmp.eq.s32.totalorder %s28, 0
    %p218 = por %p216, %p217
    %s219 = ssub.s32 %s30, %s37
    %p220 = scmp.eq.s32.totalorder %s219, 0
    %s222 = sadd.s32 %s221, 1
    %s223 = scalar_select %p220, %s221, %s222
    %p226 = pneg %p220
    %p227 = scmp.eq.s32.totalorder %s22, 3
    %p228 = por %p226, %p227
    %p229 = scmp.ne.s32.totalorder %s221, %s224
    %p230 = scmp.eq.s32.totalorder %s22, 0
    %p231 = por %p229, %p230
    %p232 = scmp.ne.s32.totalorder %s221, %s224
    %p233 = scmp.eq.s32.totalorder %s27, 3
    %p234 = por %p232, %p233
    %p235 = scmp.ne.s32.totalorder %s224, %s225
    %p236 = scmp.eq.s32.totalorder %s27, 0
    %p237 = por %p235, %p236
    %p238 = scmp.ne.s32.totalorder %s224, %s225
    %p239 = scmp.eq.s32.totalorder %s28, 3
    %p240 = por %p238, %p239
    %p242 = scmp.ne.s32.totalorder %s225, %s241
    %p243 = scmp.eq.s32.totalorder %s28, 0
    %p244 = por %p242, %p243
    %s245 = ssub.s32 %s30, %s37
    %p246 = scmp.eq.s32.totalorder %s245, 0
    %s248 = sadd.s32 %s247, 1
    %s249 = scalar_select %p246, %s247, %s248
    %p252 = pneg %p246
    %p253 = scmp.eq.s32.totalorder %s22, 3
    %p254 = por %p252, %p253
    %p255 = scmp.ne.s32.totalorder %s247, %s250
    %p256 = scmp.eq.s32.totalorder %s22, 0
    %p257 = por %p255, %p256
    %p258 = scmp.ne.s32.totalorder %s247, %s250
    %p259 = scmp.eq.s32.totalorder %s27, 3
    %p260 = por %p258, %p259
    %p261 = scmp.ne.s32.totalorder %s250, %s251
    %p262 = scmp.eq.s32.totalorder %s27, 0
    %p263 = por %p261, %p262
    %p264 = scmp.ne.s32.totalorder %s250, %s251
    %p265 = scmp.eq.s32.totalorder %s28, 3
    %p266 = por %p264, %p265
    %p268 = scmp.ne.s32.totalorder %s251, %s267
    %p269 = scmp.eq.s32.totalorder %s28, 0
    %p270 = por %p268, %p269
    %s271 = ssub.s32 %s30, %s37
    %p272 = scmp.eq.s32.totalorder %s271, 0
    %s274 = sadd.s32 %s273, 1
    %s275 = scalar_select %p272, %s273, %s274
    %p278 = pneg %p272
    %p279 = scmp.eq.s32.totalorder %s22, 3
    %p280 = por %p278, %p279
    %p281 = scmp.ne.s32.totalorder %s273, %s276
    %p282 = scmp.eq.s32.totalorder %s22, 0
    %p283 = por %p281, %p282
    %p284 = scmp.ne.s32.totalorder %s273, %s276
    %p285 = scmp.eq.s32.totalorder %s27, 3
    %p286 = por %p284, %p285
    %p287 = scmp.ne.s32.totalorder %s276, %s277
    %p288 = scmp.eq.s32.totalorder %s27, 0
    %p289 = por %p287, %p288
    %p290 = scmp.ne.s32.totalorder %s276, %s277
    %p291 = scmp.eq.s32.totalorder %s28, 3
    %p292 = por %p290, %p291
    %p294 = scmp.ne.s32.totalorder %s277, %s293
    %p295 = scmp.eq.s32.totalorder %s28, 0
    %p296 = por %p294, %p295
    %s297 = ssub.s32 %s30, %s37
    %p298 = scmp.eq.s32.totalorder %s297, 0
    %s300 = sadd.s32 %s299, 1
    %s301 = scalar_select %p298, %s299, %s300
    %p304 = pneg %p298
    %p305 = scmp.eq.s32.totalorder %s22, 3
    %p306 = por %p304, %p305
    %p307 = scmp.ne.s32.totalorder %s299, %s302
    %p308 = scmp.eq.s32.totalorder %s22, 0
    %p309 = por %p307, %p308
    %p310 = scmp.ne.s32.totalorder %s299, %s302
    %p311 = scmp.eq.s32.totalorder %s27, 3
    %p312 = por %p310, %p311
    %p313 = scmp.ne.s32.totalorder %s302, %s303
    %p314 = scmp.eq.s32.totalorder %s27, 0
    %p315 = por %p313, %p314
    %p316 = scmp.ne.s32.totalorder %s302, %s303
    %p317 = scmp.eq.s32.totalorder %s28, 3
    %p318 = por %p316, %p317
    %p320 = scmp.ne.s32.totalorder %s303, %s319
    %p321 = scmp.eq.s32.totalorder %s28, 0
    %p322 = por %p320, %p321
    %s323 = ssub.s32 %s30, %s37
    %p324 = scmp.eq.s32.totalorder %s323, 0
    %s326 = sadd.s32 %s325, 1
    %s327 = scalar_select %p324, %s325, %s326
    %p330 = pneg %p324
    %p331 = scmp.eq.s32.totalorder %s22, 3
    %p332 = por %p330, %p331
    %p333 = scmp.ne.s32.totalorder %s325, %s328
    %p334 = scmp.eq.s32.totalorder %s22, 0
    %p335 = por %p333, %p334
    %p336 = scmp.ne.s32.totalorder %s325, %s328
    %p337 = scmp.eq.s32.totalorder %s27, 3
    %p338 = por %p336, %p337
    %p339 = scmp.ne.s32.totalorder %s328, %s329
    %p340 = scmp.eq.s32.totalorder %s27, 0
    %p341 = por %p339, %p340
    %p342 = scmp.ne.s32.totalorder %s328, %s329
    %p343 = scmp.eq.s32.totalorder %s28, 3
    %p344 = por %p342, %p343
    %p346 = scmp.ne.s32.totalorder %s329, %s345
    %p347 = scmp.eq.s32.totalorder %s28, 0
    %p348 = por %p346, %p347
    %s349 = ssub.s32 %s30, %s37
    %p350 = scmp.eq.s32.totalorder %s349, 0
    %s352 = sadd.s32 %s351, 1
    %s353 = scalar_select %p350, %s351, %s352
    %p356 = pneg %p350
    %p357 = scmp.eq.s32.totalorder %s22, 3
    %p358 = por %p356, %p357
    %p359 = scmp.ne.s32.totalorder %s351, %s354
    %p360 = scmp.eq.s32.totalorder %s22, 0
    %p361 = por %p359, %p360
    %p362 = scmp.ne.s32.totalorder %s351, %s354
    %p363 = scmp.eq.s32.totalorder %s27, 3
    %p364 = por %p362, %p363
    %p365 = scmp.ne.s32.totalorder %s354, %s355
    %p366 = scmp.eq.s32.totalorder %s27, 0
    %p367 = por %p365, %p366
    %p368 = scmp.ne.s32.totalorder %s354, %s355
    %p369 = scmp.eq.s32.totalorder %s28, 3
    %p370 = por %p368, %p369
    %p372 = scmp.ne.s32.totalorder %s355, %s371
    %p373 = scmp.eq.s32.totalorder %s28, 0
    %p374 = por %p372, %p373
    %s375 = ssub.s32 %s30, %s37
    %p376 = scmp.eq.s32.totalorder %s375, 0
    %s378 = sadd.s32 %s377, 1
    %s379 = scalar_select %p376, %s377, %s378
    %p382 = pneg %p376
    %p383 = scmp.eq.s32.totalorder %s22, 3
    %p384 = por %p382, %p383
    %p385 = scmp.ne.s32.totalorder %s377, %s380
    %p386 = scmp.eq.s32.totalorder %s22, 0
    %p387 = por %p385, %p386
    %p388 = scmp.ne.s32.totalorder %s377, %s380
    %p389 = scmp.eq.s32.totalorder %s27, 3
    %p390 = por %p388, %p389
    %p391 = scmp.ne.s32.totalorder %s380, %s381
    %p392 = scmp.eq.s32.totalorder %s27, 0
    %p393 = por %p391, %p392
    %p394 = scmp.ne.s32.totalorder %s380, %s381
    %p395 = scmp.eq.s32.totalorder %s28, 3
    %p396 = por %p394, %p395
    %p398 = scmp.ne.s32.totalorder %s381, %s397
    %p399 = scmp.eq.s32.totalorder %s28, 0
    %p400 = por %p398, %p399
    %s402 = sadd.s32 %s401, 1
    %p405 = scmp.eq.s32.totalorder %s22, 3
    %p406 = scmp.ne.s32.totalorder %s401, %s403
    %p407 = scmp.eq.s32.totalorder %s22, 0
    %p408 = por %p406, %p407
    %p409 = scmp.ne.s32.totalorder %s401, %s403
    %p410 = scmp.eq.s32.totalorder %s27, 3
    %p411 = por %p409, %p410
    %p412 = scmp.ne.s32.totalorder %s403, %s404
    %p413 = scmp.eq.s32.totalorder %s27, 0
    %p414 = por %p412, %p413
    %p415 = scmp.ne.s32.totalorder %s403, %s404
    %p416 = scmp.eq.s32.totalorder %s28, 3
    %p417 = por %p415, %p416
    %p419 = scmp.ne.s32.totalorder %s404, %s418
    %p420 = scmp.eq.s32.totalorder %s28, 0
    %p421 = por %p419, %p420
    %s423 = sadd.s32 %s422, 1
    %p426 = scmp.eq.s32.totalorder %s22, 3
    %p427 = scmp.ne.s32.totalorder %s422, %s424
    %p428 = scmp.eq.s32.totalorder %s22, 0
    %p429 = por %p427, %p428
    %p430 = scmp.ne.s32.totalorder %s422, %s424
    %p431 = scmp.eq.s32.totalorder %s27, 3
    %p432 = por %p430, %p431
    %p433 = scmp.ne.s32.totalorder %s424, %s425
    %p434 = scmp.eq.s32.totalorder %s27, 0
    %p435 = por %p433, %p434
    %p436 = scmp.ne.s32.totalorder %s424, %s425
    %p437 = scmp.eq.s32.totalorder %s28, 3
    %p438 = por %p436, %p437
    %p440 = scmp.ne.s32.totalorder %s425, %s439
    %p441 = scmp.eq.s32.totalorder %s28, 0
    %p442 = por %p440, %p441
    %s443 = ssub.s32 %s29, %s41
    %p444 = scmp.eq.s32.totalorder %s443, 0
    %s446 = sadd.s32 %s445, 1
    %s447 = scalar_select %p444, %s445, %s446
    %p450 = pneg %p444
    %p451 = scmp.eq.s32.totalorder %s22, 3
    %p452 = por %p450, %p451
    %p453 = scmp.ne.s32.totalorder %s445, %s448
    %p454 = scmp.eq.s32.totalorder %s22, 0
    %p455 = por %p453, %p454
    %p456 = scmp.ne.s32.totalorder %s445, %s448
    %p457 = scmp.eq.s32.totalorder %s27, 3
    %p458 = por %p456, %p457
    %p459 = scmp.ne.s32.totalorder %s448, %s449
    %p460 = scmp.eq.s32.totalorder %s27, 0
    %p461 = por %p459, %p460
    %p462 = scmp.ne.s32.totalorder %s448, %s449
    %p463 = scmp.eq.s32.totalorder %s28, 3
    %p464 = por %p462, %p463
    %p466 = scmp.ne.s32.totalorder %s449, %s465
    %p467 = scmp.eq.s32.totalorder %s28, 0
    %p468 = por %p466, %p467
    %p469 = scmp.le.s32.totalorder 1, %s22
    %p470 = scmp.lt.s32.totalorder %s22, 5
    %p471 = pnand %p469, %p470
    %p472 = pneg %p471
    // Predicated region
    $region9: #{sepformer_block.2} parent=5 // pred_check
      _
    $region10: #{sepformer_block.2} parent=5 // pred_check_branch
      %474 = sbr.rel (%p471) target = $region12
    $region11: #{sepformer_block.2} parent=5 // pred_region
      %s475 = ssub.s32 %s22, 1
      // Predicated region
      $region13: #{sepformer_block.2} parent=11 // pred_check
        %p476 = pneg %p81
      $region14: #{sepformer_block.2} parent=11 // pred_check_branch
        %478 = sbr.rel (%p476) target = $region16
      $region15: #{sepformer_block.2} parent=11 // pred_region
        _
      $region16: #{sepformer_block.2} parent=11 // pred_fallthru
        _
      // Predicated region
      $region17: #{sepformer_block.2} parent=11 // pred_check
        %p479 = pneg %p414
      $region18: #{sepformer_block.2} parent=11 // pred_check_branch
        %481 = sbr.rel (%p479) target = $region20
      $region19: #{sepformer_block.2} parent=11 // pred_region
        _
      $region20: #{sepformer_block.2} parent=11 // pred_fallthru
        _
      // Predicated region
      $region21: #{sepformer_block.2} parent=11 // pred_check
        %p482 = pneg %p435
      $region22: #{sepformer_block.2} parent=11 // pred_check_branch
        %484 = sbr.rel (%p482) target = $region24
      $region23: #{sepformer_block.2} parent=11 // pred_region
        _
      $region24: #{sepformer_block.2} parent=11 // pred_fallthru
        _
    $region12: #{sepformer_block.2} parent=5 // pred_fallthru
      _
    %p485 = scmp.lt.s32.totalorder %s22, 4
    // Predicated region
    $region25: #{sepformer_block.2} parent=5 // pred_check
      %p486 = pneg %p485
    $region26: #{sepformer_block.2} parent=5 // pred_check_branch
      %488 = sbr.rel (%p486) target = $region28
    $region27: #{sepformer_block.2} parent=5 // pred_region
      // Predicated region
      $region29: #{sepformer_block.2} parent=27 // pred_check
        %p489 = pneg %p54
      $region30: #{sepformer_block.2} parent=27 // pred_check_branch
        %491 = sbr.rel (%p489) target = $region32
      $region31: #{sepformer_block.2} parent=27 // pred_region
        %s492 = smul.u32 4, %s29
        %p493 = scmp.lt.s32.totalorder %s492, 7
        %s494 = scalar_select %p493, %s492, 7
        %s495 = smul.addr %s494, 8
        %s496 = scalar_lea.vmem %s0, %s495
        %s497 = smul.u32 4, %s29
      $region32: #{sepformer_block.2} parent=27 // pred_fallthru
        _
      // Predicated region
      $region33: #{sepformer_block.2} parent=27 // pred_check
        %p498 = pneg %p101
      $region34: #{sepformer_block.2} parent=27 // pred_check_branch
        %500 = sbr.rel (%p498) target = $region36
      $region35: #{sepformer_block.2} parent=27 // pred_region
        %p501 = scmp.lt.s32.totalorder %s30, 1
        %s502 = scalar_select %p501, %s30, 1
        %s503 = smul.addr %s502, 4
        %s504 = smul.addr %s503, 4
        %s505 = scalar_lea.vmem %s2, %s504
      $region36: #{sepformer_block.2} parent=27 // pred_fallthru
        _
      // Predicated region
      $region37: #{sepformer_block.2} parent=27 // pred_check
        %p506 = pneg %p127
      $region38: #{sepformer_block.2} parent=27 // pred_check_branch
        %508 = sbr.rel (%p506) target = $region40
      $region39: #{sepformer_block.2} parent=27 // pred_region
        %p509 = scmp.lt.s32.totalorder %s30, 1
        %s510 = scalar_select %p509, %s30, 1
        %s511 = scalar_lea.vmem %s3, %s510
      $region40: #{sepformer_block.2} parent=27 // pred_fallthru
        _
      // Predicated region
      $region41: #{sepformer_block.2} parent=27 // pred_check
        %p512 = pneg %p153
      $region42: #{sepformer_block.2} parent=27 // pred_check_branch
        %514 = sbr.rel (%p512) target = $region44
      $region43: #{sepformer_block.2} parent=27 // pred_region
        %p515 = scmp.lt.s32.totalorder %s30, 1
        %s516 = scalar_select %p515, %s30, 1
        %s517 = smul.addr %s516, 4
        %s518 = smul.addr %s517, 4
        %s519 = scalar_lea.vmem %s4, %s518
      $region44: #{sepformer_block.2} parent=27 // pred_fallthru
        _
      // Predicated region
      $region45: #{sepformer_block.2} parent=27 // pred_check
        %p520 = pneg %p179
      $region46: #{sepformer_block.2} parent=27 // pred_check_branch
        %522 = sbr.rel (%p520) target = $region48
      $region47: #{sepformer_block.2} parent=27 // pred_region
        %p523 = scmp.lt.s32.totalorder %s30, 1
        %s524 = scalar_select %p523, %s30, 1
        %s525 = scalar_lea.vmem %s5, %s524
      $region48: #{sepformer_block.2} parent=27 // pred_fallthru
        _
      // Predicated region
      $region49: #{sepformer_block.2} parent=27 // pred_check
        %p526 = pneg %p205
      $region50: #{sepformer_block.2} parent=27 // pred_check_branch
        %528 = sbr.rel (%p526) target = $region52
      $region51: #{sepformer_block.2} parent=27 // pred_region
        %p529 = scmp.lt.s32.totalorder %s30, 1
        %s530 = scalar_select %p529, %s30, 1
        %s531 = scalar_lea.vmem %s6, %s530
      $region52: #{sepformer_block.2} parent=27 // pred_fallthru
        _
      // Predicated region
      $region53: #{sepformer_block.2} parent=27 // pred_check
        %p532 = pneg %p231
      $region54: #{sepformer_block.2} parent=27 // pred_check_branch
        %534 = sbr.rel (%p532) target = $region56
      $region55: #{sepformer_block.2} parent=27 // pred_region
        %p535 = scmp.lt.s32.totalorder %s30, 1
        %s536 = scalar_select %p535, %s30, 1
        %s537 = scalar_lea.vmem %s7, %s536
      $region56: #{sepformer_block.2} parent=27 // pred_fallthru
        _
      // Predicated region
      $region57: #{sepformer_block.2} parent=27 // pred_check
        %p538 = pneg %p257
      $region58: #{sepformer_block.2} parent=27 // pred_check_branch
        %540 = sbr.rel (%p538) target = $region60
      $region59: #{sepformer_block.2} parent=27 // pred_region
        %p541 = scmp.lt.s32.totalorder %s30, 1
        %s542 = scalar_select %p541, %s30, 1
        %s543 = scalar_lea.vmem %s8, %s542
      $region60: #{sepformer_block.2} parent=27 // pred_fallthru
        _
      // Predicated region
      $region61: #{sepformer_block.2} parent=27 // pred_check
        %p544 = pneg %p283
      $region62: #{sepformer_block.2} parent=27 // pred_check_branch
        %546 = sbr.rel (%p544) target = $region64
      $region63: #{sepformer_block.2} parent=27 // pred_region
        %p547 = scmp.lt.s32.totalorder %s30, 1
        %s548 = scalar_select %p547, %s30, 1
        %s549 = scalar_lea.vmem %s9, %s548
      $region64: #{sepformer_block.2} parent=27 // pred_fallthru
        _
      // Predicated region
      $region65: #{sepformer_block.2} parent=27 // pred_check
        %p550 = pneg %p309
      $region66: #{sepformer_block.2} parent=27 // pred_check_branch
        %552 = sbr.rel (%p550) target = $region68
      $region67: #{sepformer_block.2} parent=27 // pred_region
        %p553 = scmp.lt.s32.totalorder %s30, 1
        %s554 = scalar_select %p553, %s30, 1
        %s555 = smul.addr %s554, 4
        %s556 = smul.addr %s555, 4
        %s557 = scalar_lea.vmem %s10, %s556
      $region68: #{sepformer_block.2} parent=27 // pred_fallthru
        _
      // Predicated region
      $region69: #{sepformer_block.2} parent=27 // pred_check
        %p558 = pneg %p335
      $region70: #{sepformer_block.2} parent=27 // pred_check_branch
        %560 = sbr.rel (%p558) target = $region72
      $region71: #{sepformer_block.2} parent=27 // pred_region
        %p561 = scmp.lt.s32.totalorder %s30, 1
        %s562 = scalar_select %p561, %s30, 1
        %s563 = scalar_lea.vmem %s11, %s562
      $region72: #{sepformer_block.2} parent=27 // pred_fallthru
        _
      // Predicated region
      $region73: #{sepformer_block.2} parent=27 // pred_check
        %p564 = pneg %p361
      $region74: #{sepformer_block.2} parent=27 // pred_check_branch
        %566 = sbr.rel (%p564) target = $region76
      $region75: #{sepformer_block.2} parent=27 // pred_region
        %p567 = scmp.lt.s32.totalorder %s30, 1
        %s568 = scalar_select %p567, %s30, 1
        %s569 = smul.addr %s568, 8
        %s570 = smul.addr %s569, 4
        %s571 = scalar_lea.vmem %s12, %s570
      $region76: #{sepformer_block.2} parent=27 // pred_fallthru
        _
      // Predicated region
      $region77: #{sepformer_block.2} parent=27 // pred_check
        %p572 = pneg %p387
      $region78: #{sepformer_block.2} parent=27 // pred_check_branch
        %574 = sbr.rel (%p572) target = $region80
      $region79: #{sepformer_block.2} parent=27 // pred_region
        %p575 = scmp.lt.s32.totalorder %s30, 1
        %s576 = scalar_select %p575, %s30, 1
        %s577 = scalar_lea.vmem %s13, %s576
      $region80: #{sepformer_block.2} parent=27 // pred_fallthru
        _
    $region28: #{sepformer_block.2} parent=5 // pred_fallthru
      _
    %p578 = scmp.le.s32.totalorder 1, %s22
    %p579 = scmp.lt.s32.totalorder %s22, 5
    %p580 = pnand %p578, %p579
    %p581 = pneg %p580
    // Predicated region
    $region81: #{sepformer_block.2} parent=5 // pred_check
      _
    $region82: #{sepformer_block.2} parent=5 // pred_check_branch
      %583 = sbr.rel (%p580) target = $region84
    $region83: #{sepformer_block.2} parent=5 // pred_region
      %s584 = ssub.s32 %s22, 1
      %s585 = smul.u32 4, %s31
      %p586 = scmp.lt.s32.totalorder %s585, 7
      %s587 = scalar_select %p586, %s585, 7
      %s588 = smul.addr %s587, 8
      %s589 = scalar_lea.vmem %s0, %s588
      %p590 = pneg %p60
      %p591 = pneg %p57
      %p592 = pneg %p81
      %p593 = pneg %p78
      %p594 = scmp.lt.s32.totalorder %s32, 1
      %s595 = scalar_select %p594, %s32, 1
      %s596 = smul.addr %s595, 4
      %s597 = smul.addr %s596, 4
      %s598 = scalar_lea.vmem %s2, %s597
      %p599 = pneg %p107
      %p600 = pneg %p104
      %p601 = scmp.lt.s32.totalorder %s32, 1
      %s602 = scalar_select %p601, %s32, 1
      %s603 = scalar_lea.vmem %s3, %s602
      %p604 = pneg %p133
      %p605 = pneg %p130
      %p606 = scmp.lt.s32.totalorder %s32, 1
      %s607 = scalar_select %p606, %s32, 1
      %s608 = smul.addr %s607, 4
      %s609 = smul.addr %s608, 4
      %s610 = scalar_lea.vmem %s4, %s609
      %p611 = pneg %p159
      %p612 = pneg %p156
      %p613 = scmp.lt.s32.totalorder %s32, 1
      %s614 = scalar_select %p613, %s32, 1
      %s615 = scalar_lea.vmem %s5, %s614
      %p616 = pneg %p185
      %p617 = pneg %p182
      %p618 = scmp.lt.s32.totalorder %s32, 1
      %s619 = scalar_select %p618, %s32, 1
      %s620 = scalar_lea.vmem %s6, %s619
      %p621 = pneg %p211
      %p622 = pneg %p208
      %p623 = scmp.lt.s32.totalorder %s32, 1
      %s624 = scalar_select %p623, %s32, 1
      %s625 = scalar_lea.vmem %s7, %s624
      %p626 = pneg %p237
      %p627 = pneg %p234
      %p628 = scmp.lt.s32.totalorder %s32, 1
      %s629 = scalar_select %p628, %s32, 1
      %s630 = scalar_lea.vmem %s8, %s629
      %p631 = pneg %p263
      %p632 = pneg %p260
      %p633 = scmp.lt.s32.totalorder %s32, 1
      %s634 = scalar_select %p633, %s32, 1
      %s635 = scalar_lea.vmem %s9, %s634
      %p636 = pneg %p289
      %p637 = pneg %p286
      %p638 = scmp.lt.s32.totalorder %s32, 1
      %s639 = scalar_select %p638, %s32, 1
      %s640 = smul.addr %s639, 4
      %s641 = smul.addr %s640, 4
      %s642 = scalar_lea.vmem %s10, %s641
      %p643 = pneg %p315
      %p644 = pneg %p312
      %p645 = scmp.lt.s32.totalorder %s32, 1
      %s646 = scalar_select %p645, %s32, 1
      %s647 = scalar_lea.vmem %s11, %s646
      %p648 = pneg %p341
      %p649 = pneg %p338
      %p650 = scmp.lt.s32.totalorder %s32, 1
      %s651 = scalar_select %p650, %s32, 1
      %s652 = smul.addr %s651, 8
      %s653 = smul.addr %s652, 4
      %s654 = scalar_lea.vmem %s12, %s653
      %p655 = pneg %p367
      %p656 = pneg %p364
      %p657 = scmp.lt.s32.totalorder %s32, 1
      %s658 = scalar_select %p657, %s32, 1
      %s659 = scalar_lea.vmem %s13, %s658
      %p660 = pneg %p393
      %p661 = pneg %p390
      %p662 = pneg %p414
      %p663 = pneg %p411
      %p664 = pneg %p435
      %p665 = pneg %p432
      %p666 = pneg %p461
      %p667 = pneg %p458
      %s668 = smul.u32 4, %s31
      %p669 = scmp.lt.s32.totalorder %s668, 7
      %s670 = scalar_select %p669, %s668, 7
      %s671 = smul.addr %s670, 8
      %s672 = scalar_lea.vmem %s16, %s671
      %s673 = smul.u32 4, %s31
      %p674 = scmp.lt.s32.totalorder %s673, 7
      %s675 = scalar_select %p674, %s673, 7
      %s676 = smul.addr %s675, 8
      %s677 = scalar_lea.vmem %s0, %s676
      %s678 = smul.u32 4, %s31
      %p679 = scmp.lt.s32.totalorder %s32, 1
      %s680 = scalar_select %p679, %s32, 1
      %s681 = smul.addr %s680, 4
      %s682 = smul.addr %s681, 4
      %s683 = scalar_lea.vmem %s2, %s682
      %p684 = scmp.lt.s32.totalorder %s32, 1
      %s685 = scalar_select %p684, %s32, 1
      %s686 = scalar_lea.vmem %s3, %s685
      %p687 = scmp.lt.s32.totalorder %s32, 1
      %s688 = scalar_select %p687, %s32, 1
      %s689 = smul.addr %s688, 4
      %s690 = smul.addr %s689, 4
      %s691 = scalar_lea.vmem %s4, %s690
      %p692 = scmp.lt.s32.totalorder %s32, 1
      %s693 = scalar_select %p692, %s32, 1
      %s694 = scalar_lea.vmem %s5, %s693
      %p695 = scmp.lt.s32.totalorder %s32, 1
      %s696 = scalar_select %p695, %s32, 1
      %s697 = scalar_lea.vmem %s6, %s696
      %p698 = scmp.lt.s32.totalorder %s32, 1
      %s699 = scalar_select %p698, %s32, 1
      %s700 = scalar_lea.vmem %s7, %s699
      %p701 = scmp.lt.s32.totalorder %s32, 1
      %s702 = scalar_select %p701, %s32, 1
      %s703 = scalar_lea.vmem %s8, %s702
      %p704 = scmp.lt.s32.totalorder %s32, 1
      %s705 = scalar_select %p704, %s32, 1
      %s706 = scalar_lea.vmem %s9, %s705
      %p707 = scmp.lt.s32.totalorder %s32, 1
      %s708 = scalar_select %p707, %s32, 1
      %s709 = smul.addr %s708, 4
      %s710 = smul.addr %s709, 4
      %s711 = scalar_lea.vmem %s10, %s710
      %p712 = scmp.lt.s32.totalorder %s32, 1
      %s713 = scalar_select %p712, %s32, 1
      %s714 = scalar_lea.vmem %s11, %s713
      %p715 = scmp.lt.s32.totalorder %s32, 1
      %s716 = scalar_select %p715, %s32, 1
      %s717 = smul.addr %s716, 8
      %s718 = smul.addr %s717, 4
      %s719 = scalar_lea.vmem %s12, %s718
      %p720 = scmp.lt.s32.totalorder %s32, 1
      %s721 = scalar_select %p720, %s32, 1
      %s722 = scalar_lea.vmem %s13, %s721
      %s723 = smul.u32 4, %s31
      %p724 = scmp.lt.s32.totalorder %s723, 7
      %s725 = scalar_select %p724, %s723, 7
      %s726 = smul.addr %s725, 8
      %s727 = scalar_lea.vmem %s16, %s726
      %s728 = smul.u32 4, %s31
      %p730 = scmp.eq.s32.totalorder %s32, 0
      // Predicated region
      $region85: #{sepformer_block.2} parent=83 // pred_check
        %p731 = pneg %p730
      $region86: #{sepformer_block.2} parent=83 // pred_check_branch
        %733 = sbr.rel (%p731) target = $region88
      $region87: #{sepformer_block.2} parent=83 // pred_region
        %v734 = vld [vmem:[%s677] sm:$0xff]
        %v735 = vld [vmem:[%s677 + $0x8] sm:$0xff]
        %v736 = vld [vmem:[%s677 + $0x10] sm:$0xff]
        %v737 = vld [vmem:[%s677 + $0x18] sm:$0xff]
        %v738 = vmul.f32 %v734, 2.0
        %v739 = vmul.f32 %v735, 2.0
        %v740 = vmul.f32 %v736, 2.0
        %v741 = vmul.f32 %v737, 2.0
        %v742 = vld [vmem:[%s1] sm:$0xff]
        %v743 = vadd.f32 %v738, %v742
        %v744 = vadd.f32 %v739, %v742
        %v745 = vadd.f32 %v740, %v742
        %v746 = vadd.f32 %v741, %v742
        %vm747 = vcmask 261120
        %748 = vst.msk [vmem:[#allocation2] sm:$0xff] %vm747, %v743
        %749 = vst.msk [vmem:[#allocation2 + $0x8] sm:$0xff] %vm747, %v744
        %750 = vst.msk [vmem:[#allocation2 + $0x10] sm:$0xff] %vm747, %v745
        %751 = vst.msk [vmem:[#allocation2 + $0x18] sm:$0xff] %vm747, %v746
      $region88: #{sepformer_block.2} parent=83 // pred_fallthru
        _
      %v752 = vld [vmem:[%s683] sm:$0xf]
      %v753 = vld [vmem:[%s683 + $0x4] sm:$0xf]
      %v754 = vld [vmem:[%s683 + $0x8] sm:$0xf]
      %v755 = vld [vmem:[%s683 + $0xc] sm:$0xf]
      %v756 = vld [vmem:[%s686] sm:$0x1]
      %v757 = vld [vmem:[%s691] sm:$0xf]
      %v758 = vld [vmem:[%s691 + $0x4] sm:$0xf]
      %v759 = vld [vmem:[%s691 + $0x8] sm:$0xf]
      %v760 = vld [vmem:[%s691 + $0xc] sm:$0xf]
      %v761 = vld [vmem:[%s694] sm:$0x1]
      %v762 = vld [vmem:[%s697] sm:$0x1]
      %v763 = vld [vmem:[%s700] sm:$0x1]
      %v764 = vld [vmem:[%s703] sm:$0x1]
      %v765 = vld [vmem:[%s706] sm:$0x1]
      %v766 = vld [vmem:[%s711] sm:$0xf]
      %v767 = vld [vmem:[%s711 + $0x4] sm:$0xf]
      %v768 = vld [vmem:[%s711 + $0x8] sm:$0xf]
      %v769 = vld [vmem:[%s711 + $0xc] sm:$0xf]
      %v770 = vld [vmem:[%s714] sm:$0x1]
      %v771 = vld [vmem:[%s719] sm:$0xf]
      %v772 = vld [vmem:[%s719 + $0x4] sm:$0xf]
      %v773 = vld [vmem:[%s719 + $0x8] sm:$0xf]
      %v774 = vld [vmem:[%s719 + $0xc] sm:$0xf]
      %v775 = vld [vmem:[%s719 + $0x10] sm:$0xf]
      %v776 = vld [vmem:[%s719 + $0x14] sm:$0xf]
      %v777 = vld [vmem:[%s719 + $0x18] sm:$0xf]
      %v778 = vld [vmem:[%s719 + $0x1c] sm:$0xf]
      %v779 = vld [vmem:[%s722] sm:$0x1]
      %v780 = vld [vmem:[#allocation2] sm:$0xff]
      %v781 = vld [vmem:[#allocation2 + $0x8] sm:$0xff]
      %v782 = vld [vmem:[#allocation2 + $0x10] sm:$0xff]
      %v783 = vld [vmem:[#allocation2 + $0x18] sm:$0xff]
      %v784 = vpack.c.bf16 %v781, %v780
      %v785 = vpack.c.bf16 %v783, %v782
      %v787 = vlaneseq
      %v788 = vshrl.u32 %v787, 7
      %v789 = vsub.s32 0, %v788
      %v790 = vrot.slane %v756, %v789
      %v796 = vunpack.c.l.b16 %v752
      %v797 = vunpack.c.l.b16 %v753
      %v798 = vunpack.c.l.b16 %v754
      %v799 = vunpack.c.l.b16 %v755
      %v800 = vpack.c.b16 %v797, %v796
      %v801 = vpack.c.b16 %v799, %v798
      %vm804 = vcmask 261120
      %v806 = vsel %vm804, %v784, 0
      %v809 = vsel %vm804, %v785, 0
      %811 = vmatprep.subr.bf16.mxu0 0
      %812 = vmatpush1.bf16.msra.mxu0 0
      %813 = vmatprep.subr.bf16.mxu0 0
      %814 = vmatpush1.bf16.msra.mxu0 0
      %815 = vmatprep.subr.bf16.mxu0 0
      %816 = vmatpush1.bf16.msra.mxu0 0
      %817 = vmatprep.subr.bf16.mxu0 0
      %818 = vmatpush1.bf16.msra.mxu0 0
      %819 = vmatprep.subr.bf16.mxu0 0
      %820 = vmatpush1.bf16.msra.mxu0 0
      %821 = vmatprep.subr.bf16.mxu0 0
      %822 = vmatpush1.bf16.msra.mxu0 0
      %823 = vmatprep.subr.bf16.mxu0 0
      %824 = vmatpush1.bf16.msra.mxu0 %v801
      %825 = vmatprep.subr.bf16.mxu0 0
      %826 = vmatpush1.bf16.msra.mxu0 %v800
      %827 = vmatprep.subr.bf16.mxu0 0
      %828 = vmatpush2.bf16.msra.mxu0 0
      %829 = vmatprep.subr.bf16.mxu0 0
      %830 = vmatpush2.bf16.msra.mxu0 0
      %831 = vmatprep.subr.bf16.mxu0 0
      %832 = vmatpush2.bf16.msra.mxu0 0
      %833 = vmatprep.subr.bf16.mxu0 0
      %834 = vmatpush2.bf16.msra.mxu0 0
      %835 = vmatprep.subr.bf16.mxu0 0
      %836 = vmatpush2.bf16.msra.mxu0 0
      %837 = vmatprep.subr.bf16.mxu0 0
      %838 = vmatpush2.bf16.msra.mxu0 0
      %839 = vmatprep.subr.bf16.mxu0 0
      %840 = vmatpush2.bf16.msra.mxu0 0
      %841 = vmatprep.subr.bf16.mxu0 0
      %842 = vmatpush2.bf16.msra.mxu0 0
      %843 = vmatprep.mubr.bf16.mxu0 0
      %844 = vmatmul.mubr.bf16.gmra.mxu0 %v806
      %v845 = vpop.f32.mrf.mxu0
      %v846 = vadd.f32 %v790, %v845
      %v847 = vpop.f32.mrf.mxu0
      %v848 = vpop.f32.mrf.mxu0
      %v849 = vadd.f32 %v790, %v848
      %v850 = vpop.f32.mrf.mxu0
      %851 = vmatprep.mubr.bf16.mxu0 0
      %852 = vmatmul.mubr.bf16.gmra.mxu0 %v809
      %v853 = vpop.f32.mrf.mxu0
      %v854 = vadd.f32 %v790, %v853
      %v855 = vpop.f32.mrf.mxu0
      %v856 = vpop.f32.mrf.mxu0
      %v857 = vadd.f32 %v790, %v856
      %v858 = vpop.f32.mrf.mxu0
      %859 = vdwg.mxu0
      %v860 = vpack.c.bf16 %v846, %v846
      %v861 = vpack.c.bf16 %v849, %v849
      %v862 = vpack.c.bf16 %v854, %v854
      %v863 = vpack.c.bf16 %v857, %v857
      %865 = vrot.lane.b32.xlu0 %v860, 96
      %v866 = vpop.permute.xlu0 %865
      %vm867 = vcmask 130048
      %v869 = vsel %vm867, %v860, 0
      %v872 = vsel %vm867, %v866, 0
      %874 = vmatprep.subr.bf16.mxu0 0
      %875 = vmatpush1.bf16.xpose.msra.mxu0 0
      %876 = vmatprep.subr.bf16.mxu0 0
      %877 = vmatpush1.bf16.xpose.msra.mxu0 0
      %878 = vmatprep.subr.bf16.mxu0 0
      %879 = vmatpush1.bf16.xpose.msra.mxu0 0
      %880 = vmatprep.subr.bf16.mxu0 0
      %881 = vmatpush1.bf16.xpose.msra.mxu0 0
      %882 = vmatprep.subr.bf16.mxu0 0
      %883 = vmatpush1.bf16.xpose.msra.mxu0 0
      %884 = vmatprep.subr.bf16.mxu0 0
      %885 = vmatpush1.bf16.xpose.msra.mxu0 0
      %886 = vmatprep.subr.bf16.mxu0 0
      %887 = vmatpush1.bf16.xpose.msra.mxu0 0
      %888 = vmatprep.subr.bf16.mxu0 0
      %889 = vmatpush1.bf16.xpose.msra.mxu0 %v872
      %890 = vmatprep.subr.bf16.mxu0 0
      %891 = vmatpush2.bf16.xpose.msra.mxu0 0
      %892 = vmatprep.subr.bf16.mxu0 0
      %893 = vmatpush2.bf16.xpose.msra.mxu0 0
      %894 = vmatprep.subr.bf16.mxu0 0
      %895 = vmatpush2.bf16.xpose.msra.mxu0 0
      %896 = vmatprep.subr.bf16.mxu0 0
      %897 = vmatpush2.bf16.xpose.msra.mxu0 0
      %898 = vmatprep.subr.bf16.mxu0 0
      %899 = vmatpush2.bf16.xpose.msra.mxu0 0
      %900 = vmatprep.subr.bf16.mxu0 0
      %901 = vmatpush2.bf16.xpose.msra.mxu0 0
      %902 = vmatprep.subr.bf16.mxu0 0
      %903 = vmatpush2.bf16.xpose.msra.mxu0 0
      %904 = vmatprep.subr.bf16.mxu0 0
      %905 = vmatpush2.bf16.xpose.msra.mxu0 0
      %906 = vmatprep.mubr.bf16.mxu0 0
      %907 = vmatmul.mubr.bf16.gmra.mxu0 %v869
      %v908 = vpop.f32.mrf.mxu0
      %v909 = vadd.f32 0.0, %v908
      %v910 = vpop.f32.mrf.mxu0
      %v911 = vpop.f32.mrf.mxu0
      %v912 = vpop.f32.mrf.mxu0
      %913 = vdwg.mxu0
      %915 = vrot.lane.b32.xlu0 %v861, 96
      %v916 = vpop.permute.xlu0 %915
      %v918 = vsel %vm867, %v861, 0
      %v921 = vsel %vm867, %v916, 0
      %923 = vmatprep.subr.bf16.mxu0 0
      %924 = vmatpush1.bf16.xpose.msra.mxu0 0
      %925 = vmatprep.subr.bf16.mxu0 0
      %926 = vmatpush1.bf16.xpose.msra.mxu0 0
      %927 = vmatprep.subr.bf16.mxu0 0
      %928 = vmatpush1.bf16.xpose.msra.mxu0 0
      %929 = vmatprep.subr.bf16.mxu0 0
      %930 = vmatpush1.bf16.xpose.msra.mxu0 0
      %931 = vmatprep.subr.bf16.mxu0 0
      %932 = vmatpush1.bf16.xpose.msra.mxu0 0
      %933 = vmatprep.subr.bf16.mxu0 0
      %934 = vmatpush1.bf16.xpose.msra.mxu0 0
      %935 = vmatprep.subr.bf16.mxu0 0
      %936 = vmatpush1.bf16.xpose.msra.mxu0 0
      %937 = vmatprep.subr.bf16.mxu0 0
      %938 = vmatpush1.bf16.xpose.msra.mxu0 %v921
      %939 = vmatprep.subr.bf16.mxu0 0
      %940 = vmatpush2.bf16.xpose.msra.mxu0 0
      %941 = vmatprep.subr.bf16.mxu0 0
      %942 = vmatpush2.bf16.xpose.msra.mxu0 0
      %943 = vmatprep.subr.bf16.mxu0 0
      %944 = vmatpush2.bf16.xpose.msra.mxu0 0
      %945 = vmatprep.subr.bf16.mxu0 0
      %946 = vmatpush2.bf16.xpose.msra.mxu0 0
      %947 = vmatprep.subr.bf16.mxu0 0
      %948 = vmatpush2.bf16.xpose.msra.mxu0 0
      %949 = vmatprep.subr.bf16.mxu0 0
      %950 = vmatpush2.bf16.xpose.msra.mxu0 0
      %951 = vmatprep.subr.bf16.mxu0 0
      %952 = vmatpush2.bf16.xpose.msra.mxu0 0
      %953 = vmatprep.subr.bf16.mxu0 0
      %954 = vmatpush2.bf16.xpose.msra.mxu0 0
      %955 = vmatprep.mubr.bf16.mxu0 0
      %956 = vmatmul.mubr.bf16.gmra.mxu0 %v918
      %v957 = vpop.f32.mrf.mxu0
      %v958 = vadd.f32 0.0, %v957
      %v959 = vpop.f32.mrf.mxu0
      %v960 = vpop.f32.mrf.mxu0
      %v961 = vpop.f32.mrf.mxu0
      %962 = vdwg.mxu0
      %964 = vrot.lane.b32.xlu0 %v862, 96
      %v965 = vpop.permute.xlu0 %964
      %v967 = vsel %vm867, %v862, 0
      %v970 = vsel %vm867, %v965, 0
      %972 = vmatprep.subr.bf16.mxu0 0
      %973 = vmatpush1.bf16.xpose.msra.mxu0 0
      %974 = vmatprep.subr.bf16.mxu0 0
      %975 = vmatpush1.bf16.xpose.msra.mxu0 0
      %976 = vmatprep.subr.bf16.mxu0 0
      %977 = vmatpush1.bf16.xpose.msra.mxu0 0
      %978 = vmatprep.subr.bf16.mxu0 0
      %979 = vmatpush1.bf16.xpose.msra.mxu0 0
      %980 = vmatprep.subr.bf16.mxu0 0
      %981 = vmatpush1.bf16.xpose.msra.mxu0 0
      %982 = vmatprep.subr.bf16.mxu0 0
      %983 = vmatpush1.bf16.xpose.msra.mxu0 0
      %984 = vmatprep.subr.bf16.mxu0 0
      %985 = vmatpush1.bf16.xpose.msra.mxu0 0
      %986 = vmatprep.subr.bf16.mxu0 0
      %987 = vmatpush1.bf16.xpose.msra.mxu0 %v970
      %988 = vmatprep.subr.bf16.mxu0 0
      %989 = vmatpush2.bf16.xpose.msra.mxu0 0
      %990 = vmatprep.subr.bf16.mxu0 0
      %991 = vmatpush2.bf16.xpose.msra.mxu0 0
      %992 = vmatprep.subr.bf16.mxu0 0
      %993 = vmatpush2.bf16.xpose.msra.mxu0 0
      %994 = vmatprep.subr.bf16.mxu0 0
      %995 = vmatpush2.bf16.xpose.msra.mxu0 0
      %996 = vmatprep.subr.bf16.mxu0 0
      %997 = vmatpush2.bf16.xpose.msra.mxu0 0
      %998 = vmatprep.subr.bf16.mxu0 0
      %999 = vmatpush2.bf16.xpose.msra.mxu0 0
      %1000 = vmatprep.subr.bf16.mxu0 0
      %1001 = vmatpush2.bf16.xpose.msra.mxu0 0
      %1002 = vmatprep.subr.bf16.mxu0 0
      %1003 = vmatpush2.bf16.xpose.msra.mxu0 0
      %1004 = vmatprep.mubr.bf16.mxu0 0
      %1005 = vmatmul.mubr.bf16.gmra.mxu0 %v967
      %v1006 = vpop.f32.mrf.mxu0
      %v1007 = vadd.f32 0.0, %v1006
      %v1008 = vpop.f32.mrf.mxu0
      %v1009 = vpop.f32.mrf.mxu0
      %v1010 = vpop.f32.mrf.mxu0
      %1011 = vdwg.mxu0
      %1013 = vrot.lane.b32.xlu0 %v863, 96
      %v1014 = vpop.permute.xlu0 %1013
      %v1016 = vsel %vm867, %v863, 0
      %v1019 = vsel %vm867, %v1014, 0
      %1021 = vmatprep.subr.bf16.mxu0 0
      %1022 = vmatpush1.bf16.xpose.msra.mxu0 0
      %1023 = vmatprep.subr.bf16.mxu0 0
      %1024 = vmatpush1.bf16.xpose.msra.mxu0 0
      %1025 = vmatprep.subr.bf16.mxu0 0
      %1026 = vmatpush1.bf16.xpose.msra.mxu0 0
      %1027 = vmatprep.subr.bf16.mxu0 0
      %1028 = vmatpush1.bf16.xpose.msra.mxu0 0
      %1029 = vmatprep.subr.bf16.mxu0 0
      %1030 = vmatpush1.bf16.xpose.msra.mxu0 0
      %1031 = vmatprep.subr.bf16.mxu0 0
      %1032 = vmatpush1.bf16.xpose.msra.mxu0 0
      %1033 = vmatprep.subr.bf16.mxu0 0
      %1034 = vmatpush1.bf16.xpose.msra.mxu0 0
      %1035 = vmatprep.subr.bf16.mxu0 0
      %1036 = vmatpush1.bf16.xpose.msra.mxu0 %v1019
      %1037 = vmatprep.subr.bf16.mxu0 0
      %1038 = vmatpush2.bf16.xpose.msra.mxu0 0
      %1039 = vmatprep.subr.bf16.mxu0 0
      %1040 = vmatpush2.bf16.xpose.msra.mxu0 0
      %1041 = vmatprep.subr.bf16.mxu0 0
      %1042 = vmatpush2.bf16.xpose.msra.mxu0 0
      %1043 = vmatprep.subr.bf16.mxu0 0
      %1044 = vmatpush2.bf16.xpose.msra.mxu0 0
      %1045 = vmatprep.subr.bf16.mxu0 0
      %1046 = vmatpush2.bf16.xpose.msra.mxu0 0
      %1047 = vmatprep.subr.bf16.mxu0 0
      %1048 = vmatpush2.bf16.xpose.msra.mxu0 0
      %1049 = vmatprep.subr.bf16.mxu0 0
      %1050 = vmatpush2.bf16.xpose.msra.mxu0 0
      %1051 = vmatprep.subr.bf16.mxu0 0
      %1052 = vmatpush2.bf16.xpose.msra.mxu0 0
      %1053 = vmatprep.mubr.bf16.mxu0 0
      %1054 = vmatmul.mubr.bf16.gmra.mxu0 %v1016
      %v1055 = vpop.f32.mrf.mxu0
      %v1056 = vadd.f32 0.0, %v1055
      %v1057 = vpop.f32.mrf.mxu0
      %v1058 = vpop.f32.mrf.mxu0
      %v1059 = vpop.f32.mrf.mxu0
      %1060 = vdwg.mxu0
      %vm1061 = vcmask 64512
      %v1062 = vsel %vm1061, %v909, -inf
      %1063 = vmax.xlane.f32.xlu0 %v1062
      %v1064 = vpop.xlane.xlu0 %1063
      %v1065 = vsel %vm1061, %v958, -inf
      %1066 = vmax.xlane.f32.xlu0 %v1065
      %v1067 = vpop.xlane.xlu0 %1066
      %v1068 = vsel %vm1061, %v1007, -inf
      %1069 = vmax.xlane.f32.xlu0 %v1068
      %v1070 = vpop.xlane.xlu0 %1069
      %v1071 = vsel %vm1061, %v1056, -inf
      %1072 = vmax.xlane.f32.xlu0 %v1071
      %v1073 = vpop.xlane.xlu0 %1072
      %v1074 = vsub.f32 %v909, %v1064
      %v1075 = vsub.f32 %v958, %v1067
      %v1076 = vsub.f32 %v1007, %v1070
      %v1077 = vsub.f32 %v1056, %v1073
      %v1078 = vmul.f32 %v1074, 1.442695
      %v1079 = vpow.pop %v1078
      %v1080 = vmul.f32 %v1075, 1.442695
      %v1081 = vpow.pop %v1080
      %v1082 = vmul.f32 %v1076, 1.442695
      %v1083 = vpow.pop %v1082
      %v1084 = vmul.f32 %v1077, 1.442695
      %v1085 = vpow.pop %v1084
      %v1086 = vsel %vm1061, %v1079, 0.0
      %1087 = vadd.xlane.f32.xlu0 %v1086
      %v1088 = vpop.xlane.xlu0 %1087
      %v1089 = vsel %vm1061, %v1081, 0.0
      %1090 = vadd.xlane.f32.xlu0 %v1089
      %v1091 = vpop.xlane.xlu0 %1090
      %v1092 = vsel %vm1061, %v1083, 0.0
      %1093 = vadd.xlane.f32.xlu0 %v1092
      %v1094 = vpop.xlane.xlu0 %1093
      %v1095 = vsel %vm1061, %v1085, 0.0
      %1096 = vadd.xlane.f32.xlu0 %v1095
      %v1097 = vpop.xlane.xlu0 %1096
      %v1098 = vrcp.pop %v1088
      %v1099 = vrcp.pop %v1091
      %v1100 = vrcp.pop %v1094
      %v1101 = vrcp.pop %v1097
      %v1102 = vmul.f32 %v1079, %v1098
      %v1103 = vmul.f32 %v1081, %v1099
      %v1104 = vmul.f32 %v1083, %v1100
      %v1105 = vmul.f32 %v1085, %v1101
      %v1106 = vpack.c.bf16 %v1102, %v1102
      %v1107 = vpack.c.bf16 %v1103, %v1103
      %v1108 = vpack.c.bf16 %v1104, %v1104
      %v1109 = vpack.c.bf16 %v1105, %v1105
      %1110 = vrot.lane.b32.xlu0 %v860, 64
      %v1111 = vpop.permute.xlu0 %1110
      %v1113 = vsel %vm1061, %v1106, 0
      %vm1115 = vcmask 1043456
      %v1117 = vsel %vm1115, %v1111, 0
      %1119 = vmatprep.subr.bf16.mxu0 0
      %1120 = vmatpush1.bf16.msra.mxu0 0
      %1121 = vmatprep.subr.bf16.mxu0 0
      %1122 = vmatpush1.bf16.msra.mxu0 0
      %1123 = vmatprep.subr.bf16.mxu0 0
      %1124 = vmatpush1.bf16.msra.mxu0 0
      %1125 = vmatprep.subr.bf16.mxu0 0
      %1126 = vmatpush1.bf16.msra.mxu0 0
      %1127 = vmatprep.subr.bf16.mxu0 0
      %1128 = vmatpush1.bf16.msra.mxu0 0
      %1129 = vmatprep.subr.bf16.mxu0 0
      %1130 = vmatpush1.bf16.msra.mxu0 0
      %1131 = vmatprep.subr.bf16.mxu0 0
      %1132 = vmatpush1.bf16.msra.mxu0 0
      %1133 = vmatprep.subr.bf16.mxu0 0
      %1134 = vmatpush1.bf16.msra.mxu0 %v1117
      %1135 = vmatprep.subr.bf16.mxu0 0
      %1136 = vmatpush2.bf16.msra.mxu0 0
      %1137 = vmatprep.subr.bf16.mxu0 0
      %1138 = vmatpush2.bf16.msra.mxu0 0
      %1139 = vmatprep.subr.bf16.mxu0 0
      %1140 = vmatpush2.bf16.msra.mxu0 0
      %1141 = vmatprep.subr.bf16.mxu0 0
      %1142 = vmatpush2.bf16.msra.mxu0 0
      %1143 = vmatprep.subr.bf16.mxu0 0
      %1144 = vmatpush2.bf16.msra.mxu0 0
      %1145 = vmatprep.subr.bf16.mxu0 0
      %1146 = vmatpush2.bf16.msra.mxu0 0
      %1147 = vmatprep.subr.bf16.mxu0 0
      %1148 = vmatpush2.bf16.msra.mxu0 0
      %1149 = vmatprep.subr.bf16.mxu0 0
      %1150 = vmatpush2.bf16.msra.mxu0 0
      %1151 = vmatprep.mubr.bf16.mxu0 0
      %1152 = vmatmul.mubr.bf16.gmra.mxu0 %v1113
      %v1153 = vpop.f32.mrf.mxu0
      %v1154 = vadd.f32 0.0, %v1153
      %v1155 = vpop.f32.mrf.mxu0
      %v1156 = vpop.f32.mrf.mxu0
      %v1157 = vpop.f32.mrf.mxu0
      %1158 = vdwg.mxu0
      %1159 = vrot.lane.b32.xlu0 %v861, 64
      %v1160 = vpop.permute.xlu0 %1159
      %v1162 = vsel %vm1061, %v1107, 0
      %v1165 = vsel %vm1115, %v1160, 0
      %1167 = vmatprep.subr.bf16.mxu0 0
      %1168 = vmatpush1.bf16.msra.mxu0 0
      %1169 = vmatprep.subr.bf16.mxu0 0
      %1170 = vmatpush1.bf16.msra.mxu0 0
      %1171 = vmatprep.subr.bf16.mxu0 0
      %1172 = vmatpush1.bf16.msra.mxu0 0
      %1173 = vmatprep.subr.bf16.mxu0 0
      %1174 = vmatpush1.bf16.msra.mxu0 0
      %1175 = vmatprep.subr.bf16.mxu0 0
      %1176 = vmatpush1.bf16.msra.mxu0 0
      %1177 = vmatprep.subr.bf16.mxu0 0
      %1178 = vmatpush1.bf16.msra.mxu0 0
      %1179 = vmatprep.subr.bf16.mxu0 0
      %1180 = vmatpush1.bf16.msra.mxu0 0
      %1181 = vmatprep.subr.bf16.mxu0 0
      %1182 = vmatpush1.bf16.msra.mxu0 %v1165
      %1183 = vmatprep.subr.bf16.mxu0 0
      %1184 = vmatpush2.bf16.msra.mxu0 0
      %1185 = vmatprep.subr.bf16.mxu0 0
      %1186 = vmatpush2.bf16.msra.mxu0 0
      %1187 = vmatprep.subr.bf16.mxu0 0
      %1188 = vmatpush2.bf16.msra.mxu0 0
      %1189 = vmatprep.subr.bf16.mxu0 0
      %1190 = vmatpush2.bf16.msra.mxu0 0
      %1191 = vmatprep.subr.bf16.mxu0 0
      %1192 = vmatpush2.bf16.msra.mxu0 0
      %1193 = vmatprep.subr.bf16.mxu0 0
      %1194 = vmatpush2.bf16.msra.mxu0 0
      %1195 = vmatprep.subr.bf16.mxu0 0
      %1196 = vmatpush2.bf16.msra.mxu0 0
      %1197 = vmatprep.subr.bf16.mxu0 0
      %1198 = vmatpush2.bf16.msra.mxu0 0
      %1199 = vmatprep.mubr.bf16.mxu0 0
      %1200 = vmatmul.mubr.bf16.gmra.mxu0 %v1162
      %v1201 = vpop.f32.mrf.mxu0
      %v1202 = vadd.f32 0.0, %v1201
      %v1203 = vpop.f32.mrf.mxu0
      %v1204 = vpop.f32.mrf.mxu0
      %v1205 = vpop.f32.mrf.mxu0
      %1206 = vdwg.mxu0
      %1207 = vrot.lane.b32.xlu0 %v862, 64
      %v1208 = vpop.permute.xlu0 %1207
      %v1210 = vsel %vm1061, %v1108, 0
      %v1213 = vsel %vm1115, %v1208, 0
      %1215 = vmatprep.subr.bf16.mxu0 0
      %1216 = vmatpush1.bf16.msra.mxu0 0
      %1217 = vmatprep.subr.bf16.mxu0 0
      %1218 = vmatpush1.bf16.msra.mxu0 0
      %1219 = vmatprep.subr.bf16.mxu0 0
      %1220 = vmatpush1.bf16.msra.mxu0 0
      %1221 = vmatprep.subr.bf16.mxu0 0
      %1222 = vmatpush1.bf16.msra.mxu0 0
      %1223 = vmatprep.subr.bf16.mxu0 0
      %1224 = vmatpush1.bf16.msra.mxu0 0
      %1225 = vmatprep.subr.bf16.mxu0 0
      %1226 = vmatpush1.bf16.msra.mxu0 0
      %1227 = vmatprep.subr.bf16.mxu0 0
      %1228 = vmatpush1.bf16.msra.mxu0 0
      %1229 = vmatprep.subr.bf16.mxu0 0
      %1230 = vmatpush1.bf16.msra.mxu0 %v1213
      %1231 = vmatprep.subr.bf16.mxu0 0
      %1232 = vmatpush2.bf16.msra.mxu0 0
      %1233 = vmatprep.subr.bf16.mxu0 0
      %1234 = vmatpush2.bf16.msra.mxu0 0
      %1235 = vmatprep.subr.bf16.mxu0 0
      %1236 = vmatpush2.bf16.msra.mxu0 0
      %1237 = vmatprep.subr.bf16.mxu0 0
      %1238 = vmatpush2.bf16.msra.mxu0 0
      %1239 = vmatprep.subr.bf16.mxu0 0
      %1240 = vmatpush2.bf16.msra.mxu0 0
      %1241 = vmatprep.subr.bf16.mxu0 0
      %1242 = vmatpush2.bf16.msra.mxu0 0
      %1243 = vmatprep.subr.bf16.mxu0 0
      %1244 = vmatpush2.bf16.msra.mxu0 0
      %1245 = vmatprep.subr.bf16.mxu0 0
      %1246 = vmatpush2.bf16.msra.mxu0 0
      %1247 = vmatprep.mubr.bf16.mxu0 0
      %1248 = vmatmul.mubr.bf16.gmra.mxu0 %v1210
      %v1249 = vpop.f32.mrf.mxu0
      %v1250 = vadd.f32 0.0, %v1249
      %v1251 = vpop.f32.mrf.mxu0
      %v1252 = vpop.f32.mrf.mxu0
      %v1253 = vpop.f32.mrf.mxu0
      %1254 = vdwg.mxu0
      %1255 = vrot.lane.b32.xlu0 %v863, 64
      %v1256 = vpop.permute.xlu0 %1255
      %v1258 = vsel %vm1061, %v1109, 0
      %v1261 = vsel %vm1115, %v1256, 0
      %1263 = vmatprep.subr.bf16.mxu0 0
      %1264 = vmatpush1.bf16.msra.mxu0 0
      %1265 = vmatprep.subr.bf16.mxu0 0
      %1266 = vmatpush1.bf16.msra.mxu0 0
      %1267 = vmatprep.subr.bf16.mxu0 0
      %1268 = vmatpush1.bf16.msra.mxu0 0
      %1269 = vmatprep.subr.bf16.mxu0 0
      %1270 = vmatpush1.bf16.msra.mxu0 0
      %1271 = vmatprep.subr.bf16.mxu0 0
      %1272 = vmatpush1.bf16.msra.mxu0 0
      %1273 = vmatprep.subr.bf16.mxu0 0
      %1274 = vmatpush1.bf16.msra.mxu0 0
      %1275 = vmatprep.subr.bf16.mxu0 0
      %1276 = vmatpush1.bf16.msra.mxu0 0
      %1277 = vmatprep.subr.bf16.mxu0 0
      %1278 = vmatpush1.bf16.msra.mxu0 %v1261
      %1279 = vmatprep.subr.bf16.mxu0 0
      %1280 = vmatpush2.bf16.msra.mxu0 0
      %1281 = vmatprep.subr.bf16.mxu0 0
      %1282 = vmatpush2.bf16.msra.mxu0 0
      %1283 = vmatprep.subr.bf16.mxu0 0
      %1284 = vmatpush2.bf16.msra.mxu0 0
      %1285 = vmatprep.subr.bf16.mxu0 0
      %1286 = vmatpush2.bf16.msra.mxu0 0
      %1287 = vmatprep.subr.bf16.mxu0 0
      %1288 = vmatpush2.bf16.msra.mxu0 0
      %1289 = vmatprep.subr.bf16.mxu0 0
      %1290 = vmatpush2.bf16.msra.mxu0 0
      %1291 = vmatprep.subr.bf16.mxu0 0
      %1292 = vmatpush2.bf16.msra.mxu0 0
      %1293 = vmatprep.subr.bf16.mxu0 0
      %1294 = vmatpush2.bf16.msra.mxu0 0
      %1295 = vmatprep.mubr.bf16.mxu0 0
      %1296 = vmatmul.mubr.bf16.gmra.mxu0 %v1258
      %v1297 = vpop.f32.mrf.mxu0
      %v1298 = vadd.f32 0.0, %v1297
      %v1299 = vpop.f32.mrf.mxu0
      %v1300 = vpop.f32.mrf.mxu0
      %v1301 = vpop.f32.mrf.mxu0
      %1302 = vdwg.mxu0
      %1303 = vrot.lane.b32.xlu0 %v860, 112
      %v1304 = vpop.permute.xlu0 %1303
      %1305 = vrot.lane.b32.xlu0 %v860, 80
      %v1306 = vpop.permute.xlu0 %1305
      %v1308 = vsel %vm867, %v1304, 0
      %v1311 = vsel %vm867, %v1306, 0
      %1313 = vmatprep.subr.bf16.mxu0 0
      %1314 = vmatpush1.bf16.xpose.msra.mxu0 0
      %1315 = vmatprep.subr.bf16.mxu0 0
      %1316 = vmatpush1.bf16.xpose.msra.mxu0 0
      %1317 = vmatprep.subr.bf16.mxu0 0
      %1318 = vmatpush1.bf16.xpose.msra.mxu0 0
      %1319 = vmatprep.subr.bf16.mxu0 0
      %1320 = vmatpush1.bf16.xpose.msra.mxu0 0
      %1321 = vmatprep.subr.bf16.mxu0 0
      %1322 = vmatpush1.bf16.xpose.msra.mxu0 0
      %1323 = vmatprep.subr.bf16.mxu0 0
      %1324 = vmatpush1.bf16.xpose.msra.mxu0 0
      %1325 = vmatprep.subr.bf16.mxu0 0
      %1326 = vmatpush1.bf16.xpose.msra.mxu0 0
      %1327 = vmatprep.subr.bf16.mxu0 0
      %1328 = vmatpush1.bf16.xpose.msra.mxu0 %v1311
      %1329 = vmatprep.subr.bf16.mxu0 0
      %1330 = vmatpush2.bf16.xpose.msra.mxu0 0
      %1331 = vmatprep.subr.bf16.mxu0 0
      %1332 = vmatpush2.bf16.xpose.msra.mxu0 0
      %1333 = vmatprep.subr.bf16.mxu0 0
      %1334 = vmatpush2.bf16.xpose.msra.mxu0 0
      %1335 = vmatprep.subr.bf16.mxu0 0
      %1336 = vmatpush2.bf16.xpose.msra.mxu0 0
      %1337 = vmatprep.subr.bf16.mxu0 0
      %1338 = vmatpush2.bf16.xpose.msra.mxu0 0
      %1339 = vmatprep.subr.bf16.mxu0 0
      %1340 = vmatpush2.bf16.xpose.msra.mxu0 0
      %1341 = vmatprep.subr.bf16.mxu0 0
      %1342 = vmatpush2.bf16.xpose.msra.mxu0 0
      %1343 = vmatprep.subr.bf16.mxu0 0
      %1344 = vmatpush2.bf16.xpose.msra.mxu0 0
      %1345 = vmatprep.mubr.bf16.mxu0 0
      %1346 = vmatmul.mubr.bf16.gmra.mxu0 %v1308
      %v1347 = vpop.f32.mrf.mxu0
      %v1348 = vadd.f32 0.0, %v1347
      %v1349 = vpop.f32.mrf.mxu0
      %v1350 = vpop.f32.mrf.mxu0
      %v1351 = vpop.f32.mrf.mxu0
      %1352 = vdwg.mxu0
      %1353 = vrot.lane.b32.xlu0 %v861, 112
      %v1354 = vpop.permute.xlu0 %1353
      %1355 = vrot.lane.b32.xlu0 %v861, 80
      %v1356 = vpop.permute.xlu0 %1355
      %v1358 = vsel %vm867, %v1354, 0
      %v1361 = vsel %vm867, %v1356, 0
      %1363 = vmatprep.subr.bf16.mxu0 0
      %1364 = vmatpush1.bf16.xpose.msra.mxu0 0
      %1365 = vmatprep.subr.bf16.mxu0 0
      %1366 = vmatpush1.bf16.xpose.msra.mxu0 0
      %1367 = vmatprep.subr.bf16.mxu0 0
      %1368 = vmatpush1.bf16.xpose.msra.mxu0 0
      %1369 = vmatprep.subr.bf16.mxu0 0
      %1370 = vmatpush1.bf16.xpose.msra.mxu0 0
      %1371 = vmatprep.subr.bf16.mxu0 0
      %1372 = vmatpush1.bf16.xpose.msra.mxu0 0
      %1373 = vmatprep.subr.bf16.mxu0 0
      %1374 = vmatpush1.bf16.xpose.msra.mxu0 0
      %1375 = vmatprep.subr.bf16.mxu0 0
      %1376 = vmatpush1.bf16.xpose.msra.mxu0 0
      %1377 = vmatprep.subr.bf16.mxu0 0
      %1378 = vmatpush1.bf16.xpose.msra.mxu0 %v1361
      %1379 = vmatprep.subr.bf16.mxu0 0
      %1380 = vmatpush2.bf16.xpose.msra.mxu0 0
      %1381 = vmatprep.subr.bf16.mxu0 0
      %1382 = vmatpush2.bf16.xpose.msra.mxu0 0
      %1383 = vmatprep.subr.bf16.mxu0 0
      %1384 = vmatpush2.bf16.xpose.msra.mxu0 0
      %1385 = vmatprep.subr.bf16.mxu0 0
      %1386 = vmatpush2.bf16.xpose.msra.mxu0 0
      %1387 = vmatprep.subr.bf16.mxu0 0
      %1388 = vmatpush2.bf16.xpose.msra.mxu0 0
      %1389 = vmatprep.subr.bf16.mxu0 0
      %1390 = vmatpush2.bf16.xpose.msra.mxu0 0
      %1391 = vmatprep.subr.bf16.mxu0 0
      %1392 = vmatpush2.bf16.xpose.msra.mxu0 0
      %1393 = vmatprep.subr.bf16.mxu0 0
      %1394 = vmatpush2.bf16.xpose.msra.mxu0 0
      %1395 = vmatprep.mubr.bf16.mxu0 0
      %1396 = vmatmul.mubr.bf16.gmra.mxu0 %v1358
      %v1397 = vpop.f32.mrf.mxu0
      %v1398 = vadd.f32 0.0, %v1397
      %v1399 = vpop.f32.mrf.mxu0
      %v1400 = vpop.f32.mrf.mxu0
      %v1401 = vpop.f32.mrf.mxu0
      %1402 = vdwg.mxu0
      %1403 = vrot.lane.b32.xlu0 %v862, 112
      %v1404 = vpop.permute.xlu0 %1403
      %1405 = vrot.lane.b32.xlu0 %v862, 80
      %v1406 = vpop.permute.xlu0 %1405
      %v1408 = vsel %vm867, %v1404, 0
      %v1411 = vsel %vm867, %v1406, 0
      %1413 = vmatprep.subr.bf16.mxu0 0
      %1414 = vmatpush1.bf16.xpose.msra.mxu0 0
      %1415 = vmatprep.subr.bf16.mxu0 0
      %1416 = vmatpush1.bf16.xpose.msra.mxu0 0
      %1417 = vmatprep.subr.bf16.mxu0 0
      %1418 = vmatpush1.bf16.xpose.msra.mxu0 0
      %1419 = vmatprep.subr.bf16.mxu0 0
      %1420 = vmatpush1.bf16.xpose.msra.mxu0 0
      %1421 = vmatprep.subr.bf16.mxu0 0
      %1422 = vmatpush1.bf16.xpose.msra.mxu0 0
      %1423 = vmatprep.subr.bf16.mxu0 0
      %1424 = vmatpush1.bf16.xpose.msra.mxu0 0
      %1425 = vmatprep.subr.bf16.mxu0 0
      %1426 = vmatpush1.bf16.xpose.msra.mxu0 0
      %1427 = vmatprep.subr.bf16.mxu0 0
      %1428 = vmatpush1.bf16.xpose.msra.mxu0 %v1411
      %1429 = vmatprep.subr.bf16.mxu0 0
      %1430 = vmatpush2.bf16.xpose.msra.mxu0 0
      %1431 = vmatprep.subr.bf16.mxu0 0
      %1432 = vmatpush2.bf16.xpose.msra.mxu0 0
      %1433 = vmatprep.subr.bf16.mxu0 0
      %1434 = vmatpush2.bf16.xpose.msra.mxu0 0
      %1435 = vmatprep.subr.bf16.mxu0 0
      %1436 = vmatpush2.bf16.xpose.msra.mxu0 0
      %1437 = vmatprep.subr.bf16.mxu0 0
      %1438 = vmatpush2.bf16.xpose.msra.mxu0 0
      %1439 = vmatprep.subr.bf16.mxu0 0
      %1440 = vmatpush2.bf16.xpose.msra.mxu0 0
      %1441 = vmatprep.subr.bf16.mxu0 0
      %1442 = vmatpush2.bf16.xpose.msra.mxu0 0
      %1443 = vmatprep.subr.bf16.mxu0 0
      %1444 = vmatpush2.bf16.xpose.msra.mxu0 0
      %1445 = vmatprep.mubr.bf16.mxu0 0
      %1446 = vmatmul.mubr.bf16.gmra.mxu0 %v1408
      %v1447 = vpop.f32.mrf.mxu0
      %v1448 = vadd.f32 0.0, %v1447
      %v1449 = vpop.f32.mrf.mxu0
      %v1450 = vpop.f32.mrf.mxu0
      %v1451 = vpop.f32.mrf.mxu0
      %1452 = vdwg.mxu0
      %1453 = vrot.lane.b32.xlu0 %v863, 112
      %v1454 = vpop.permute.xlu0 %1453
      %1455 = vrot.lane.b32.xlu0 %v863, 80
      %v1456 = vpop.permute.xlu0 %1455
      %v1458 = vsel %vm867, %v1454, 0
      %v1461 = vsel %vm867, %v1456, 0
      %1463 = vmatprep.subr.bf16.mxu0 0
      %1464 = vmatpush1.bf16.xpose.msra.mxu0 0
      %1465 = vmatprep.subr.bf16.mxu0 0
      %1466 = vmatpush1.bf16.xpose.msra.mxu0 0
      %1467 = vmatprep.subr.bf16.mxu0 0
      %1468 = vmatpush1.bf16.xpose.msra.mxu0 0
      %1469 = vmatprep.subr.bf16.mxu0 0
      %1470 = vmatpush1.bf16.xpose.msra.mxu0 0
      %1471 = vmatprep.subr.bf16.mxu0 0
      %1472 = vmatpush1.bf16.xpose.msra.mxu0 0
      %1473 = vmatprep.subr.bf16.mxu0 0
      %1474 = vmatpush1.bf16.xpose.msra.mxu0 0
      %1475 = vmatprep.subr.bf16.mxu0 0
      %1476 = vmatpush1.bf16.xpose.msra.mxu0 0
      %1477 = vmatprep.subr.bf16.mxu0 0
      %1478 = vmatpush1.bf16.xpose.msra.mxu0 %v1461
      %1479 = vmatprep.subr.bf16.mxu0 0
      %1480 = vmatpush2.bf16.xpose.msra.mxu0 0
      %1481 = vmatprep.subr.bf16.mxu0 0
      %1482 = vmatpush2.bf16.xpose.msra.mxu0 0
      %1483 = vmatprep.subr.bf16.mxu0 0
      %1484 = vmatpush2.bf16.xpose.msra.mxu0 0
      %1485 = vmatprep.subr.bf16.mxu0 0
      %1486 = vmatpush2.bf16.xpose.msra.mxu0 0
      %1487 = vmatprep.subr.bf16.mxu0 0
      %1488 = vmatpush2.bf16.xpose.msra.mxu0 0
      %1489 = vmatprep.subr.bf16.mxu0 0
      %1490 = vmatpush2.bf16.xpose.msra.mxu0 0
      %1491 = vmatprep.subr.bf16.mxu0 0
      %1492 = vmatpush2.bf16.xpose.msra.mxu0 0
      %1493 = vmatprep.subr.bf16.mxu0 0
      %1494 = vmatpush2.bf16.xpose.msra.mxu0 0
      %1495 = vmatprep.mubr.bf16.mxu0 0
      %1496 = vmatmul.mubr.bf16.gmra.mxu0 %v1458
      %v1497 = vpop.f32.mrf.mxu0
      %v1498 = vadd.f32 0.0, %v1497
      %v1499 = vpop.f32.mrf.mxu0
      %v1500 = vpop.f32.mrf.mxu0
      %v1501 = vpop.f32.mrf.mxu0
      %1502 = vdwg.mxu0
      %v1503 = vsel %vm1061, %v1348, -inf
      %1504 = vmax.xlane.f32.xlu0 %v1503
      %v1505 = vpop.xlane.xlu0 %1504
      %v1506 = vsel %vm1061, %v1398, -inf
      %1507 = vmax.xlane.f32.xlu0 %v1506
      %v1508 = vpop.xlane.xlu0 %1507
      %v1509 = vsel %vm1061, %v1448, -inf
      %1510 = vmax.xlane.f32.xlu0 %v1509
      %v1511 = vpop.xlane.xlu0 %1510
      %v1512 = vsel %vm1061, %v1498, -inf
      %1513 = vmax.xlane.f32.xlu0 %v1512
      %v1514 = vpop.xlane.xlu0 %1513
      %v1515 = vsub.f32 %v1348, %v1505
      %v1516 = vsub.f32 %v1398, %v1508
      %v1517 = vsub.f32 %v1448, %v1511
      %v1518 = vsub.f32 %v1498, %v1514
      %v1519 = vmul.f32 %v1515, 1.442695
      %v1520 = vpow.pop %v1519
      %v1521 = vmul.f32 %v1516, 1.442695
      %v1522 = vpow.pop %v1521
      %v1523 = vmul.f32 %v1517, 1.442695
      %v1524 = vpow.pop %v1523
      %v1525 = vmul.f32 %v1518, 1.442695
      %v1526 = vpow.pop %v1525
      %v1527 = vsel %vm1061, %v1520, 0.0
      %1528 = vadd.xlane.f32.xlu0 %v1527
      %v1529 = vpop.xlane.xlu0 %1528
      %v1530 = vsel %vm1061, %v1522, 0.0
      %1531 = vadd.xlane.f32.xlu0 %v1530
      %v1532 = vpop.xlane.xlu0 %1531
      %v1533 = vsel %vm1061, %v1524, 0.0
      %1534 = vadd.xlane.f32.xlu0 %v1533
      %v1535 = vpop.xlane.xlu0 %1534
      %v1536 = vsel %vm1061, %v1526, 0.0
      %1537 = vadd.xlane.f32.xlu0 %v1536
      %v1538 = vpop.xlane.xlu0 %1537
      %v1539 = vrcp.pop %v1529
      %v1540 = vrcp.pop %v1532
      %v1541 = vrcp.pop %v1535
      %v1542 = vrcp.pop %v1538
      %v1543 = vmul.f32 %v1520, %v1539
      %v1544 = vmul.f32 %v1522, %v1540
      %v1545 = vmul.f32 %v1524, %v1541
      %v1546 = vmul.f32 %v1526, %v1542
      %v1547 = vpack.c.bf16 %v1543, %v1543
      %v1548 = vpack.c.bf16 %v1544, %v1544
      %v1549 = vpack.c.bf16 %v1545, %v1545
      %v1550 = vpack.c.bf16 %v1546, %v1546
      %1551 = vrot.lane.b32.xlu0 %v860, 48
      %v1552 = vpop.permute.xlu0 %1551
      %v1554 = vsel %vm1061, %v1547, 0
      %v1557 = vsel %vm1115, %v1552, 0
      %1559 = vmatprep.subr.bf16.mxu0 0
      %1560 = vmatpush1.bf16.msra.mxu0 0
      %1561 = vmatprep.subr.bf16.mxu0 0
      %1562 = vmatpush1.bf16.msra.mxu0 0
      %1563 = vmatprep.subr.bf16.mxu0 0
      %1564 = vmatpush1.bf16.msra.mxu0 0
      %1565 = vmatprep.subr.bf16.mxu0 0
      %1566 = vmatpush1.bf16.msra.mxu0 0
      %1567 = vmatprep.subr.bf16.mxu0 0
      %1568 = vmatpush1.bf16.msra.mxu0 0
      %1569 = vmatprep.subr.bf16.mxu0 0
      %1570 = vmatpush1.bf16.msra.mxu0 0
      %1571 = vmatprep.subr.bf16.mxu0 0
      %1572 = vmatpush1.bf16.msra.mxu0 0
      %1573 = vmatprep.subr.bf16.mxu0 0
      %1574 = vmatpush1.bf16.msra.mxu0 %v1557
      %1575 = vmatprep.subr.bf16.mxu0 0
      %1576 = vmatpush2.bf16.msra.mxu0 0
      %1577 = vmatprep.subr.bf16.mxu0 0
      %1578 = vmatpush2.bf16.msra.mxu0 0
      %1579 = vmatprep.subr.bf16.mxu0 0
      %1580 = vmatpush2.bf16.msra.mxu0 0
      %1581 = vmatprep.subr.bf16.mxu0 0
      %1582 = vmatpush2.bf16.msra.mxu0 0
      %1583 = vmatprep.subr.bf16.mxu0 0
      %1584 = vmatpush2.bf16.msra.mxu0 0
      %1585 = vmatprep.subr.bf16.mxu0 0
      %1586 = vmatpush2.bf16.msra.mxu0 0
      %1587 = vmatprep.subr.bf16.mxu0 0
      %1588 = vmatpush2.bf16.msra.mxu0 0
      %1589 = vmatprep.subr.bf16.mxu0 0
      %1590 = vmatpush2.bf16.msra.mxu0 0
      %1591 = vmatprep.mubr.bf16.mxu0 0
      %1592 = vmatmul.mubr.bf16.gmra.mxu0 %v1554
      %v1593 = vpop.f32.mrf.mxu0
      %v1594 = vadd.f32 0.0, %v1593
      %v1595 = vpop.f32.mrf.mxu0
      %v1596 = vpop.f32.mrf.mxu0
      %v1597 = vpop.f32.mrf.mxu0
      %1598 = vdwg.mxu0
      %1599 = vrot.lane.b32.xlu0 %v861, 48
      %v1600 = vpop.permute.xlu0 %1599
      %v1602 = vsel %vm1061, %v1548, 0
      %v1605 = vsel %vm1115, %v1600, 0
      %1607 = vmatprep.subr.bf16.mxu0 0
      %1608 = vmatpush1.bf16.msra.mxu0 0
      %1609 = vmatprep.subr.bf16.mxu0 0
      %1610 = vmatpush1.bf16.msra.mxu0 0
      %1611 = vmatprep.subr.bf16.mxu0 0
      %1612 = vmatpush1.bf16.msra.mxu0 0
      %1613 = vmatprep.subr.bf16.mxu0 0
      %1614 = vmatpush1.bf16.msra.mxu0 0
      %1615 = vmatprep.subr.bf16.mxu0 0
      %1616 = vmatpush1.bf16.msra.mxu0 0
      %1617 = vmatprep.subr.bf16.mxu0 0
      %1618 = vmatpush1.bf16.msra.mxu0 0
      %1619 = vmatprep.subr.bf16.mxu0 0
      %1620 = vmatpush1.bf16.msra.mxu0 0
      %1621 = vmatprep.subr.bf16.mxu0 0
      %1622 = vmatpush1.bf16.msra.mxu0 %v1605
      %1623 = vmatprep.subr.bf16.mxu0 0
      %1624 = vmatpush2.bf16.msra.mxu0 0
      %1625 = vmatprep.subr.bf16.mxu0 0
      %1626 = vmatpush2.bf16.msra.mxu0 0
      %1627 = vmatprep.subr.bf16.mxu0 0
      %1628 = vmatpush2.bf16.msra.mxu0 0
      %1629 = vmatprep.subr.bf16.mxu0 0
      %1630 = vmatpush2.bf16.msra.mxu0 0
      %1631 = vmatprep.subr.bf16.mxu0 0
      %1632 = vmatpush2.bf16.msra.mxu0 0
      %1633 = vmatprep.subr.bf16.mxu0 0
      %1634 = vmatpush2.bf16.msra.mxu0 0
      %1635 = vmatprep.subr.bf16.mxu0 0
      %1636 = vmatpush2.bf16.msra.mxu0 0
      %1637 = vmatprep.subr.bf16.mxu0 0
      %1638 = vmatpush2.bf16.msra.mxu0 0
      %1639 = vmatprep.mubr.bf16.mxu0 0
      %1640 = vmatmul.mubr.bf16.gmra.mxu0 %v1602
      %v1641 = vpop.f32.mrf.mxu0
      %v1642 = vadd.f32 0.0, %v1641
      %v1643 = vpop.f32.mrf.mxu0
      %v1644 = vpop.f32.mrf.mxu0
      %v1645 = vpop.f32.mrf.mxu0
      %1646 = vdwg.mxu0
      %1647 = vrot.lane.b32.xlu0 %v862, 48
      %v1648 = vpop.permute.xlu0 %1647
      %v1650 = vsel %vm1061, %v1549, 0
      %v1653 = vsel %vm1115, %v1648, 0
      %1655 = vmatprep.subr.bf16.mxu0 0
      %1656 = vmatpush1.bf16.msra.mxu0 0
      %1657 = vmatprep.subr.bf16.mxu0 0
      %1658 = vmatpush1.bf16.msra.mxu0 0
      %1659 = vmatprep.subr.bf16.mxu0 0
      %1660 = vmatpush1.bf16.msra.mxu0 0
      %1661 = vmatprep.subr.bf16.mxu0 0
      %1662 = vmatpush1.bf16.msra.mxu0 0
      %1663 = vmatprep.subr.bf16.mxu0 0
      %1664 = vmatpush1.bf16.msra.mxu0 0
      %1665 = vmatprep.subr.bf16.mxu0 0
      %1666 = vmatpush1.bf16.msra.mxu0 0
      %1667 = vmatprep.subr.bf16.mxu0 0
      %1668 = vmatpush1.bf16.msra.mxu0 0
      %1669 = vmatprep.subr.bf16.mxu0 0
      %1670 = vmatpush1.bf16.msra.mxu0 %v1653
      %1671 = vmatprep.subr.bf16.mxu0 0
      %1672 = vmatpush2.bf16.msra.mxu0 0
      %1673 = vmatprep.subr.bf16.mxu0 0
      %1674 = vmatpush2.bf16.msra.mxu0 0
      %1675 = vmatprep.subr.bf16.mxu0 0
      %1676 = vmatpush2.bf16.msra.mxu0 0
      %1677 = vmatprep.subr.bf16.mxu0 0
      %1678 = vmatpush2.bf16.msra.mxu0 0
      %1679 = vmatprep.subr.bf16.mxu0 0
      %1680 = vmatpush2.bf16.msra.mxu0 0
      %1681 = vmatprep.subr.bf16.mxu0 0
      %1682 = vmatpush2.bf16.msra.mxu0 0
      %1683 = vmatprep.subr.bf16.mxu0 0
      %1684 = vmatpush2.bf16.msra.mxu0 0
      %1685 = vmatprep.subr.bf16.mxu0 0
      %1686 = vmatpush2.bf16.msra.mxu0 0
      %1687 = vmatprep.mubr.bf16.mxu0 0
      %1688 = vmatmul.mubr.bf16.gmra.mxu0 %v1650
      %v1689 = vpop.f32.mrf.mxu0
      %v1690 = vadd.f32 0.0, %v1689
      %v1691 = vpop.f32.mrf.mxu0
      %v1692 = vpop.f32.mrf.mxu0
      %v1693 = vpop.f32.mrf.mxu0
      %1694 = vdwg.mxu0
      %1695 = vrot.lane.b32.xlu0 %v863, 48
      %v1696 = vpop.permute.xlu0 %1695
      %v1698 = vsel %vm1061, %v1550, 0
      %v1701 = vsel %vm1115, %v1696, 0
      %1703 = vmatprep.subr.bf16.mxu0 0
      %1704 = vmatpush1.bf16.msra.mxu0 0
      %1705 = vmatprep.subr.bf16.mxu0 0
      %1706 = vmatpush1.bf16.msra.mxu0 0
      %1707 = vmatprep.subr.bf16.mxu0 0
      %1708 = vmatpush1.bf16.msra.mxu0 0
      %1709 = vmatprep.subr.bf16.mxu0 0
      %1710 = vmatpush1.bf16.msra.mxu0 0
      %1711 = vmatprep.subr.bf16.mxu0 0
      %1712 = vmatpush1.bf16.msra.mxu0 0
      %1713 = vmatprep.subr.bf16.mxu0 0
      %1714 = vmatpush1.bf16.msra.mxu0 0
      %1715 = vmatprep.subr.bf16.mxu0 0
      %1716 = vmatpush1.bf16.msra.mxu0 0
      %1717 = vmatprep.subr.bf16.mxu0 0
      %1718 = vmatpush1.bf16.msra.mxu0 %v1701
      %1719 = vmatprep.subr.bf16.mxu0 0
      %1720 = vmatpush2.bf16.msra.mxu0 0
      %1721 = vmatprep.subr.bf16.mxu0 0
      %1722 = vmatpush2.bf16.msra.mxu0 0
      %1723 = vmatprep.subr.bf16.mxu0 0
      %1724 = vmatpush2.bf16.msra.mxu0 0
      %1725 = vmatprep.subr.bf16.mxu0 0
      %1726 = vmatpush2.bf16.msra.mxu0 0
      %1727 = vmatprep.subr.bf16.mxu0 0
      %1728 = vmatpush2.bf16.msra.mxu0 0
      %1729 = vmatprep.subr.bf16.mxu0 0
      %1730 = vmatpush2.bf16.msra.mxu0 0
      %1731 = vmatprep.subr.bf16.mxu0 0
      %1732 = vmatpush2.bf16.msra.mxu0 0
      %1733 = vmatprep.subr.bf16.mxu0 0
      %1734 = vmatpush2.bf16.msra.mxu0 0
      %1735 = vmatprep.mubr.bf16.mxu0 0
      %1736 = vmatmul.mubr.bf16.gmra.mxu0 %v1698
      %v1737 = vpop.f32.mrf.mxu0
      %v1738 = vadd.f32 0.0, %v1737
      %v1739 = vpop.f32.mrf.mxu0
      %v1740 = vpop.f32.mrf.mxu0
      %v1741 = vpop.f32.mrf.mxu0
      %1742 = vdwg.mxu0
      %1747 = vrot.lane.b32.xlu0 %v1594, 16
      %v1748 = vpop.permute.xlu0 %1747
      %1749 = vrot.lane.b32.xlu0 %v1642, 16
      %v1750 = vpop.permute.xlu0 %1749
      %1751 = vrot.lane.b32.xlu0 %v1690, 16
      %v1752 = vpop.permute.xlu0 %1751
      %1753 = vrot.lane.b32.xlu0 %v1738, 16
      %v1754 = vpop.permute.xlu0 %1753
      %v1759 = vsel %vm867, %v1154, %v1748
      %v1760 = vsel %vm867, %v1202, %v1750
      %v1761 = vsel %vm867, %v1250, %v1752
      %v1762 = vsel %vm867, %v1298, %v1754
      %v1763 = vpack.c.bf16 %v1760, %v1759
      %v1764 = vpack.c.bf16 %v1762, %v1761
      %v1766 = vlaneseq
      %v1767 = vshrl.u32 %v1766, 7
      %v1768 = vsub.s32 0, %v1767
      %v1769 = vrot.slane %v761, %v1768
      %v1775 = vunpack.c.l.b16 %v757
      %v1776 = vunpack.c.l.b16 %v758
      %v1777 = vunpack.c.l.b16 %v759
      %v1778 = vunpack.c.l.b16 %v760
      %v1779 = vpack.c.b16 %v1776, %v1775
      %v1780 = vpack.c.b16 %v1778, %v1777
      %v1784 = vsel %vm804, %v1763, 0
      %v1787 = vsel %vm804, %v1764, 0
      %1789 = vmatprep.subr.bf16.mxu0 0
      %1790 = vmatpush1.bf16.msra.mxu0 0
      %1791 = vmatprep.subr.bf16.mxu0 0
      %1792 = vmatpush1.bf16.msra.mxu0 0
      %1793 = vmatprep.subr.bf16.mxu0 0
      %1794 = vmatpush1.bf16.msra.mxu0 0
      %1795 = vmatprep.subr.bf16.mxu0 0
      %1796 = vmatpush1.bf16.msra.mxu0 0
      %1797 = vmatprep.subr.bf16.mxu0 0
      %1798 = vmatpush1.bf16.msra.mxu0 0
      %1799 = vmatprep.subr.bf16.mxu0 0
      %1800 = vmatpush1.bf16.msra.mxu0 0
      %1801 = vmatprep.subr.bf16.mxu0 0
      %1802 = vmatpush1.bf16.msra.mxu0 %v1780
      %1803 = vmatprep.subr.bf16.mxu0 0
      %1804 = vmatpush1.bf16.msra.mxu0 %v1779
      %1805 = vmatprep.subr.bf16.mxu0 0
      %1806 = vmatpush2.bf16.msra.mxu0 0
      %1807 = vmatprep.subr.bf16.mxu0 0
      %1808 = vmatpush2.bf16.msra.mxu0 0
      %1809 = vmatprep.subr.bf16.mxu0 0
      %1810 = vmatpush2.bf16.msra.mxu0 0
      %1811 = vmatprep.subr.bf16.mxu0 0
      %1812 = vmatpush2.bf16.msra.mxu0 0
      %1813 = vmatprep.subr.bf16.mxu0 0
      %1814 = vmatpush2.bf16.msra.mxu0 0
      %1815 = vmatprep.subr.bf16.mxu0 0
      %1816 = vmatpush2.bf16.msra.mxu0 0
      %1817 = vmatprep.subr.bf16.mxu0 0
      %1818 = vmatpush2.bf16.msra.mxu0 0
      %1819 = vmatprep.subr.bf16.mxu0 0
      %1820 = vmatpush2.bf16.msra.mxu0 0
      %1821 = vmatprep.mubr.bf16.mxu0 0
      %1822 = vmatmul.mubr.bf16.gmra.mxu0 %v1784
      %v1823 = vpop.f32.mrf.mxu0
      %v1824 = vadd.f32 %v1769, %v1823
      %v1825 = vpop.f32.mrf.mxu0
      %v1826 = vpop.f32.mrf.mxu0
      %v1827 = vadd.f32 %v1769, %v1826
      %v1828 = vpop.f32.mrf.mxu0
      %1829 = vmatprep.mubr.bf16.mxu0 0
      %1830 = vmatmul.mubr.bf16.gmra.mxu0 %v1787
      %v1831 = vpop.f32.mrf.mxu0
      %v1832 = vadd.f32 %v1769, %v1831
      %v1833 = vpop.f32.mrf.mxu0
      %v1834 = vpop.f32.mrf.mxu0
      %v1835 = vadd.f32 %v1769, %v1834
      %v1836 = vpop.f32.mrf.mxu0
      %1837 = vdwg.mxu0
      %v1838 = vadd.f32 %v780, %v1824
      %v1839 = vadd.f32 %v781, %v1827
      %v1840 = vadd.f32 %v782, %v1832
      %v1841 = vadd.f32 %v783, %v1835
      %v1842 = vsel %vm804, %v1838, 0.0
      %1843 = vadd.xlane.f32.xlu0 %v1842
      %v1844 = vpop.xlane.xlu0 %1843
      %v1845 = vsel %vm804, %v1839, 0.0
      %1846 = vadd.xlane.f32.xlu0 %v1845
      %v1847 = vpop.xlane.xlu0 %1846
      %v1848 = vsel %vm804, %v1840, 0.0
      %1849 = vadd.xlane.f32.xlu0 %v1848
      %v1850 = vpop.xlane.xlu0 %1849
      %v1851 = vsel %vm804, %v1841, 0.0
      %1852 = vadd.xlane.f32.xlu0 %v1851
      %v1853 = vpop.xlane.xlu0 %1852
      %v1854 = vrcp.pop 32.0
      %v1855 = vmul.f32 %v1844, %v1854
      %v1856 = vmul.f32 %v1847, %v1854
      %v1857 = vmul.f32 %v1850, %v1854
      %v1858 = vmul.f32 %v1853, %v1854
      %v1859 = vsub.f32 %v1838, %v1855
      %v1860 = vsub.f32 %v1839, %v1856
      %v1861 = vsub.f32 %v1840, %v1857
      %v1862 = vsub.f32 %v1841, %v1858
      %v1863 = vmul.f32 %v1859, %v1859
      %v1864 = vmul.f32 %v1860, %v1860
      %v1865 = vmul.f32 %v1861, %v1861
      %v1866 = vmul.f32 %v1862, %v1862
      %v1867 = vsel %vm804, %v1863, 0.0
      %1868 = vadd.xlane.f32.xlu0 %v1867
      %v1869 = vpop.xlane.xlu0 %1868
      %v1870 = vsel %vm804, %v1864, 0.0
      %1871 = vadd.xlane.f32.xlu0 %v1870
      %v1872 = vpop.xlane.xlu0 %1871
      %v1873 = vsel %vm804, %v1865, 0.0
      %1874 = vadd.xlane.f32.xlu0 %v1873
      %v1875 = vpop.xlane.xlu0 %1874
      %v1876 = vsel %vm804, %v1866, 0.0
      %1877 = vadd.xlane.f32.xlu0 %v1876
      %v1878 = vpop.xlane.xlu0 %1877
      %v1879 = vmul.f32 %v1869, %v1854
      %v1880 = vmul.f32 %v1872, %v1854
      %v1881 = vmul.f32 %v1875, %v1854
      %v1882 = vmul.f32 %v1878, %v1854
      %v1883 = vadd.f32 %v1879, 1e-12
      %v1884 = vadd.f32 %v1880, 1e-12
      %v1885 = vadd.f32 %v1881, 1e-12
      %v1886 = vadd.f32 %v1882, 1e-12
      %v1887 = vrsqrt.pop %v1883
      %v1888 = vrsqrt.pop %v1884
      %v1889 = vrsqrt.pop %v1885
      %v1890 = vrsqrt.pop %v1886
      %v1891 = vmul.f32 %v1859, %v1887
      %v1892 = vmul.f32 %v1860, %v1888
      %v1893 = vmul.f32 %v1861, %v1889
      %v1894 = vmul.f32 %v1862, %v1890
      %v1896 = vlaneseq
      %v1897 = vshrl.u32 %v1896, 7
      %v1898 = vsub.s32 0, %v1897
      %v1899 = vrot.slane %v762, %v1898
      %v1901 = vmul.f32 %v1891, %v1899
      %v1902 = vmul.f32 %v1892, %v1899
      %v1903 = vmul.f32 %v1893, %v1899
      %v1904 = vmul.f32 %v1894, %v1899
      %v1906 = vlaneseq
      %v1907 = vshrl.u32 %v1906, 7
      %v1908 = vsub.s32 0, %v1907
      %v1909 = vrot.slane %v763, %v1908
      %v1911 = vadd.f32 %v1901, %v1909
      %v1912 = vadd.f32 %v1902, %v1909
      %v1913 = vadd.f32 %v1903, %v1909
      %v1914 = vadd.f32 %v1904, %v1909
      %v1915 = vpack.c.bf16 %v1912, %v1911
      %v1916 = vpack.c.bf16 %v1914, %v1913
      %v1918 = vlaneseq
      %v1919 = vshrl.u32 %v1918, 7
      %v1920 = vsub.s32 0, %v1919
      %v1921 = vrot.slane %v770, %v1920
      %v1927 = vunpack.c.l.b16 %v766
      %v1928 = vunpack.c.l.b16 %v767
      %v1929 = vunpack.c.l.b16 %v768
      %v1930 = vunpack.c.l.b16 %v769
      %v1931 = vpack.c.b16 %v1928, %v1927
      %v1932 = vpack.c.b16 %v1930, %v1929
      %v1936 = vsel %vm804, %v1915, 0
      %v1939 = vsel %vm804, %v1916, 0
      %1941 = vmatprep.subr.bf16.mxu0 0
      %1942 = vmatpush1.bf16.msra.mxu0 0
      %1943 = vmatprep.subr.bf16.mxu0 0
      %1944 = vmatpush1.bf16.msra.mxu0 0
      %1945 = vmatprep.subr.bf16.mxu0 0
      %1946 = vmatpush1.bf16.msra.mxu0 0
      %1947 = vmatprep.subr.bf16.mxu0 0
      %1948 = vmatpush1.bf16.msra.mxu0 0
      %1949 = vmatprep.subr.bf16.mxu0 0
      %1950 = vmatpush1.bf16.msra.mxu0 0
      %1951 = vmatprep.subr.bf16.mxu0 0
      %1952 = vmatpush1.bf16.msra.mxu0 0
      %1953 = vmatprep.subr.bf16.mxu0 0
      %1954 = vmatpush1.bf16.msra.mxu0 %v1932
      %1955 = vmatprep.subr.bf16.mxu0 0
      %1956 = vmatpush1.bf16.msra.mxu0 %v1931
      %1957 = vmatprep.subr.bf16.mxu0 0
      %1958 = vmatpush2.bf16.msra.mxu0 0
      %1959 = vmatprep.subr.bf16.mxu0 0
      %1960 = vmatpush2.bf16.msra.mxu0 0
      %1961 = vmatprep.subr.bf16.mxu0 0
      %1962 = vmatpush2.bf16.msra.mxu0 0
      %1963 = vmatprep.subr.bf16.mxu0 0
      %1964 = vmatpush2.bf16.msra.mxu0 0
      %1965 = vmatprep.subr.bf16.mxu0 0
      %1966 = vmatpush2.bf16.msra.mxu0 0
      %1967 = vmatprep.subr.bf16.mxu0 0
      %1968 = vmatpush2.bf16.msra.mxu0 0
      %1969 = vmatprep.subr.bf16.mxu0 0
      %1970 = vmatpush2.bf16.msra.mxu0 0
      %1971 = vmatprep.subr.bf16.mxu0 0
      %1972 = vmatpush2.bf16.msra.mxu0 0
      %1973 = vmatprep.mubr.bf16.mxu0 0
      %1974 = vmatmul.mubr.bf16.gmra.mxu0 %v1936
      %v1975 = vpop.f32.mrf.mxu0
      %v1976 = vadd.f32 %v1921, %v1975
      %v1977 = vpop.f32.mrf.mxu0
      %v1978 = vpop.f32.mrf.mxu0
      %v1979 = vadd.f32 %v1921, %v1978
      %v1980 = vpop.f32.mrf.mxu0
      %1981 = vmatprep.mubr.bf16.mxu0 0
      %1982 = vmatmul.mubr.bf16.gmra.mxu0 %v1939
      %v1983 = vpop.f32.mrf.mxu0
      %v1984 = vadd.f32 %v1921, %v1983
      %v1985 = vpop.f32.mrf.mxu0
      %v1986 = vpop.f32.mrf.mxu0
      %v1987 = vadd.f32 %v1921, %v1986
      %v1988 = vpop.f32.mrf.mxu0
      %1989 = vdwg.mxu0
      %v1990 = vmax.f32 %v1976, 0.0
      %v1991 = vmax.f32 %v1979, 0.0
      %v1992 = vmax.f32 %v1984, 0.0
      %v1993 = vmax.f32 %v1987, 0.0
      %v1994 = vpack.c.bf16 %v1991, %v1990
      %v1995 = vpack.c.bf16 %v1993, %v1992
      %v1997 = vlaneseq
      %v1998 = vshrl.u32 %v1997, 7
      %v1999 = vsub.s32 0, %v1998
      %v2000 = vrot.slane %v779, %v1999
      %v2010 = vunpack.c.l.b16 %v771
      %v2011 = vunpack.c.l.b16 %v772
      %v2012 = vunpack.c.l.b16 %v773
      %v2013 = vunpack.c.l.b16 %v774
      %v2014 = vunpack.c.l.b16 %v775
      %v2015 = vunpack.c.l.b16 %v776
      %v2016 = vunpack.c.l.b16 %v777
      %v2017 = vunpack.c.l.b16 %v778
      %v2018 = vpack.c.b16 %v2011, %v2010
      %v2019 = vpack.c.b16 %v2013, %v2012
      %v2020 = vpack.c.b16 %v2015, %v2014
      %v2021 = vpack.c.b16 %v2017, %v2016
      %vm2026 = vcmask 523264
      %v2028 = vsel %vm2026, %v1994, 0
      %v2031 = vsel %vm2026, %v1995, 0
      %2033 = vmatprep.subr.bf16.mxu0 0
      %2034 = vmatpush1.bf16.msra.mxu0 0
      %2035 = vmatprep.subr.bf16.mxu0 0
      %2036 = vmatpush1.bf16.msra.mxu0 0
      %2037 = vmatprep.subr.bf16.mxu0 0
      %2038 = vmatpush1.bf16.msra.mxu0 0
      %2039 = vmatprep.subr.bf16.mxu0 0
      %2040 = vmatpush1.bf16.msra.mxu0 0
      %2041 = vmatprep.subr.bf16.mxu0 0
      %2042 = vmatpush1.bf16.msra.mxu0 %v2021
      %2043 = vmatprep.subr.bf16.mxu0 0
      %2044 = vmatpush1.bf16.msra.mxu0 %v2020
      %2045 = vmatprep.subr.bf16.mxu0 0
      %2046 = vmatpush1.bf16.msra.mxu0 %v2019
      %2047 = vmatprep.subr.bf16.mxu0 0
      %2048 = vmatpush1.bf16.msra.mxu0 %v2018
      %2049 = vmatprep.subr.bf16.mxu0 0
      %2050 = vmatpush2.bf16.msra.mxu0 0
      %2051 = vmatprep.subr.bf16.mxu0 0
      %2052 = vmatpush2.bf16.msra.mxu0 0
      %2053 = vmatprep.subr.bf16.mxu0 0
      %2054 = vmatpush2.bf16.msra.mxu0 0
      %2055 = vmatprep.subr.bf16.mxu0 0
      %2056 = vmatpush2.bf16.msra.mxu0 0
      %2057 = vmatprep.subr.bf16.mxu0 0
      %2058 = vmatpush2.bf16.msra.mxu0 0
      %2059 = vmatprep.subr.bf16.mxu0 0
      %2060 = vmatpush2.bf16.msra.mxu0 0
      %2061 = vmatprep.subr.bf16.mxu0 0
      %2062 = vmatpush2.bf16.msra.mxu0 0
      %2063 = vmatprep.subr.bf16.mxu0 0
      %2064 = vmatpush2.bf16.msra.mxu0 0
      %2065 = vmatprep.mubr.bf16.mxu0 0
      %2066 = vmatmul.mubr.bf16.gmra.mxu0 %v2028
      %v2067 = vpop.f32.mrf.mxu0
      %v2068 = vadd.f32 %v2000, %v2067
      %v2069 = vpop.f32.mrf.mxu0
      %v2070 = vpop.f32.mrf.mxu0
      %v2071 = vadd.f32 %v2000, %v2070
      %v2072 = vpop.f32.mrf.mxu0
      %2073 = vmatprep.mubr.bf16.mxu0 0
      %2074 = vmatmul.mubr.bf16.gmra.mxu0 %v2031
      %v2075 = vpop.f32.mrf.mxu0
      %v2076 = vadd.f32 %v2000, %v2075
      %v2077 = vpop.f32.mrf.mxu0
      %v2078 = vpop.f32.mrf.mxu0
      %v2079 = vadd.f32 %v2000, %v2078
      %v2080 = vpop.f32.mrf.mxu0
      %2081 = vdwg.mxu0
      %v2082 = vadd.f32 %v1911, %v2068
      %v2083 = vadd.f32 %v1912, %v2071
      %v2084 = vadd.f32 %v1913, %v2076
      %v2085 = vadd.f32 %v1914, %v2079
      %v2086 = vsel %vm804, %v2082, 0.0
      %2087 = vadd.xlane.f32.xlu0 %v2086
      %v2088 = vpop.xlane.xlu0 %2087
      %v2089 = vsel %vm804, %v2083, 0.0
      %2090 = vadd.xlane.f32.xlu0 %v2089
      %v2091 = vpop.xlane.xlu0 %2090
      %v2092 = vsel %vm804, %v2084, 0.0
      %2093 = vadd.xlane.f32.xlu0 %v2092
      %v2094 = vpop.xlane.xlu0 %2093
      %v2095 = vsel %vm804, %v2085, 0.0
      %2096 = vadd.xlane.f32.xlu0 %v2095
      %v2097 = vpop.xlane.xlu0 %2096
      %v2098 = vmul.f32 %v2088, %v1854
      %v2099 = vmul.f32 %v2091, %v1854
      %v2100 = vmul.f32 %v2094, %v1854
      %v2101 = vmul.f32 %v2097, %v1854
      %v2102 = vsub.f32 %v2082, %v2098
      %v2103 = vsub.f32 %v2083, %v2099
      %v2104 = vsub.f32 %v2084, %v2100
      %v2105 = vsub.f32 %v2085, %v2101
      %v2106 = vmul.f32 %v2102, %v2102
      %v2107 = vmul.f32 %v2103, %v2103
      %v2108 = vmul.f32 %v2104, %v2104
      %v2109 = vmul.f32 %v2105, %v2105
      %v2110 = vsel %vm804, %v2106, 0.0
      %2111 = vadd.xlane.f32.xlu0 %v2110
      %v2112 = vpop.xlane.xlu0 %2111
      %v2113 = vsel %vm804, %v2107, 0.0
      %2114 = vadd.xlane.f32.xlu0 %v2113
      %v2115 = vpop.xlane.xlu0 %2114
      %v2116 = vsel %vm804, %v2108, 0.0
      %2117 = vadd.xlane.f32.xlu0 %v2116
      %v2118 = vpop.xlane.xlu0 %2117
      %v2119 = vsel %vm804, %v2109, 0.0
      %2120 = vadd.xlane.f32.xlu0 %v2119
      %v2121 = vpop.xlane.xlu0 %2120
      %v2122 = vmul.f32 %v2112, %v1854
      %v2123 = vmul.f32 %v2115, %v1854
      %v2124 = vmul.f32 %v2118, %v1854
      %v2125 = vmul.f32 %v2121, %v1854
      %v2126 = vadd.f32 %v2122, 1e-12
      %v2127 = vadd.f32 %v2123, 1e-12
      %v2128 = vadd.f32 %v2124, 1e-12
      %v2129 = vadd.f32 %v2125, 1e-12
      %v2130 = vrsqrt.pop %v2126
      %v2131 = vrsqrt.pop %v2127
      %v2132 = vrsqrt.pop %v2128
      %v2133 = vrsqrt.pop %v2129
      %v2134 = vmul.f32 %v2102, %v2130
      %v2135 = vmul.f32 %v2103, %v2131
      %v2136 = vmul.f32 %v2104, %v2132
      %v2137 = vmul.f32 %v2105, %v2133
      %v2139 = vlaneseq
      %v2140 = vshrl.u32 %v2139, 7
      %v2141 = vsub.s32 0, %v2140
      %v2142 = vrot.slane %v764, %v2141
      %v2144 = vmul.f32 %v2134, %v2142
      %v2145 = vmul.f32 %v2135, %v2142
      %v2146 = vmul.f32 %v2136, %v2142
      %v2147 = vmul.f32 %v2137, %v2142
      %v2149 = vlaneseq
      %v2150 = vshrl.u32 %v2149, 7
      %v2151 = vsub.s32 0, %v2150
      %v2152 = vrot.slane %v765, %v2151
      %v2154 = vadd.f32 %v2144, %v2152
      %v2155 = vadd.f32 %v2145, %v2152
      %v2156 = vadd.f32 %v2146, %v2152
      %v2157 = vadd.f32 %v2147, %v2152
      %2158 = vst.msk [vmem:[#allocation2] sm:$0xff] %vm804, %v2154
      %2159 = vst.msk [vmem:[#allocation2 + $0x8] sm:$0xff] %vm804, %v2155
      %2160 = vst.msk [vmem:[#allocation2 + $0x10] sm:$0xff] %vm804, %v2156
      %2161 = vst.msk [vmem:[#allocation2 + $0x18] sm:$0xff] %vm804, %v2157
      %p2162 = scmp.eq.s32.totalorder %s32, 1
      // Predicated region
      $region89: #{sepformer_block.2} parent=83 // pred_check
        %p2163 = pneg %p2162
      $region90: #{sepformer_block.2} parent=83 // pred_check_branch
        %2165 = sbr.rel (%p2163) target = $region92
      $region91: #{sepformer_block.2} parent=83 // pred_region
        %v2166 = vsel %vm804, %v2154, 0.0
        %2167 = vadd.xlane.f32.xlu0 %v2166
        %v2168 = vpop.xlane.xlu0 %2167
        %v2169 = vsel %vm804, %v2155, 0.0
        %2170 = vadd.xlane.f32.xlu0 %v2169
        %v2171 = vpop.xlane.xlu0 %2170
        %v2172 = vsel %vm804, %v2156, 0.0
        %2173 = vadd.xlane.f32.xlu0 %v2172
        %v2174 = vpop.xlane.xlu0 %2173
        %v2175 = vsel %vm804, %v2157, 0.0
        %2176 = vadd.xlane.f32.xlu0 %v2175
        %v2177 = vpop.xlane.xlu0 %2176
        %v2178 = vrot.slane %v2168, 4
        %v2179 = vadd.f32 %v2168, %v2178
        %v2180 = vrot.slane %v2179, 2
        %v2181 = vadd.f32 %v2179, %v2180
        %v2182 = vrot.slane %v2181, 1
        %v2183 = vadd.f32 %v2181, %v2182
        %v2184 = vrot.slane %v2171, 4
        %v2185 = vadd.f32 %v2171, %v2184
        %v2186 = vrot.slane %v2185, 2
        %v2187 = vadd.f32 %v2185, %v2186
        %v2188 = vrot.slane %v2187, 1
        %v2189 = vadd.f32 %v2187, %v2188
        %v2190 = vrot.slane %v2174, 4
        %v2191 = vadd.f32 %v2174, %v2190
        %v2192 = vrot.slane %v2191, 2
        %v2193 = vadd.f32 %v2191, %v2192
        %v2194 = vrot.slane %v2193, 1
        %v2195 = vadd.f32 %v2193, %v2194
        %v2196 = vrot.slane %v2177, 4
        %v2197 = vadd.f32 %v2177, %v2196
        %v2198 = vrot.slane %v2197, 2
        %v2199 = vadd.f32 %v2197, %v2198
        %v2200 = vrot.slane %v2199, 1
        %v2201 = vadd.f32 %v2199, %v2200
        %v2202 = vmul.f32 %v2183, 0.00390625
        %v2203 = vmul.f32 %v2189, 0.00390625
        %v2204 = vmul.f32 %v2195, 0.00390625
        %v2205 = vmul.f32 %v2201, 0.00390625
        %v2206 = vsub.f32 %v2154, %v2202
        %v2207 = vsub.f32 %v2155, %v2203
        %v2208 = vsub.f32 %v2156, %v2204
        %v2209 = vsub.f32 %v2157, %v2205
        %v2210 = vmul.f32 %v2206, %v2206
        %v2211 = vmul.f32 %v2207, %v2207
        %v2212 = vmul.f32 %v2208, %v2208
        %v2213 = vmul.f32 %v2209, %v2209
        %v2214 = vsel %vm804, %v2210, 0.0
        %2215 = vadd.xlane.f32.xlu0 %v2214
        %v2216 = vpop.xlane.xlu0 %2215
        %v2217 = vsel %vm804, %v2211, 0.0
        %2218 = vadd.xlane.f32.xlu0 %v2217
        %v2219 = vpop.xlane.xlu0 %2218
        %v2220 = vsel %vm804, %v2212, 0.0
        %2221 = vadd.xlane.f32.xlu0 %v2220
        %v2222 = vpop.xlane.xlu0 %2221
        %v2223 = vsel %vm804, %v2213, 0.0
        %2224 = vadd.xlane.f32.xlu0 %v2223
        %v2225 = vpop.xlane.xlu0 %2224
        %v2226 = vrot.slane %v2216, 4
        %v2227 = vadd.f32 %v2216, %v2226
        %v2228 = vrot.slane %v2227, 2
        %v2229 = vadd.f32 %v2227, %v2228
        %v2230 = vrot.slane %v2229, 1
        %v2231 = vadd.f32 %v2229, %v2230
        %v2232 = vrot.slane %v2219, 4
        %v2233 = vadd.f32 %v2219, %v2232
        %v2234 = vrot.slane %v2233, 2
        %v2235 = vadd.f32 %v2233, %v2234
        %v2236 = vrot.slane %v2235, 1
        %v2237 = vadd.f32 %v2235, %v2236
        %v2238 = vrot.slane %v2222, 4
        %v2239 = vadd.f32 %v2222, %v2238
        %v2240 = vrot.slane %v2239, 2
        %v2241 = vadd.f32 %v2239, %v2240
        %v2242 = vrot.slane %v2241, 1
        %v2243 = vadd.f32 %v2241, %v2242
        %v2244 = vrot.slane %v2225, 4
        %v2245 = vadd.f32 %v2225, %v2244
        %v2246 = vrot.slane %v2245, 2
        %v2247 = vadd.f32 %v2245, %v2246
        %v2248 = vrot.slane %v2247, 1
        %v2249 = vadd.f32 %v2247, %v2248
        %v2250 = vmul.f32 %v2231, 0.00390625
        %v2251 = vmul.f32 %v2237, 0.00390625
        %v2252 = vmul.f32 %v2243, 0.00390625
        %v2253 = vmul.f32 %v2249, 0.00390625
        %v2254 = vadd.f32 %v2250, 1e-12
        %v2255 = vadd.f32 %v2251, 1e-12
        %v2256 = vadd.f32 %v2252, 1e-12
        %v2257 = vadd.f32 %v2253, 1e-12
        %v2258 = vrsqrt.pop %v2254
        %v2259 = vrsqrt.pop %v2255
        %v2260 = vrsqrt.pop %v2256
        %v2261 = vrsqrt.pop %v2257
        %v2262 = vmul.f32 %v2206, %v2258
        %v2263 = vmul.f32 %v2207, %v2259
        %v2264 = vmul.f32 %v2208, %v2260
        %v2265 = vmul.f32 %v2209, %v2261
        %v2266 = vld [vmem:[%s14] sm:$0x1]
        %v2268 = vlaneseq
        %v2269 = vshrl.u32 %v2268, 7
        %v2270 = vsub.s32 0, %v2269
        %v2271 = vrot.slane %v2266, %v2270
        %v2273 = vmul.f32 %v2262, %v2271
        %v2274 = vmul.f32 %v2263, %v2271
        %v2275 = vmul.f32 %v2264, %v2271
        %v2276 = vmul.f32 %v2265, %v2271
        %v2277 = vld [vmem:[%s15] sm:$0x1]
        %v2279 = vlaneseq
        %v2280 = vshrl.u32 %v2279, 7
        %v2281 = vsub.s32 0, %v2280
        %v2282 = vrot.slane %v2277, %v2281
        %v2284 = vadd.f32 %v2273, %v2282
        %v2285 = vadd.f32 %v2274, %v2282
        %v2286 = vadd.f32 %v2275, %v2282
        %v2287 = vadd.f32 %v2276, %v2282
        %v2288 = vld [vmem:[%s677] sm:$0xff]
        %v2289 = vld [vmem:[%s677 + $0x8] sm:$0xff]
        %v2290 = vld [vmem:[%s677 + $0x10] sm:$0xff]
        %v2291 = vld [vmem:[%s677 + $0x18] sm:$0xff]
        %v2292 = vadd.f32 %v2284, %v2288
        %v2293 = vadd.f32 %v2285, %v2289
        %v2294 = vadd.f32 %v2286, %v2290
        %v2295 = vadd.f32 %v2287, %v2291
        %2296 = vst.msk [vmem:[%s727] sm:$0xff] %vm804, %v2292
        %2297 = vst.msk [vmem:[%s727 + $0x8] sm:$0xff] %vm804, %v2293
        %2298 = vst.msk [vmem:[%s727 + $0x10] sm:$0xff] %vm804, %v2294
        %2299 = vst.msk [vmem:[%s727 + $0x18] sm:$0xff] %vm804, %v2295
      $region92: #{sepformer_block.2} parent=83 // pred_fallthru
        _
      %s2300 = smul.u32 4, %s31
      %p2301 = scmp.lt.s32.totalorder %s2300, 7
      %s2302 = scalar_select %p2301, %s2300, 7
      %s2303 = smul.addr %s2302, 8
      %s2304 = scalar_lea.vmem %s16, %s2303
      // Predicated region
      $region93: #{sepformer_block.2} parent=83 // pred_check
        %p2305 = pneg %p458
      $region94: #{sepformer_block.2} parent=83 // pred_check_branch
        %2307 = sbr.rel (%p2305) target = $region96
      $region95: #{sepformer_block.2} parent=83 // pred_region
        %s2308 = smul.u32 4, %s31
      $region96: #{sepformer_block.2} parent=83 // pred_fallthru
        _
    $region84: #{sepformer_block.2} parent=5 // pred_fallthru
      _
    %p2309 = scmp.le.s32.totalorder 2, %s22
    // Predicated region
    $region97: #{sepformer_block.2} parent=5 // pred_check
      %p2310 = pneg %p2309
    $region98: #{sepformer_block.2} parent=5 // pred_check_branch
      %2312 = sbr.rel (%p2310) target = $region100
    $region99: #{sepformer_block.2} parent=5 // pred_region
      %s2313 = ssub.s32 %s22, 2
      // Predicated region
      $region101: #{sepformer_block.2} parent=99 // pred_check
        %p2314 = pneg %p464
      $region102: #{sepformer_block.2} parent=99 // pred_check_branch
        %2316 = sbr.rel (%p2314) target = $region104
      $region103: #{sepformer_block.2} parent=99 // pred_region
        %s2317 = smul.u32 4, %s33
        %p2318 = scmp.lt.s32.totalorder %s2317, 7
        %s2319 = scalar_select %p2318, %s2317, 7
        %s2320 = smul.addr %s2319, 8
        %s2321 = scalar_lea.vmem %s16, %s2320
      $region104: #{sepformer_block.2} parent=99 // pred_fallthru
        _
    $region100: #{sepformer_block.2} parent=5 // pred_fallthru
      _
  $region6: #{sepformer_block.2} parent=0 // loop_footer
    %s26 = sadd.s32 1, %s22
  $region7: #{sepformer_block.2} parent=0 // loop_footer_branch
    %21 = sbr.rel target = $region3
  $region8: #{sepformer_block.2} parent=0 // loop_exit
    _

// kernel: sepformer_block.3
$region0: #{sepformer_block.3}
  #allocation0 [shape = 'u32[]', space=smem, size = 0x4, offset = 0x4, fixed_abs, tag = 'smem constant byte address 0x4 - core index']
  #allocation1 [shape = 'u32[144,128]{1,0:T(1,128)}', space=vmem, size = 0x12000, scoped, tag = 'internal scratch']
  #allocation2 [shape = 'f32[8,4,32]{2,1,0:T(4,128)}', space=vmem, size = 0x4000, scoped, tag = 'scratch operand']
  %s0 = inlined_call_operand.vmem [shape: f32[16,4,32], index: 0, kind: input, shape index: {}]
  %s1 = inlined_call_operand.vmem [shape: f32[4,32], index: 1, kind: input, shape index: {}]
  %s2 = inlined_call_operand.vmem [shape: bf16[2,32,96], index: 2, kind: input, shape index: {}]
  %s3 = inlined_call_operand.vmem [shape: f32[2,1,96], index: 3, kind: input, shape index: {}]
  %s4 = inlined_call_operand.vmem [shape: bf16[2,32,32], index: 4, kind: input, shape index: {}]
  %s5 = inlined_call_operand.vmem [shape: f32[2,1,32], index: 5, kind: input, shape index: {}]
  %s6 = inlined_call_operand.vmem [shape: f32[2,1,32], index: 6, kind: input, shape index: {}]
  %s7 = inlined_call_operand.vmem [shape: f32[2,1,32], index: 7, kind: input, shape index: {}]
  %s8 = inlined_call_operand.vmem [shape: f32[2,1,32], index: 8, kind: input, shape index: {}]
  %s9 = inlined_call_operand.vmem [shape: f32[2,1,32], index: 9, kind: input, shape index: {}]
  %s10 = inlined_call_operand.vmem [shape: bf16[2,32,64], index: 10, kind: input, shape index: {}]
  %s11 = inlined_call_operand.vmem [shape: f32[2,1,64], index: 11, kind: input, shape index: {}]
  %s12 = inlined_call_operand.vmem [shape: bf16[2,64,32], index: 12, kind: input, shape index: {}]
  %s13 = inlined_call_operand.vmem [shape: f32[2,1,32], index: 13, kind: input, shape index: {}]
  %s14 = inlined_call_operand.vmem [shape: f32[1,32], index: 14, kind: input, shape index: {}]
  %s15 = inlined_call_operand.vmem [shape: f32[1,32], index: 15, kind: input, shape index: {}]
  %s16 = inlined_call_operand.vmem [shape: f32[16,4,32], index: 16, kind: output, shape index: {}]
  %s17 = sld [smem:[#allocation0]]
  $region105: #{sepformer_block.3} parent=0
    _
  %s19 = ssub.s32 1, %s17
  %s20 = scalar_select 0, %s19, %s17
  loop: start=0, step=1, limit=6
  $region2: #{sepformer_block.3} parent=0 // loop_pre_header
    _
  $region3: #{sepformer_block.3} parent=0 // loop_header
    %s22 = sphi 0, %s26
    %p23 = scmp.ge.s32.totalorder %s22, 6
    %s29 = sphi 0, %s41
    %s30 = sphi 0, %s37
    %s31 = sphi 0, %s29
    %s32 = sphi 0, %s30
    %s33 = sphi 0, %s31
    %s34 = sphi 0, %s32
    %s44 = sphi 0, %s46
    %s47 = sphi 0, %s44
    %s48 = sphi 0, %s47
    %s64 = sphi 0, %s48
    %s68 = sphi 0, %s68
    %s70 = sphi 0, %s68
    %s71 = sphi 0, %s70
    %s85 = sphi 0, %s71
    %s91 = sphi 0, %s93
    %s94 = sphi 0, %s91
    %s95 = sphi 0, %s94
    %s111 = sphi 0, %s95
    %s117 = sphi 0, %s119
    %s120 = sphi 0, %s117
    %s121 = sphi 0, %s120
    %s137 = sphi 0, %s121
    %s143 = sphi 0, %s145
    %s146 = sphi 0, %s143
    %s147 = sphi 0, %s146
    %s163 = sphi 0, %s147
    %s169 = sphi 0, %s171
    %s172 = sphi 0, %s169
    %s173 = sphi 0, %s172
    %s189 = sphi 0, %s173
    %s195 = sphi 0, %s197
    %s198 = sphi 0, %s195
    %s199 = sphi 0, %s198
    %s215 = sphi 0, %s199
    %s221 = sphi 0, %s223
    %s224 = sphi 0, %s221
    %s225 = sphi 0, %s224
    %s241 = sphi 0, %s225
    %s247 = sphi 0, %s249
    %s250 = sphi 0, %s247
    %s251 = sphi 0, %s250
    %s267 = sphi 0, %s251
    %s273 = sphi 0, %s275
    %s276 = sphi 0, %s273
    %s277 = sphi 0, %s276
    %s293 = sphi 0, %s277
    %s299 = sphi 0, %s301
    %s302 = sphi 0, %s299
    %s303 = sphi 0, %s302
    %s319 = sphi 0, %s303
    %s325 = sphi 0, %s327
    %s328 = sphi 0, %s325
    %s329 = sphi 0, %s328
    %s345 = sphi 0, %s329
    %s351 = sphi 0, %s353
    %s354 = sphi 0, %s351
    %s355 = sphi 0, %s354
    %s371 = sphi 0, %s355
    %s377 = sphi 0, %s379
    %s380 = sphi 0, %s377
    %s381 = sphi 0, %s380
    %s397 = sphi 0, %s381
    %s401 = sphi 0, %s401
    %s403 = sphi 0, %s401
    %s404 = sphi 0, %s403
    %s418 = sphi 0, %s404
    %s422 = sphi 0, %s422
    %s424 = sphi 0, %s422
    %s425 = sphi 0, %s424
    %s439 = sphi 0, %s425
    %s445 = sphi 0, %s447
    %s448 = sphi 0, %s445
    %s449 = sphi 0, %s448
    %s465 = sphi 0, %s449
  $region4: #{sepformer_block.3} parent=0 // loop_header_branch
    %25 = sbr.rel (%p23) target = $region8
  $region5: #{sepformer_block.3} parent=0 // loop_body
    %s27 = ssub.s32 %s22, 1
    %s28 = ssub.s32 %s22, 2
    %s35 = sadd.s32 1, %s30
    %p36 = scmp.ge.s32.totalorder %s35, 2
    %s37 = scalar_select %p36, 0, %s35
    %s38 = sadd.s32 1, %s29
    %s39 = scalar_select %p36, %s38, %s29
    %p40 = scmp.ge.s32.totalorder %s39, 2
    %s41 = scalar_select %p40, 0, %s39
    %s42 = ssub.s32 %s29, %s41
    %p43 = scmp.eq.s32.totalorder %s42, 0
    %s45 = sadd.s32 %s44, 1
    %s46 = scalar_select %p43, %s44, %s45
    %p49 = pneg %p43
    %p50 = scmp.eq.s32.totalorder %s22, 3
    %p51 = por %p49, %p50
    %p52 = scmp.ne.s32.totalorder %s44, %s47
    %p53 = scmp.eq.s32.totalorder %s22, 0
    %p54 = por %p52, %p53
    %p55 = scmp.ne.s32.totalorder %s44, %s47
    %p56 = scmp.eq.s32.totalorder %s27, 3
    %p57 = por %p55, %p56
    %p58 = scmp.ne.s32.totalorder %s47, %s48
    %p59 = scmp.eq.s32.totalorder %s27, 0
    %p60 = por %p58, %p59
    %p61 = scmp.ne.s32.totalorder %s47, %s48
    %p62 = scmp.eq.s32.totalorder %s28, 3
    %p63 = por %p61, %p62
    %p65 = scmp.ne.s32.totalorder %s48, %s64
    %p66 = scmp.eq.s32.totalorder %s28, 0
    %p67 = por %p65, %p66
    %s69 = sadd.s32 %s68, 1
    %p72 = scmp.eq.s32.totalorder %s22, 3
    %p73 = scmp.ne.s32.totalorder %s68, %s70
    %p74 = scmp.eq.s32.totalorder %s22, 0
    %p75 = por %p73, %p74
    %p76 = scmp.ne.s32.totalorder %s68, %s70
    %p77 = scmp.eq.s32.totalorder %s27, 3
    %p78 = por %p76, %p77
    %p79 = scmp.ne.s32.totalorder %s70, %s71
    %p80 = scmp.eq.s32.totalorder %s27, 0
    %p81 = por %p79, %p80
    %p82 = scmp.ne.s32.totalorder %s70, %s71
    %p83 = scmp.eq.s32.totalorder %s28, 3
    %p84 = por %p82, %p83
    %p86 = scmp.ne.s32.totalorder %s71, %s85
    %p87 = scmp.eq.s32.totalorder %s28, 0
    %p88 = por %p86, %p87
    %s89 = ssub.s32 %s30, %s37
    %p90 = scmp.eq.s32.totalorder %s89, 0
    %s92 = sadd.s32 %s91, 1
    %s93 = scalar_select %p90, %s91, %s92
    %p96 = pneg %p90
    %p97 = scmp.eq.s32.totalorder %s22, 3
    %p98 = por %p96, %p97
    %p99 = scmp.ne.s32.totalorder %s91, %s94
    %p100 = scmp.eq.s32.totalorder %s22, 0
    %p101 = por %p99, %p100
    %p102 = scmp.ne.s32.totalorder %s91, %s94
    %p103 = scmp.eq.s32.totalorder %s27, 3
    %p104 = por %p102, %p103
    %p105 = scmp.ne.s32.totalorder %s94, %s95
    %p106 = scmp.eq.s32.totalorder %s27, 0
    %p107 = por %p105, %p106
    %p108 = scmp.ne.s32.totalorder %s94, %s95
    %p109 = scmp.eq.s32.totalorder %s28, 3
    %p110 = por %p108, %p109
    %p112 = scmp.ne.s32.totalorder %s95, %s111
    %p113 = scmp.eq.s32.totalorder %s28, 0
    %p114 = por %p112, %p113
    %s115 = ssub.s32 %s30, %s37
    %p116 = scmp.eq.s32.totalorder %s115, 0
    %s118 = sadd.s32 %s117, 1
    %s119 = scalar_select %p116, %s117, %s118
    %p122 = pneg %p116
    %p123 = scmp.eq.s32.totalorder %s22, 3
    %p124 = por %p122, %p123
    %p125 = scmp.ne.s32.totalorder %s117, %s120
    %p126 = scmp.eq.s32.totalorder %s22, 0
    %p127 = por %p125, %p126
    %p128 = scmp.ne.s32.totalorder %s117, %s120
    %p129 = scmp.eq.s32.totalorder %s27, 3
    %p130 = por %p128, %p129
    %p131 = scmp.ne.s32.totalorder %s120, %s121
    %p132 = scmp.eq.s32.totalorder %s27, 0
    %p133 = por %p131, %p132
    %p134 = scmp.ne.s32.totalorder %s120, %s121
    %p135 = scmp.eq.s32.totalorder %s28, 3
    %p136 = por %p134, %p135
    %p138 = scmp.ne.s32.totalorder %s121, %s137
    %p139 = scmp.eq.s32.totalorder %s28, 0
    %p140 = por %p138, %p139
    %s141 = ssub.s32 %s30, %s37
    %p142 = scmp.eq.s32.totalorder %s141, 0
    %s144 = sadd.s32 %s143, 1
    %s145 = scalar_select %p142, %s143, %s144
    %p148 = pneg %p142
    %p149 = scmp.eq.s32.totalorder %s22, 3
    %p150 = por %p148, %p149
    %p151 = scmp.ne.s32.totalorder %s143, %s146
    %p152 = scmp.eq.s32.totalorder %s22, 0
    %p153 = por %p151, %p152
    %p154 = scmp.ne.s32.totalorder %s143, %s146
    %p155 = scmp.eq.s32.totalorder %s27, 3
    %p156 = por %p154, %p155
    %p157 = scmp.ne.s32.totalorder %s146, %s147
    %p158 = scmp.eq.s32.totalorder %s27, 0
    %p159 = por %p157, %p158
    %p160 = scmp.ne.s32.totalorder %s146, %s147
    %p161 = scmp.eq.s32.totalorder %s28, 3
    %p162 = por %p160, %p161
    %p164 = scmp.ne.s32.totalorder %s147, %s163
    %p165 = scmp.eq.s32.totalorder %s28, 0
    %p166 = por %p164, %p165
    %s167 = ssub.s32 %s30, %s37
    %p168 = scmp.eq.s32.totalorder %s167, 0
    %s170 = sadd.s32 %s169, 1
    %s171 = scalar_select %p168, %s169, %s170
    %p174 = pneg %p168
    %p175 = scmp.eq.s32.totalorder %s22, 3
    %p176 = por %p174, %p175
    %p177 = scmp.ne.s32.totalorder %s169, %s172
    %p178 = scmp.eq.s32.totalorder %s22, 0
    %p179 = por %p177, %p178
    %p180 = scmp.ne.s32.totalorder %s169, %s172
    %p181 = scmp.eq.s32.totalorder %s27, 3
    %p182 = por %p180, %p181
    %p183 = scmp.ne.s32.totalorder %s172, %s173
    %p184 = scmp.eq.s32.totalorder %s27, 0
    %p185 = por %p183, %p184
    %p186 = scmp.ne.s32.totalorder %s172, %s173
    %p187 = scmp.eq.s32.totalorder %s28, 3
    %p188 = por %p186, %p187
    %p190 = scmp.ne.s32.totalorder %s173, %s189
    %p191 = scmp.eq.s32.totalorder %s28, 0
    %p192 = por %p190, %p191
    %s193 = ssub.s32 %s30, %s37
    %p194 = scmp.eq.s32.totalorder %s193, 0
    %s196 = sadd.s32 %s195, 1
    %s197 = scalar_select %p194, %s195, %s196
    %p200 = pneg %p194
    %p201 = scmp.eq.s32.totalorder %s22, 3
    %p202 = por %p200, %p201
    %p203 = scmp.ne.s32.totalorder %s195, %s198
    %p204 = scmp.eq.s32.totalorder %s22, 0
    %p205 = por %p203, %p204
    %p206 = scmp.ne.s32.totalorder %s195, %s198
    %p207 = scmp.eq.s32.totalorder %s27, 3
    %p208 = por %p206, %p207
    %p209 = scmp.ne.s32.totalorder %s198, %s199
    %p210 = scmp.eq.s32.totalorder %s27, 0
    %p211 = por %p209, %p210
    %p212 = scmp.ne.s32.totalorder %s198, %s199
    %p213 = scmp.eq.s32.totalorder %s28, 3
    %p214 = por %p212, %p213
    %p216 = scmp.ne.s32.totalorder %s199, %s215
    %p217 = scmp.eq.s32.totalorder %s28, 0
    %p218 = por %p216, %p217
    %s219 = ssub.s32 %s30, %s37
    %p220 = scmp.eq.s32.totalorder %s219, 0
    %s222 = sadd.s32 %s221, 1
    %s223 = scalar_select %p220, %s221, %s222
    %p226 = pneg %p220
    %p227 = scmp.eq.s32.totalorder %s22, 3
    %p228 = por %p226, %p227
    %p229 = scmp.ne.s32.totalorder %s221, %s224
    %p230 = scmp.eq.s32.totalorder %s22, 0
    %p231 = por %p229, %p230
    %p232 = scmp.ne.s32.totalorder %s221, %s224
    %p233 = scmp.eq.s32.totalorder %s27, 3
    %p234 = por %p232, %p233
    %p235 = scmp.ne.s32.totalorder %s224, %s225
    %p236 = scmp.eq.s32.totalorder %s27, 0
    %p237 = por %p235, %p236
    %p238 = scmp.ne.s32.totalorder %s224, %s225
    %p239 = scmp.eq.s32.totalorder %s28, 3
    %p240 = por %p238, %p239
    %p242 = scmp.ne.s32.totalorder %s225, %s241
    %p243 = scmp.eq.s32.totalorder %s28, 0
    %p244 = por %p242, %p243
    %s245 = ssub.s32 %s30, %s37
    %p246 = scmp.eq.s32.totalorder %s245, 0
    %s248 = sadd.s32 %s247, 1
    %s249 = scalar_select %p246, %s247, %s248
    %p252 = pneg %p246
    %p253 = scmp.eq.s32.totalorder %s22, 3
    %p254 = por %p252, %p253
    %p255 = scmp.ne.s32.totalorder %s247, %s250
    %p256 = scmp.eq.s32.totalorder %s22, 0
    %p257 = por %p255, %p256
    %p258 = scmp.ne.s32.totalorder %s247, %s250
    %p259 = scmp.eq.s32.totalorder %s27, 3
    %p260 = por %p258, %p259
    %p261 = scmp.ne.s32.totalorder %s250, %s251
    %p262 = scmp.eq.s32.totalorder %s27, 0
    %p263 = por %p261, %p262
    %p264 = scmp.ne.s32.totalorder %s250, %s251
    %p265 = scmp.eq.s32.totalorder %s28, 3
    %p266 = por %p264, %p265
    %p268 = scmp.ne.s32.totalorder %s251, %s267
    %p269 = scmp.eq.s32.totalorder %s28, 0
    %p270 = por %p268, %p269
    %s271 = ssub.s32 %s30, %s37
    %p272 = scmp.eq.s32.totalorder %s271, 0
    %s274 = sadd.s32 %s273, 1
    %s275 = scalar_select %p272, %s273, %s274
    %p278 = pneg %p272
    %p279 = scmp.eq.s32.totalorder %s22, 3
    %p280 = por %p278, %p279
    %p281 = scmp.ne.s32.totalorder %s273, %s276
    %p282 = scmp.eq.s32.totalorder %s22, 0
    %p283 = por %p281, %p282
    %p284 = scmp.ne.s32.totalorder %s273, %s276
    %p285 = scmp.eq.s32.totalorder %s27, 3
    %p286 = por %p284, %p285
    %p287 = scmp.ne.s32.totalorder %s276, %s277
    %p288 = scmp.eq.s32.totalorder %s27, 0
    %p289 = por %p287, %p288
    %p290 = scmp.ne.s32.totalorder %s276, %s277
    %p291 = scmp.eq.s32.totalorder %s28, 3
    %p292 = por %p290, %p291
    %p294 = scmp.ne.s32.totalorder %s277, %s293
    %p295 = scmp.eq.s32.totalorder %s28, 0
    %p296 = por %p294, %p295
    %s297 = ssub.s32 %s30, %s37
    %p298 = scmp.eq.s32.totalorder %s297, 0
    %s300 = sadd.s32 %s299, 1
    %s301 = scalar_select %p298, %s299, %s300
    %p304 = pneg %p298
    %p305 = scmp.eq.s32.totalorder %s22, 3
    %p306 = por %p304, %p305
    %p307 = scmp.ne.s32.totalorder %s299, %s302
    %p308 = scmp.eq.s32.totalorder %s22, 0
    %p309 = por %p307, %p308
    %p310 = scmp.ne.s32.totalorder %s299, %s302
    %p311 = scmp.eq.s32.totalorder %s27, 3
    %p312 = por %p310, %p311
    %p313 = scmp.ne.s32.totalorder %s302, %s303
    %p314 = scmp.eq.s32.totalorder %s27, 0
    %p315 = por %p313, %p314
    %p316 = scmp.ne.s32.totalorder %s302, %s303
    %p317 = scmp.eq.s32.totalorder %s28, 3
    %p318 = por %p316, %p317
    %p320 = scmp.ne.s32.totalorder %s303, %s319
    %p321 = scmp.eq.s32.totalorder %s28, 0
    %p322 = por %p320, %p321
    %s323 = ssub.s32 %s30, %s37
    %p324 = scmp.eq.s32.totalorder %s323, 0
    %s326 = sadd.s32 %s325, 1
    %s327 = scalar_select %p324, %s325, %s326
    %p330 = pneg %p324
    %p331 = scmp.eq.s32.totalorder %s22, 3
    %p332 = por %p330, %p331
    %p333 = scmp.ne.s32.totalorder %s325, %s328
    %p334 = scmp.eq.s32.totalorder %s22, 0
    %p335 = por %p333, %p334
    %p336 = scmp.ne.s32.totalorder %s325, %s328
    %p337 = scmp.eq.s32.totalorder %s27, 3
    %p338 = por %p336, %p337
    %p339 = scmp.ne.s32.totalorder %s328, %s329
    %p340 = scmp.eq.s32.totalorder %s27, 0
    %p341 = por %p339, %p340
    %p342 = scmp.ne.s32.totalorder %s328, %s329
    %p343 = scmp.eq.s32.totalorder %s28, 3
    %p344 = por %p342, %p343
    %p346 = scmp.ne.s32.totalorder %s329, %s345
    %p347 = scmp.eq.s32.totalorder %s28, 0
    %p348 = por %p346, %p347
    %s349 = ssub.s32 %s30, %s37
    %p350 = scmp.eq.s32.totalorder %s349, 0
    %s352 = sadd.s32 %s351, 1
    %s353 = scalar_select %p350, %s351, %s352
    %p356 = pneg %p350
    %p357 = scmp.eq.s32.totalorder %s22, 3
    %p358 = por %p356, %p357
    %p359 = scmp.ne.s32.totalorder %s351, %s354
    %p360 = scmp.eq.s32.totalorder %s22, 0
    %p361 = por %p359, %p360
    %p362 = scmp.ne.s32.totalorder %s351, %s354
    %p363 = scmp.eq.s32.totalorder %s27, 3
    %p364 = por %p362, %p363
    %p365 = scmp.ne.s32.totalorder %s354, %s355
    %p366 = scmp.eq.s32.totalorder %s27, 0
    %p367 = por %p365, %p366
    %p368 = scmp.ne.s32.totalorder %s354, %s355
    %p369 = scmp.eq.s32.totalorder %s28, 3
    %p370 = por %p368, %p369
    %p372 = scmp.ne.s32.totalorder %s355, %s371
    %p373 = scmp.eq.s32.totalorder %s28, 0
    %p374 = por %p372, %p373
    %s375 = ssub.s32 %s30, %s37
    %p376 = scmp.eq.s32.totalorder %s375, 0
    %s378 = sadd.s32 %s377, 1
    %s379 = scalar_select %p376, %s377, %s378
    %p382 = pneg %p376
    %p383 = scmp.eq.s32.totalorder %s22, 3
    %p384 = por %p382, %p383
    %p385 = scmp.ne.s32.totalorder %s377, %s380
    %p386 = scmp.eq.s32.totalorder %s22, 0
    %p387 = por %p385, %p386
    %p388 = scmp.ne.s32.totalorder %s377, %s380
    %p389 = scmp.eq.s32.totalorder %s27, 3
    %p390 = por %p388, %p389
    %p391 = scmp.ne.s32.totalorder %s380, %s381
    %p392 = scmp.eq.s32.totalorder %s27, 0
    %p393 = por %p391, %p392
    %p394 = scmp.ne.s32.totalorder %s380, %s381
    %p395 = scmp.eq.s32.totalorder %s28, 3
    %p396 = por %p394, %p395
    %p398 = scmp.ne.s32.totalorder %s381, %s397
    %p399 = scmp.eq.s32.totalorder %s28, 0
    %p400 = por %p398, %p399
    %s402 = sadd.s32 %s401, 1
    %p405 = scmp.eq.s32.totalorder %s22, 3
    %p406 = scmp.ne.s32.totalorder %s401, %s403
    %p407 = scmp.eq.s32.totalorder %s22, 0
    %p408 = por %p406, %p407
    %p409 = scmp.ne.s32.totalorder %s401, %s403
    %p410 = scmp.eq.s32.totalorder %s27, 3
    %p411 = por %p409, %p410
    %p412 = scmp.ne.s32.totalorder %s403, %s404
    %p413 = scmp.eq.s32.totalorder %s27, 0
    %p414 = por %p412, %p413
    %p415 = scmp.ne.s32.totalorder %s403, %s404
    %p416 = scmp.eq.s32.totalorder %s28, 3
    %p417 = por %p415, %p416
    %p419 = scmp.ne.s32.totalorder %s404, %s418
    %p420 = scmp.eq.s32.totalorder %s28, 0
    %p421 = por %p419, %p420
    %s423 = sadd.s32 %s422, 1
    %p426 = scmp.eq.s32.totalorder %s22, 3
    %p427 = scmp.ne.s32.totalorder %s422, %s424
    %p428 = scmp.eq.s32.totalorder %s22, 0
    %p429 = por %p427, %p428
    %p430 = scmp.ne.s32.totalorder %s422, %s424
    %p431 = scmp.eq.s32.totalorder %s27, 3
    %p432 = por %p430, %p431
    %p433 = scmp.ne.s32.totalorder %s424, %s425
    %p434 = scmp.eq.s32.totalorder %s27, 0
    %p435 = por %p433, %p434
    %p436 = scmp.ne.s32.totalorder %s424, %s425
    %p437 = scmp.eq.s32.totalorder %s28, 3
    %p438 = por %p436, %p437
    %p440 = scmp.ne.s32.totalorder %s425, %s439
    %p441 = scmp.eq.s32.totalorder %s28, 0
    %p442 = por %p440, %p441
    %s443 = ssub.s32 %s29, %s41
    %p444 = scmp.eq.s32.totalorder %s443, 0
    %s446 = sadd.s32 %s445, 1
    %s447 = scalar_select %p444, %s445, %s446
    %p450 = pneg %p444
    %p451 = scmp.eq.s32.totalorder %s22, 3
    %p452 = por %p450, %p451
    %p453 = scmp.ne.s32.totalorder %s445, %s448
    %p454 = scmp.eq.s32.totalorder %s22, 0
    %p455 = por %p453, %p454
    %p456 = scmp.ne.s32.totalorder %s445, %s448
    %p457 = scmp.eq.s32.totalorder %s27, 3
    %p458 = por %p456, %p457
    %p459 = scmp.ne.s32.totalorder %s448, %s449
    %p460 = scmp.eq.s32.totalorder %s27, 0
    %p461 = por %p459, %p460
    %p462 = scmp.ne.s32.totalorder %s448, %s449
    %p463 = scmp.eq.s32.totalorder %s28, 3
    %p464 = por %p462, %p463
    %p466 = scmp.ne.s32.totalorder %s449, %s465
    %p467 = scmp.eq.s32.totalorder %s28, 0
    %p468 = por %p466, %p467
    %p469 = scmp.le.s32.totalorder 1, %s22
    %p470 = scmp.lt.s32.totalorder %s22, 5
    %p471 = pnand %p469, %p470
    %p472 = pneg %p471
    // Predicated region
    $region9: #{sepformer_block.3} parent=5 // pred_check
      _
    $region10: #{sepformer_block.3} parent=5 // pred_check_branch
      %474 = sbr.rel (%p471) target = $region12
    $region11: #{sepformer_block.3} parent=5 // pred_region
      %s475 = ssub.s32 %s22, 1
      // Predicated region
      $region13: #{sepformer_block.3} parent=11 // pred_check
        %p476 = pneg %p81
      $region14: #{sepformer_block.3} parent=11 // pred_check_branch
        %478 = sbr.rel (%p476) target = $region16
      $region15: #{sepformer_block.3} parent=11 // pred_region
        _
      $region16: #{sepformer_block.3} parent=11 // pred_fallthru
        _
      // Predicated region
      $region17: #{sepformer_block.3} parent=11 // pred_check
        %p479 = pneg %p414
      $region18: #{sepformer_block.3} parent=11 // pred_check_branch
        %481 = sbr.rel (%p479) target = $region20
      $region19: #{sepformer_block.3} parent=11 // pred_region
        _
      $region20: #{sepformer_block.3} parent=11 // pred_fallthru
        _
      // Predicated region
      $region21: #{sepformer_block.3} parent=11 // pred_check
        %p482 = pneg %p435
      $region22: #{sepformer_block.3} parent=11 // pred_check_branch
        %484 = sbr.rel (%p482) target = $region24
      $region23: #{sepformer_block.3} parent=11 // pred_region
        _
      $region24: #{sepformer_block.3} parent=11 // pred_fallthru
        _
    $region12: #{sepformer_block.3} parent=5 // pred_fallthru
      _
    %p485 = scmp.lt.s32.totalorder %s22, 4
    // Predicated region
    $region25: #{sepformer_block.3} parent=5 // pred_check
      %p486 = pneg %p485
    $region26: #{sepformer_block.3} parent=5 // pred_check_branch
      %488 = sbr.rel (%p486) target = $region28
    $region27: #{sepformer_block.3} parent=5 // pred_region
      // Predicated region
      $region29: #{sepformer_block.3} parent=27 // pred_check
        %p489 = pneg %p54
      $region30: #{sepformer_block.3} parent=27 // pred_check_branch
        %491 = sbr.rel (%p489) target = $region32
      $region31: #{sepformer_block.3} parent=27 // pred_region
        %s492 = smul.u32 8, %s29
        %p493 = scmp.lt.s32.totalorder %s492, 15
        %s494 = scalar_select %p493, %s492, 15
        %s495 = smul.addr %s494, 4
        %s496 = scalar_lea.vmem %s0, %s495
        %s497 = smul.u32 8, %s29
      $region32: #{sepformer_block.3} parent=27 // pred_fallthru
        _
      // Predicated region
      $region33: #{sepformer_block.3} parent=27 // pred_check
        %p498 = pneg %p101
      $region34: #{sepformer_block.3} parent=27 // pred_check_branch
        %500 = sbr.rel (%p498) target = $region36
      $region35: #{sepformer_block.3} parent=27 // pred_region
        %p501 = scmp.lt.s32.totalorder %s30, 1
        %s502 = scalar_select %p501, %s30, 1
        %s503 = smul.addr %s502, 4
        %s504 = smul.addr %s503, 4
        %s505 = scalar_lea.vmem %s2, %s504
      $region36: #{sepformer_block.3} parent=27 // pred_fallthru
        _
      // Predicated region
      $region37: #{sepformer_block.3} parent=27 // pred_check
        %p506 = pneg %p127
      $region38: #{sepformer_block.3} parent=27 // pred_check_branch
        %508 = sbr.rel (%p506) target = $region40
      $region39: #{sepformer_block.3} parent=27 // pred_region
        %p509 = scmp.lt.s32.totalorder %s30, 1
        %s510 = scalar_select %p509, %s30, 1
        %s511 = scalar_lea.vmem %s3, %s510
      $region40: #{sepformer_block.3} parent=27 // pred_fallthru
        _
      // Predicated region
      $region41: #{sepformer_block.3} parent=27 // pred_check
        %p512 = pneg %p153
      $region42: #{sepformer_block.3} parent=27 // pred_check_branch
        %514 = sbr.rel (%p512) target = $region44
      $region43: #{sepformer_block.3} parent=27 // pred_region
        %p515 = scmp.lt.s32.totalorder %s30, 1
        %s516 = scalar_select %p515, %s30, 1
        %s517 = smul.addr %s516, 4
        %s518 = smul.addr %s517, 4
        %s519 = scalar_lea.vmem %s4, %s518
      $region44: #{sepformer_block.3} parent=27 // pred_fallthru
        _
      // Predicated region
      $region45: #{sepformer_block.3} parent=27 // pred_check
        %p520 = pneg %p179
      $region46: #{sepformer_block.3} parent=27 // pred_check_branch
        %522 = sbr.rel (%p520) target = $region48
      $region47: #{sepformer_block.3} parent=27 // pred_region
        %p523 = scmp.lt.s32.totalorder %s30, 1
        %s524 = scalar_select %p523, %s30, 1
        %s525 = scalar_lea.vmem %s5, %s524
      $region48: #{sepformer_block.3} parent=27 // pred_fallthru
        _
      // Predicated region
      $region49: #{sepformer_block.3} parent=27 // pred_check
        %p526 = pneg %p205
      $region50: #{sepformer_block.3} parent=27 // pred_check_branch
        %528 = sbr.rel (%p526) target = $region52
      $region51: #{sepformer_block.3} parent=27 // pred_region
        %p529 = scmp.lt.s32.totalorder %s30, 1
        %s530 = scalar_select %p529, %s30, 1
        %s531 = scalar_lea.vmem %s6, %s530
      $region52: #{sepformer_block.3} parent=27 // pred_fallthru
        _
      // Predicated region
      $region53: #{sepformer_block.3} parent=27 // pred_check
        %p532 = pneg %p231
      $region54: #{sepformer_block.3} parent=27 // pred_check_branch
        %534 = sbr.rel (%p532) target = $region56
      $region55: #{sepformer_block.3} parent=27 // pred_region
        %p535 = scmp.lt.s32.totalorder %s30, 1
        %s536 = scalar_select %p535, %s30, 1
        %s537 = scalar_lea.vmem %s7, %s536
      $region56: #{sepformer_block.3} parent=27 // pred_fallthru
        _
      // Predicated region
      $region57: #{sepformer_block.3} parent=27 // pred_check
        %p538 = pneg %p257
      $region58: #{sepformer_block.3} parent=27 // pred_check_branch
        %540 = sbr.rel (%p538) target = $region60
      $region59: #{sepformer_block.3} parent=27 // pred_region
        %p541 = scmp.lt.s32.totalorder %s30, 1
        %s542 = scalar_select %p541, %s30, 1
        %s543 = scalar_lea.vmem %s8, %s542
      $region60: #{sepformer_block.3} parent=27 // pred_fallthru
        _
      // Predicated region
      $region61: #{sepformer_block.3} parent=27 // pred_check
        %p544 = pneg %p283
      $region62: #{sepformer_block.3} parent=27 // pred_check_branch
        %546 = sbr.rel (%p544) target = $region64
      $region63: #{sepformer_block.3} parent=27 // pred_region
        %p547 = scmp.lt.s32.totalorder %s30, 1
        %s548 = scalar_select %p547, %s30, 1
        %s549 = scalar_lea.vmem %s9, %s548
      $region64: #{sepformer_block.3} parent=27 // pred_fallthru
        _
      // Predicated region
      $region65: #{sepformer_block.3} parent=27 // pred_check
        %p550 = pneg %p309
      $region66: #{sepformer_block.3} parent=27 // pred_check_branch
        %552 = sbr.rel (%p550) target = $region68
      $region67: #{sepformer_block.3} parent=27 // pred_region
        %p553 = scmp.lt.s32.totalorder %s30, 1
        %s554 = scalar_select %p553, %s30, 1
        %s555 = smul.addr %s554, 4
        %s556 = smul.addr %s555, 4
        %s557 = scalar_lea.vmem %s10, %s556
      $region68: #{sepformer_block.3} parent=27 // pred_fallthru
        _
      // Predicated region
      $region69: #{sepformer_block.3} parent=27 // pred_check
        %p558 = pneg %p335
      $region70: #{sepformer_block.3} parent=27 // pred_check_branch
        %560 = sbr.rel (%p558) target = $region72
      $region71: #{sepformer_block.3} parent=27 // pred_region
        %p561 = scmp.lt.s32.totalorder %s30, 1
        %s562 = scalar_select %p561, %s30, 1
        %s563 = scalar_lea.vmem %s11, %s562
      $region72: #{sepformer_block.3} parent=27 // pred_fallthru
        _
      // Predicated region
      $region73: #{sepformer_block.3} parent=27 // pred_check
        %p564 = pneg %p361
      $region74: #{sepformer_block.3} parent=27 // pred_check_branch
        %566 = sbr.rel (%p564) target = $region76
      $region75: #{sepformer_block.3} parent=27 // pred_region
        %p567 = scmp.lt.s32.totalorder %s30, 1
        %s568 = scalar_select %p567, %s30, 1
        %s569 = smul.addr %s568, 8
        %s570 = smul.addr %s569, 4
        %s571 = scalar_lea.vmem %s12, %s570
      $region76: #{sepformer_block.3} parent=27 // pred_fallthru
        _
      // Predicated region
      $region77: #{sepformer_block.3} parent=27 // pred_check
        %p572 = pneg %p387
      $region78: #{sepformer_block.3} parent=27 // pred_check_branch
        %574 = sbr.rel (%p572) target = $region80
      $region79: #{sepformer_block.3} parent=27 // pred_region
        %p575 = scmp.lt.s32.totalorder %s30, 1
        %s576 = scalar_select %p575, %s30, 1
        %s577 = scalar_lea.vmem %s13, %s576
      $region80: #{sepformer_block.3} parent=27 // pred_fallthru
        _
    $region28: #{sepformer_block.3} parent=5 // pred_fallthru
      _
    %p578 = scmp.le.s32.totalorder 1, %s22
    %p579 = scmp.lt.s32.totalorder %s22, 5
    %p580 = pnand %p578, %p579
    %p581 = pneg %p580
    // Predicated region
    $region81: #{sepformer_block.3} parent=5 // pred_check
      _
    $region82: #{sepformer_block.3} parent=5 // pred_check_branch
      %583 = sbr.rel (%p580) target = $region84
    $region83: #{sepformer_block.3} parent=5 // pred_region
      %s584 = ssub.s32 %s22, 1
      %s585 = smul.u32 8, %s31
      %p586 = scmp.lt.s32.totalorder %s585, 15
      %s587 = scalar_select %p586, %s585, 15
      %s588 = smul.addr %s587, 4
      %s589 = scalar_lea.vmem %s0, %s588
      %p590 = pneg %p60
      %p591 = pneg %p57
      %p592 = pneg %p81
      %p593 = pneg %p78
      %p594 = scmp.lt.s32.totalorder %s32, 1
      %s595 = scalar_select %p594, %s32, 1
      %s596 = smul.addr %s595, 4
      %s597 = smul.addr %s596, 4
      %s598 = scalar_lea.vmem %s2, %s597
      %p599 = pneg %p107
      %p600 = pneg %p104
      %p601 = scmp.lt.s32.totalorder %s32, 1
      %s602 = scalar_select %p601, %s32, 1
      %s603 = scalar_lea.vmem %s3, %s602
      %p604 = pneg %p133
      %p605 = pneg %p130
      %p606 = scmp.lt.s32.totalorder %s32, 1
      %s607 = scalar_select %p606, %s32, 1
      %s608 = smul.addr %s607, 4
      %s609 = smul.addr %s608, 4
      %s610 = scalar_lea.vmem %s4, %s609
      %p611 = pneg %p159
      %p612 = pneg %p156
      %p613 = scmp.lt.s32.totalorder %s32, 1
      %s614 = scalar_select %p613, %s32, 1
      %s615 = scalar_lea.vmem %s5, %s614
      %p616 = pneg %p185
      %p617 = pneg %p182
      %p618 = scmp.lt.s32.totalorder %s32, 1
      %s619 = scalar_select %p618, %s32, 1
      %s620 = scalar_lea.vmem %s6, %s619
      %p621 = pneg %p211
      %p622 = pneg %p208
      %p623 = scmp.lt.s32.totalorder %s32, 1
      %s624 = scalar_select %p623, %s32, 1
      %s625 = scalar_lea.vmem %s7, %s624
      %p626 = pneg %p237
      %p627 = pneg %p234
      %p628 = scmp.lt.s32.totalorder %s32, 1
      %s629 = scalar_select %p628, %s32, 1
      %s630 = scalar_lea.vmem %s8, %s629
      %p631 = pneg %p263
      %p632 = pneg %p260
      %p633 = scmp.lt.s32.totalorder %s32, 1
      %s634 = scalar_select %p633, %s32, 1
      %s635 = scalar_lea.vmem %s9, %s634
      %p636 = pneg %p289
      %p637 = pneg %p286
      %p638 = scmp.lt.s32.totalorder %s32, 1
      %s639 = scalar_select %p638, %s32, 1
      %s640 = smul.addr %s639, 4
      %s641 = smul.addr %s640, 4
      %s642 = scalar_lea.vmem %s10, %s641
      %p643 = pneg %p315
      %p644 = pneg %p312
      %p645 = scmp.lt.s32.totalorder %s32, 1
      %s646 = scalar_select %p645, %s32, 1
      %s647 = scalar_lea.vmem %s11, %s646
      %p648 = pneg %p341
      %p649 = pneg %p338
      %p650 = scmp.lt.s32.totalorder %s32, 1
      %s651 = scalar_select %p650, %s32, 1
      %s652 = smul.addr %s651, 8
      %s653 = smul.addr %s652, 4
      %s654 = scalar_lea.vmem %s12, %s653
      %p655 = pneg %p367
      %p656 = pneg %p364
      %p657 = scmp.lt.s32.totalorder %s32, 1
      %s658 = scalar_select %p657, %s32, 1
      %s659 = scalar_lea.vmem %s13, %s658
      %p660 = pneg %p393
      %p661 = pneg %p390
      %p662 = pneg %p414
      %p663 = pneg %p411
      %p664 = pneg %p435
      %p665 = pneg %p432
      %p666 = pneg %p461
      %p667 = pneg %p458
      %s668 = smul.u32 8, %s31
      %p669 = scmp.lt.s32.totalorder %s668, 15
      %s670 = scalar_select %p669, %s668, 15
      %s671 = smul.addr %s670, 4
      %s672 = scalar_lea.vmem %s16, %s671
      %s673 = smul.u32 8, %s31
      %p674 = scmp.lt.s32.totalorder %s673, 15
      %s675 = scalar_select %p674, %s673, 15
      %s676 = smul.addr %s675, 4
      %s677 = scalar_lea.vmem %s0, %s676
      %s678 = smul.u32 8, %s31
      %p679 = scmp.lt.s32.totalorder %s32, 1
      %s680 = scalar_select %p679, %s32, 1
      %s681 = smul.addr %s680, 4
      %s682 = smul.addr %s681, 4
      %s683 = scalar_lea.vmem %s2, %s682
      %p684 = scmp.lt.s32.totalorder %s32, 1
      %s685 = scalar_select %p684, %s32, 1
      %s686 = scalar_lea.vmem %s3, %s685
      %p687 = scmp.lt.s32.totalorder %s32, 1
      %s688 = scalar_select %p687, %s32, 1
      %s689 = smul.addr %s688, 4
      %s690 = smul.addr %s689, 4
      %s691 = scalar_lea.vmem %s4, %s690
      %p692 = scmp.lt.s32.totalorder %s32, 1
      %s693 = scalar_select %p692, %s32, 1
      %s694 = scalar_lea.vmem %s5, %s693
      %p695 = scmp.lt.s32.totalorder %s32, 1
      %s696 = scalar_select %p695, %s32, 1
      %s697 = scalar_lea.vmem %s6, %s696
      %p698 = scmp.lt.s32.totalorder %s32, 1
      %s699 = scalar_select %p698, %s32, 1
      %s700 = scalar_lea.vmem %s7, %s699
      %p701 = scmp.lt.s32.totalorder %s32, 1
      %s702 = scalar_select %p701, %s32, 1
      %s703 = scalar_lea.vmem %s8, %s702
      %p704 = scmp.lt.s32.totalorder %s32, 1
      %s705 = scalar_select %p704, %s32, 1
      %s706 = scalar_lea.vmem %s9, %s705
      %p707 = scmp.lt.s32.totalorder %s32, 1
      %s708 = scalar_select %p707, %s32, 1
      %s709 = smul.addr %s708, 4
      %s710 = smul.addr %s709, 4
      %s711 = scalar_lea.vmem %s10, %s710
      %p712 = scmp.lt.s32.totalorder %s32, 1
      %s713 = scalar_select %p712, %s32, 1
      %s714 = scalar_lea.vmem %s11, %s713
      %p715 = scmp.lt.s32.totalorder %s32, 1
      %s716 = scalar_select %p715, %s32, 1
      %s717 = smul.addr %s716, 8
      %s718 = smul.addr %s717, 4
      %s719 = scalar_lea.vmem %s12, %s718
      %p720 = scmp.lt.s32.totalorder %s32, 1
      %s721 = scalar_select %p720, %s32, 1
      %s722 = scalar_lea.vmem %s13, %s721
      %s723 = smul.u32 8, %s31
      %p724 = scmp.lt.s32.totalorder %s723, 15
      %s725 = scalar_select %p724, %s723, 15
      %s726 = smul.addr %s725, 4
      %s727 = scalar_lea.vmem %s16, %s726
      %s728 = smul.u32 8, %s31
      %p730 = scmp.eq.s32.totalorder %s32, 0
      // Predicated region
      $region85: #{sepformer_block.3} parent=83 // pred_check
        %p731 = pneg %p730
      $region86: #{sepformer_block.3} parent=83 // pred_check_branch
        %733 = sbr.rel (%p731) target = $region88
      $region87: #{sepformer_block.3} parent=83 // pred_region
        %v734 = vld [vmem:[%s677] sm:$0xf]
        %v735 = vld [vmem:[%s677 + $0x4] sm:$0xf]
        %v736 = vld [vmem:[%s677 + $0x8] sm:$0xf]
        %v737 = vld [vmem:[%s677 + $0xc] sm:$0xf]
        %v738 = vld [vmem:[%s677 + $0x10] sm:$0xf]
        %v739 = vld [vmem:[%s677 + $0x14] sm:$0xf]
        %v740 = vld [vmem:[%s677 + $0x18] sm:$0xf]
        %v741 = vld [vmem:[%s677 + $0x1c] sm:$0xf]
        %v742 = vmul.f32 %v734, 2.0
        %v743 = vmul.f32 %v735, 2.0
        %v744 = vmul.f32 %v736, 2.0
        %v745 = vmul.f32 %v737, 2.0
        %v746 = vmul.f32 %v738, 2.0
        %v747 = vmul.f32 %v739, 2.0
        %v748 = vmul.f32 %v740, 2.0
        %v749 = vmul.f32 %v741, 2.0
        %v750 = vld [vmem:[%s1] sm:$0xf]
        %v751 = vadd.f32 %v742, %v750
        %v752 = vadd.f32 %v743, %v750
        %v753 = vadd.f32 %v744, %v750
        %v754 = vadd.f32 %v745, %v750
        %v755 = vadd.f32 %v746, %v750
        %v756 = vadd.f32 %v747, %v750
        %v757 = vadd.f32 %v748, %v750
        %v758 = vadd.f32 %v749, %v750
        %vm759 = vcmask 257024
        %760 = vst.msk [vmem:[#allocation2] sm:$0xf] %vm759, %v751
        %761 = vst.msk [vmem:[#allocation2 + $0x4] sm:$0xf] %vm759, %v752
        %762 = vst.msk [vmem:[#allocation2 + $0x8] sm:$0xf] %vm759, %v753
        %763 = vst.msk [vmem:[#allocation2 + $0xc] sm:$0xf] %vm759, %v754
        %764 = vst.msk [vmem:[#allocation2 + $0x10] sm:$0xf] %vm759, %v755
        %765 = vst.msk [vmem:[#allocation2 + $0x14] sm:$0xf] %vm759, %v756
        %766 = vst.msk [vmem:[#allocation2 + $0x18] sm:$0xf] %vm759, %v757
        %767 = vst.msk [vmem:[#allocation2 + $0x1c] sm:$0xf] %vm759, %v758
      $region88: #{sepformer_block.3} parent=83 // pred_fallthru
        _
      %v768 = vld [vmem:[%s683] sm:$0xf]
      %v769 = vld [vmem:[%s683 + $0x4] sm:$0xf]
      %v770 = vld [vmem:[%s683 + $0x8] sm:$0xf]
      %v771 = vld [vmem:[%s683 + $0xc] sm:$0xf]
      %v772 = vld [vmem:[%s686] sm:$0x1]
      %v773 = vld [vmem:[%s691] sm:$0xf]
      %v774 = vld [vmem:[%s691 + $0x4] sm:$0xf]
      %v775 = vld [vmem:[%s691 + $0x8] sm:$0xf]
      %v776 = vld [vmem:[%s691 + $0xc] sm:$0xf]
      %v777 = vld [vmem:[%s694] sm:$0x1]
      %v778 = vld [vmem:[%s697] sm:$0x1]
      %v779 = vld [vmem:[%s700] sm:$0x1]
      %v780 = vld [vmem:[%s703] sm:$0x1]
      %v781 = vld [vmem:[%s706] sm:$0x1]
      %v782 = vld [vmem:[%s711] sm:$0xf]
      %v783 = vld [vmem:[%s711 + $0x4] sm:$0xf]
      %v784 = vld [vmem:[%s711 + $0x8] sm:$0xf]
      %v785 = vld [vmem:[%s711 + $0xc] sm:$0xf]
      %v786 = vld [vmem:[%s714] sm:$0x1]
      %v787 = vld [vmem:[%s719] sm:$0xf]
      %v788 = vld [vmem:[%s719 + $0x4] sm:$0xf]
      %v789 = vld [vmem:[%s719 + $0x8] sm:$0xf]
      %v790 = vld [vmem:[%s719 + $0xc] sm:$0xf]
      %v791 = vld [vmem:[%s719 + $0x10] sm:$0xf]
      %v792 = vld [vmem:[%s719 + $0x14] sm:$0xf]
      %v793 = vld [vmem:[%s719 + $0x18] sm:$0xf]
      %v794 = vld [vmem:[%s719 + $0x1c] sm:$0xf]
      %v795 = vld [vmem:[%s722] sm:$0x1]
      %v796 = vld [vmem:[#allocation2] sm:$0xf]
      %v797 = vld [vmem:[#allocation2 + $0x4] sm:$0xf]
      %v798 = vld [vmem:[#allocation2 + $0x8] sm:$0xf]
      %v799 = vld [vmem:[#allocation2 + $0xc] sm:$0xf]
      %v800 = vld [vmem:[#allocation2 + $0x10] sm:$0xf]
      %v801 = vld [vmem:[#allocation2 + $0x14] sm:$0xf]
      %v802 = vld [vmem:[#allocation2 + $0x18] sm:$0xf]
      %v803 = vld [vmem:[#allocation2 + $0x1c] sm:$0xf]
      %v812 = vcombine.low %v796, %v797
      %v813 = vcombine.low %v798, %v799
      %v814 = vcombine.low %v800, %v801
      %v815 = vcombine.low %v802, %v803
      %v820 = vpack.c.bf16 %v813, %v812
      %v821 = vpack.c.bf16 %v815, %v814
      %v823 = vlaneseq
      %v824 = vshrl.u32 %v823, 7
      %v825 = vsub.s32 0, %v824
      %v826 = vrot.slane %v772, %v825
      %v832 = vunpack.c.l.b16 %v768
      %v833 = vunpack.c.l.b16 %v769
      %v834 = vunpack.c.l.b16 %v770
      %v835 = vunpack.c.l.b16 %v771
      %v836 = vpack.c.b16 %v833, %v832
      %v837 = vpack.c.b16 %v835, %v834
      %vm840 = vcmask 261120
      %v842 = vsel %vm840, %v820, 0
      %v845 = vsel %vm840, %v821, 0
      %847 = vmatprep.subr.bf16.mxu0 0
      %848 = vmatpush1.bf16.msra.mxu0 0
      %849 = vmatprep.subr.bf16.mxu0 0
      %850 = vmatpush1.bf16.msra.mxu0 0
      %851 = vmatprep.subr.bf16.mxu0 0
      %852 = vmatpush1.bf16.msra.mxu0 0
      %853 = vmatprep.subr.bf16.mxu0 0
      %854 = vmatpush1.bf16.msra.mxu0 0
      %855 = vmatprep.subr.bf16.mxu0 0
      %856 = vmatpush1.bf16.msra.mxu0 0
      %857 = vmatprep.subr.bf16.mxu0 0
      %858 = vmatpush1.bf16.msra.mxu0 0
      %859 = vmatprep.subr.bf16.mxu0 0
      %860 = vmatpush1.bf16.msra.mxu0 %v837
      %861 = vmatprep.subr.bf16.mxu0 0
      %862 = vmatpush1.bf16.msra.mxu0 %v836
      %863 = vmatprep.subr.bf16.mxu0 0
      %864 = vmatpush2.bf16.msra.mxu0 0
      %865 = vmatprep.subr.bf16.mxu0 0
      %866 = vmatpush2.bf16.msra.mxu0 0
      %867 = vmatprep.subr.bf16.mxu0 0
      %868 = vmatpush2.bf16.msra.mxu0 0
      %869 = vmatprep.subr.bf16.mxu0 0
      %870 = vmatpush2.bf16.msra.mxu0 0
      %871 = vmatprep.subr.bf16.mxu0 0
      %872 = vmatpush2.bf16.msra.mxu0 0
      %873 = vmatprep.subr.bf16.mxu0 0
      %874 = vmatpush2.bf16.msra.mxu0 0
      %875 = vmatprep.subr.bf16.mxu0 0
      %876 = vmatpush2.bf16.msra.mxu0 0
      %877 = vmatprep.subr.bf16.mxu0 0
      %878 = vmatpush2.bf16.msra.mxu0 0
      %879 = vmatprep.mubr.bf16.mxu0 0
      %880 = vmatmul.mubr.bf16.gmra.mxu0 %v842
      %v881 = vpop.f32.mrf.mxu0
      %v882 = vadd.f32 %v826, %v881
      %v883 = vpop.f32.mrf.mxu0
      %v884 = vpop.f32.mrf.mxu0
      %v885 = vadd.f32 %v826, %v884
      %v886 = vpop.f32.mrf.mxu0
      %887 = vmatprep.mubr.bf16.mxu0 0
      %888 = vmatmul.mubr.bf16.gmra.mxu0 %v845
      %v889 = vpop.f32.mrf.mxu0
      %v890 = vadd.f32 %v826, %v889
      %v891 = vpop.f32.mrf.mxu0
      %v892 = vpop.f32.mrf.mxu0
      %v893 = vadd.f32 %v826, %v892
      %v894 = vpop.f32.mrf.mxu0
      %895 = vdwg.mxu0
      %v900 = vcombine.high %v882, %v882
      %v901 = vcombine.high %v885, %v885
      %v902 = vcombine.high %v890, %v890
      %v903 = vcombine.high %v893, %v893
      %v908 = vpack.c.bf16 %v882, %v882
      %v909 = vpack.c.bf16 %v900, %v900
      %v910 = vpack.c.bf16 %v885, %v885
      %v911 = vpack.c.bf16 %v901, %v901
      %v912 = vpack.c.bf16 %v890, %v890
      %v913 = vpack.c.bf16 %v902, %v902
      %v914 = vpack.c.bf16 %v893, %v893
      %v915 = vpack.c.bf16 %v903, %v903
      %917 = vrot.lane.b32.xlu0 %v908, 96
      %v918 = vpop.permute.xlu0 %917
      %vm919 = vcmask 130048
      %v921 = vsel %vm919, %v908, 0
      %v924 = vsel %vm919, %v918, 0
      %926 = vmatprep.subr.bf16.mxu0 0
      %927 = vmatpush1.bf16.xpose.msra.mxu0 0
      %928 = vmatprep.subr.bf16.mxu0 0
      %929 = vmatpush1.bf16.xpose.msra.mxu0 0
      %930 = vmatprep.subr.bf16.mxu0 0
      %931 = vmatpush1.bf16.xpose.msra.mxu0 0
      %932 = vmatprep.subr.bf16.mxu0 0
      %933 = vmatpush1.bf16.xpose.msra.mxu0 0
      %934 = vmatprep.subr.bf16.mxu0 0
      %935 = vmatpush1.bf16.xpose.msra.mxu0 0
      %936 = vmatprep.subr.bf16.mxu0 0
      %937 = vmatpush1.bf16.xpose.msra.mxu0 0
      %938 = vmatprep.subr.bf16.mxu0 0
      %939 = vmatpush1.bf16.xpose.msra.mxu0 0
      %940 = vmatprep.subr.bf16.mxu0 0
      %941 = vmatpush1.bf16.xpose.msra.mxu0 %v924
      %942 = vmatprep.subr.bf16.mxu0 0
      %943 = vmatpush2.bf16.xpose.msra.mxu0 0
      %944 = vmatprep.subr.bf16.mxu0 0
      %945 = vmatpush2.bf16.xpose.msra.mxu0 0
      %946 = vmatprep.subr.bf16.mxu0 0
      %947 = vmatpush2.bf16.xpose.msra.mxu0 0
      %948 = vmatprep.subr.bf16.mxu0 0
      %949 = vmatpush2.bf16.xpose.msra.mxu0 0
      %950 = vmatprep.subr.bf16.mxu0 0
      %951 = vmatpush2.bf16.xpose.msra.mxu0 0
      %952 = vmatprep.subr.bf16.mxu0 0
      %953 = vmatpush2.bf16.xpose.msra.mxu0 0
      %954 = vmatprep.subr.bf16.mxu0 0
      %955 = vmatpush2.bf16.xpose.msra.mxu0 0
      %956 = vmatprep.subr.bf16.mxu0 0
      %957 = vmatpush2.bf16.xpose.msra.mxu0 0
      %958 = vmatprep.mubr.bf16.mxu0 0
      %959 = vmatmul.mubr.bf16.gmra.mxu0 %v921
      %v960 = vpop.f32.mrf.mxu0
      %v961 = vadd.f32 0.0, %v960
      %v962 = vpop.f32.mrf.mxu0
      %v963 = vpop.f32.mrf.mxu0
      %v964 = vpop.f32.mrf.mxu0
      %965 = vdwg.mxu0
      %967 = vrot.lane.b32.xlu0 %v909, 96
      %v968 = vpop.permute.xlu0 %967
      %v970 = vsel %vm919, %v909, 0
      %v973 = vsel %vm919, %v968, 0
      %975 = vmatprep.subr.bf16.mxu0 0
      %976 = vmatpush1.bf16.xpose.msra.mxu0 0
      %977 = vmatprep.subr.bf16.mxu0 0
      %978 = vmatpush1.bf16.xpose.msra.mxu0 0
      %979 = vmatprep.subr.bf16.mxu0 0
      %980 = vmatpush1.bf16.xpose.msra.mxu0 0
      %981 = vmatprep.subr.bf16.mxu0 0
      %982 = vmatpush1.bf16.xpose.msra.mxu0 0
      %983 = vmatprep.subr.bf16.mxu0 0
      %984 = vmatpush1.bf16.xpose.msra.mxu0 0
      %985 = vmatprep.subr.bf16.mxu0 0
      %986 = vmatpush1.bf16.xpose.msra.mxu0 0
      %987 = vmatprep.subr.bf16.mxu0 0
      %988 = vmatpush1.bf16.xpose.msra.mxu0 0
      %989 = vmatprep.subr.bf16.mxu0 0
      %990 = vmatpush1.bf16.xpose.msra.mxu0 %v973
      %991 = vmatprep.subr.bf16.mxu0 0
      %992 = vmatpush2.bf16.xpose.msra.mxu0 0
      %993 = vmatprep.subr.bf16.mxu0 0
      %994 = vmatpush2.bf16.xpose.msra.mxu0 0
      %995 = vmatprep.subr.bf16.mxu0 0
      %996 = vmatpush2.bf16.xpose.msra.mxu0 0
      %997 = vmatprep.subr.bf16.mxu0 0
      %998 = vmatpush2.bf16.xpose.msra.mxu0 0
      %999 = vmatprep.subr.bf16.mxu0 0
      %1000 = vmatpush2.bf16.xpose.msra.mxu0 0
      %1001 = vmatprep.subr.bf16.mxu0 0
      %1002 = vmatpush2.bf16.xpose.msra.mxu0 0
      %1003 = vmatprep.subr.bf16.mxu0 0
      %1004 = vmatpush2.bf16.xpose.msra.mxu0 0
      %1005 = vmatprep.subr.bf16.mxu0 0
      %1006 = vmatpush2.bf16.xpose.msra.mxu0 0
      %1007 = vmatprep.mubr.bf16.mxu0 0
      %1008 = vmatmul.mubr.bf16.gmra.mxu0 %v970
      %v1009 = vpop.f32.mrf.mxu0
      %v1010 = vadd.f32 0.0, %v1009
      %v1011 = vpop.f32.mrf.mxu0
      %v1012 = vpop.f32.mrf.mxu0
      %v1013 = vpop.f32.mrf.mxu0
      %1014 = vdwg.mxu0
      %1016 = vrot.lane.b32.xlu0 %v910, 96
      %v1017 = vpop.permute.xlu0 %1016
      %v1019 = vsel %vm919, %v910, 0
      %v1022 = vsel %vm919, %v1017, 0
      %1024 = vmatprep.subr.bf16.mxu0 0
      %1025 = vmatpush1.bf16.xpose.msra.mxu0 0
      %1026 = vmatprep.subr.bf16.mxu0 0
      %1027 = vmatpush1.bf16.xpose.msra.mxu0 0
      %1028 = vmatprep.subr.bf16.mxu0 0
      %1029 = vmatpush1.bf16.xpose.msra.mxu0 0
      %1030 = vmatprep.subr.bf16.mxu0 0
      %1031 = vmatpush1.bf16.xpose.msra.mxu0 0
      %1032 = vmatprep.subr.bf16.mxu0 0
      %1033 = vmatpush1.bf16.xpose.msra.mxu0 0
      %1034 = vmatprep.subr.bf16.mxu0 0
      %1035 = vmatpush1.bf16.xpose.msra.mxu0 0
      %1036 = vmatprep.subr.bf16.mxu0 0
      %1037 = vmatpush1.bf16.xpose.msra.mxu0 0
      %1038 = vmatprep.subr.bf16.mxu0 0
      %1039 = vmatpush1.bf16.xpose.msra.mxu0 %v1022
      %1040 = vmatprep.subr.bf16.mxu0 0
      %1041 = vmatpush2.bf16.xpose.msra.mxu0 0
      %1042 = vmatprep.subr.bf16.mxu0 0
      %1043 = vmatpush2.bf16.xpose.msra.mxu0 0
      %1044 = vmatprep.subr.bf16.mxu0 0
      %1045 = vmatpush2.bf16.xpose.msra.mxu0 0
      %1046 = vmatprep.subr.bf16.mxu0 0
      %1047 = vmatpush2.bf16.xpose.msra.mxu0 0
      %1048 = vmatprep.subr.bf16.mxu0 0
      %1049 = vmatpush2.bf16.xpose.msra.mxu0 0
      %1050 = vmatprep.subr.bf16.mxu0 0
      %1051 = vmatpush2.bf16.xpose.msra.mxu0 0
      %1052 = vmatprep.subr.bf16.mxu0 0
      %1053 = vmatpush2.bf16.xpose.msra.mxu0 0
      %1054 = vmatprep.subr.bf16.mxu0 0
      %1055 = vmatpush2.bf16.xpose.msra.mxu0 0
      %1056 = vmatprep.mubr.bf16.mxu0 0
      %1057 = vmatmul.mubr.bf16.gmra.mxu0 %v1019
      %v1058 = vpop.f32.mrf.mxu0
      %v1059 = vadd.f32 0.0, %v1058
      %v1060 = vpop.f32.mrf.mxu0
      %v1061 = vpop.f32.mrf.mxu0
      %v1062 = vpop.f32.mrf.mxu0
      %1063 = vdwg.mxu0
      %1065 = vrot.lane.b32.xlu0 %v911, 96
      %v1066 = vpop.permute.xlu0 %1065
      %v1068 = vsel %vm919, %v911, 0
      %v1071 = vsel %vm919, %v1066, 0
      %1073 = vmatprep.subr.bf16.mxu0 0
      %1074 = vmatpush1.bf16.xpose.msra.mxu0 0
      %1075 = vmatprep.subr.bf16.mxu0 0
      %1076 = vmatpush1.bf16.xpose.msra.mxu0 0
      %1077 = vmatprep.subr.bf16.mxu0 0
      %1078 = vmatpush1.bf16.xpose.msra.mxu0 0
      %1079 = vmatprep.subr.bf16.mxu0 0
      %1080 = vmatpush1.bf16.xpose.msra.mxu0 0
      %1081 = vmatprep.subr.bf16.mxu0 0
      %1082 = vmatpush1.bf16.xpose.msra.mxu0 0
      %1083 = vmatprep.subr.bf16.mxu0 0
      %1084 = vmatpush1.bf16.xpose.msra.mxu0 0
      %1085 = vmatprep.subr.bf16.mxu0 0
      %1086 = vmatpush1.bf16.xpose.msra.mxu0 0
      %1087 = vmatprep.subr.bf16.mxu0 0
      %1088 = vmatpush1.bf16.xpose.msra.mxu0 %v1071
      %1089 = vmatprep.subr.bf16.mxu0 0
      %1090 = vmatpush2.bf16.xpose.msra.mxu0 0
      %1091 = vmatprep.subr.bf16.mxu0 0
      %1092 = vmatpush2.bf16.xpose.msra.mxu0 0
      %1093 = vmatprep.subr.bf16.mxu0 0
      %1094 = vmatpush2.bf16.xpose.msra.mxu0 0
      %1095 = vmatprep.subr.bf16.mxu0 0
      %1096 = vmatpush2.bf16.xpose.msra.mxu0 0
      %1097 = vmatprep.subr.bf16.mxu0 0
      %1098 = vmatpush2.bf16.xpose.msra.mxu0 0
      %1099 = vmatprep.subr.bf16.mxu0 0
      %1100 = vmatpush2.bf16.xpose.msra.mxu0 0
      %1101 = vmatprep.subr.bf16.mxu0 0
      %1102 = vmatpush2.bf16.xpose.msra.mxu0 0
      %1103 = vmatprep.subr.bf16.mxu0 0
      %1104 = vmatpush2.bf16.xpose.msra.mxu0 0
      %1105 = vmatprep.mubr.bf16.mxu0 0
      %1106 = vmatmul.mubr.bf16.gmra.mxu0 %v1068
      %v1107 = vpop.f32.mrf.mxu0
      %v1108 = vadd.f32 0.0, %v1107
      %v1109 = vpop.f32.mrf.mxu0
      %v1110 = vpop.f32.mrf.mxu0
      %v1111 = vpop.f32.mrf.mxu0
      %1112 = vdwg.mxu0
      %1114 = vrot.lane.b32.xlu0 %v912, 96
      %v1115 = vpop.permute.xlu0 %1114
      %v1117 = vsel %vm919, %v912, 0
      %v1120 = vsel %vm919, %v1115, 0
      %1122 = vmatprep.subr.bf16.mxu0 0
      %1123 = vmatpush1.bf16.xpose.msra.mxu0 0
      %1124 = vmatprep.subr.bf16.mxu0 0
      %1125 = vmatpush1.bf16.xpose.msra.mxu0 0
      %1126 = vmatprep.subr.bf16.mxu0 0
      %1127 = vmatpush1.bf16.xpose.msra.mxu0 0
      %1128 = vmatprep.subr.bf16.mxu0 0
      %1129 = vmatpush1.bf16.xpose.msra.mxu0 0
      %1130 = vmatprep.subr.bf16.mxu0 0
      %1131 = vmatpush1.bf16.xpose.msra.mxu0 0
      %1132 = vmatprep.subr.bf16.mxu0 0
      %1133 = vmatpush1.bf16.xpose.msra.mxu0 0
      %1134 = vmatprep.subr.bf16.mxu0 0
      %1135 = vmatpush1.bf16.xpose.msra.mxu0 0
      %1136 = vmatprep.subr.bf16.mxu0 0
      %1137 = vmatpush1.bf16.xpose.msra.mxu0 %v1120
      %1138 = vmatprep.subr.bf16.mxu0 0
      %1139 = vmatpush2.bf16.xpose.msra.mxu0 0
      %1140 = vmatprep.subr.bf16.mxu0 0
      %1141 = vmatpush2.bf16.xpose.msra.mxu0 0
      %1142 = vmatprep.subr.bf16.mxu0 0
      %1143 = vmatpush2.bf16.xpose.msra.mxu0 0
      %1144 = vmatprep.subr.bf16.mxu0 0
      %1145 = vmatpush2.bf16.xpose.msra.mxu0 0
      %1146 = vmatprep.subr.bf16.mxu0 0
      %1147 = vmatpush2.bf16.xpose.msra.mxu0 0
      %1148 = vmatprep.subr.bf16.mxu0 0
      %1149 = vmatpush2.bf16.xpose.msra.mxu0 0
      %1150 = vmatprep.subr.bf16.mxu0 0
      %1151 = vmatpush2.bf16.xpose.msra.mxu0 0
      %1152 = vmatprep.subr.bf16.mxu0 0
      %1153 = vmatpush2.bf16.xpose.msra.mxu0 0
      %1154 = vmatprep.mubr.bf16.mxu0 0
      %1155 = vmatmul.mubr.bf16.gmra.mxu0 %v1117
      %v1156 = vpop.f32.mrf.mxu0
      %v1157 = vadd.f32 0.0, %v1156
      %v1158 = vpop.f32.mrf.mxu0
      %v1159 = vpop.f32.mrf.mxu0
      %v1160 = vpop.f32.mrf.mxu0
      %1161 = vdwg.mxu0
      %1163 = vrot.lane.b32.xlu0 %v913, 96
      %v1164 = vpop.permute.xlu0 %1163
      %v1166 = vsel %vm919, %v913, 0
      %v1169 = vsel %vm919, %v1164, 0
      %1171 = vmatprep.subr.bf16.mxu0 0
      %1172 = vmatpush1.bf16.xpose.msra.mxu0 0
      %1173 = vmatprep.subr.bf16.mxu0 0
      %1174 = vmatpush1.bf16.xpose.msra.mxu0 0
      %1175 = vmatprep.subr.bf16.mxu0 0
      %1176 = vmatpush1.bf16.xpose.msra.mxu0 0
      %1177 = vmatprep.subr.bf16.mxu0 0
      %1178 = vmatpush1.bf16.xpose.msra.mxu0 0
      %1179 = vmatprep.subr.bf16.mxu0 0
      %1180 = vmatpush1.bf16.xpose.msra.mxu0 0
      %1181 = vmatprep.subr.bf16.mxu0 0
      %1182 = vmatpush1.bf16.xpose.msra.mxu0 0
      %1183 = vmatprep.subr.bf16.mxu0 0
      %1184 = vmatpush1.bf16.xpose.msra.mxu0 0
      %1185 = vmatprep.subr.bf16.mxu0 0
      %1186 = vmatpush1.bf16.xpose.msra.mxu0 %v1169
      %1187 = vmatprep.subr.bf16.mxu0 0
      %1188 = vmatpush2.bf16.xpose.msra.mxu0 0
      %1189 = vmatprep.subr.bf16.mxu0 0
      %1190 = vmatpush2.bf16.xpose.msra.mxu0 0
      %1191 = vmatprep.subr.bf16.mxu0 0
      %1192 = vmatpush2.bf16.xpose.msra.mxu0 0
      %1193 = vmatprep.subr.bf16.mxu0 0
      %1194 = vmatpush2.bf16.xpose.msra.mxu0 0
      %1195 = vmatprep.subr.bf16.mxu0 0
      %1196 = vmatpush2.bf16.xpose.msra.mxu0 0
      %1197 = vmatprep.subr.bf16.mxu0 0
      %1198 = vmatpush2.bf16.xpose.msra.mxu0 0
      %1199 = vmatprep.subr.bf16.mxu0 0
      %1200 = vmatpush2.bf16.xpose.msra.mxu0 0
      %1201 = vmatprep.subr.bf16.mxu0 0
      %1202 = vmatpush2.bf16.xpose.msra.mxu0 0
      %1203 = vmatprep.mubr.bf16.mxu0 0
      %1204 = vmatmul.mubr.bf16.gmra.mxu0 %v1166
      %v1205 = vpop.f32.mrf.mxu0
      %v1206 = vadd.f32 0.0, %v1205
      %v1207 = vpop.f32.mrf.mxu0
      %v1208 = vpop.f32.mrf.mxu0
      %v1209 = vpop.f32.mrf.mxu0
      %1210 = vdwg.mxu0
      %1212 = vrot.lane.b32.xlu0 %v914, 96
      %v1213 = vpop.permute.xlu0 %1212
      %v1215 = vsel %vm919, %v914, 0
      %v1218 = vsel %vm919, %v1213, 0
      %1220 = vmatprep.subr.bf16.mxu0 0
      %1221 = vmatpush1.bf16.xpose.msra.mxu0 0
      %1222 = vmatprep.subr.bf16.mxu0 0
      %1223 = vmatpush1.bf16.xpose.msra.mxu0 0
      %1224 = vmatprep.subr.bf16.mxu0 0
      %1225 = vmatpush1.bf16.xpose.msra.mxu0 0
      %1226 = vmatprep.subr.bf16.mxu0 0
      %1227 = vmatpush1.bf16.xpose.msra.mxu0 0
      %1228 = vmatprep.subr.bf16.mxu0 0
      %1229 = vmatpush1.bf16.xpose.msra.mxu0 0
      %1230 = vmatprep.subr.bf16.mxu0 0
      %1231 = vmatpush1.bf16.xpose.msra.mxu0 0
      %1232 = vmatprep.subr.bf16.mxu0 0
      %1233 = vmatpush1.bf16.xpose.msra.mxu0 0
      %1234 = vmatprep.subr.bf16.mxu0 0
      %1235 = vmatpush1.bf16.xpose.msra.mxu0 %v1218
      %1236 = vmatprep.subr.bf16.mxu0 0
      %1237 = vmatpush2.bf16.xpose.msra.mxu0 0
      %1238 = vmatprep.subr.bf16.mxu0 0
      %1239 = vmatpush2.bf16.xpose.msra.mxu0 0
      %1240 = vmatprep.subr.bf16.mxu0 0
      %1241 = vmatpush2.bf16.xpose.msra.mxu0 0
      %1242 = vmatprep.subr.bf16.mxu0 0
      %1243 = vmatpush2.bf16.xpose.msra.mxu0 0
      %1244 = vmatprep.subr.bf16.mxu0 0
      %1245 = vmatpush2.bf16.xpose.msra.mxu0 0
      %1246 = vmatprep.subr.bf16.mxu0 0
      %1247 = vmatpush2.bf16.xpose.msra.mxu0 0
      %1248 = vmatprep.subr.bf16.mxu0 0
      %1249 = vmatpush2.bf16.xpose.msra.mxu0 0
      %1250 = vmatprep.subr.bf16.mxu0 0
      %1251 = vmatpush2.bf16.xpose.msra.mxu0 0
      %1252 = vmatprep.mubr.bf16.mxu0 0
      %1253 = vmatmul.mubr.bf16.gmra.mxu0 %v1215
      %v1254 = vpop.f32.mrf.mxu0
      %v1255 = vadd.f32 0.0, %v1254
      %v1256 = vpop.f32.mrf.mxu0
      %v1257 = vpop.f32.mrf.mxu0
      %v1258 = vpop.f32.mrf.mxu0
      %1259 = vdwg.mxu0
      %1261 = vrot.lane.b32.xlu0 %v915, 96
      %v1262 = vpop.permute.xlu0 %1261
      %v1264 = vsel %vm919, %v915, 0
      %v1267 = vsel %vm919, %v1262, 0
      %1269 = vmatprep.subr.bf16.mxu0 0
      %1270 = vmatpush1.bf16.xpose.msra.mxu0 0
      %1271 = vmatprep.subr.bf16.mxu0 0
      %1272 = vmatpush1.bf16.xpose.msra.mxu0 0
      %1273 = vmatprep.subr.bf16.mxu0 0
      %1274 = vmatpush1.bf16.xpose.msra.mxu0 0
      %1275 = vmatprep.subr.bf16.mxu0 0
      %1276 = vmatpush1.bf16.xpose.msra.mxu0 0
      %1277 = vmatprep.subr.bf16.mxu0 0
      %1278 = vmatpush1.bf16.xpose.msra.mxu0 0
      %1279 = vmatprep.subr.bf16.mxu0 0
      %1280 = vmatpush1.bf16.xpose.msra.mxu0 0
      %1281 = vmatprep.subr.bf16.mxu0 0
      %1282 = vmatpush1.bf16.xpose.msra.mxu0 0
      %1283 = vmatprep.subr.bf16.mxu0 0
      %1284 = vmatpush1.bf16.xpose.msra.mxu0 %v1267
      %1285 = vmatprep.subr.bf16.mxu0 0
      %1286 = vmatpush2.bf16.xpose.msra.mxu0 0
      %1287 = vmatprep.subr.bf16.mxu0 0
      %1288 = vmatpush2.bf16.xpose.msra.mxu0 0
      %1289 = vmatprep.subr.bf16.mxu0 0
      %1290 = vmatpush2.bf16.xpose.msra.mxu0 0
      %1291 = vmatprep.subr.bf16.mxu0 0
      %1292 = vmatpush2.bf16.xpose.msra.mxu0 0
      %1293 = vmatprep.subr.bf16.mxu0 0
      %1294 = vmatpush2.bf16.xpose.msra.mxu0 0
      %1295 = vmatprep.subr.bf16.mxu0 0
      %1296 = vmatpush2.bf16.xpose.msra.mxu0 0
      %1297 = vmatprep.subr.bf16.mxu0 0
      %1298 = vmatpush2.bf16.xpose.msra.mxu0 0
      %1299 = vmatprep.subr.bf16.mxu0 0
      %1300 = vmatpush2.bf16.xpose.msra.mxu0 0
      %1301 = vmatprep.mubr.bf16.mxu0 0
      %1302 = vmatmul.mubr.bf16.gmra.mxu0 %v1264
      %v1303 = vpop.f32.mrf.mxu0
      %v1304 = vadd.f32 0.0, %v1303
      %v1305 = vpop.f32.mrf.mxu0
      %v1306 = vpop.f32.mrf.mxu0
      %v1307 = vpop.f32.mrf.mxu0
      %1308 = vdwg.mxu0
      %vm1309 = vcmask 27648
      %v1310 = vsel %vm1309, %v961, -inf
      %1311 = vmax.xlane.f32.xlu0 %v1310
      %v1312 = vpop.xlane.xlu0 %1311
      %v1313 = vsel %vm1309, %v1010, -inf
      %1314 = vmax.xlane.f32.xlu0 %v1313
      %v1315 = vpop.xlane.xlu0 %1314
      %v1316 = vsel %vm1309, %v1059, -inf
      %1317 = vmax.xlane.f32.xlu0 %v1316
      %v1318 = vpop.xlane.xlu0 %1317
      %v1319 = vsel %vm1309, %v1108, -inf
      %1320 = vmax.xlane.f32.xlu0 %v1319
      %v1321 = vpop.xlane.xlu0 %1320
      %v1322 = vsel %vm1309, %v1157, -inf
      %1323 = vmax.xlane.f32.xlu0 %v1322
      %v1324 = vpop.xlane.xlu0 %1323
      %v1325 = vsel %vm1309, %v1206, -inf
      %1326 = vmax.xlane.f32.xlu0 %v1325
      %v1327 = vpop.xlane.xlu0 %1326
      %v1328 = vsel %vm1309, %v1255, -inf
      %1329 = vmax.xlane.f32.xlu0 %v1328
      %v1330 = vpop.xlane.xlu0 %1329
      %v1331 = vsel %vm1309, %v1304, -inf
      %1332 = vmax.xlane.f32.xlu0 %v1331
      %v1333 = vpop.xlane.xlu0 %1332
      %v1334 = vsub.f32 %v961, %v1312
      %v1335 = vsub.f32 %v1010, %v1315
      %v1336 = vsub.f32 %v1059, %v1318
      %v1337 = vsub.f32 %v1108, %v1321
      %v1338 = vsub.f32 %v1157, %v1324
      %v1339 = vsub.f32 %v1206, %v1327
      %v1340 = vsub.f32 %v1255, %v1330
      %v1341 = vsub.f32 %v1304, %v1333
      %v1342 = vmul.f32 %v1334, 1.442695
      %v1343 = vpow.pop %v1342
      %v1344 = vmul.f32 %v1335, 1.442695
      %v1345 = vpow.pop %v1344
      %v1346 = vmul.f32 %v1336, 1.442695
      %v1347 = vpow.pop %v1346
      %v1348 = vmul.f32 %v1337, 1.442695
      %v1349 = vpow.pop %v1348
      %v1350 = vmul.f32 %v1338, 1.442695
      %v1351 = vpow.pop %v1350
      %v1352 = vmul.f32 %v1339, 1.442695
      %v1353 = vpow.pop %v1352
      %v1354 = vmul.f32 %v1340, 1.442695
      %v1355 = vpow.pop %v1354
      %v1356 = vmul.f32 %v1341, 1.442695
      %v1357 = vpow.pop %v1356
      %v1358 = vsel %vm1309, %v1343, 0.0
      %1359 = vadd.xlane.f32.xlu0 %v1358
      %v1360 = vpop.xlane.xlu0 %1359
      %v1361 = vsel %vm1309, %v1345, 0.0
      %1362 = vadd.xlane.f32.xlu0 %v1361
      %v1363 = vpop.xlane.xlu0 %1362
      %v1364 = vsel %vm1309, %v1347, 0.0
      %1365 = vadd.xlane.f32.xlu0 %v1364
      %v1366 = vpop.xlane.xlu0 %1365
      %v1367 = vsel %vm1309, %v1349, 0.0
      %1368 = vadd.xlane.f32.xlu0 %v1367
      %v1369 = vpop.xlane.xlu0 %1368
      %v1370 = vsel %vm1309, %v1351, 0.0
      %1371 = vadd.xlane.f32.xlu0 %v1370
      %v1372 = vpop.xlane.xlu0 %1371
      %v1373 = vsel %vm1309, %v1353, 0.0
      %1374 = vadd.xlane.f32.xlu0 %v1373
      %v1375 = vpop.xlane.xlu0 %1374
      %v1376 = vsel %vm1309, %v1355, 0.0
      %1377 = vadd.xlane.f32.xlu0 %v1376
      %v1378 = vpop.xlane.xlu0 %1377
      %v1379 = vsel %vm1309, %v1357, 0.0
      %1380 = vadd.xlane.f32.xlu0 %v1379
      %v1381 = vpop.xlane.xlu0 %1380
      %v1382 = vrcp.pop %v1360
      %v1383 = vrcp.pop %v1363
      %v1384 = vrcp.pop %v1366
      %v1385 = vrcp.pop %v1369
      %v1386 = vrcp.pop %v1372
      %v1387 = vrcp.pop %v1375
      %v1388 = vrcp.pop %v1378
      %v1389 = vrcp.pop %v1381
      %v1390 = vmul.f32 %v1343, %v1382
      %v1391 = vmul.f32 %v1345, %v1383
      %v1392 = vmul.f32 %v1347, %v1384
      %v1393 = vmul.f32 %v1349, %v1385
      %v1394 = vmul.f32 %v1351, %v1386
      %v1395 = vmul.f32 %v1353, %v1387
      %v1396 = vmul.f32 %v1355, %v1388
      %v1397 = vmul.f32 %v1357, %v1389
      %v1398 = vpack.c.bf16 %v1390, %v1390
      %v1399 = vpack.c.bf16 %v1391, %v1391
      %v1400 = vpack.c.bf16 %v1392, %v1392
      %v1401 = vpack.c.bf16 %v1393, %v1393
      %v1402 = vpack.c.bf16 %v1394, %v1394
      %v1403 = vpack.c.bf16 %v1395, %v1395
      %v1404 = vpack.c.bf16 %v1396, %v1396
      %v1405 = vpack.c.bf16 %v1397, %v1397
      %1406 = vrot.lane.b32.xlu0 %v908, 64
      %v1407 = vpop.permute.xlu0 %1406
      %vm1408 = vcmask 31744
      %v1410 = vsel %vm1408, %v1398, 0
      %vm1412 = vcmask 1041408
      %v1414 = vsel %vm1412, %v1407, 0
      %1416 = vmatprep.subr.bf16.mxu0 0
      %1417 = vmatpush1.bf16.msra.mxu0 0
      %1418 = vmatprep.subr.bf16.mxu0 0
      %1419 = vmatpush1.bf16.msra.mxu0 0
      %1420 = vmatprep.subr.bf16.mxu0 0
      %1421 = vmatpush1.bf16.msra.mxu0 0
      %1422 = vmatprep.subr.bf16.mxu0 0
      %1423 = vmatpush1.bf16.msra.mxu0 0
      %1424 = vmatprep.subr.bf16.mxu0 0
      %1425 = vmatpush1.bf16.msra.mxu0 0
      %1426 = vmatprep.subr.bf16.mxu0 0
      %1427 = vmatpush1.bf16.msra.mxu0 0
      %1428 = vmatprep.subr.bf16.mxu0 0
      %1429 = vmatpush1.bf16.msra.mxu0 0
      %1430 = vmatprep.subr.bf16.mxu0 0
      %1431 = vmatpush1.bf16.msra.mxu0 %v1414
      %1432 = vmatprep.subr.bf16.mxu0 0
      %1433 = vmatpush2.bf16.msra.mxu0 0
      %1434 = vmatprep.subr.bf16.mxu0 0
      %1435 = vmatpush2.bf16.msra.mxu0 0
      %1436 = vmatprep.subr.bf16.mxu0 0
      %1437 = vmatpush2.bf16.msra.mxu0 0
      %1438 = vmatprep.subr.bf16.mxu0 0
      %1439 = vmatpush2.bf16.msra.mxu0 0
      %1440 = vmatprep.subr.bf16.mxu0 0
      %1441 = vmatpush2.bf16.msra.mxu0 0
      %1442 = vmatprep.subr.bf16.mxu0 0
      %1443 = vmatpush2.bf16.msra.mxu0 0
      %1444 = vmatprep.subr.bf16.mxu0 0
      %1445 = vmatpush2.bf16.msra.mxu0 0
      %1446 = vmatprep.subr.bf16.mxu0 0
      %1447 = vmatpush2.bf16.msra.mxu0 0
      %1448 = vmatprep.mubr.bf16.mxu0 0
      %1449 = vmatmul.mubr.bf16.gmra.mxu0 %v1410
      %v1450 = vpop.f32.mrf.mxu0
      %v1451 = vadd.f32 0.0, %v1450
      %v1452 = vpop.f32.mrf.mxu0
      %v1453 = vpop.f32.mrf.mxu0
      %v1454 = vpop.f32.mrf.mxu0
      %1455 = vdwg.mxu0
      %1456 = vrot.lane.b32.xlu0 %v909, 64
      %v1457 = vpop.permute.xlu0 %1456
      %v1459 = vsel %vm1408, %v1399, 0
      %v1462 = vsel %vm1412, %v1457, 0
      %1464 = vmatprep.subr.bf16.mxu0 0
      %1465 = vmatpush1.bf16.msra.mxu0 0
      %1466 = vmatprep.subr.bf16.mxu0 0
      %1467 = vmatpush1.bf16.msra.mxu0 0
      %1468 = vmatprep.subr.bf16.mxu0 0
      %1469 = vmatpush1.bf16.msra.mxu0 0
      %1470 = vmatprep.subr.bf16.mxu0 0
      %1471 = vmatpush1.bf16.msra.mxu0 0
      %1472 = vmatprep.subr.bf16.mxu0 0
      %1473 = vmatpush1.bf16.msra.mxu0 0
      %1474 = vmatprep.subr.bf16.mxu0 0
      %1475 = vmatpush1.bf16.msra.mxu0 0
      %1476 = vmatprep.subr.bf16.mxu0 0
      %1477 = vmatpush1.bf16.msra.mxu0 0
      %1478 = vmatprep.subr.bf16.mxu0 0
      %1479 = vmatpush1.bf16.msra.mxu0 %v1462
      %1480 = vmatprep.subr.bf16.mxu0 0
      %1481 = vmatpush2.bf16.msra.mxu0 0
      %1482 = vmatprep.subr.bf16.mxu0 0
      %1483 = vmatpush2.bf16.msra.mxu0 0
      %1484 = vmatprep.subr.bf16.mxu0 0
      %1485 = vmatpush2.bf16.msra.mxu0 0
      %1486 = vmatprep.subr.bf16.mxu0 0
      %1487 = vmatpush2.bf16.msra.mxu0 0
      %1488 = vmatprep.subr.bf16.mxu0 0
      %1489 = vmatpush2.bf16.msra.mxu0 0
      %1490 = vmatprep.subr.bf16.mxu0 0
      %1491 = vmatpush2.bf16.msra.mxu0 0
      %1492 = vmatprep.subr.bf16.mxu0 0
      %1493 = vmatpush2.bf16.msra.mxu0 0
      %1494 = vmatprep.subr.bf16.mxu0 0
      %1495 = vmatpush2.bf16.msra.mxu0 0
      %1496 = vmatprep.mubr.bf16.mxu0 0
      %1497 = vmatmul.mubr.bf16.gmra.mxu0 %v1459
      %v1498 = vpop.f32.mrf.mxu0
      %v1499 = vadd.f32 0.0, %v1498
      %v1500 = vpop.f32.mrf.mxu0
      %v1501 = vpop.f32.mrf.mxu0
      %v1502 = vpop.f32.mrf.mxu0
      %1503 = vdwg.mxu0
      %1504 = vrot.lane.b32.xlu0 %v910, 64
      %v1505 = vpop.permute.xlu0 %1504
      %v1507 = vsel %vm1408, %v1400, 0
      %v1510 = vsel %vm1412, %v1505, 0
      %1512 = vmatprep.subr.bf16.mxu0 0
      %1513 = vmatpush1.bf16.msra.mxu0 0
      %1514 = vmatprep.subr.bf16.mxu0 0
      %1515 = vmatpush1.bf16.msra.mxu0 0
      %1516 = vmatprep.subr.bf16.mxu0 0
      %1517 = vmatpush1.bf16.msra.mxu0 0
      %1518 = vmatprep.subr.bf16.mxu0 0
      %1519 = vmatpush1.bf16.msra.mxu0 0
      %1520 = vmatprep.subr.bf16.mxu0 0
      %1521 = vmatpush1.bf16.msra.mxu0 0
      %1522 = vmatprep.subr.bf16.mxu0 0
      %1523 = vmatpush1.bf16.msra.mxu0 0
      %1524 = vmatprep.subr.bf16.mxu0 0
      %1525 = vmatpush1.bf16.msra.mxu0 0
      %1526 = vmatprep.subr.bf16.mxu0 0
      %1527 = vmatpush1.bf16.msra.mxu0 %v1510
      %1528 = vmatprep.subr.bf16.mxu0 0
      %1529 = vmatpush2.bf16.msra.mxu0 0
      %1530 = vmatprep.subr.bf16.mxu0 0
      %1531 = vmatpush2.bf16.msra.mxu0 0
      %1532 = vmatprep.subr.bf16.mxu0 0
      %1533 = vmatpush2.bf16.msra.mxu0 0
      %1534 = vmatprep.subr.bf16.mxu0 0
      %1535 = vmatpush2.bf16.msra.mxu0 0
      %1536 = vmatprep.subr.bf16.mxu0 0
      %1537 = vmatpush2.bf16.msra.mxu0 0
      %1538 = vmatprep.subr.bf16.mxu0 0
      %1539 = vmatpush2.bf16.msra.mxu0 0
      %1540 = vmatprep.subr.bf16.mxu0 0
      %1541 = vmatpush2.bf16.msra.mxu0 0
      %1542 = vmatprep.subr.bf16.mxu0 0
      %1543 = vmatpush2.bf16.msra.mxu0 0
      %1544 = vmatprep.mubr.bf16.mxu0 0
      %1545 = vmatmul.mubr.bf16.gmra.mxu0 %v1507
      %v1546 = vpop.f32.mrf.mxu0
      %v1547 = vadd.f32 0.0, %v1546
      %v1548 = vpop.f32.mrf.mxu0
      %v1549 = vpop.f32.mrf.mxu0
      %v1550 = vpop.f32.mrf.mxu0
      %1551 = vdwg.mxu0
      %1552 = vrot.lane.b32.xlu0 %v911, 64
      %v1553 = vpop.permute.xlu0 %1552
      %v1555 = vsel %vm1408, %v1401, 0
      %v1558 = vsel %vm1412, %v1553, 0
      %1560 = vmatprep.subr.bf16.mxu0 0
      %1561 = vmatpush1.bf16.msra.mxu0 0
      %1562 = vmatprep.subr.bf16.mxu0 0
      %1563 = vmatpush1.bf16.msra.mxu0 0
      %1564 = vmatprep.subr.bf16.mxu0 0
      %1565 = vmatpush1.bf16.msra.mxu0 0
      %1566 = vmatprep.subr.bf16.mxu0 0
      %1567 = vmatpush1.bf16.msra.mxu0 0
      %1568 = vmatprep.subr.bf16.mxu0 0
      %1569 = vmatpush1.bf16.msra.mxu0 0
      %1570 = vmatprep.subr.bf16.mxu0 0
      %1571 = vmatpush1.bf16.msra.mxu0 0
      %1572 = vmatprep.subr.bf16.mxu0 0
      %1573 = vmatpush1.bf16.msra.mxu0 0
      %1574 = vmatprep.subr.bf16.mxu0 0
      %1575 = vmatpush1.bf16.msra.mxu0 %v1558
      %1576 = vmatprep.subr.bf16.mxu0 0
      %1577 = vmatpush2.bf16.msra.mxu0 0
      %1578 = vmatprep.subr.bf16.mxu0 0
      %1579 = vmatpush2.bf16.msra.mxu0 0
      %1580 = vmatprep.subr.bf16.mxu0 0
      %1581 = vmatpush2.bf16.msra.mxu0 0
      %1582 = vmatprep.subr.bf16.mxu0 0
      %1583 = vmatpush2.bf16.msra.mxu0 0
      %1584 = vmatprep.subr.bf16.mxu0 0
      %1585 = vmatpush2.bf16.msra.mxu0 0
      %1586 = vmatprep.subr.bf16.mxu0 0
      %1587 = vmatpush2.bf16.msra.mxu0 0
      %1588 = vmatprep.subr.bf16.mxu0 0
      %1589 = vmatpush2.bf16.msra.mxu0 0
      %1590 = vmatprep.subr.bf16.mxu0 0
      %1591 = vmatpush2.bf16.msra.mxu0 0
      %1592 = vmatprep.mubr.bf16.mxu0 0
      %1593 = vmatmul.mubr.bf16.gmra.mxu0 %v1555
      %v1594 = vpop.f32.mrf.mxu0
      %v1595 = vadd.f32 0.0, %v1594
      %v1596 = vpop.f32.mrf.mxu0
      %v1597 = vpop.f32.mrf.mxu0
      %v1598 = vpop.f32.mrf.mxu0
      %1599 = vdwg.mxu0
      %1600 = vrot.lane.b32.xlu0 %v912, 64
      %v1601 = vpop.permute.xlu0 %1600
      %v1603 = vsel %vm1408, %v1402, 0
      %v1606 = vsel %vm1412, %v1601, 0
      %1608 = vmatprep.subr.bf16.mxu0 0
      %1609 = vmatpush1.bf16.msra.mxu0 0
      %1610 = vmatprep.subr.bf16.mxu0 0
      %1611 = vmatpush1.bf16.msra.mxu0 0
      %1612 = vmatprep.subr.bf16.mxu0 0
      %1613 = vmatpush1.bf16.msra.mxu0 0
      %1614 = vmatprep.subr.bf16.mxu0 0
      %1615 = vmatpush1.bf16.msra.mxu0 0
      %1616 = vmatprep.subr.bf16.mxu0 0
      %1617 = vmatpush1.bf16.msra.mxu0 0
      %1618 = vmatprep.subr.bf16.mxu0 0
      %1619 = vmatpush1.bf16.msra.mxu0 0
      %1620 = vmatprep.subr.bf16.mxu0 0
      %1621 = vmatpush1.bf16.msra.mxu0 0
      %1622 = vmatprep.subr.bf16.mxu0 0
      %1623 = vmatpush1.bf16.msra.mxu0 %v1606
      %1624 = vmatprep.subr.bf16.mxu0 0
      %1625 = vmatpush2.bf16.msra.mxu0 0
      %1626 = vmatprep.subr.bf16.mxu0 0
      %1627 = vmatpush2.bf16.msra.mxu0 0
      %1628 = vmatprep.subr.bf16.mxu0 0
      %1629 = vmatpush2.bf16.msra.mxu0 0
      %1630 = vmatprep.subr.bf16.mxu0 0
      %1631 = vmatpush2.bf16.msra.mxu0 0
      %1632 = vmatprep.subr.bf16.mxu0 0
      %1633 = vmatpush2.bf16.msra.mxu0 0
      %1634 = vmatprep.subr.bf16.mxu0 0
      %1635 = vmatpush2.bf16.msra.mxu0 0
      %1636 = vmatprep.subr.bf16.mxu0 0
      %1637 = vmatpush2.bf16.msra.mxu0 0
      %1638 = vmatprep.subr.bf16.mxu0 0
      %1639 = vmatpush2.bf16.msra.mxu0 0
      %1640 = vmatprep.mubr.bf16.mxu0 0
      %1641 = vmatmul.mubr.bf16.gmra.mxu0 %v1603
      %v1642 = vpop.f32.mrf.mxu0
      %v1643 = vadd.f32 0.0, %v1642
      %v1644 = vpop.f32.mrf.mxu0
      %v1645 = vpop.f32.mrf.mxu0
      %v1646 = vpop.f32.mrf.mxu0
      %1647 = vdwg.mxu0
      %1648 = vrot.lane.b32.xlu0 %v913, 64
      %v1649 = vpop.permute.xlu0 %1648
      %v1651 = vsel %vm1408, %v1403, 0
      %v1654 = vsel %vm1412, %v1649, 0
      %1656 = vmatprep.subr.bf16.mxu0 0
      %1657 = vmatpush1.bf16.msra.mxu0 0
      %1658 = vmatprep.subr.bf16.mxu0 0
      %1659 = vmatpush1.bf16.msra.mxu0 0
      %1660 = vmatprep.subr.bf16.mxu0 0
      %1661 = vmatpush1.bf16.msra.mxu0 0
      %1662 = vmatprep.subr.bf16.mxu0 0
      %1663 = vmatpush1.bf16.msra.mxu0 0
      %1664 = vmatprep.subr.bf16.mxu0 0
      %1665 = vmatpush1.bf16.msra.mxu0 0
      %1666 = vmatprep.subr.bf16.mxu0 0
      %1667 = vmatpush1.bf16.msra.mxu0 0
      %1668 = vmatprep.subr.bf16.mxu0 0
      %1669 = vmatpush1.bf16.msra.mxu0 0
      %1670 = vmatprep.subr.bf16.mxu0 0
      %1671 = vmatpush1.bf16.msra.mxu0 %v1654
      %1672 = vmatprep.subr.bf16.mxu0 0
      %1673 = vmatpush2.bf16.msra.mxu0 0
      %1674 = vmatprep.subr.bf16.mxu0 0
      %1675 = vmatpush2.bf16.msra.mxu0 0
      %1676 = vmatprep.subr.bf16.mxu0 0
      %1677 = vmatpush2.bf16.msra.mxu0 0
      %1678 = vmatprep.subr.bf16.mxu0 0
      %1679 = vmatpush2.bf16.msra.mxu0 0
      %1680 = vmatprep.subr.bf16.mxu0 0
      %1681 = vmatpush2.bf16.msra.mxu0 0
      %1682 = vmatprep.subr.bf16.mxu0 0
      %1683 = vmatpush2.bf16.msra.mxu0 0
      %1684 = vmatprep.subr.bf16.mxu0 0
      %1685 = vmatpush2.bf16.msra.mxu0 0
      %1686 = vmatprep.subr.bf16.mxu0 0
      %1687 = vmatpush2.bf16.msra.mxu0 0
      %1688 = vmatprep.mubr.bf16.mxu0 0
      %1689 = vmatmul.mubr.bf16.gmra.mxu0 %v1651
      %v1690 = vpop.f32.mrf.mxu0
      %v1691 = vadd.f32 0.0, %v1690
      %v1692 = vpop.f32.mrf.mxu0
      %v1693 = vpop.f32.mrf.mxu0
      %v1694 = vpop.f32.mrf.mxu0
      %1695 = vdwg.mxu0
      %1696 = vrot.lane.b32.xlu0 %v914, 64
      %v1697 = vpop.permute.xlu0 %1696
      %v1699 = vsel %vm1408, %v1404, 0
      %v1702 = vsel %vm1412, %v1697, 0
      %1704 = vmatprep.subr.bf16.mxu0 0
      %1705 = vmatpush1.bf16.msra.mxu0 0
      %1706 = vmatprep.subr.bf16.mxu0 0
      %1707 = vmatpush1.bf16.msra.mxu0 0
      %1708 = vmatprep.subr.bf16.mxu0 0
      %1709 = vmatpush1.bf16.msra.mxu0 0
      %1710 = vmatprep.subr.bf16.mxu0 0
      %1711 = vmatpush1.bf16.msra.mxu0 0
      %1712 = vmatprep.subr.bf16.mxu0 0
      %1713 = vmatpush1.bf16.msra.mxu0 0
      %1714 = vmatprep.subr.bf16.mxu0 0
      %1715 = vmatpush1.bf16.msra.mxu0 0
      %1716 = vmatprep.subr.bf16.mxu0 0
      %1717 = vmatpush1.bf16.msra.mxu0 0
      %1718 = vmatprep.subr.bf16.mxu0 0
      %1719 = vmatpush1.bf16.msra.mxu0 %v1702
      %1720 = vmatprep.subr.bf16.mxu0 0
      %1721 = vmatpush2.bf16.msra.mxu0 0
      %1722 = vmatprep.subr.bf16.mxu0 0
      %1723 = vmatpush2.bf16.msra.mxu0 0
      %1724 = vmatprep.subr.bf16.mxu0 0
      %1725 = vmatpush2.bf16.msra.mxu0 0
      %1726 = vmatprep.subr.bf16.mxu0 0
      %1727 = vmatpush2.bf16.msra.mxu0 0
      %1728 = vmatprep.subr.bf16.mxu0 0
      %1729 = vmatpush2.bf16.msra.mxu0 0
      %1730 = vmatprep.subr.bf16.mxu0 0
      %1731 = vmatpush2.bf16.msra.mxu0 0
      %1732 = vmatprep.subr.bf16.mxu0 0
      %1733 = vmatpush2.bf16.msra.mxu0 0
      %1734 = vmatprep.subr.bf16.mxu0 0
      %1735 = vmatpush2.bf16.msra.mxu0 0
      %1736 = vmatprep.mubr.bf16.mxu0 0
      %1737 = vmatmul.mubr.bf16.gmra.mxu0 %v1699
      %v1738 = vpop.f32.mrf.mxu0
      %v1739 = vadd.f32 0.0, %v1738
      %v1740 = vpop.f32.mrf.mxu0
      %v1741 = vpop.f32.mrf.mxu0
      %v1742 = vpop.f32.mrf.mxu0
      %1743 = vdwg.mxu0
      %1744 = vrot.lane.b32.xlu0 %v915, 64
      %v1745 = vpop.permute.xlu0 %1744
      %v1747 = vsel %vm1408, %v1405, 0
      %v1750 = vsel %vm1412, %v1745, 0
      %1752 = vmatprep.subr.bf16.mxu0 0
      %1753 = vmatpush1.bf16.msra.mxu0 0
      %1754 = vmatprep.subr.bf16.mxu0 0
      %1755 = vmatpush1.bf16.msra.mxu0 0
      %1756 = vmatprep.subr.bf16.mxu0 0
      %1757 = vmatpush1.bf16.msra.mxu0 0
      %1758 = vmatprep.subr.bf16.mxu0 0
      %1759 = vmatpush1.bf16.msra.mxu0 0
      %1760 = vmatprep.subr.bf16.mxu0 0
      %1761 = vmatpush1.bf16.msra.mxu0 0
      %1762 = vmatprep.subr.bf16.mxu0 0
      %1763 = vmatpush1.bf16.msra.mxu0 0
      %1764 = vmatprep.subr.bf16.mxu0 0
      %1765 = vmatpush1.bf16.msra.mxu0 0
      %1766 = vmatprep.subr.bf16.mxu0 0
      %1767 = vmatpush1.bf16.msra.mxu0 %v1750
      %1768 = vmatprep.subr.bf16.mxu0 0
      %1769 = vmatpush2.bf16.msra.mxu0 0
      %1770 = vmatprep.subr.bf16.mxu0 0
      %1771 = vmatpush2.bf16.msra.mxu0 0
      %1772 = vmatprep.subr.bf16.mxu0 0
      %1773 = vmatpush2.bf16.msra.mxu0 0
      %1774 = vmatprep.subr.bf16.mxu0 0
      %1775 = vmatpush2.bf16.msra.mxu0 0
      %1776 = vmatprep.subr.bf16.mxu0 0
      %1777 = vmatpush2.bf16.msra.mxu0 0
      %1778 = vmatprep.subr.bf16.mxu0 0
      %1779 = vmatpush2.bf16.msra.mxu0 0
      %1780 = vmatprep.subr.bf16.mxu0 0
      %1781 = vmatpush2.bf16.msra.mxu0 0
      %1782 = vmatprep.subr.bf16.mxu0 0
      %1783 = vmatpush2.bf16.msra.mxu0 0
      %1784 = vmatprep.mubr.bf16.mxu0 0
      %1785 = vmatmul.mubr.bf16.gmra.mxu0 %v1747
      %v1786 = vpop.f32.mrf.mxu0
      %v1787 = vadd.f32 0.0, %v1786
      %v1788 = vpop.f32.mrf.mxu0
      %v1789 = vpop.f32.mrf.mxu0
      %v1790 = vpop.f32.mrf.mxu0
      %1791 = vdwg.mxu0
      %1792 = vrot.lane.b32.xlu0 %v908, 112
      %v1793 = vpop.permute.xlu0 %1792
      %1794 = vrot.lane.b32.xlu0 %v908, 80
      %v1795 = vpop.permute.xlu0 %1794
      %v1797 = vsel %vm919, %v1793, 0
      %v1800 = vsel %vm919, %v1795, 0
      %1802 = vmatprep.subr.bf16.mxu0 0
      %1803 = vmatpush1.bf16.xpose.msra.mxu0 0
      %1804 = vmatprep.subr.bf16.mxu0 0
      %1805 = vmatpush1.bf16.xpose.msra.mxu0 0
      %1806 = vmatprep.subr.bf16.mxu0 0
      %1807 = vmatpush1.bf16.xpose.msra.mxu0 0
      %1808 = vmatprep.subr.bf16.mxu0 0
      %1809 = vmatpush1.bf16.xpose.msra.mxu0 0
      %1810 = vmatprep.subr.bf16.mxu0 0
      %1811 = vmatpush1.bf16.xpose.msra.mxu0 0
      %1812 = vmatprep.subr.bf16.mxu0 0
      %1813 = vmatpush1.bf16.xpose.msra.mxu0 0
      %1814 = vmatprep.subr.bf16.mxu0 0
      %1815 = vmatpush1.bf16.xpose.msra.mxu0 0
      %1816 = vmatprep.subr.bf16.mxu0 0
      %1817 = vmatpush1.bf16.xpose.msra.mxu0 %v1800
      %1818 = vmatprep.subr.bf16.mxu0 0
      %1819 = vmatpush2.bf16.xpose.msra.mxu0 0
      %1820 = vmatprep.subr.bf16.mxu0 0
      %1821 = vmatpush2.bf16.xpose.msra.mxu0 0
      %1822 = vmatprep.subr.bf16.mxu0 0
      %1823 = vmatpush2.bf16.xpose.msra.mxu0 0
      %1824 = vmatprep.subr.bf16.mxu0 0
      %1825 = vmatpush2.bf16.xpose.msra.mxu0 0
      %1826 = vmatprep.subr.bf16.mxu0 0
      %1827 = vmatpush2.bf16.xpose.msra.mxu0 0
      %1828 = vmatprep.subr.bf16.mxu0 0
      %1829 = vmatpush2.bf16.xpose.msra.mxu0 0
      %1830 = vmatprep.subr.bf16.mxu0 0
      %1831 = vmatpush2.bf16.xpose.msra.mxu0 0
      %1832 = vmatprep.subr.bf16.mxu0 0
      %1833 = vmatpush2.bf16.xpose.msra.mxu0 0
      %1834 = vmatprep.mubr.bf16.mxu0 0
      %1835 = vmatmul.mubr.bf16.gmra.mxu0 %v1797
      %v1836 = vpop.f32.mrf.mxu0
      %v1837 = vadd.f32 0.0, %v1836
      %v1838 = vpop.f32.mrf.mxu0
      %v1839 = vpop.f32.mrf.mxu0
      %v1840 = vpop.f32.mrf.mxu0
      %1841 = vdwg.mxu0
      %1842 = vrot.lane.b32.xlu0 %v909, 112
      %v1843 = vpop.permute.xlu0 %1842
      %1844 = vrot.lane.b32.xlu0 %v909, 80
      %v1845 = vpop.permute.xlu0 %1844
      %v1847 = vsel %vm919, %v1843, 0
      %v1850 = vsel %vm919, %v1845, 0
      %1852 = vmatprep.subr.bf16.mxu0 0
      %1853 = vmatpush1.bf16.xpose.msra.mxu0 0
      %1854 = vmatprep.subr.bf16.mxu0 0
      %1855 = vmatpush1.bf16.xpose.msra.mxu0 0
      %1856 = vmatprep.subr.bf16.mxu0 0
      %1857 = vmatpush1.bf16.xpose.msra.mxu0 0
      %1858 = vmatprep.subr.bf16.mxu0 0
      %1859 = vmatpush1.bf16.xpose.msra.mxu0 0
      %1860 = vmatprep.subr.bf16.mxu0 0
      %1861 = vmatpush1.bf16.xpose.msra.mxu0 0
      %1862 = vmatprep.subr.bf16.mxu0 0
      %1863 = vmatpush1.bf16.xpose.msra.mxu0 0
      %1864 = vmatprep.subr.bf16.mxu0 0
      %1865 = vmatpush1.bf16.xpose.msra.mxu0 0
      %1866 = vmatprep.subr.bf16.mxu0 0
      %1867 = vmatpush1.bf16.xpose.msra.mxu0 %v1850
      %1868 = vmatprep.subr.bf16.mxu0 0
      %1869 = vmatpush2.bf16.xpose.msra.mxu0 0
      %1870 = vmatprep.subr.bf16.mxu0 0
      %1871 = vmatpush2.bf16.xpose.msra.mxu0 0
      %1872 = vmatprep.subr.bf16.mxu0 0
      %1873 = vmatpush2.bf16.xpose.msra.mxu0 0
      %1874 = vmatprep.subr.bf16.mxu0 0
      %1875 = vmatpush2.bf16.xpose.msra.mxu0 0
      %1876 = vmatprep.subr.bf16.mxu0 0
      %1877 = vmatpush2.bf16.xpose.msra.mxu0 0
      %1878 = vmatprep.subr.bf16.mxu0 0
      %1879 = vmatpush2.bf16.xpose.msra.mxu0 0
      %1880 = vmatprep.subr.bf16.mxu0 0
      %1881 = vmatpush2.bf16.xpose.msra.mxu0 0
      %1882 = vmatprep.subr.bf16.mxu0 0
      %1883 = vmatpush2.bf16.xpose.msra.mxu0 0
      %1884 = vmatprep.mubr.bf16.mxu0 0
      %1885 = vmatmul.mubr.bf16.gmra.mxu0 %v1847
      %v1886 = vpop.f32.mrf.mxu0
      %v1887 = vadd.f32 0.0, %v1886
      %v1888 = vpop.f32.mrf.mxu0
      %v1889 = vpop.f32.mrf.mxu0
      %v1890 = vpop.f32.mrf.mxu0
      %1891 = vdwg.mxu0
      %1892 = vrot.lane.b32.xlu0 %v910, 112
      %v1893 = vpop.permute.xlu0 %1892
      %1894 = vrot.lane.b32.xlu0 %v910, 80
      %v1895 = vpop.permute.xlu0 %1894
      %v1897 = vsel %vm919, %v1893, 0
      %v1900 = vsel %vm919, %v1895, 0
      %1902 = vmatprep.subr.bf16.mxu0 0
      %1903 = vmatpush1.bf16.xpose.msra.mxu0 0
      %1904 = vmatprep.subr.bf16.mxu0 0
      %1905 = vmatpush1.bf16.xpose.msra.mxu0 0
      %1906 = vmatprep.subr.bf16.mxu0 0
      %1907 = vmatpush1.bf16.xpose.msra.mxu0 0
      %1908 = vmatprep.subr.bf16.mxu0 0
      %1909 = vmatpush1.bf16.xpose.msra.mxu0 0
      %1910 = vmatprep.subr.bf16.mxu0 0
      %1911 = vmatpush1.bf16.xpose.msra.mxu0 0
      %1912 = vmatprep.subr.bf16.mxu0 0
      %1913 = vmatpush1.bf16.xpose.msra.mxu0 0
      %1914 = vmatprep.subr.bf16.mxu0 0
      %1915 = vmatpush1.bf16.xpose.msra.mxu0 0
      %1916 = vmatprep.subr.bf16.mxu0 0
      %1917 = vmatpush1.bf16.xpose.msra.mxu0 %v1900
      %1918 = vmatprep.subr.bf16.mxu0 0
      %1919 = vmatpush2.bf16.xpose.msra.mxu0 0
      %1920 = vmatprep.subr.bf16.mxu0 0
      %1921 = vmatpush2.bf16.xpose.msra.mxu0 0
      %1922 = vmatprep.subr.bf16.mxu0 0
      %1923 = vmatpush2.bf16.xpose.msra.mxu0 0
      %1924 = vmatprep.subr.bf16.mxu0 0
      %1925 = vmatpush2.bf16.xpose.msra.mxu0 0
      %1926 = vmatprep.subr.bf16.mxu0 0
      %1927 = vmatpush2.bf16.xpose.msra.mxu0 0
      %1928 = vmatprep.subr.bf16.mxu0 0
      %1929 = vmatpush2.bf16.xpose.msra.mxu0 0
      %1930 = vmatprep.subr.bf16.mxu0 0
      %1931 = vmatpush2.bf16.xpose.msra.mxu0 0
      %1932 = vmatprep.subr.bf16.mxu0 0
      %1933 = vmatpush2.bf16.xpose.msra.mxu0 0
      %1934 = vmatprep.mubr.bf16.mxu0 0
      %1935 = vmatmul.mubr.bf16.gmra.mxu0 %v1897
      %v1936 = vpop.f32.mrf.mxu0
      %v1937 = vadd.f32 0.0, %v1936
      %v1938 = vpop.f32.mrf.mxu0
      %v1939 = vpop.f32.mrf.mxu0
      %v1940 = vpop.f32.mrf.mxu0
      %1941 = vdwg.mxu0
      %1942 = vrot.lane.b32.xlu0 %v911, 112
      %v1943 = vpop.permute.xlu0 %1942
      %1944 = vrot.lane.b32.xlu0 %v911, 80
      %v1945 = vpop.permute.xlu0 %1944
      %v1947 = vsel %vm919, %v1943, 0
      %v1950 = vsel %vm919, %v1945, 0
      %1952 = vmatprep.subr.bf16.mxu0 0
      %1953 = vmatpush1.bf16.xpose.msra.mxu0 0
      %1954 = vmatprep.subr.bf16.mxu0 0
      %1955 = vmatpush1.bf16.xpose.msra.mxu0 0
      %1956 = vmatprep.subr.bf16.mxu0 0
      %1957 = vmatpush1.bf16.xpose.msra.mxu0 0
      %1958 = vmatprep.subr.bf16.mxu0 0
      %1959 = vmatpush1.bf16.xpose.msra.mxu0 0
      %1960 = vmatprep.subr.bf16.mxu0 0
      %1961 = vmatpush1.bf16.xpose.msra.mxu0 0
      %1962 = vmatprep.subr.bf16.mxu0 0
      %1963 = vmatpush1.bf16.xpose.msra.mxu0 0
      %1964 = vmatprep.subr.bf16.mxu0 0
      %1965 = vmatpush1.bf16.xpose.msra.mxu0 0
      %1966 = vmatprep.subr.bf16.mxu0 0
      %1967 = vmatpush1.bf16.xpose.msra.mxu0 %v1950
      %1968 = vmatprep.subr.bf16.mxu0 0
      %1969 = vmatpush2.bf16.xpose.msra.mxu0 0
      %1970 = vmatprep.subr.bf16.mxu0 0
      %1971 = vmatpush2.bf16.xpose.msra.mxu0 0
      %1972 = vmatprep.subr.bf16.mxu0 0
      %1973 = vmatpush2.bf16.xpose.msra.mxu0 0
      %1974 = vmatprep.subr.bf16.mxu0 0
      %1975 = vmatpush2.bf16.xpose.msra.mxu0 0
      %1976 = vmatprep.subr.bf16.mxu0 0
      %1977 = vmatpush2.bf16.xpose.msra.mxu0 0
      %1978 = vmatprep.subr.bf16.mxu0 0
      %1979 = vmatpush2.bf16.xpose.msra.mxu0 0
      %1980 = vmatprep.subr.bf16.mxu0 0
      %1981 = vmatpush2.bf16.xpose.msra.mxu0 0
      %1982 = vmatprep.subr.bf16.mxu0 0
      %1983 = vmatpush2.bf16.xpose.msra.mxu0 0
      %1984 = vmatprep.mubr.bf16.mxu0 0
      %1985 = vmatmul.mubr.bf16.gmra.mxu0 %v1947
      %v1986 = vpop.f32.mrf.mxu0
      %v1987 = vadd.f32 0.0, %v1986
      %v1988 = vpop.f32.mrf.mxu0
      %v1989 = vpop.f32.mrf.mxu0
      %v1990 = vpop.f32.mrf.mxu0
      %1991 = vdwg.mxu0
      %1992 = vrot.lane.b32.xlu0 %v912, 112
      %v1993 = vpop.permute.xlu0 %1992
      %1994 = vrot.lane.b32.xlu0 %v912, 80
      %v1995 = vpop.permute.xlu0 %1994
      %v1997 = vsel %vm919, %v1993, 0
      %v2000 = vsel %vm919, %v1995, 0
      %2002 = vmatprep.subr.bf16.mxu0 0
      %2003 = vmatpush1.bf16.xpose.msra.mxu0 0
      %2004 = vmatprep.subr.bf16.mxu0 0
      %2005 = vmatpush1.bf16.xpose.msra.mxu0 0
      %2006 = vmatprep.subr.bf16.mxu0 0
      %2007 = vmatpush1.bf16.xpose.msra.mxu0 0
      %2008 = vmatprep.subr.bf16.mxu0 0
      %2009 = vmatpush1.bf16.xpose.msra.mxu0 0
      %2010 = vmatprep.subr.bf16.mxu0 0
      %2011 = vmatpush1.bf16.xpose.msra.mxu0 0
      %2012 = vmatprep.subr.bf16.mxu0 0
      %2013 = vmatpush1.bf16.xpose.msra.mxu0 0
      %2014 = vmatprep.subr.bf16.mxu0 0
      %2015 = vmatpush1.bf16.xpose.msra.mxu0 0
      %2016 = vmatprep.subr.bf16.mxu0 0
      %2017 = vmatpush1.bf16.xpose.msra.mxu0 %v2000
      %2018 = vmatprep.subr.bf16.mxu0 0
      %2019 = vmatpush2.bf16.xpose.msra.mxu0 0
      %2020 = vmatprep.subr.bf16.mxu0 0
      %2021 = vmatpush2.bf16.xpose.msra.mxu0 0
      %2022 = vmatprep.subr.bf16.mxu0 0
      %2023 = vmatpush2.bf16.xpose.msra.mxu0 0
      %2024 = vmatprep.subr.bf16.mxu0 0
      %2025 = vmatpush2.bf16.xpose.msra.mxu0 0
      %2026 = vmatprep.subr.bf16.mxu0 0
      %2027 = vmatpush2.bf16.xpose.msra.mxu0 0
      %2028 = vmatprep.subr.bf16.mxu0 0
      %2029 = vmatpush2.bf16.xpose.msra.mxu0 0
      %2030 = vmatprep.subr.bf16.mxu0 0
      %2031 = vmatpush2.bf16.xpose.msra.mxu0 0
      %2032 = vmatprep.subr.bf16.mxu0 0
      %2033 = vmatpush2.bf16.xpose.msra.mxu0 0
      %2034 = vmatprep.mubr.bf16.mxu0 0
      %2035 = vmatmul.mubr.bf16.gmra.mxu0 %v1997
      %v2036 = vpop.f32.mrf.mxu0
      %v2037 = vadd.f32 0.0, %v2036
      %v2038 = vpop.f32.mrf.mxu0
      %v2039 = vpop.f32.mrf.mxu0
      %v2040 = vpop.f32.mrf.mxu0
      %2041 = vdwg.mxu0
      %2042 = vrot.lane.b32.xlu0 %v913, 112
      %v2043 = vpop.permute.xlu0 %2042
      %2044 = vrot.lane.b32.xlu0 %v913, 80
      %v2045 = vpop.permute.xlu0 %2044
      %v2047 = vsel %vm919, %v2043, 0
      %v2050 = vsel %vm919, %v2045, 0
      %2052 = vmatprep.subr.bf16.mxu0 0
      %2053 = vmatpush1.bf16.xpose.msra.mxu0 0
      %2054 = vmatprep.subr.bf16.mxu0 0
      %2055 = vmatpush1.bf16.xpose.msra.mxu0 0
      %2056 = vmatprep.subr.bf16.mxu0 0
      %2057 = vmatpush1.bf16.xpose.msra.mxu0 0
      %2058 = vmatprep.subr.bf16.mxu0 0
      %2059 = vmatpush1.bf16.xpose.msra.mxu0 0
      %2060 = vmatprep.subr.bf16.mxu0 0
      %2061 = vmatpush1.bf16.xpose.msra.mxu0 0
      %2062 = vmatprep.subr.bf16.mxu0 0
      %2063 = vmatpush1.bf16.xpose.msra.mxu0 0
      %2064 = vmatprep.subr.bf16.mxu0 0
      %2065 = vmatpush1.bf16.xpose.msra.mxu0 0
      %2066 = vmatprep.subr.bf16.mxu0 0
      %2067 = vmatpush1.bf16.xpose.msra.mxu0 %v2050
      %2068 = vmatprep.subr.bf16.mxu0 0
      %2069 = vmatpush2.bf16.xpose.msra.mxu0 0
      %2070 = vmatprep.subr.bf16.mxu0 0
      %2071 = vmatpush2.bf16.xpose.msra.mxu0 0
      %2072 = vmatprep.subr.bf16.mxu0 0
      %2073 = vmatpush2.bf16.xpose.msra.mxu0 0
      %2074 = vmatprep.subr.bf16.mxu0 0
      %2075 = vmatpush2.bf16.xpose.msra.mxu0 0
      %2076 = vmatprep.subr.bf16.mxu0 0
      %2077 = vmatpush2.bf16.xpose.msra.mxu0 0
      %2078 = vmatprep.subr.bf16.mxu0 0
      %2079 = vmatpush2.bf16.xpose.msra.mxu0 0
      %2080 = vmatprep.subr.bf16.mxu0 0
      %2081 = vmatpush2.bf16.xpose.msra.mxu0 0
      %2082 = vmatprep.subr.bf16.mxu0 0
      %2083 = vmatpush2.bf16.xpose.msra.mxu0 0
      %2084 = vmatprep.mubr.bf16.mxu0 0
      %2085 = vmatmul.mubr.bf16.gmra.mxu0 %v2047
      %v2086 = vpop.f32.mrf.mxu0
      %v2087 = vadd.f32 0.0, %v2086
      %v2088 = vpop.f32.mrf.mxu0
      %v2089 = vpop.f32.mrf.mxu0
      %v2090 = vpop.f32.mrf.mxu0
      %2091 = vdwg.mxu0
      %2092 = vrot.lane.b32.xlu0 %v914, 112
      %v2093 = vpop.permute.xlu0 %2092
      %2094 = vrot.lane.b32.xlu0 %v914, 80
      %v2095 = vpop.permute.xlu0 %2094
      %v2097 = vsel %vm919, %v2093, 0
      %v2100 = vsel %vm919, %v2095, 0
      %2102 = vmatprep.subr.bf16.mxu0 0
      %2103 = vmatpush1.bf16.xpose.msra.mxu0 0
      %2104 = vmatprep.subr.bf16.mxu0 0
      %2105 = vmatpush1.bf16.xpose.msra.mxu0 0
      %2106 = vmatprep.subr.bf16.mxu0 0
      %2107 = vmatpush1.bf16.xpose.msra.mxu0 0
      %2108 = vmatprep.subr.bf16.mxu0 0
      %2109 = vmatpush1.bf16.xpose.msra.mxu0 0
      %2110 = vmatprep.subr.bf16.mxu0 0
      %2111 = vmatpush1.bf16.xpose.msra.mxu0 0
      %2112 = vmatprep.subr.bf16.mxu0 0
      %2113 = vmatpush1.bf16.xpose.msra.mxu0 0
      %2114 = vmatprep.subr.bf16.mxu0 0
      %2115 = vmatpush1.bf16.xpose.msra.mxu0 0
      %2116 = vmatprep.subr.bf16.mxu0 0
      %2117 = vmatpush1.bf16.xpose.msra.mxu0 %v2100
      %2118 = vmatprep.subr.bf16.mxu0 0
      %2119 = vmatpush2.bf16.xpose.msra.mxu0 0
      %2120 = vmatprep.subr.bf16.mxu0 0
      %2121 = vmatpush2.bf16.xpose.msra.mxu0 0
      %2122 = vmatprep.subr.bf16.mxu0 0
      %2123 = vmatpush2.bf16.xpose.msra.mxu0 0
      %2124 = vmatprep.subr.bf16.mxu0 0
      %2125 = vmatpush2.bf16.xpose.msra.mxu0 0
      %2126 = vmatprep.subr.bf16.mxu0 0
      %2127 = vmatpush2.bf16.xpose.msra.mxu0 0
      %2128 = vmatprep.subr.bf16.mxu0 0
      %2129 = vmatpush2.bf16.xpose.msra.mxu0 0
      %2130 = vmatprep.subr.bf16.mxu0 0
      %2131 = vmatpush2.bf16.xpose.msra.mxu0 0
      %2132 = vmatprep.subr.bf16.mxu0 0
      %2133 = vmatpush2.bf16.xpose.msra.mxu0 0
      %2134 = vmatprep.mubr.bf16.mxu0 0
      %2135 = vmatmul.mubr.bf16.gmra.mxu0 %v2097
      %v2136 = vpop.f32.mrf.mxu0
      %v2137 = vadd.f32 0.0, %v2136
      %v2138 = vpop.f32.mrf.mxu0
      %v2139 = vpop.f32.mrf.mxu0
      %v2140 = vpop.f32.mrf.mxu0
      %2141 = vdwg.mxu0
      %2142 = vrot.lane.b32.xlu0 %v915, 112
      %v2143 = vpop.permute.xlu0 %2142
      %2144 = vrot.lane.b32.xlu0 %v915, 80
      %v2145 = vpop.permute.xlu0 %2144
      %v2147 = vsel %vm919, %v2143, 0
      %v2150 = vsel %vm919, %v2145, 0
      %2152 = vmatprep.subr.bf16.mxu0 0
      %2153 = vmatpush1.bf16.xpose.msra.mxu0 0
      %2154 = vmatprep.subr.bf16.mxu0 0
      %2155 = vmatpush1.bf16.xpose.msra.mxu0 0
      %2156 = vmatprep.subr.bf16.mxu0 0
      %2157 = vmatpush1.bf16.xpose.msra.mxu0 0
      %2158 = vmatprep.subr.bf16.mxu0 0
      %2159 = vmatpush1.bf16.xpose.msra.mxu0 0
      %2160 = vmatprep.subr.bf16.mxu0 0
      %2161 = vmatpush1.bf16.xpose.msra.mxu0 0
      %2162 = vmatprep.subr.bf16.mxu0 0
      %2163 = vmatpush1.bf16.xpose.msra.mxu0 0
      %2164 = vmatprep.subr.bf16.mxu0 0
      %2165 = vmatpush1.bf16.xpose.msra.mxu0 0
      %2166 = vmatprep.subr.bf16.mxu0 0
      %2167 = vmatpush1.bf16.xpose.msra.mxu0 %v2150
      %2168 = vmatprep.subr.bf16.mxu0 0
      %2169 = vmatpush2.bf16.xpose.msra.mxu0 0
      %2170 = vmatprep.subr.bf16.mxu0 0
      %2171 = vmatpush2.bf16.xpose.msra.mxu0 0
      %2172 = vmatprep.subr.bf16.mxu0 0
      %2173 = vmatpush2.bf16.xpose.msra.mxu0 0
      %2174 = vmatprep.subr.bf16.mxu0 0
      %2175 = vmatpush2.bf16.xpose.msra.mxu0 0
      %2176 = vmatprep.subr.bf16.mxu0 0
      %2177 = vmatpush2.bf16.xpose.msra.mxu0 0
      %2178 = vmatprep.subr.bf16.mxu0 0
      %2179 = vmatpush2.bf16.xpose.msra.mxu0 0
      %2180 = vmatprep.subr.bf16.mxu0 0
      %2181 = vmatpush2.bf16.xpose.msra.mxu0 0
      %2182 = vmatprep.subr.bf16.mxu0 0
      %2183 = vmatpush2.bf16.xpose.msra.mxu0 0
      %2184 = vmatprep.mubr.bf16.mxu0 0
      %2185 = vmatmul.mubr.bf16.gmra.mxu0 %v2147
      %v2186 = vpop.f32.mrf.mxu0
      %v2187 = vadd.f32 0.0, %v2186
      %v2188 = vpop.f32.mrf.mxu0
      %v2189 = vpop.f32.mrf.mxu0
      %v2190 = vpop.f32.mrf.mxu0
      %2191 = vdwg.mxu0
      %v2192 = vsel %vm1309, %v1837, -inf
      %2193 = vmax.xlane.f32.xlu0 %v2192
      %v2194 = vpop.xlane.xlu0 %2193
      %v2195 = vsel %vm1309, %v1887, -inf
      %2196 = vmax.xlane.f32.xlu0 %v2195
      %v2197 = vpop.xlane.xlu0 %2196
      %v2198 = vsel %vm1309, %v1937, -inf
      %2199 = vmax.xlane.f32.xlu0 %v2198
      %v2200 = vpop.xlane.xlu0 %2199
      %v2201 = vsel %vm1309, %v1987, -inf
      %2202 = vmax.xlane.f32.xlu0 %v2201
      %v2203 = vpop.xlane.xlu0 %2202
      %v2204 = vsel %vm1309, %v2037, -inf
      %2205 = vmax.xlane.f32.xlu0 %v2204
      %v2206 = vpop.xlane.xlu0 %2205
      %v2207 = vsel %vm1309, %v2087, -inf
      %2208 = vmax.xlane.f32.xlu0 %v2207
      %v2209 = vpop.xlane.xlu0 %2208
      %v2210 = vsel %vm1309, %v2137, -inf
      %2211 = vmax.xlane.f32.xlu0 %v2210
      %v2212 = vpop.xlane.xlu0 %2211
      %v2213 = vsel %vm1309, %v2187, -inf
      %2214 = vmax.xlane.f32.xlu0 %v2213
      %v2215 = vpop.xlane.xlu0 %2214
      %v2216 = vsub.f32 %v1837, %v2194
      %v2217 = vsub.f32 %v1887, %v2197
      %v2218 = vsub.f32 %v1937, %v2200
      %v2219 = vsub.f32 %v1987, %v2203
      %v2220 = vsub.f32 %v2037, %v2206
      %v2221 = vsub.f32 %v2087, %v2209
      %v2222 = vsub.f32 %v2137, %v2212
      %v2223 = vsub.f32 %v2187, %v2215
      %v2224 = vmul.f32 %v2216, 1.442695
      %v2225 = vpow.pop %v2224
      %v2226 = vmul.f32 %v2217, 1.442695
      %v2227 = vpow.pop %v2226
      %v2228 = vmul.f32 %v2218, 1.442695
      %v2229 = vpow.pop %v2228
      %v2230 = vmul.f32 %v2219, 1.442695
      %v2231 = vpow.pop %v2230
      %v2232 = vmul.f32 %v2220, 1.442695
      %v2233 = vpow.pop %v2232
      %v2234 = vmul.f32 %v2221, 1.442695
      %v2235 = vpow.pop %v2234
      %v2236 = vmul.f32 %v2222, 1.442695
      %v2237 = vpow.pop %v2236
      %v2238 = vmul.f32 %v2223, 1.442695
      %v2239 = vpow.pop %v2238
      %v2240 = vsel %vm1309, %v2225, 0.0
      %2241 = vadd.xlane.f32.xlu0 %v2240
      %v2242 = vpop.xlane.xlu0 %2241
      %v2243 = vsel %vm1309, %v2227, 0.0
      %2244 = vadd.xlane.f32.xlu0 %v2243
      %v2245 = vpop.xlane.xlu0 %2244
      %v2246 = vsel %vm1309, %v2229, 0.0
      %2247 = vadd.xlane.f32.xlu0 %v2246
      %v2248 = vpop.xlane.xlu0 %2247
      %v2249 = vsel %vm1309, %v2231, 0.0
      %2250 = vadd.xlane.f32.xlu0 %v2249
      %v2251 = vpop.xlane.xlu0 %2250
      %v2252 = vsel %vm1309, %v2233, 0.0
      %2253 = vadd.xlane.f32.xlu0 %v2252
      %v2254 = vpop.xlane.xlu0 %2253
      %v2255 = vsel %vm1309, %v2235, 0.0
      %2256 = vadd.xlane.f32.xlu0 %v2255
      %v2257 = vpop.xlane.xlu0 %2256
      %v2258 = vsel %vm1309, %v2237, 0.0
      %2259 = vadd.xlane.f32.xlu0 %v2258
      %v2260 = vpop.xlane.xlu0 %2259
      %v2261 = vsel %vm1309, %v2239, 0.0
      %2262 = vadd.xlane.f32.xlu0 %v2261
      %v2263 = vpop.xlane.xlu0 %2262
      %v2264 = vrcp.pop %v2242
      %v2265 = vrcp.pop %v2245
      %v2266 = vrcp.pop %v2248
      %v2267 = vrcp.pop %v2251
      %v2268 = vrcp.pop %v2254
      %v2269 = vrcp.pop %v2257
      %v2270 = vrcp.pop %v2260
      %v2271 = vrcp.pop %v2263
      %v2272 = vmul.f32 %v2225, %v2264
      %v2273 = vmul.f32 %v2227, %v2265
      %v2274 = vmul.f32 %v2229, %v2266
      %v2275 = vmul.f32 %v2231, %v2267
      %v2276 = vmul.f32 %v2233, %v2268
      %v2277 = vmul.f32 %v2235, %v2269
      %v2278 = vmul.f32 %v2237, %v2270
      %v2279 = vmul.f32 %v2239, %v2271
      %v2280 = vpack.c.bf16 %v2272, %v2272
      %v2281 = vpack.c.bf16 %v2273, %v2273
      %v2282 = vpack.c.bf16 %v2274, %v2274
      %v2283 = vpack.c.bf16 %v2275, %v2275
      %v2284 = vpack.c.bf16 %v2276, %v2276
      %v2285 = vpack.c.bf16 %v2277, %v2277
      %v2286 = vpack.c.bf16 %v2278, %v2278
      %v2287 = vpack.c.bf16 %v2279, %v2279
      %2288 = vrot.lane.b32.xlu0 %v908, 48
      %v2289 = vpop.permute.xlu0 %2288
      %v2291 = vsel %vm1408, %v2280, 0
      %v2294 = vsel %vm1412, %v2289, 0
      %2296 = vmatprep.subr.bf16.mxu0 0
      %2297 = vmatpush1.bf16.msra.mxu0 0
      %2298 = vmatprep.subr.bf16.mxu0 0
      %2299 = vmatpush1.bf16.msra.mxu0 0
      %2300 = vmatprep.subr.bf16.mxu0 0
      %2301 = vmatpush1.bf16.msra.mxu0 0
      %2302 = vmatprep.subr.bf16.mxu0 0
      %2303 = vmatpush1.bf16.msra.mxu0 0
      %2304 = vmatprep.subr.bf16.mxu0 0
      %2305 = vmatpush1.bf16.msra.mxu0 0
      %2306 = vmatprep.subr.bf16.mxu0 0
      %2307 = vmatpush1.bf16.msra.mxu0 0
      %2308 = vmatprep.subr.bf16.mxu0 0
      %2309 = vmatpush1.bf16.msra.mxu0 0
      %2310 = vmatprep.subr.bf16.mxu0 0
      %2311 = vmatpush1.bf16.msra.mxu0 %v2294
      %2312 = vmatprep.subr.bf16.mxu0 0
      %2313 = vmatpush2.bf16.msra.mxu0 0
      %2314 = vmatprep.subr.bf16.mxu0 0
      %2315 = vmatpush2.bf16.msra.mxu0 0
      %2316 = vmatprep.subr.bf16.mxu0 0
      %2317 = vmatpush2.bf16.msra.mxu0 0
      %2318 = vmatprep.subr.bf16.mxu0 0
      %2319 = vmatpush2.bf16.msra.mxu0 0
      %2320 = vmatprep.subr.bf16.mxu0 0
      %2321 = vmatpush2.bf16.msra.mxu0 0
      %2322 = vmatprep.subr.bf16.mxu0 0
      %2323 = vmatpush2.bf16.msra.mxu0 0
      %2324 = vmatprep.subr.bf16.mxu0 0
      %2325 = vmatpush2.bf16.msra.mxu0 0
      %2326 = vmatprep.subr.bf16.mxu0 0
      %2327 = vmatpush2.bf16.msra.mxu0 0
      %2328 = vmatprep.mubr.bf16.mxu0 0
      %2329 = vmatmul.mubr.bf16.gmra.mxu0 %v2291
      %v2330 = vpop.f32.mrf.mxu0
      %v2331 = vadd.f32 0.0, %v2330
      %v2332 = vpop.f32.mrf.mxu0
      %v2333 = vpop.f32.mrf.mxu0
      %v2334 = vpop.f32.mrf.mxu0
      %2335 = vdwg.mxu0
      %2336 = vrot.lane.b32.xlu0 %v909, 48
      %v2337 = vpop.permute.xlu0 %2336
      %v2339 = vsel %vm1408, %v2281, 0
      %v2342 = vsel %vm1412, %v2337, 0
      %2344 = vmatprep.subr.bf16.mxu0 0
      %2345 = vmatpush1.bf16.msra.mxu0 0
      %2346 = vmatprep.subr.bf16.mxu0 0
      %2347 = vmatpush1.bf16.msra.mxu0 0
      %2348 = vmatprep.subr.bf16.mxu0 0
      %2349 = vmatpush1.bf16.msra.mxu0 0
      %2350 = vmatprep.subr.bf16.mxu0 0
      %2351 = vmatpush1.bf16.msra.mxu0 0
      %2352 = vmatprep.subr.bf16.mxu0 0
      %2353 = vmatpush1.bf16.msra.mxu0 0
      %2354 = vmatprep.subr.bf16.mxu0 0
      %2355 = vmatpush1.bf16.msra.mxu0 0
      %2356 = vmatprep.subr.bf16.mxu0 0
      %2357 = vmatpush1.bf16.msra.mxu0 0
      %2358 = vmatprep.subr.bf16.mxu0 0
      %2359 = vmatpush1.bf16.msra.mxu0 %v2342
      %2360 = vmatprep.subr.bf16.mxu0 0
      %2361 = vmatpush2.bf16.msra.mxu0 0
      %2362 = vmatprep.subr.bf16.mxu0 0
      %2363 = vmatpush2.bf16.msra.mxu0 0
      %2364 = vmatprep.subr.bf16.mxu0 0
      %2365 = vmatpush2.bf16.msra.mxu0 0
      %2366 = vmatprep.subr.bf16.mxu0 0
      %2367 = vmatpush2.bf16.msra.mxu0 0
      %2368 = vmatprep.subr.bf16.mxu0 0
      %2369 = vmatpush2.bf16.msra.mxu0 0
      %2370 = vmatprep.subr.bf16.mxu0 0
      %2371 = vmatpush2.bf16.msra.mxu0 0
      %2372 = vmatprep.subr.bf16.mxu0 0
      %2373 = vmatpush2.bf16.msra.mxu0 0
      %2374 = vmatprep.subr.bf16.mxu0 0
      %2375 = vmatpush2.bf16.msra.mxu0 0
      %2376 = vmatprep.mubr.bf16.mxu0 0
      %2377 = vmatmul.mubr.bf16.gmra.mxu0 %v2339
      %v2378 = vpop.f32.mrf.mxu0
      %v2379 = vadd.f32 0.0, %v2378
      %v2380 = vpop.f32.mrf.mxu0
      %v2381 = vpop.f32.mrf.mxu0
      %v2382 = vpop.f32.mrf.mxu0
      %2383 = vdwg.mxu0
      %2384 = vrot.lane.b32.xlu0 %v910, 48
      %v2385 = vpop.permute.xlu0 %2384
      %v2387 = vsel %vm1408, %v2282, 0
      %v2390 = vsel %vm1412, %v2385, 0
      %2392 = vmatprep.subr.bf16.mxu0 0
      %2393 = vmatpush1.bf16.msra.mxu0 0
      %2394 = vmatprep.subr.bf16.mxu0 0
      %2395 = vmatpush1.bf16.msra.mxu0 0
      %2396 = vmatprep.subr.bf16.mxu0 0
      %2397 = vmatpush1.bf16.msra.mxu0 0
      %2398 = vmatprep.subr.bf16.mxu0 0
      %2399 = vmatpush1.bf16.msra.mxu0 0
      %2400 = vmatprep.subr.bf16.mxu0 0
      %2401 = vmatpush1.bf16.msra.mxu0 0
      %2402 = vmatprep.subr.bf16.mxu0 0
      %2403 = vmatpush1.bf16.msra.mxu0 0
      %2404 = vmatprep.subr.bf16.mxu0 0
      %2405 = vmatpush1.bf16.msra.mxu0 0
      %2406 = vmatprep.subr.bf16.mxu0 0
      %2407 = vmatpush1.bf16.msra.mxu0 %v2390
      %2408 = vmatprep.subr.bf16.mxu0 0
      %2409 = vmatpush2.bf16.msra.mxu0 0
      %2410 = vmatprep.subr.bf16.mxu0 0
      %2411 = vmatpush2.bf16.msra.mxu0 0
      %2412 = vmatprep.subr.bf16.mxu0 0
      %2413 = vmatpush2.bf16.msra.mxu0 0
      %2414 = vmatprep.subr.bf16.mxu0 0
      %2415 = vmatpush2.bf16.msra.mxu0 0
      %2416 = vmatprep.subr.bf16.mxu0 0
      %2417 = vmatpush2.bf16.msra.mxu0 0
      %2418 = vmatprep.subr.bf16.mxu0 0
      %2419 = vmatpush2.bf16.msra.mxu0 0
      %2420 = vmatprep.subr.bf16.mxu0 0
      %2421 = vmatpush2.bf16.msra.mxu0 0
      %2422 = vmatprep.subr.bf16.mxu0 0
      %2423 = vmatpush2.bf16.msra.mxu0 0
      %2424 = vmatprep.mubr.bf16.mxu0 0
      %2425 = vmatmul.mubr.bf16.gmra.mxu0 %v2387
      %v2426 = vpop.f32.mrf.mxu0
      %v2427 = vadd.f32 0.0, %v2426
      %v2428 = vpop.f32.mrf.mxu0
      %v2429 = vpop.f32.mrf.mxu0
      %v2430 = vpop.f32.mrf.mxu0
      %2431 = vdwg.mxu0
      %2432 = vrot.lane.b32.xlu0 %v911, 48
      %v2433 = vpop.permute.xlu0 %2432
      %v2435 = vsel %vm1408, %v2283, 0
      %v2438 = vsel %vm1412, %v2433, 0
      %2440 = vmatprep.subr.bf16.mxu0 0
      %2441 = vmatpush1.bf16.msra.mxu0 0
      %2442 = vmatprep.subr.bf16.mxu0 0
      %2443 = vmatpush1.bf16.msra.mxu0 0
      %2444 = vmatprep.subr.bf16.mxu0 0
      %2445 = vmatpush1.bf16.msra.mxu0 0
      %2446 = vmatprep.subr.bf16.mxu0 0
      %2447 = vmatpush1.bf16.msra.mxu0 0
      %2448 = vmatprep.subr.bf16.mxu0 0
      %2449 = vmatpush1.bf16.msra.mxu0 0
      %2450 = vmatprep.subr.bf16.mxu0 0
      %2451 = vmatpush1.bf16.msra.mxu0 0
      %2452 = vmatprep.subr.bf16.mxu0 0
      %2453 = vmatpush1.bf16.msra.mxu0 0
      %2454 = vmatprep.subr.bf16.mxu0 0
      %2455 = vmatpush1.bf16.msra.mxu0 %v2438
      %2456 = vmatprep.subr.bf16.mxu0 0
      %2457 = vmatpush2.bf16.msra.mxu0 0
      %2458 = vmatprep.subr.bf16.mxu0 0
      %2459 = vmatpush2.bf16.msra.mxu0 0
      %2460 = vmatprep.subr.bf16.mxu0 0
      %2461 = vmatpush2.bf16.msra.mxu0 0
      %2462 = vmatprep.subr.bf16.mxu0 0
      %2463 = vmatpush2.bf16.msra.mxu0 0
      %2464 = vmatprep.subr.bf16.mxu0 0
      %2465 = vmatpush2.bf16.msra.mxu0 0
      %2466 = vmatprep.subr.bf16.mxu0 0
      %2467 = vmatpush2.bf16.msra.mxu0 0
      %2468 = vmatprep.subr.bf16.mxu0 0
      %2469 = vmatpush2.bf16.msra.mxu0 0
      %2470 = vmatprep.subr.bf16.mxu0 0
      %2471 = vmatpush2.bf16.msra.mxu0 0
      %2472 = vmatprep.mubr.bf16.mxu0 0
      %2473 = vmatmul.mubr.bf16.gmra.mxu0 %v2435
      %v2474 = vpop.f32.mrf.mxu0
      %v2475 = vadd.f32 0.0, %v2474
      %v2476 = vpop.f32.mrf.mxu0
      %v2477 = vpop.f32.mrf.mxu0
      %v2478 = vpop.f32.mrf.mxu0
      %2479 = vdwg.mxu0
      %2480 = vrot.lane.b32.xlu0 %v912, 48
      %v2481 = vpop.permute.xlu0 %2480
      %v2483 = vsel %vm1408, %v2284, 0
      %v2486 = vsel %vm1412, %v2481, 0
      %2488 = vmatprep.subr.bf16.mxu0 0
      %2489 = vmatpush1.bf16.msra.mxu0 0
      %2490 = vmatprep.subr.bf16.mxu0 0
      %2491 = vmatpush1.bf16.msra.mxu0 0
      %2492 = vmatprep.subr.bf16.mxu0 0
      %2493 = vmatpush1.bf16.msra.mxu0 0
      %2494 = vmatprep.subr.bf16.mxu0 0
      %2495 = vmatpush1.bf16.msra.mxu0 0
      %2496 = vmatprep.subr.bf16.mxu0 0
      %2497 = vmatpush1.bf16.msra.mxu0 0
      %2498 = vmatprep.subr.bf16.mxu0 0
      %2499 = vmatpush1.bf16.msra.mxu0 0
      %2500 = vmatprep.subr.bf16.mxu0 0
      %2501 = vmatpush1.bf16.msra.mxu0 0
      %2502 = vmatprep.subr.bf16.mxu0 0
      %2503 = vmatpush1.bf16.msra.mxu0 %v2486
      %2504 = vmatprep.subr.bf16.mxu0 0
      %2505 = vmatpush2.bf16.msra.mxu0 0
      %2506 = vmatprep.subr.bf16.mxu0 0
      %2507 = vmatpush2.bf16.msra.mxu0 0
      %2508 = vmatprep.subr.bf16.mxu0 0
      %2509 = vmatpush2.bf16.msra.mxu0 0
      %2510 = vmatprep.subr.bf16.mxu0 0
      %2511 = vmatpush2.bf16.msra.mxu0 0
      %2512 = vmatprep.subr.bf16.mxu0 0
      %2513 = vmatpush2.bf16.msra.mxu0 0
      %2514 = vmatprep.subr.bf16.mxu0 0
      %2515 = vmatpush2.bf16.msra.mxu0 0
      %2516 = vmatprep.subr.bf16.mxu0 0
      %2517 = vmatpush2.bf16.msra.mxu0 0
      %2518 = vmatprep.subr.bf16.mxu0 0
      %2519 = vmatpush2.bf16.msra.mxu0 0
      %2520 = vmatprep.mubr.bf16.mxu0 0
      %2521 = vmatmul.mubr.bf16.gmra.mxu0 %v2483
      %v2522 = vpop.f32.mrf.mxu0
      %v2523 = vadd.f32 0.0, %v2522
      %v2524 = vpop.f32.mrf.mxu0
      %v2525 = vpop.f32.mrf.mxu0
      %v2526 = vpop.f32.mrf.mxu0
      %2527 = vdwg.mxu0
      %2528 = vrot.lane.b32.xlu0 %v913, 48
      %v2529 = vpop.permute.xlu0 %2528
      %v2531 = vsel %vm1408, %v2285, 0
      %v2534 = vsel %vm1412, %v2529, 0
      %2536 = vmatprep.subr.bf16.mxu0 0
      %2537 = vmatpush1.bf16.msra.mxu0 0
      %2538 = vmatprep.subr.bf16.mxu0 0
      %2539 = vmatpush1.bf16.msra.mxu0 0
      %2540 = vmatprep.subr.bf16.mxu0 0
      %2541 = vmatpush1.bf16.msra.mxu0 0
      %2542 = vmatprep.subr.bf16.mxu0 0
      %2543 = vmatpush1.bf16.msra.mxu0 0
      %2544 = vmatprep.subr.bf16.mxu0 0
      %2545 = vmatpush1.bf16.msra.mxu0 0
      %2546 = vmatprep.subr.bf16.mxu0 0
      %2547 = vmatpush1.bf16.msra.mxu0 0
      %2548 = vmatprep.subr.bf16.mxu0 0
      %2549 = vmatpush1.bf16.msra.mxu0 0
      %2550 = vmatprep.subr.bf16.mxu0 0
      %2551 = vmatpush1.bf16.msra.mxu0 %v2534
      %2552 = vmatprep.subr.bf16.mxu0 0
      %2553 = vmatpush2.bf16.msra.mxu0 0
      %2554 = vmatprep.subr.bf16.mxu0 0
      %2555 = vmatpush2.bf16.msra.mxu0 0
      %2556 = vmatprep.subr.bf16.mxu0 0
      %2557 = vmatpush2.bf16.msra.mxu0 0
      %2558 = vmatprep.subr.bf16.mxu0 0
      %2559 = vmatpush2.bf16.msra.mxu0 0
      %2560 = vmatprep.subr.bf16.mxu0 0
      %2561 = vmatpush2.bf16.msra.mxu0 0
      %2562 = vmatprep.subr.bf16.mxu0 0
      %2563 = vmatpush2.bf16.msra.mxu0 0
      %2564 = vmatprep.subr.bf16.mxu0 0
      %2565 = vmatpush2.bf16.msra.mxu0 0
      %2566 = vmatprep.subr.bf16.mxu0 0
      %2567 = vmatpush2.bf16.msra.mxu0 0
      %2568 = vmatprep.mubr.bf16.mxu0 0
      %2569 = vmatmul.mubr.bf16.gmra.mxu0 %v2531
      %v2570 = vpop.f32.mrf.mxu0
      %v2571 = vadd.f32 0.0, %v2570
      %v2572 = vpop.f32.mrf.mxu0
      %v2573 = vpop.f32.mrf.mxu0
      %v2574 = vpop.f32.mrf.mxu0
      %2575 = vdwg.mxu0
      %2576 = vrot.lane.b32.xlu0 %v914, 48
      %v2577 = vpop.permute.xlu0 %2576
      %v2579 = vsel %vm1408, %v2286, 0
      %v2582 = vsel %vm1412, %v2577, 0
      %2584 = vmatprep.subr.bf16.mxu0 0
      %2585 = vmatpush1.bf16.msra.mxu0 0
      %2586 = vmatprep.subr.bf16.mxu0 0
      %2587 = vmatpush1.bf16.msra.mxu0 0
      %2588 = vmatprep.subr.bf16.mxu0 0
      %2589 = vmatpush1.bf16.msra.mxu0 0
      %2590 = vmatprep.subr.bf16.mxu0 0
      %2591 = vmatpush1.bf16.msra.mxu0 0
      %2592 = vmatprep.subr.bf16.mxu0 0
      %2593 = vmatpush1.bf16.msra.mxu0 0
      %2594 = vmatprep.subr.bf16.mxu0 0
      %2595 = vmatpush1.bf16.msra.mxu0 0
      %2596 = vmatprep.subr.bf16.mxu0 0
      %2597 = vmatpush1.bf16.msra.mxu0 0
      %2598 = vmatprep.subr.bf16.mxu0 0
      %2599 = vmatpush1.bf16.msra.mxu0 %v2582
      %2600 = vmatprep.subr.bf16.mxu0 0
      %2601 = vmatpush2.bf16.msra.mxu0 0
      %2602 = vmatprep.subr.bf16.mxu0 0
      %2603 = vmatpush2.bf16.msra.mxu0 0
      %2604 = vmatprep.subr.bf16.mxu0 0
      %2605 = vmatpush2.bf16.msra.mxu0 0
      %2606 = vmatprep.subr.bf16.mxu0 0
      %2607 = vmatpush2.bf16.msra.mxu0 0
      %2608 = vmatprep.subr.bf16.mxu0 0
      %2609 = vmatpush2.bf16.msra.mxu0 0
      %2610 = vmatprep.subr.bf16.mxu0 0
      %2611 = vmatpush2.bf16.msra.mxu0 0
      %2612 = vmatprep.subr.bf16.mxu0 0
      %2613 = vmatpush2.bf16.msra.mxu0 0
      %2614 = vmatprep.subr.bf16.mxu0 0
      %2615 = vmatpush2.bf16.msra.mxu0 0
      %2616 = vmatprep.mubr.bf16.mxu0 0
      %2617 = vmatmul.mubr.bf16.gmra.mxu0 %v2579
      %v2618 = vpop.f32.mrf.mxu0
      %v2619 = vadd.f32 0.0, %v2618
      %v2620 = vpop.f32.mrf.mxu0
      %v2621 = vpop.f32.mrf.mxu0
      %v2622 = vpop.f32.mrf.mxu0
      %2623 = vdwg.mxu0
      %2624 = vrot.lane.b32.xlu0 %v915, 48
      %v2625 = vpop.permute.xlu0 %2624
      %v2627 = vsel %vm1408, %v2287, 0
      %v2630 = vsel %vm1412, %v2625, 0
      %2632 = vmatprep.subr.bf16.mxu0 0
      %2633 = vmatpush1.bf16.msra.mxu0 0
      %2634 = vmatprep.subr.bf16.mxu0 0
      %2635 = vmatpush1.bf16.msra.mxu0 0
      %2636 = vmatprep.subr.bf16.mxu0 0
      %2637 = vmatpush1.bf16.msra.mxu0 0
      %2638 = vmatprep.subr.bf16.mxu0 0
      %2639 = vmatpush1.bf16.msra.mxu0 0
      %2640 = vmatprep.subr.bf16.mxu0 0
      %2641 = vmatpush1.bf16.msra.mxu0 0
      %2642 = vmatprep.subr.bf16.mxu0 0
      %2643 = vmatpush1.bf16.msra.mxu0 0
      %2644 = vmatprep.subr.bf16.mxu0 0
      %2645 = vmatpush1.bf16.msra.mxu0 0
      %2646 = vmatprep.subr.bf16.mxu0 0
      %2647 = vmatpush1.bf16.msra.mxu0 %v2630
      %2648 = vmatprep.subr.bf16.mxu0 0
      %2649 = vmatpush2.bf16.msra.mxu0 0
      %2650 = vmatprep.subr.bf16.mxu0 0
      %2651 = vmatpush2.bf16.msra.mxu0 0
      %2652 = vmatprep.subr.bf16.mxu0 0
      %2653 = vmatpush2.bf16.msra.mxu0 0
      %2654 = vmatprep.subr.bf16.mxu0 0
      %2655 = vmatpush2.bf16.msra.mxu0 0
      %2656 = vmatprep.subr.bf16.mxu0 0
      %2657 = vmatpush2.bf16.msra.mxu0 0
      %2658 = vmatprep.subr.bf16.mxu0 0
      %2659 = vmatpush2.bf16.msra.mxu0 0
      %2660 = vmatprep.subr.bf16.mxu0 0
      %2661 = vmatpush2.bf16.msra.mxu0 0
      %2662 = vmatprep.subr.bf16.mxu0 0
      %2663 = vmatpush2.bf16.msra.mxu0 0
      %2664 = vmatprep.mubr.bf16.mxu0 0
      %2665 = vmatmul.mubr.bf16.gmra.mxu0 %v2627
      %v2666 = vpop.f32.mrf.mxu0
      %v2667 = vadd.f32 0.0, %v2666
      %v2668 = vpop.f32.mrf.mxu0
      %v2669 = vpop.f32.mrf.mxu0
      %v2670 = vpop.f32.mrf.mxu0
      %2671 = vdwg.mxu0
      %2680 = vrot.lane.b32.xlu0 %v2331, 16
      %v2681 = vpop.permute.xlu0 %2680
      %2682 = vrot.lane.b32.xlu0 %v2379, 16
      %v2683 = vpop.permute.xlu0 %2682
      %2684 = vrot.lane.b32.xlu0 %v2427, 16
      %v2685 = vpop.permute.xlu0 %2684
      %2686 = vrot.lane.b32.xlu0 %v2475, 16
      %v2687 = vpop.permute.xlu0 %2686
      %2688 = vrot.lane.b32.xlu0 %v2523, 16
      %v2689 = vpop.permute.xlu0 %2688
      %2690 = vrot.lane.b32.xlu0 %v2571, 16
      %v2691 = vpop.permute.xlu0 %2690
      %2692 = vrot.lane.b32.xlu0 %v2619, 16
      %v2693 = vpop.permute.xlu0 %2692
      %2694 = vrot.lane.b32.xlu0 %v2667, 16
      %v2695 = vpop.permute.xlu0 %2694
      %v2704 = vsel %vm919, %v1451, %v2681
      %v2705 = vsel %vm919, %v1499, %v2683
      %v2706 = vsel %vm919, %v1547, %v2685
      %v2707 = vsel %vm919, %v1595, %v2687
      %v2708 = vsel %vm919, %v1643, %v2689
      %v2709 = vsel %vm919, %v1691, %v2691
      %v2710 = vsel %vm919, %v1739, %v2693
      %v2711 = vsel %vm919, %v1787, %v2695
      %v2720 = vcombine.low %v2704, %v2705
      %v2721 = vcombine.low %v2706, %v2707
      %v2722 = vcombine.low %v2708, %v2709
      %v2723 = vcombine.low %v2710, %v2711
      %v2728 = vpack.c.bf16 %v2721, %v2720
      %v2729 = vpack.c.bf16 %v2723, %v2722
      %v2731 = vlaneseq
      %v2732 = vshrl.u32 %v2731, 7
      %v2733 = vsub.s32 0, %v2732
      %v2734 = vrot.slane %v777, %v2733
      %v2740 = vunpack.c.l.b16 %v773
      %v2741 = vunpack.c.l.b16 %v774
      %v2742 = vunpack.c.l.b16 %v775
      %v2743 = vunpack.c.l.b16 %v776
      %v2744 = vpack.c.b16 %v2741, %v2740
      %v2745 = vpack.c.b16 %v2743, %v2742
      %v2749 = vsel %vm840, %v2728, 0
      %v2752 = vsel %vm840, %v2729, 0
      %2754 = vmatprep.subr.bf16.mxu0 0
      %2755 = vmatpush1.bf16.msra.mxu0 0
      %2756 = vmatprep.subr.bf16.mxu0 0
      %2757 = vmatpush1.bf16.msra.mxu0 0
      %2758 = vmatprep.subr.bf16.mxu0 0
      %2759 = vmatpush1.bf16.msra.mxu0 0
      %2760 = vmatprep.subr.bf16.mxu0 0
      %2761 = vmatpush1.bf16.msra.mxu0 0
      %2762 = vmatprep.subr.bf16.mxu0 0
      %2763 = vmatpush1.bf16.msra.mxu0 0
      %2764 = vmatprep.subr.bf16.mxu0 0
      %2765 = vmatpush1.bf16.msra.mxu0 0
      %2766 = vmatprep.subr.bf16.mxu0 0
      %2767 = vmatpush1.bf16.msra.mxu0 %v2745
      %2768 = vmatprep.subr.bf16.mxu0 0
      %2769 = vmatpush1.bf16.msra.mxu0 %v2744
      %2770 = vmatprep.subr.bf16.mxu0 0
      %2771 = vmatpush2.bf16.msra.mxu0 0
      %2772 = vmatprep.subr.bf16.mxu0 0
      %2773 = vmatpush2.bf16.msra.mxu0 0
      %2774 = vmatprep.subr.bf16.mxu0 0
      %2775 = vmatpush2.bf16.msra.mxu0 0
      %2776 = vmatprep.subr.bf16.mxu0 0
      %2777 = vmatpush2.bf16.msra.mxu0 0
      %2778 = vmatprep.subr.bf16.mxu0 0
      %2779 = vmatpush2.bf16.msra.mxu0 0
      %2780 = vmatprep.subr.bf16.mxu0 0
      %2781 = vmatpush2.bf16.msra.mxu0 0
      %2782 = vmatprep.subr.bf16.mxu0 0
      %2783 = vmatpush2.bf16.msra.mxu0 0
      %2784 = vmatprep.subr.bf16.mxu0 0
      %2785 = vmatpush2.bf16.msra.mxu0 0
      %2786 = vmatprep.mubr.bf16.mxu0 0
      %2787 = vmatmul.mubr.bf16.gmra.mxu0 %v2749
      %v2788 = vpop.f32.mrf.mxu0
      %v2789 = vadd.f32 %v2734, %v2788
      %v2790 = vpop.f32.mrf.mxu0
      %v2791 = vpop.f32.mrf.mxu0
      %v2792 = vadd.f32 %v2734, %v2791
      %v2793 = vpop.f32.mrf.mxu0
      %2794 = vmatprep.mubr.bf16.mxu0 0
      %2795 = vmatmul.mubr.bf16.gmra.mxu0 %v2752
      %v2796 = vpop.f32.mrf.mxu0
      %v2797 = vadd.f32 %v2734, %v2796
      %v2798 = vpop.f32.mrf.mxu0
      %v2799 = vpop.f32.mrf.mxu0
      %v2800 = vadd.f32 %v2734, %v2799
      %v2801 = vpop.f32.mrf.mxu0
      %2802 = vdwg.mxu0
      %v2807 = vcombine.high %v2789, %v2789
      %v2808 = vcombine.high %v2792, %v2792
      %v2809 = vcombine.high %v2797, %v2797
      %v2810 = vcombine.high %v2800, %v2800
      %v2815 = vadd.f32 %v796, %v2789
      %v2816 = vadd.f32 %v797, %v2807
      %v2817 = vadd.f32 %v798, %v2792
      %v2818 = vadd.f32 %v799, %v2808
      %v2819 = vadd.f32 %v800, %v2797
      %v2820 = vadd.f32 %v801, %v2809
      %v2821 = vadd.f32 %v802, %v2800
      %v2822 = vadd.f32 %v803, %v2810
      %v2831 = vcombine.low %v2815, %v2816
      %v2832 = vcombine.low %v2817, %v2818
      %v2833 = vcombine.low %v2819, %v2820
      %v2834 = vcombine.low %v2821, %v2822
      %v2839 = vsel %vm840, %v2831, 0.0
      %2840 = vadd.xlane.f32.xlu0 %v2839
      %v2841 = vpop.xlane.xlu0 %2840
      %v2842 = vsel %vm840, %v2832, 0.0
      %2843 = vadd.xlane.f32.xlu0 %v2842
      %v2844 = vpop.xlane.xlu0 %2843
      %v2845 = vsel %vm840, %v2833, 0.0
      %2846 = vadd.xlane.f32.xlu0 %v2845
      %v2847 = vpop.xlane.xlu0 %2846
      %v2848 = vsel %vm840, %v2834, 0.0
      %2849 = vadd.xlane.f32.xlu0 %v2848
      %v2850 = vpop.xlane.xlu0 %2849
      %v2851 = vrcp.pop 32.0
      %v2852 = vmul.f32 %v2841, %v2851
      %v2853 = vmul.f32 %v2844, %v2851
      %v2854 = vmul.f32 %v2847, %v2851
      %v2855 = vmul.f32 %v2850, %v2851
      %v2861 = vunpack.c.l.s4 839922192
      %v2862 = vunpack.c.0.s8 %v2861
      %v2863 = vlaneseq
      %v2864 = vshrl.u32 %v2863, 7
      %v2865 = vsub.s32 %v2862, %v2864
      %v2866 = vrot.slane %v2852, %v2865
      %v2868 = vunpack.c.l.s4 1985246804
      %v2869 = vunpack.c.0.s8 %v2868
      %v2870 = vlaneseq
      %v2871 = vshrl.u32 %v2870, 7
      %v2872 = vsub.s32 %v2869, %v2871
      %v2873 = vrot.slane %v2852, %v2872
      %v2875 = vunpack.c.l.s4 839922192
      %v2876 = vunpack.c.0.s8 %v2875
      %v2877 = vlaneseq
      %v2878 = vshrl.u32 %v2877, 7
      %v2879 = vsub.s32 %v2876, %v2878
      %v2880 = vrot.slane %v2853, %v2879
      %v2882 = vunpack.c.l.s4 1985246804
      %v2883 = vunpack.c.0.s8 %v2882
      %v2884 = vlaneseq
      %v2885 = vshrl.u32 %v2884, 7
      %v2886 = vsub.s32 %v2883, %v2885
      %v2887 = vrot.slane %v2853, %v2886
      %v2889 = vunpack.c.l.s4 839922192
      %v2890 = vunpack.c.0.s8 %v2889
      %v2891 = vlaneseq
      %v2892 = vshrl.u32 %v2891, 7
      %v2893 = vsub.s32 %v2890, %v2892
      %v2894 = vrot.slane %v2854, %v2893
      %v2896 = vunpack.c.l.s4 1985246804
      %v2897 = vunpack.c.0.s8 %v2896
      %v2898 = vlaneseq
      %v2899 = vshrl.u32 %v2898, 7
      %v2900 = vsub.s32 %v2897, %v2899
      %v2901 = vrot.slane %v2854, %v2900
      %v2903 = vunpack.c.l.s4 839922192
      %v2904 = vunpack.c.0.s8 %v2903
      %v2905 = vlaneseq
      %v2906 = vshrl.u32 %v2905, 7
      %v2907 = vsub.s32 %v2904, %v2906
      %v2908 = vrot.slane %v2855, %v2907
      %v2910 = vunpack.c.l.s4 1985246804
      %v2911 = vunpack.c.0.s8 %v2910
      %v2912 = vlaneseq
      %v2913 = vshrl.u32 %v2912, 7
      %v2914 = vsub.s32 %v2911, %v2913
      %v2915 = vrot.slane %v2855, %v2914
      %v2924 = vsub.f32 %v2815, %v2866
      %v2925 = vsub.f32 %v2816, %v2873
      %v2926 = vsub.f32 %v2817, %v2880
      %v2927 = vsub.f32 %v2818, %v2887
      %v2928 = vsub.f32 %v2819, %v2894
      %v2929 = vsub.f32 %v2820, %v2901
      %v2930 = vsub.f32 %v2821, %v2908
      %v2931 = vsub.f32 %v2822, %v2915
      %v2932 = vmul.f32 %v2924, %v2924
      %v2933 = vmul.f32 %v2925, %v2925
      %v2934 = vmul.f32 %v2926, %v2926
      %v2935 = vmul.f32 %v2927, %v2927
      %v2936 = vmul.f32 %v2928, %v2928
      %v2937 = vmul.f32 %v2929, %v2929
      %v2938 = vmul.f32 %v2930, %v2930
      %v2939 = vmul.f32 %v2931, %v2931
      %v2948 = vcombine.low %v2932, %v2933
      %v2949 = vcombine.low %v2934, %v2935
      %v2950 = vcombine.low %v2936, %v2937
      %v2951 = vcombine.low %v2938, %v2939
      %v2956 = vsel %vm840, %v2948, 0.0
      %2957 = vadd.xlane.f32.xlu0 %v2956
      %v2958 = vpop.xlane.xlu0 %2957
      %v2959 = vsel %vm840, %v2949, 0.0
      %2960 = vadd.xlane.f32.xlu0 %v2959
      %v2961 = vpop.xlane.xlu0 %2960
      %v2962 = vsel %vm840, %v2950, 0.0
      %2963 = vadd.xlane.f32.xlu0 %v2962
      %v2964 = vpop.xlane.xlu0 %2963
      %v2965 = vsel %vm840, %v2951, 0.0
      %2966 = vadd.xlane.f32.xlu0 %v2965
      %v2967 = vpop.xlane.xlu0 %2966
      %v2968 = vmul.f32 %v2958, %v2851
      %v2969 = vmul.f32 %v2961, %v2851
      %v2970 = vmul.f32 %v2964, %v2851
      %v2971 = vmul.f32 %v2967, %v2851
      %v2972 = vadd.f32 %v2968, 1e-12
      %v2973 = vadd.f32 %v2969, 1e-12
      %v2974 = vadd.f32 %v2970, 1e-12
      %v2975 = vadd.f32 %v2971, 1e-12
      %v2976 = vrsqrt.pop %v2972
      %v2977 = vrsqrt.pop %v2973
      %v2978 = vrsqrt.pop %v2974
      %v2979 = vrsqrt.pop %v2975
      %v2985 = vunpack.c.l.s4 839922192
      %v2986 = vunpack.c.0.s8 %v2985
      %v2987 = vlaneseq
      %v2988 = vshrl.u32 %v2987, 7
      %v2989 = vsub.s32 %v2986, %v2988
      %v2990 = vrot.slane %v2976, %v2989
      %v2992 = vunpack.c.l.s4 1985246804
      %v2993 = vunpack.c.0.s8 %v2992
      %v2994 = vlaneseq
      %v2995 = vshrl.u32 %v2994, 7
      %v2996 = vsub.s32 %v2993, %v2995
      %v2997 = vrot.slane %v2976, %v2996
      %v2999 = vunpack.c.l.s4 839922192
      %v3000 = vunpack.c.0.s8 %v2999
      %v3001 = vlaneseq
      %v3002 = vshrl.u32 %v3001, 7
      %v3003 = vsub.s32 %v3000, %v3002
      %v3004 = vrot.slane %v2977, %v3003
      %v3006 = vunpack.c.l.s4 1985246804
      %v3007 = vunpack.c.0.s8 %v3006
      %v3008 = vlaneseq
      %v3009 = vshrl.u32 %v3008, 7
      %v3010 = vsub.s32 %v3007, %v3009
      %v3011 = vrot.slane %v2977, %v3010
      %v3013 = vunpack.c.l.s4 839922192
      %v3014 = vunpack.c.0.s8 %v3013
      %v3015 = vlaneseq
      %v3016 = vshrl.u32 %v3015, 7
      %v3017 = vsub.s32 %v3014, %v3016
      %v3018 = vrot.slane %v2978, %v3017
      %v3020 = vunpack.c.l.s4 1985246804
      %v3021 = vunpack.c.0.s8 %v3020
      %v3022 = vlaneseq
      %v3023 = vshrl.u32 %v3022, 7
      %v3024 = vsub.s32 %v3021, %v3023
      %v3025 = vrot.slane %v2978, %v3024
      %v3027 = vunpack.c.l.s4 839922192
      %v3028 = vunpack.c.0.s8 %v3027
      %v3029 = vlaneseq
      %v3030 = vshrl.u32 %v3029, 7
      %v3031 = vsub.s32 %v3028, %v3030
      %v3032 = vrot.slane %v2979, %v3031
      %v3034 = vunpack.c.l.s4 1985246804
      %v3035 = vunpack.c.0.s8 %v3034
      %v3036 = vlaneseq
      %v3037 = vshrl.u32 %v3036, 7
      %v3038 = vsub.s32 %v3035, %v3037
      %v3039 = vrot.slane %v2979, %v3038
      %v3048 = vmul.f32 %v2924, %v2990
      %v3049 = vmul.f32 %v2925, %v2997
      %v3050 = vmul.f32 %v2926, %v3004
      %v3051 = vmul.f32 %v2927, %v3011
      %v3052 = vmul.f32 %v2928, %v3018
      %v3053 = vmul.f32 %v2929, %v3025
      %v3054 = vmul.f32 %v2930, %v3032
      %v3055 = vmul.f32 %v2931, %v3039
      %v3057 = vlaneseq
      %v3058 = vshrl.u32 %v3057, 7
      %v3059 = vsub.s32 0, %v3058
      %v3060 = vrot.slane %v778, %v3059
      %v3062 = vcombine.high %v3060, %v3060
      %v3064 = vmul.f32 %v3048, %v3060
      %v3065 = vmul.f32 %v3049, %v3062
      %v3066 = vmul.f32 %v3050, %v3060
      %v3067 = vmul.f32 %v3051, %v3062
      %v3068 = vmul.f32 %v3052, %v3060
      %v3069 = vmul.f32 %v3053, %v3062
      %v3070 = vmul.f32 %v3054, %v3060
      %v3071 = vmul.f32 %v3055, %v3062
      %v3073 = vlaneseq
      %v3074 = vshrl.u32 %v3073, 7
      %v3075 = vsub.s32 0, %v3074
      %v3076 = vrot.slane %v779, %v3075
      %v3078 = vcombine.high %v3076, %v3076
      %v3080 = vadd.f32 %v3064, %v3076
      %v3081 = vadd.f32 %v3065, %v3078
      %v3082 = vadd.f32 %v3066, %v3076
      %v3083 = vadd.f32 %v3067, %v3078
      %v3084 = vadd.f32 %v3068, %v3076
      %v3085 = vadd.f32 %v3069, %v3078
      %v3086 = vadd.f32 %v3070, %v3076
      %v3087 = vadd.f32 %v3071, %v3078
      %v3096 = vcombine.low %v3080, %v3081
      %v3097 = vcombine.low %v3082, %v3083
      %v3098 = vcombine.low %v3084, %v3085
      %v3099 = vcombine.low %v3086, %v3087
      %v3104 = vpack.c.bf16 %v3097, %v3096
      %v3105 = vpack.c.bf16 %v3099, %v3098
      %v3107 = vlaneseq
      %v3108 = vshrl.u32 %v3107, 7
      %v3109 = vsub.s32 0, %v3108
      %v3110 = vrot.slane %v786, %v3109
      %v3116 = vunpack.c.l.b16 %v782
      %v3117 = vunpack.c.l.b16 %v783
      %v3118 = vunpack.c.l.b16 %v784
      %v3119 = vunpack.c.l.b16 %v785
      %v3120 = vpack.c.b16 %v3117, %v3116
      %v3121 = vpack.c.b16 %v3119, %v3118
      %v3125 = vsel %vm840, %v3104, 0
      %v3128 = vsel %vm840, %v3105, 0
      %3130 = vmatprep.subr.bf16.mxu0 0
      %3131 = vmatpush1.bf16.msra.mxu0 0
      %3132 = vmatprep.subr.bf16.mxu0 0
      %3133 = vmatpush1.bf16.msra.mxu0 0
      %3134 = vmatprep.subr.bf16.mxu0 0
      %3135 = vmatpush1.bf16.msra.mxu0 0
      %3136 = vmatprep.subr.bf16.mxu0 0
      %3137 = vmatpush1.bf16.msra.mxu0 0
      %3138 = vmatprep.subr.bf16.mxu0 0
      %3139 = vmatpush1.bf16.msra.mxu0 0
      %3140 = vmatprep.subr.bf16.mxu0 0
      %3141 = vmatpush1.bf16.msra.mxu0 0
      %3142 = vmatprep.subr.bf16.mxu0 0
      %3143 = vmatpush1.bf16.msra.mxu0 %v3121
      %3144 = vmatprep.subr.bf16.mxu0 0
      %3145 = vmatpush1.bf16.msra.mxu0 %v3120
      %3146 = vmatprep.subr.bf16.mxu0 0
      %3147 = vmatpush2.bf16.msra.mxu0 0
      %3148 = vmatprep.subr.bf16.mxu0 0
      %3149 = vmatpush2.bf16.msra.mxu0 0
      %3150 = vmatprep.subr.bf16.mxu0 0
      %3151 = vmatpush2.bf16.msra.mxu0 0
      %3152 = vmatprep.subr.bf16.mxu0 0
      %3153 = vmatpush2.bf16.msra.mxu0 0
      %3154 = vmatprep.subr.bf16.mxu0 0
      %3155 = vmatpush2.bf16.msra.mxu0 0
      %3156 = vmatprep.subr.bf16.mxu0 0
      %3157 = vmatpush2.bf16.msra.mxu0 0
      %3158 = vmatprep.subr.bf16.mxu0 0
      %3159 = vmatpush2.bf16.msra.mxu0 0
      %3160 = vmatprep.subr.bf16.mxu0 0
      %3161 = vmatpush2.bf16.msra.mxu0 0
      %3162 = vmatprep.mubr.bf16.mxu0 0
      %3163 = vmatmul.mubr.bf16.gmra.mxu0 %v3125
      %v3164 = vpop.f32.mrf.mxu0
      %v3165 = vadd.f32 %v3110, %v3164
      %v3166 = vpop.f32.mrf.mxu0
      %v3167 = vpop.f32.mrf.mxu0
      %v3168 = vadd.f32 %v3110, %v3167
      %v3169 = vpop.f32.mrf.mxu0
      %3170 = vmatprep.mubr.bf16.mxu0 0
      %3171 = vmatmul.mubr.bf16.gmra.mxu0 %v3128
      %v3172 = vpop.f32.mrf.mxu0
      %v3173 = vadd.f32 %v3110, %v3172
      %v3174 = vpop.f32.mrf.mxu0
      %v3175 = vpop.f32.mrf.mxu0
      %v3176 = vadd.f32 %v3110, %v3175
      %v3177 = vpop.f32.mrf.mxu0
      %3178 = vdwg.mxu0
      %v3179 = vmax.f32 %v3165, 0.0
      %v3180 = vmax.f32 %v3168, 0.0
      %v3181 = vmax.f32 %v3173, 0.0
      %v3182 = vmax.f32 %v3176, 0.0
      %v3183 = vpack.c.bf16 %v3180, %v3179
      %v3184 = vpack.c.bf16 %v3182, %v3181
      %v3186 = vlaneseq
      %v3187 = vshrl.u32 %v3186, 7
      %v3188 = vsub.s32 0, %v3187
      %v3189 = vrot.slane %v795, %v3188
      %v3199 = vunpack.c.l.b16 %v787
      %v3200 = vunpack.c.l.b16 %v788
      %v3201 = vunpack.c.l.b16 %v789
      %v3202 = vunpack.c.l.b16 %v790
      %v3203 = vunpack.c.l.b16 %v791
      %v3204 = vunpack.c.l.b16 %v792
      %v3205 = vunpack.c.l.b16 %v793
      %v3206 = vunpack.c.l.b16 %v794
      %v3207 = vpack.c.b16 %v3200, %v3199
      %v3208 = vpack.c.b16 %v3202, %v3201
      %v3209 = vpack.c.b16 %v3204, %v3203
      %v3210 = vpack.c.b16 %v3206, %v3205
      %vm3215 = vcmask 523264
      %v3217 = vsel %vm3215, %v3183, 0
      %v3220 = vsel %vm3215, %v3184, 0
      %3222 = vmatprep.subr.bf16.mxu0 0
      %3223 = vmatpush1.bf16.msra.mxu0 0
      %3224 = vmatprep.subr.bf16.mxu0 0
      %3225 = vmatpush1.bf16.msra.mxu0 0
      %3226 = vmatprep.subr.bf16.mxu0 0
      %3227 = vmatpush1.bf16.msra.mxu0 0
      %3228 = vmatprep.subr.bf16.mxu0 0
      %3229 = vmatpush1.bf16.msra.mxu0 0
      %3230 = vmatprep.subr.bf16.mxu0 0
      %3231 = vmatpush1.bf16.msra.mxu0 %v3210
      %3232 = vmatprep.subr.bf16.mxu0 0
      %3233 = vmatpush1.bf16.msra.mxu0 %v3209
      %3234 = vmatprep.subr.bf16.mxu0 0
      %3235 = vmatpush1.bf16.msra.mxu0 %v3208
      %3236 = vmatprep.subr.bf16.mxu0 0
      %3237 = vmatpush1.bf16.msra.mxu0 %v3207
      %3238 = vmatprep.subr.bf16.mxu0 0
      %3239 = vmatpush2.bf16.msra.mxu0 0
      %3240 = vmatprep.subr.bf16.mxu0 0
      %3241 = vmatpush2.bf16.msra.mxu0 0
      %3242 = vmatprep.subr.bf16.mxu0 0
      %3243 = vmatpush2.bf16.msra.mxu0 0
      %3244 = vmatprep.subr.bf16.mxu0 0
      %3245 = vmatpush2.bf16.msra.mxu0 0
      %3246 = vmatprep.subr.bf16.mxu0 0
      %3247 = vmatpush2.bf16.msra.mxu0 0
      %3248 = vmatprep.subr.bf16.mxu0 0
      %3249 = vmatpush2.bf16.msra.mxu0 0
      %3250 = vmatprep.subr.bf16.mxu0 0
      %3251 = vmatpush2.bf16.msra.mxu0 0
      %3252 = vmatprep.subr.bf16.mxu0 0
      %3253 = vmatpush2.bf16.msra.mxu0 0
      %3254 = vmatprep.mubr.bf16.mxu0 0
      %3255 = vmatmul.mubr.bf16.gmra.mxu0 %v3217
      %v3256 = vpop.f32.mrf.mxu0
      %v3257 = vadd.f32 %v3189, %v3256
      %v3258 = vpop.f32.mrf.mxu0
      %v3259 = vpop.f32.mrf.mxu0
      %v3260 = vadd.f32 %v3189, %v3259
      %v3261 = vpop.f32.mrf.mxu0
      %3262 = vmatprep.mubr.bf16.mxu0 0
      %3263 = vmatmul.mubr.bf16.gmra.mxu0 %v3220
      %v3264 = vpop.f32.mrf.mxu0
      %v3265 = vadd.f32 %v3189, %v3264
      %v3266 = vpop.f32.mrf.mxu0
      %v3267 = vpop.f32.mrf.mxu0
      %v3268 = vadd.f32 %v3189, %v3267
      %v3269 = vpop.f32.mrf.mxu0
      %3270 = vdwg.mxu0
      %v3275 = vcombine.high %v3257, %v3257
      %v3276 = vcombine.high %v3260, %v3260
      %v3277 = vcombine.high %v3265, %v3265
      %v3278 = vcombine.high %v3268, %v3268
      %v3283 = vadd.f32 %v3080, %v3257
      %v3284 = vadd.f32 %v3081, %v3275
      %v3285 = vadd.f32 %v3082, %v3260
      %v3286 = vadd.f32 %v3083, %v3276
      %v3287 = vadd.f32 %v3084, %v3265
      %v3288 = vadd.f32 %v3085, %v3277
      %v3289 = vadd.f32 %v3086, %v3268
      %v3290 = vadd.f32 %v3087, %v3278
      %v3299 = vcombine.low %v3283, %v3284
      %v3300 = vcombine.low %v3285, %v3286
      %v3301 = vcombine.low %v3287, %v3288
      %v3302 = vcombine.low %v3289, %v3290
      %v3307 = vsel %vm840, %v3299, 0.0
      %3308 = vadd.xlane.f32.xlu0 %v3307
      %v3309 = vpop.xlane.xlu0 %3308
      %v3310 = vsel %vm840, %v3300, 0.0
      %3311 = vadd.xlane.f32.xlu0 %v3310
      %v3312 = vpop.xlane.xlu0 %3311
      %v3313 = vsel %vm840, %v3301, 0.0
      %3314 = vadd.xlane.f32.xlu0 %v3313
      %v3315 = vpop.xlane.xlu0 %3314
      %v3316 = vsel %vm840, %v3302, 0.0
      %3317 = vadd.xlane.f32.xlu0 %v3316
      %v3318 = vpop.xlane.xlu0 %3317
      %v3319 = vmul.f32 %v3309, %v2851
      %v3320 = vmul.f32 %v3312, %v2851
      %v3321 = vmul.f32 %v3315, %v2851
      %v3322 = vmul.f32 %v3318, %v2851
      %v3328 = vunpack.c.l.s4 839922192
      %v3329 = vunpack.c.0.s8 %v3328
      %v3330 = vlaneseq
      %v3331 = vshrl.u32 %v3330, 7
      %v3332 = vsub.s32 %v3329, %v3331
      %v3333 = vrot.slane %v3319, %v3332
      %v3335 = vunpack.c.l.s4 1985246804
      %v3336 = vunpack.c.0.s8 %v3335
      %v3337 = vlaneseq
      %v3338 = vshrl.u32 %v3337, 7
      %v3339 = vsub.s32 %v3336, %v3338
      %v3340 = vrot.slane %v3319, %v3339
      %v3342 = vunpack.c.l.s4 839922192
      %v3343 = vunpack.c.0.s8 %v3342
      %v3344 = vlaneseq
      %v3345 = vshrl.u32 %v3344, 7
      %v3346 = vsub.s32 %v3343, %v3345
      %v3347 = vrot.slane %v3320, %v3346
      %v3349 = vunpack.c.l.s4 1985246804
      %v3350 = vunpack.c.0.s8 %v3349
      %v3351 = vlaneseq
      %v3352 = vshrl.u32 %v3351, 7
      %v3353 = vsub.s32 %v3350, %v3352
      %v3354 = vrot.slane %v3320, %v3353
      %v3356 = vunpack.c.l.s4 839922192
      %v3357 = vunpack.c.0.s8 %v3356
      %v3358 = vlaneseq
      %v3359 = vshrl.u32 %v3358, 7
      %v3360 = vsub.s32 %v3357, %v3359
      %v3361 = vrot.slane %v3321, %v3360
      %v3363 = vunpack.c.l.s4 1985246804
      %v3364 = vunpack.c.0.s8 %v3363
      %v3365 = vlaneseq
      %v3366 = vshrl.u32 %v3365, 7
      %v3367 = vsub.s32 %v3364, %v3366
      %v3368 = vrot.slane %v3321, %v3367
      %v3370 = vunpack.c.l.s4 839922192
      %v3371 = vunpack.c.0.s8 %v3370
      %v3372 = vlaneseq
      %v3373 = vshrl.u32 %v3372, 7
      %v3374 = vsub.s32 %v3371, %v3373
      %v3375 = vrot.slane %v3322, %v3374
      %v3377 = vunpack.c.l.s4 1985246804
      %v3378 = vunpack.c.0.s8 %v3377
      %v3379 = vlaneseq
      %v3380 = vshrl.u32 %v3379, 7
      %v3381 = vsub.s32 %v3378, %v3380
      %v3382 = vrot.slane %v3322, %v3381
      %v3391 = vsub.f32 %v3283, %v3333
      %v3392 = vsub.f32 %v3284, %v3340
      %v3393 = vsub.f32 %v3285, %v3347
      %v3394 = vsub.f32 %v3286, %v3354
      %v3395 = vsub.f32 %v3287, %v3361
      %v3396 = vsub.f32 %v3288, %v3368
      %v3397 = vsub.f32 %v3289, %v3375
      %v3398 = vsub.f32 %v3290, %v3382
      %v3399 = vmul.f32 %v3391, %v3391
      %v3400 = vmul.f32 %v3392, %v3392
      %v3401 = vmul.f32 %v3393, %v3393
      %v3402 = vmul.f32 %v3394, %v3394
      %v3403 = vmul.f32 %v3395, %v3395
      %v3404 = vmul.f32 %v3396, %v3396
      %v3405 = vmul.f32 %v3397, %v3397
      %v3406 = vmul.f32 %v3398, %v3398
      %v3415 = vcombine.low %v3399, %v3400
      %v3416 = vcombine.low %v3401, %v3402
      %v3417 = vcombine.low %v3403, %v3404
      %v3418 = vcombine.low %v3405, %v3406
      %v3423 = vsel %vm840, %v3415, 0.0
      %3424 = vadd.xlane.f32.xlu0 %v3423
      %v3425 = vpop.xlane.xlu0 %3424
      %v3426 = vsel %vm840, %v3416, 0.0
      %3427 = vadd.xlane.f32.xlu0 %v3426
      %v3428 = vpop.xlane.xlu0 %3427
      %v3429 = vsel %vm840, %v3417, 0.0
      %3430 = vadd.xlane.f32.xlu0 %v3429
      %v3431 = vpop.xlane.xlu0 %3430
      %v3432 = vsel %vm840, %v3418, 0.0
      %3433 = vadd.xlane.f32.xlu0 %v3432
      %v3434 = vpop.xlane.xlu0 %3433
      %v3435 = vmul.f32 %v3425, %v2851
      %v3436 = vmul.f32 %v3428, %v2851
      %v3437 = vmul.f32 %v3431, %v2851
      %v3438 = vmul.f32 %v3434, %v2851
      %v3439 = vadd.f32 %v3435, 1e-12
      %v3440 = vadd.f32 %v3436, 1e-12
      %v3441 = vadd.f32 %v3437, 1e-12
      %v3442 = vadd.f32 %v3438, 1e-12
      %v3443 = vrsqrt.pop %v3439
      %v3444 = vrsqrt.pop %v3440
      %v3445 = vrsqrt.pop %v3441
      %v3446 = vrsqrt.pop %v3442
      %v3452 = vunpack.c.l.s4 839922192
      %v3453 = vunpack.c.0.s8 %v3452
      %v3454 = vlaneseq
      %v3455 = vshrl.u32 %v3454, 7
      %v3456 = vsub.s32 %v3453, %v3455
      %v3457 = vrot.slane %v3443, %v3456
      %v3459 = vunpack.c.l.s4 1985246804
      %v3460 = vunpack.c.0.s8 %v3459
      %v3461 = vlaneseq
      %v3462 = vshrl.u32 %v3461, 7
      %v3463 = vsub.s32 %v3460, %v3462
      %v3464 = vrot.slane %v3443, %v3463
      %v3466 = vunpack.c.l.s4 839922192
      %v3467 = vunpack.c.0.s8 %v3466
      %v3468 = vlaneseq
      %v3469 = vshrl.u32 %v3468, 7
      %v3470 = vsub.s32 %v3467, %v3469
      %v3471 = vrot.slane %v3444, %v3470
      %v3473 = vunpack.c.l.s4 1985246804
      %v3474 = vunpack.c.0.s8 %v3473
      %v3475 = vlaneseq
      %v3476 = vshrl.u32 %v3475, 7
      %v3477 = vsub.s32 %v3474, %v3476
      %v3478 = vrot.slane %v3444, %v3477
      %v3480 = vunpack.c.l.s4 839922192
      %v3481 = vunpack.c.0.s8 %v3480
      %v3482 = vlaneseq
      %v3483 = vshrl.u32 %v3482, 7
      %v3484 = vsub.s32 %v3481, %v3483
      %v3485 = vrot.slane %v3445, %v3484
      %v3487 = vunpack.c.l.s4 1985246804
      %v3488 = vunpack.c.0.s8 %v3487
      %v3489 = vlaneseq
      %v3490 = vshrl.u32 %v3489, 7
      %v3491 = vsub.s32 %v3488, %v3490
      %v3492 = vrot.slane %v3445, %v3491
      %v3494 = vunpack.c.l.s4 839922192
      %v3495 = vunpack.c.0.s8 %v3494
      %v3496 = vlaneseq
      %v3497 = vshrl.u32 %v3496, 7
      %v3498 = vsub.s32 %v3495, %v3497
      %v3499 = vrot.slane %v3446, %v3498
      %v3501 = vunpack.c.l.s4 1985246804
      %v3502 = vunpack.c.0.s8 %v3501
      %v3503 = vlaneseq
      %v3504 = vshrl.u32 %v3503, 7
      %v3505 = vsub.s32 %v3502, %v3504
      %v3506 = vrot.slane %v3446, %v3505
      %v3515 = vmul.f32 %v3391, %v3457
      %v3516 = vmul.f32 %v3392, %v3464
      %v3517 = vmul.f32 %v3393, %v3471
      %v3518 = vmul.f32 %v3394, %v3478
      %v3519 = vmul.f32 %v3395, %v3485
      %v3520 = vmul.f32 %v3396, %v3492
      %v3521 = vmul.f32 %v3397, %v3499
      %v3522 = vmul.f32 %v3398, %v3506
      %v3524 = vlaneseq
      %v3525 = vshrl.u32 %v3524, 7
      %v3526 = vsub.s32 0, %v3525
      %v3527 = vrot.slane %v780, %v3526
      %v3529 = vcombine.high %v3527, %v3527
      %v3531 = vmul.f32 %v3515, %v3527
      %v3532 = vmul.f32 %v3516, %v3529
      %v3533 = vmul.f32 %v3517, %v3527
      %v3534 = vmul.f32 %v3518, %v3529
      %v3535 = vmul.f32 %v3519, %v3527
      %v3536 = vmul.f32 %v3520, %v3529
      %v3537 = vmul.f32 %v3521, %v3527
      %v3538 = vmul.f32 %v3522, %v3529
      %v3540 = vlaneseq
      %v3541 = vshrl.u32 %v3540, 7
      %v3542 = vsub.s32 0, %v3541
      %v3543 = vrot.slane %v781, %v3542
      %v3545 = vcombine.high %v3543, %v3543
      %v3547 = vadd.f32 %v3531, %v3543
      %v3548 = vadd.f32 %v3532, %v3545
      %v3549 = vadd.f32 %v3533, %v3543
      %v3550 = vadd.f32 %v3534, %v3545
      %v3551 = vadd.f32 %v3535, %v3543
      %v3552 = vadd.f32 %v3536, %v3545
      %v3553 = vadd.f32 %v3537, %v3543
      %v3554 = vadd.f32 %v3538, %v3545
      %vm3555 = vcmask 257024
      %3556 = vst.msk [vmem:[#allocation2] sm:$0xf] %vm3555, %v3547
      %3557 = vst.msk [vmem:[#allocation2 + $0x4] sm:$0xf] %vm3555, %v3548
      %3558 = vst.msk [vmem:[#allocation2 + $0x8] sm:$0xf] %vm3555, %v3549
      %3559 = vst.msk [vmem:[#allocation2 + $0xc] sm:$0xf] %vm3555, %v3550
      %3560 = vst.msk [vmem:[#allocation2 + $0x10] sm:$0xf] %vm3555, %v3551
      %3561 = vst.msk [vmem:[#allocation2 + $0x14] sm:$0xf] %vm3555, %v3552
      %3562 = vst.msk [vmem:[#allocation2 + $0x18] sm:$0xf] %vm3555, %v3553
      %3563 = vst.msk [vmem:[#allocation2 + $0x1c] sm:$0xf] %vm3555, %v3554
      %p3564 = scmp.eq.s32.totalorder %s32, 1
      // Predicated region
      $region89: #{sepformer_block.3} parent=83 // pred_check
        %p3565 = pneg %p3564
      $region90: #{sepformer_block.3} parent=83 // pred_check_branch
        %3567 = sbr.rel (%p3565) target = $region92
      $region91: #{sepformer_block.3} parent=83 // pred_region
        %v3568 = vsel %vm3555, %v3547, 0.0
        %3569 = vadd.xlane.f32.xlu0 %v3568
        %v3570 = vpop.xlane.xlu0 %3569
        %v3571 = vsel %vm3555, %v3548, 0.0
        %3572 = vadd.xlane.f32.xlu0 %v3571
        %v3573 = vpop.xlane.xlu0 %3572
        %v3574 = vsel %vm3555, %v3549, 0.0
        %3575 = vadd.xlane.f32.xlu0 %v3574
        %v3576 = vpop.xlane.xlu0 %3575
        %v3577 = vsel %vm3555, %v3550, 0.0
        %3578 = vadd.xlane.f32.xlu0 %v3577
        %v3579 = vpop.xlane.xlu0 %3578
        %v3580 = vsel %vm3555, %v3551, 0.0
        %3581 = vadd.xlane.f32.xlu0 %v3580
        %v3582 = vpop.xlane.xlu0 %3581
        %v3583 = vsel %vm3555, %v3552, 0.0
        %3584 = vadd.xlane.f32.xlu0 %v3583
        %v3585 = vpop.xlane.xlu0 %3584
        %v3586 = vsel %vm3555, %v3553, 0.0
        %3587 = vadd.xlane.f32.xlu0 %v3586
        %v3588 = vpop.xlane.xlu0 %3587
        %v3589 = vsel %vm3555, %v3554, 0.0
        %3590 = vadd.xlane.f32.xlu0 %v3589
        %v3591 = vpop.xlane.xlu0 %3590
        %vm3592 = vcmask 1043456
        %v3593 = vsel %vm3592, %v3570, 0.0
        %v3594 = vrot.slane %v3593, 4
        %v3595 = vadd.f32 %v3593, %v3594
        %v3596 = vrot.slane %v3595, 2
        %v3597 = vadd.f32 %v3595, %v3596
        %v3598 = vrot.slane %v3597, 1
        %v3599 = vadd.f32 %v3597, %v3598
        %v3600 = vsel %vm3592, %v3573, 0.0
        %v3601 = vrot.slane %v3600, 4
        %v3602 = vadd.f32 %v3600, %v3601
        %v3603 = vrot.slane %v3602, 2
        %v3604 = vadd.f32 %v3602, %v3603
        %v3605 = vrot.slane %v3604, 1
        %v3606 = vadd.f32 %v3604, %v3605
        %v3607 = vsel %vm3592, %v3576, 0.0
        %v3608 = vrot.slane %v3607, 4
        %v3609 = vadd.f32 %v3607, %v3608
        %v3610 = vrot.slane %v3609, 2
        %v3611 = vadd.f32 %v3609, %v3610
        %v3612 = vrot.slane %v3611, 1
        %v3613 = vadd.f32 %v3611, %v3612
        %v3614 = vsel %vm3592, %v3579, 0.0
        %v3615 = vrot.slane %v3614, 4
        %v3616 = vadd.f32 %v3614, %v3615
        %v3617 = vrot.slane %v3616, 2
        %v3618 = vadd.f32 %v3616, %v3617
        %v3619 = vrot.slane %v3618, 1
        %v3620 = vadd.f32 %v3618, %v3619
        %v3621 = vsel %vm3592, %v3582, 0.0
        %v3622 = vrot.slane %v3621, 4
        %v3623 = vadd.f32 %v3621, %v3622
        %v3624 = vrot.slane %v3623, 2
        %v3625 = vadd.f32 %v3623, %v3624
        %v3626 = vrot.slane %v3625, 1
        %v3627 = vadd.f32 %v3625, %v3626
        %v3628 = vsel %vm3592, %v3585, 0.0
        %v3629 = vrot.slane %v3628, 4
        %v3630 = vadd.f32 %v3628, %v3629
        %v3631 = vrot.slane %v3630, 2
        %v3632 = vadd.f32 %v3630, %v3631
        %v3633 = vrot.slane %v3632, 1
        %v3634 = vadd.f32 %v3632, %v3633
        %v3635 = vsel %vm3592, %v3588, 0.0
        %v3636 = vrot.slane %v3635, 4
        %v3637 = vadd.f32 %v3635, %v3636
        %v3638 = vrot.slane %v3637, 2
        %v3639 = vadd.f32 %v3637, %v3638
        %v3640 = vrot.slane %v3639, 1
        %v3641 = vadd.f32 %v3639, %v3640
        %v3642 = vsel %vm3592, %v3591, 0.0
        %v3643 = vrot.slane %v3642, 4
        %v3644 = vadd.f32 %v3642, %v3643
        %v3645 = vrot.slane %v3644, 2
        %v3646 = vadd.f32 %v3644, %v3645
        %v3647 = vrot.slane %v3646, 1
        %v3648 = vadd.f32 %v3646, %v3647
        %v3649 = vmul.f32 %v3599, 0.0078125
        %v3650 = vmul.f32 %v3606, 0.0078125
        %v3651 = vmul.f32 %v3613, 0.0078125
        %v3652 = vmul.f32 %v3620, 0.0078125
        %v3653 = vmul.f32 %v3627, 0.0078125
        %v3654 = vmul.f32 %v3634, 0.0078125
        %v3655 = vmul.f32 %v3641, 0.0078125
        %v3656 = vmul.f32 %v3648, 0.0078125
        %v3657 = vsub.f32 %v3547, %v3649
        %v3658 = vsub.f32 %v3548, %v3650
        %v3659 = vsub.f32 %v3549, %v3651
        %v3660 = vsub.f32 %v3550, %v3652
        %v3661 = vsub.f32 %v3551, %v3653
        %v3662 = vsub.f32 %v3552, %v3654
        %v3663 = vsub.f32 %v3553, %v3655
        %v3664 = vsub.f32 %v3554, %v3656
        %v3665 = vmul.f32 %v3657, %v3657
        %v3666 = vmul.f32 %v3658, %v3658
        %v3667 = vmul.f32 %v3659, %v3659
        %v3668 = vmul.f32 %v3660, %v3660
        %v3669 = vmul.f32 %v3661, %v3661
        %v3670 = vmul.f32 %v3662, %v3662
        %v3671 = vmul.f32 %v3663, %v3663
        %v3672 = vmul.f32 %v3664, %v3664
        %v3673 = vsel %vm3555, %v3665, 0.0
        %3674 = vadd.xlane.f32.xlu0 %v3673
        %v3675 = vpop.xlane.xlu0 %3674
        %v3676 = vsel %vm3555, %v3666, 0.0
        %3677 = vadd.xlane.f32.xlu0 %v3676
        %v3678 = vpop.xlane.xlu0 %3677
        %v3679 = vsel %vm3555, %v3667, 0.0
        %3680 = vadd.xlane.f32.xlu0 %v3679
        %v3681 = vpop.xlane.xlu0 %3680
        %v3682 = vsel %vm3555, %v3668, 0.0
        %3683 = vadd.xlane.f32.xlu0 %v3682
        %v3684 = vpop.xlane.xlu0 %3683
        %v3685 = vsel %vm3555, %v3669, 0.0
        %3686 = vadd.xlane.f32.xlu0 %v3685
        %v3687 = vpop.xlane.xlu0 %3686
        %v3688 = vsel %vm3555, %v3670, 0.0
        %3689 = vadd.xlane.f32.xlu0 %v3688
        %v3690 = vpop.xlane.xlu0 %3689
        %v3691 = vsel %vm3555, %v3671, 0.0
        %3692 = vadd.xlane.f32.xlu0 %v3691
        %v3693 = vpop.xlane.xlu0 %3692
        %v3694 = vsel %vm3555, %v3672, 0.0
        %3695 = vadd.xlane.f32.xlu0 %v3694
        %v3696 = vpop.xlane.xlu0 %3695
        %v3697 = vsel %vm3592, %v3675, 0.0
        %v3698 = vrot.slane %v3697, 4
        %v3699 = vadd.f32 %v3697, %v3698
        %v3700 = vrot.slane %v3699, 2
        %v3701 = vadd.f32 %v3699, %v3700
        %v3702 = vrot.slane %v3701, 1
        %v3703 = vadd.f32 %v3701, %v3702
        %v3704 = vsel %vm3592, %v3678, 0.0
        %v3705 = vrot.slane %v3704, 4
        %v3706 = vadd.f32 %v3704, %v3705
        %v3707 = vrot.slane %v3706, 2
        %v3708 = vadd.f32 %v3706, %v3707
        %v3709 = vrot.slane %v3708, 1
        %v3710 = vadd.f32 %v3708, %v3709
        %v3711 = vsel %vm3592, %v3681, 0.0
        %v3712 = vrot.slane %v3711, 4
        %v3713 = vadd.f32 %v3711, %v3712
        %v3714 = vrot.slane %v3713, 2
        %v3715 = vadd.f32 %v3713, %v3714
        %v3716 = vrot.slane %v3715, 1
        %v3717 = vadd.f32 %v3715, %v3716
        %v3718 = vsel %vm3592, %v3684, 0.0
        %v3719 = vrot.slane %v3718, 4
        %v3720 = vadd.f32 %v3718, %v3719
        %v3721 = vrot.slane %v3720, 2
        %v3722 = vadd.f32 %v3720, %v3721
        %v3723 = vrot.slane %v3722, 1
        %v3724 = vadd.f32 %v3722, %v3723
        %v3725 = vsel %vm3592, %v3687, 0.0
        %v3726 = vrot.slane %v3725, 4
        %v3727 = vadd.f32 %v3725, %v3726
        %v3728 = vrot.slane %v3727, 2
        %v3729 = vadd.f32 %v3727, %v3728
        %v3730 = vrot.slane %v3729, 1
        %v3731 = vadd.f32 %v3729, %v3730
        %v3732 = vsel %vm3592, %v3690, 0.0
        %v3733 = vrot.slane %v3732, 4
        %v3734 = vadd.f32 %v3732, %v3733
        %v3735 = vrot.slane %v3734, 2
        %v3736 = vadd.f32 %v3734, %v3735
        %v3737 = vrot.slane %v3736, 1
        %v3738 = vadd.f32 %v3736, %v3737
        %v3739 = vsel %vm3592, %v3693, 0.0
        %v3740 = vrot.slane %v3739, 4
        %v3741 = vadd.f32 %v3739, %v3740
        %v3742 = vrot.slane %v3741, 2
        %v3743 = vadd.f32 %v3741, %v3742
        %v3744 = vrot.slane %v3743, 1
        %v3745 = vadd.f32 %v3743, %v3744
        %v3746 = vsel %vm3592, %v3696, 0.0
        %v3747 = vrot.slane %v3746, 4
        %v3748 = vadd.f32 %v3746, %v3747
        %v3749 = vrot.slane %v3748, 2
        %v3750 = vadd.f32 %v3748, %v3749
        %v3751 = vrot.slane %v3750, 1
        %v3752 = vadd.f32 %v3750, %v3751
        %v3753 = vmul.f32 %v3703, 0.0078125
        %v3754 = vmul.f32 %v3710, 0.0078125
        %v3755 = vmul.f32 %v3717, 0.0078125
        %v3756 = vmul.f32 %v3724, 0.0078125
        %v3757 = vmul.f32 %v3731, 0.0078125
        %v3758 = vmul.f32 %v3738, 0.0078125
        %v3759 = vmul.f32 %v3745, 0.0078125
        %v3760 = vmul.f32 %v3752, 0.0078125
        %v3761 = vadd.f32 %v3753, 1e-12
        %v3762 = vadd.f32 %v3754, 1e-12
        %v3763 = vadd.f32 %v3755, 1e-12
        %v3764 = vadd.f32 %v3756, 1e-12
        %v3765 = vadd.f32 %v3757, 1e-12
        %v3766 = vadd.f32 %v3758, 1e-12
        %v3767 = vadd.f32 %v3759, 1e-12
        %v3768 = vadd.f32 %v3760, 1e-12
        %v3769 = vrsqrt.pop %v3761
        %v3770 = vrsqrt.pop %v3762
        %v3771 = vrsqrt.pop %v3763
        %v3772 = vrsqrt.pop %v3764
        %v3773 = vrsqrt.pop %v3765
        %v3774 = vrsqrt.pop %v3766
        %v3775 = vrsqrt.pop %v3767
        %v3776 = vrsqrt.pop %v3768
        %v3777 = vmul.f32 %v3657, %v3769
        %v3778 = vmul.f32 %v3658, %v3770
        %v3779 = vmul.f32 %v3659, %v3771
        %v3780 = vmul.f32 %v3660, %v3772
        %v3781 = vmul.f32 %v3661, %v3773
        %v3782 = vmul.f32 %v3662, %v3774
        %v3783 = vmul.f32 %v3663, %v3775
        %v3784 = vmul.f32 %v3664, %v3776
        %v3785 = vld [vmem:[%s14] sm:$0x1]
        %v3787 = vlaneseq
        %v3788 = vshrl.u32 %v3787, 7
        %v3789 = vsub.s32 0, %v3788
        %v3790 = vrot.slane %v3785, %v3789
        %v3792 = vmul.f32 %v3777, %v3790
        %v3793 = vmul.f32 %v3778, %v3790
        %v3794 = vmul.f32 %v3779, %v3790
        %v3795 = vmul.f32 %v3780, %v3790
        %v3796 = vmul.f32 %v3781, %v3790
        %v3797 = vmul.f32 %v3782, %v3790
        %v3798 = vmul.f32 %v3783, %v3790
        %v3799 = vmul.f32 %v3784, %v3790
        %v3800 = vld [vmem:[%s15] sm:$0x1]
        %v3802 = vlaneseq
        %v3803 = vshrl.u32 %v3802, 7
        %v3804 = vsub.s32 0, %v3803
        %v3805 = vrot.slane %v3800, %v3804
        %v3807 = vadd.f32 %v3792, %v3805
        %v3808 = vadd.f32 %v3793, %v3805
        %v3809 = vadd.f32 %v3794, %v3805
        %v3810 = vadd.f32 %v3795, %v3805
        %v3811 = vadd.f32 %v3796, %v3805
        %v3812 = vadd.f32 %v3797, %v3805
        %v3813 = vadd.f32 %v3798, %v3805
        %v3814 = vadd.f32 %v3799, %v3805
        %v3815 = vld [vmem:[%s677] sm:$0xf]
        %v3816 = vld [vmem:[%s677 + $0x4] sm:$0xf]
        %v3817 = vld [vmem:[%s677 + $0x8] sm:$0xf]
        %v3818 = vld [vmem:[%s677 + $0xc] sm:$0xf]
        %v3819 = vld [vmem:[%s677 + $0x10] sm:$0xf]
        %v3820 = vld [vmem:[%s677 + $0x14] sm:$0xf]
        %v3821 = vld [vmem:[%s677 + $0x18] sm:$0xf]
        %v3822 = vld [vmem:[%s677 + $0x1c] sm:$0xf]
        %v3823 = vadd.f32 %v3807, %v3815
        %v3824 = vadd.f32 %v3808, %v3816
        %v3825 = vadd.f32 %v3809, %v3817
        %v3826 = vadd.f32 %v3810, %v3818
        %v3827 = vadd.f32 %v3811, %v3819
        %v3828 = vadd.f32 %v3812, %v3820
        %v3829 = vadd.f32 %v3813, %v3821
        %v3830 = vadd.f32 %v3814, %v3822
        %3831 = vst.msk [vmem:[%s727] sm:$0xf] %vm3555, %v3823
        %3832 = vst.msk [vmem:[%s727 + $0x4] sm:$0xf] %vm3555, %v3824
        %3833 = vst.msk [vmem:[%s727 + $0x8] sm:$0xf] %vm3555, %v3825
        %3834 = vst.msk [vmem:[%s727 + $0xc] sm:$0xf] %vm3555, %v3826
        %3835 = vst.msk [vmem:[%s727 + $0x10] sm:$0xf] %vm3555, %v3827
        %3836 = vst.msk [vmem:[%s727 + $0x14] sm:$0xf] %vm3555, %v3828
        %3837 = vst.msk [vmem:[%s727 + $0x18] sm:$0xf] %vm3555, %v3829
        %3838 = vst.msk [vmem:[%s727 + $0x1c] sm:$0xf] %vm3555, %v3830
      $region92: #{sepformer_block.3} parent=83 // pred_fallthru
        _
      %s3839 = smul.u32 8, %s31
      %p3840 = scmp.lt.s32.totalorder %s3839, 15
      %s3841 = scalar_select %p3840, %s3839, 15
      %s3842 = smul.addr %s3841, 4
      %s3843 = scalar_lea.vmem %s16, %s3842
      // Predicated region
      $region93: #{sepformer_block.3} parent=83 // pred_check
        %p3844 = pneg %p458
      $region94: #{sepformer_block.3} parent=83 // pred_check_branch
        %3846 = sbr.rel (%p3844) target = $region96
      $region95: #{sepformer_block.3} parent=83 // pred_region
        %s3847 = smul.u32 8, %s31
      $region96: #{sepformer_block.3} parent=83 // pred_fallthru
        _
    $region84: #{sepformer_block.3} parent=5 // pred_fallthru
      _
    %p3848 = scmp.le.s32.totalorder 2, %s22
    // Predicated region
    $region97: #{sepformer_block.3} parent=5 // pred_check
      %p3849 = pneg %p3848
    $region98: #{sepformer_block.3} parent=5 // pred_check_branch
      %3851 = sbr.rel (%p3849) target = $region100
    $region99: #{sepformer_block.3} parent=5 // pred_region
      %s3852 = ssub.s32 %s22, 2
      // Predicated region
      $region101: #{sepformer_block.3} parent=99 // pred_check
        %p3853 = pneg %p464
      $region102: #{sepformer_block.3} parent=99 // pred_check_branch
        %3855 = sbr.rel (%p3853) target = $region104
      $region103: #{sepformer_block.3} parent=99 // pred_region
        %s3856 = smul.u32 8, %s33
        %p3857 = scmp.lt.s32.totalorder %s3856, 15
        %s3858 = scalar_select %p3857, %s3856, 15
        %s3859 = smul.addr %s3858, 4
        %s3860 = scalar_lea.vmem %s16, %s3859
      $region104: #{sepformer_block.3} parent=99 // pred_fallthru
        _
    $region100: #{sepformer_block.3} parent=5 // pred_fallthru
      _
  $region6: #{sepformer_block.3} parent=0 // loop_footer
    %s26 = sadd.s32 1, %s22
  $region7: #{sepformer_block.3} parent=0 // loop_footer_branch
    %21 = sbr.rel target = $region3
  $region8: #{sepformer_block.3} parent=0 // loop_exit
    _

</llo_original>
